<compile_context>
chip_gen: v7x
topology: tpu7x:2x2x1
jax: 0.10.0
libtpu: 0.0.40
codegen_flags: <defaults>
</compile_context>

<pallas_src>
import math

import jax
import jax.numpy as jnp
from jax import lax
from jax.experimental import pallas as pl
from jax.experimental.pallas import tpu as pltpu

NEG_SLOPE = 0.01     # F.leaky_relu default slope
BN_EPS = 1e-5        # nn.BatchNorm default eps
BIG_NEG = 1e8        # self-edge mask constant from Wcompute
NUM_LAYERS = 3       # GNN_nl: 2 hidden layers + final layer
MISC_ROWS = 6        # per-layer rows in the packed bias/misc slab
R_B1, R_B2, R_B3, R_B4, R_BFC, R_WL = range(MISC_ROWS)


def _leaky(x):
    return jnp.where(x > 0.0, x, NEG_SLOPE * x)


# ----------------------------- fused Pallas kernel -----------------------------

def fused_gnn_kernel(x_ref, w1_0, w1_1, w1_2, wfc_0, wfc_1, wfc_2,
                     w2_ref, w3_ref, w4_ref, misc_ref, adj_ref, logit_ref):
    """Whole GNN_nl forward for `bb` batch elements per grid step.

    x_ref     : (bb, N, SEG)     node features, first segment (zero-padded to SEG)
    w1_i      : (i+1, SEG, 2nf)  bf16, Wcompute conv1 split per feature segment
    wfc_i     : (2(i+1), SEG, out) bf16, Gconv weights [x-part segs | A@x-part segs]
    w2/w3/w4  : (3, ., .)        bf16, Wcompute conv2..4 stacked over layers
    misc_ref  : (18, 2nf)        f32, rows = [b1,b2,b3,b4,bfc,wl] per layer
    adj_ref   : (bb, 3, N*N)     per-layer adjacencies (lane-flattened)
    logit_ref : (bb, 1, n_way)   query-node logits only
    """
    bb, n, seg = x_ref.shape
    w1_refs = (w1_0, w1_1, w1_2)
    wfc_refs = (wfc_0, wfc_1, wfc_2)
    misc = misc_ref[...]                                   # (18, 2nf) f32

    def mrow(layer, j, width):
        r = layer * MISC_ROWS + j
        return misc[r:r + 1, :width]                       # (1, width)

    # self-edge mask via iota compare (no jnp.eye materialization)
    row = lax.broadcasted_iota(jnp.int32, (n, n), 0)
    col = lax.broadcasted_iota(jnp.int32, (n, n), 1)
    diag = row == col                                      # (n, n), broadcasts over bb

    segs = [x_ref[...]]                                    # list of (bb, n, seg) f32

    for layer in range(NUM_LAYERS):
        nseg = layer + 1
        last = layer == NUM_LAYERS - 1
        c1 = w1_refs[layer].shape[-1]
        c2 = w2_ref.shape[-1]
        c3 = w3_ref.shape[-1]
        c4 = w4_ref.shape[-1]

        # -------- Wcompute: pairwise metric -> masked row-softmax adjacency ----
        # |x_i - x_j| distributes over feature segments, so conv1 is a sum of
        # per-segment MXU passes (no lane-axis concat of the growing features).
        h = None
        for s in range(nseg):
            xs = segs[s]
            d = jnp.abs(xs[:, :, None, :] - xs[:, None, :, :])        # (bb,n,n,seg)
            d = d.reshape(bb * n * n, seg).astype(jnp.bfloat16)       # M = bb*n*n
            part = jnp.dot(d, w1_refs[layer][s],
                           preferred_element_type=jnp.float32)
            h = part if h is None else h + part
        h = _leaky(h + mrow(layer, R_B1, c1))
        h = _leaky(jnp.dot(h.astype(jnp.bfloat16), w2_ref[layer],
                           preferred_element_type=jnp.float32) + mrow(layer, R_B2, c2))
        h = _leaky(jnp.dot(h.astype(jnp.bfloat16), w3_ref[layer],
                           preferred_element_type=jnp.float32) + mrow(layer, R_B3, c3))
        h = _leaky(jnp.dot(h.astype(jnp.bfloat16), w4_ref[layer],
                           preferred_element_type=jnp.float32) + mrow(layer, R_B4, c4))
        # conv2d_last (C4 -> 1): VPU mul + lane reduce; its bias is dropped since
        # a per-row constant cancels under the row softmax.
        wl = mrow(layer, R_WL, c4)                                      # (1, c4)
        scores = jnp.sum(h.reshape(bb, n, n, c4) * wl, axis=-1)         # (bb, n, n)
        scores = jnp.where(diag, scores - BIG_NEG, scores)              # mask self-edges
        scores = scores - jnp.max(scores, axis=-1, keepdims=True)
        e = jnp.exp(scores)
        a = e * pl.reciprocal(jnp.sum(e, axis=-1, keepdims=True), approx=True)
        adj_ref[:, layer, :] = a.reshape(bb, n * n)                     # direct write

        # -------- Gconv (J2): y = x @ Wx + (A @ x) @ Wa, segment-accumulated ---
        wfc = wfc_refs[layer]                                           # (2*nseg, seg, out)
        outw = wfc.shape[-1]
        bfc = mrow(layer, R_BFC, outw)
        if not last:
            y = None
            for s in range(nseg):
                xs = segs[s]
                # A @ x_seg as a broadcast-mul + reduce (tiny; keeps MXU for the
                # feature matmuls and avoids batched-dot lowering corner cases).
                ax = jnp.sum(a[:, :, :, None] * xs[:, None, :, :], axis=2)  # (bb,n,seg)
                yx = jnp.dot(xs.reshape(bb * n, seg).astype(jnp.bfloat16), wfc[s],
                             preferred_element_type=jnp.float32)
                ya = jnp.dot(ax.reshape(bb * n, seg).astype(jnp.bfloat16), wfc[nseg + s],
                             preferred_element_type=jnp.float32)
                contrib = yx + ya
                y = contrib if y is None else y + contrib
            y = _leaky(y + bfc)                                         # (bb*n, seg)
            segs.append(y.reshape(bb, n, seg))
        else:
            # Only the query node (row 0) is consumed downstream.
            y = None
            for s in range(nseg):
                xs = segs[s]
                xq = xs[:, 0, :]                                        # (bb, seg)
                axq = jnp.sum(a[:, 0, :, None] * xs, axis=1)            # (bb, seg)
                contrib = (jnp.dot(xq.astype(jnp.bfloat16), wfc[s],
                                   preferred_element_type=jnp.float32)
                           + jnp.dot(axq.astype(jnp.bfloat16), wfc[nseg + s],
                                     preferred_element_type=jnp.float32))
                y = contrib if y is None else y + contrib
            logit_ref[:, 0, :] = y + bfc                                # (bb, n_way)


# ----------------------------- host-side parameter packing -----------------------------

def pack_params(params, f0, nf):
    """Pack the 36 raw parameter arrays into 10 slabs (weights as bf16)."""
    seg = nf // 2
    assert f0 <= seg, "first-segment zero-padding requires emb_size + n_way <= nf // 2"

    def seg_widths(nseg):
        return [f0] + [seg] * (nseg - 1)

    def split_pad(w, widths):
        chunks, off = [], 0
        for wd in widths:
            c = w[off:off + wd]
            off += wd
            if wd < seg:
                c = jnp.concatenate(
                    [c, jnp.zeros((seg - wd, w.shape[1]), w.dtype)], axis=0)
            chunks.append(c)
        return chunks

    def mrow(v):
        v = v.reshape(-1)
        return jnp.pad(v, (0, 2 * nf - v.shape[0]))

    w1_packs, wfc_packs, w2s, w3s, w4s, misc_rows = [], [], [], [], [], []
    for i, (kw, kl) in enumerate((("w0", "l0"), ("w1", "l1"), ("w_last", "l_last"))):
        nseg = i + 1
        widths = seg_widths(nseg)
        (w1, b1), (w2, b2), (w3, b3), (w4, b4), (wl, _bl) = params[kw]   # bl dropped
        wfc, bfc = params[kl]

        w1_packs.append(jnp.stack(split_pad(w1, widths)).astype(jnp.bfloat16))
        fin = sum(widths)
        chunks = split_pad(wfc[:fin], widths) + split_pad(wfc[fin:], widths)
        wfc_packs.append(jnp.stack(chunks).astype(jnp.bfloat16))
        w2s.append(w2); w3s.append(w3); w4s.append(w4)
        misc_rows += [mrow(b1), mrow(b2), mrow(b3), mrow(b4), mrow(bfc), mrow(wl)]

    packed = dict(
        w1=w1_packs,                                     # 3 x (nseg, seg, 2nf) bf16
        wfc=wfc_packs,                                   # 3 x (2nseg, seg, out) bf16
        w2=jnp.stack(w2s).astype(jnp.bfloat16),          # (3, 2nf, 2nf)
        w3=jnp.stack(w3s).astype(jnp.bfloat16),          # (3, 2nf, nf)
        w4=jnp.stack(w4s).astype(jnp.bfloat16),          # (3, nf, nf)
        misc=jnp.stack(misc_rows).astype(jnp.float32),   # (18, 2nf) f32
    )
    return packed, seg


def _batch_block_size(batch):
    """bb = 1 (batch-per-core) on megacore v7x; else fold batch into matmul M."""
    try:
        kind = (jax.devices()[0].device_kind or "").lower()
    except Exception:
        kind = ""
    if "v7" in kind and batch % 2 == 0:
        return 1
    return batch


# ----------------------------- pallas_call wrapper -----------------------------

def gnn_nl_forward(nodes, params, nf=96):
    """Fused GNN_nl forward.  Returns (W_ALL list, query-node logits)."""
    b, n, f0 = nodes.shape
    n_way = params["l_last"][0].shape[1]
    packed, seg = pack_params(params, f0, nf)

    x = nodes
    if f0 < seg:                                   # zero-pad first segment to SEG lanes
        x = jnp.concatenate([x, jnp.zeros((b, n, seg - f0), x.dtype)], axis=-1)

    bb = _batch_block_size(b)
    grid = (b // bb,)

    flat = [packed["w1"][0], packed["w1"][1], packed["w1"][2],
            packed["wfc"][0], packed["wfc"][1], packed["wfc"][2],
            packed["w2"], packed["w3"], packed["w4"], packed["misc"]]

    in_specs = [pl.BlockSpec((bb, n, seg), lambda i: (i, 0, 0))]
    # weight slabs are identical across grid steps (constant block index -> DMA'd once)
    in_specs += [pl.BlockSpec(a.shape, lambda i, nd=a.ndim: (0,) * nd) for a in flat]

    out_shapes = (jax.ShapeDtypeStruct((b, NUM_LAYERS, n * n), jnp.float32),
                  jax.ShapeDtypeStruct((b, 1, n_way), jnp.float32))
    out_specs = (pl.BlockSpec((bb, NUM_LAYERS, n * n), lambda i: (i, 0, 0)),
                 pl.BlockSpec((bb, 1, n_way), lambda i: (i, 0, 0)))

    adj_flat, logits3 = pl.pallas_call(
        fused_gnn_kernel,
        out_shape=out_shapes,
        grid=grid,
        in_specs=in_specs,
        out_specs=out_specs,
        compiler_params=pltpu.CompilerParams(
            dimension_semantics=("parallel",) if bb == 1 else ("arbitrary",)),
    )(x, *flat)

    adj = adj_flat.reshape(b, NUM_LAYERS, n, n)
    w_all = [adj[:, i] for i in range(NUM_LAYERS)]
    return w_all, logits3[:, 0, :]


# ----------------------------- parameter setup (glue) -----------------------------

def _uniform(key, shape, fan_in):
    bound = 1.0 / math.sqrt(fan_in)
    return jax.random.uniform(key, shape, jnp.float32, -bound, bound)


_BN_SCALE = 1.0 / math.sqrt(1.0 + BN_EPS)   # eval-mode BN with fresh-init stats


def init_wcompute_params(key, in_feat, nf, ratio=(2, 2, 1, 1)):
    chans = [in_feat, nf * ratio[0], nf * ratio[1], nf * ratio[2], nf * ratio[3]]
    keys = jax.random.split(key, 10)
    ps = []
    for i in range(4):                       # conv2d_1..4, each followed by BN (folded)
        w = _uniform(keys[2 * i], (chans[i], chans[i + 1]), chans[i])
        bb = _uniform(keys[2 * i + 1], (1, chans[i + 1]), chans[i])
        ps.append((w * _BN_SCALE, bb * _BN_SCALE))
    # conv2d_last: (C4 -> 1), no BN; stored as a (1, C4) row + (1, 1) bias.
    wl = _uniform(keys[8], (1, chans[4]), chans[4])
    bl = _uniform(keys[9], (1, 1), chans[4])
    ps.append((wl, bl))
    return ps


def init_gconv_params(key, in_feat, out_feat, bn):
    k1, k2 = jax.random.split(key)
    fan_in = 2 * in_feat                      # J2 operator doubles the features
    w = _uniform(k1, (2 * in_feat, out_feat), fan_in)
    b = _uniform(k2, (1, out_feat), fan_in)
    if bn:                                    # BatchNorm1d folded (eval mode)
        w, b = w * _BN_SCALE, b * _BN_SCALE
    return w, b


def init_gnn_params(key, num_inputs, nf, n_way):
    ks = jax.random.split(key, 6)
    params, feats = {}, num_inputs
    for i in range(2):                        # GNN_nl has num_layers = 2
        params[f"w{i}"] = init_wcompute_params(ks[2 * i], feats, nf)
        params[f"l{i}"] = init_gconv_params(ks[2 * i + 1], feats, nf // 2, bn=True)
        feats += nf // 2
    params["w_last"] = init_wcompute_params(ks[4], feats, nf)
    params["l_last"] = init_gconv_params(ks[5], feats, n_way, bn=False)
    return params


# ----------------------------- forward pass -----------------------------

def metric_nn_forward(z, zi_s, labels_yi, params, nf=96):
    """MetricNN.gnn_iclr_forward: returns (W_ALL, sigmoid(logits), logits)."""
    zero_pad = jnp.zeros_like(labels_yi[0])
    labels = [zero_pad] + list(labels_yi)
    zs = [z] + list(zi_s)
    nodes = jnp.stack(
        [jnp.concatenate([zi, lab], axis=1) for zi, lab in zip(zs, labels)], axis=1)
    w_all, logits = gnn_nl_forward(nodes, params, nf=nf)
    outputs = jax.nn.sigmoid(logits)          # logits.squeeze(-1) is a no-op here
    return w_all, outputs, logits


# ----------------------------- demo -----------------------------

if __name__ == "__main__":
    B, EMB, N_WAY, N_SUPPORT, NF = 2, 32, 4, 7, 96
    NUM_INPUTS = EMB + N_WAY                  # emb_size + train_N_way

    key = jax.random.PRNGKey(0)
    k_in, k_par = jax.random.split(key)
    kz, *kzis = jax.random.split(k_in, 1 + N_SUPPORT)

    z = jax.random.normal(kz, (B, EMB), jnp.float32)
    zi_s = [jax.random.normal(k, (B, EMB), jnp.float32) for k in kzis]
    labels_yi = [
        jax.nn.one_hot((jnp.arange(B) + i) % N_WAY, N_WAY, dtype=jnp.float32)
        for i in range(N_SUPPORT)
    ]

    params = init_gnn_params(k_par, NUM_INPUTS, NF, N_WAY)

    w_all, outputs, logits = metric_nn_forward(z, zi_s, labels_yi, params, nf=NF)
    jax.block_until_ready((w_all, outputs, logits))

    assert logits.shape == (B, N_WAY) and outputs.shape == (B, N_WAY)
    assert all(w.shape == (B, N_SUPPORT + 1, N_SUPPORT + 1) for w in w_all)
    assert bool(jnp.all(jnp.isfinite(logits)))
    rowsums = jnp.sum(w_all[0], axis=-1)
    assert bool(jnp.all(jnp.abs(rowsums - 1.0) < 1e-2))   # adjacency rows ~softmax
    print("KERNEL_OK")
</pallas_src>

<mosaic_0001>
module attributes {stable_mosaic.version = 11 : i64} {
  func.func @fused_gnn_kernel(%arg0: i32, %arg1: memref<2x8x48xf32, #tpu.memory_space<vmem>>, %arg2: memref<1x48x192xbf16, #tpu.memory_space<vmem>>, %arg3: memref<2x48x192xbf16, #tpu.memory_space<vmem>>, %arg4: memref<3x48x192xbf16, #tpu.memory_space<vmem>>, %arg5: memref<2x48x48xbf16, #tpu.memory_space<vmem>>, %arg6: memref<4x48x48xbf16, #tpu.memory_space<vmem>>, %arg7: memref<6x48x4xbf16, #tpu.memory_space<vmem>>, %arg8: memref<3x192x192xbf16, #tpu.memory_space<vmem>>, %arg9: memref<3x192x96xbf16, #tpu.memory_space<vmem>>, %arg10: memref<3x96x96xbf16, #tpu.memory_space<vmem>>, %arg11: memref<18x192xf32, #tpu.memory_space<vmem>>, %arg12: memref<2x3x64xf32, #tpu.memory_space<vmem>>, %arg13: memref<2x1x4xf32, #tpu.memory_space<vmem>>) attributes {dimension_semantics = [#tpu.dimension_semantics<arbitrary>], iteration_bounds = array<i64: 1>, scalar_prefetch = 0 : i64, scratch_operands = 0 : i64, tpu.core_type = #tpu.core_type<tc>, window_params = [{transform_indices = @transform_0, window_bounds = array<i64: 2, 8, 48>}, {pipeline_mode = #tpu.pipeline_mode<synchronous>, transform_indices = @transform_1, window_bounds = array<i64: 1, 48, 192>}, {pipeline_mode = #tpu.pipeline_mode<synchronous>, transform_indices = @transform_2, window_bounds = array<i64: 2, 48, 192>}, {pipeline_mode = #tpu.pipeline_mode<synchronous>, transform_indices = @transform_3, window_bounds = array<i64: 3, 48, 192>}, {pipeline_mode = #tpu.pipeline_mode<synchronous>, transform_indices = @transform_4, window_bounds = array<i64: 2, 48, 48>}, {pipeline_mode = #tpu.pipeline_mode<synchronous>, transform_indices = @transform_5, window_bounds = array<i64: 4, 48, 48>}, {pipeline_mode = #tpu.pipeline_mode<synchronous>, transform_indices = @transform_6, window_bounds = array<i64: 6, 48, 4>}, {pipeline_mode = #tpu.pipeline_mode<synchronous>, transform_indices = @transform_7, window_bounds = array<i64: 3, 192, 192>}, {pipeline_mode = #tpu.pipeline_mode<synchronous>, transform_indices = @transform_8, window_bounds = array<i64: 3, 192, 96>}, {pipeline_mode = #tpu.pipeline_mode<synchronous>, transform_indices = @transform_9, window_bounds = array<i64: 3, 96, 96>}, {pipeline_mode = #tpu.pipeline_mode<synchronous>, transform_indices = @transform_10, window_bounds = array<i64: 18, 192>}, {transform_indices = @transform_11, window_bounds = array<i64: 2, 3, 64>}, {transform_indices = @transform_12, window_bounds = array<i64: 2, 1, 4>}]} {
    %c0 = arith.constant 0 : index
    %c0_0 = arith.constant 0 : index
    %0 = vector.load %arg11[%c0, %c0_0] : memref<18x192xf32, #tpu.memory_space<vmem>>, vector<18x192xf32>
    %1 = tpu.iota {dimensions = array<i32: 0>} : vector<8x8xi32>
    %2 = tpu.iota {dimensions = array<i32: 1>} : vector<8x8xi32>
    %3 = arith.cmpi eq, %1, %2 : vector<8x8xi32>
    %c0_1 = arith.constant 0 : index
    %c0_2 = arith.constant 0 : index
    %c0_3 = arith.constant 0 : index
    %4 = vector.load %arg1[%c0_1, %c0_2, %c0_3] : memref<2x8x48xf32, #tpu.memory_space<vmem>>, vector<2x8x48xf32>
    %5 = vector.shape_cast %4 : vector<2x8x48xf32> to vector<2x8x1x48xf32>
    %6 = vector.shape_cast %4 : vector<2x8x48xf32> to vector<2x1x8x48xf32>
    %7 = vector.broadcast %5 : vector<2x8x1x48xf32> to vector<2x8x8x48xf32>
    %8 = vector.broadcast %6 : vector<2x1x8x48xf32> to vector<2x8x8x48xf32>
    %9 = arith.subf %7, %8 : vector<2x8x8x48xf32>
    %10 = math.absf %9 : vector<2x8x8x48xf32>
    %11 = vector.shape_cast %10 : vector<2x8x8x48xf32> to vector<128x48xf32>
    %12 = arith.truncf %11 : vector<128x48xf32> to vector<128x48xbf16>
    %c0_4 = arith.constant 0 : index
    %c0_5 = arith.constant 0 : index
    %c0_6 = arith.constant 0 : index
    %13 = vector.load %arg2[%c0_4, %c0_5, %c0_6] : memref<1x48x192xbf16, #tpu.memory_space<vmem>>, vector<1x48x192xbf16>
    %14 = vector.shape_cast %13 : vector<1x48x192xbf16> to vector<48x192xbf16>
    %cst = arith.constant dense<0.000000e+00> : vector<128x192xf32>
    %15 = tpu.matmul %12, %14, %cst {dimension_numbers = #tpu.dot_dimension_numbers<[1], [0], [0], [1], [0, 0, 1, 1], [], []>} : vector<128x48xbf16>, vector<48x192xbf16>, vector<128x192xf32> -> vector<128x192xf32>
    %16 = vector.extract_strided_slice %0 {offsets = [0, 0], sizes = [1, 192], strides = [1, 1]} : vector<18x192xf32> to vector<1x192xf32>
    %17 = vector.broadcast %16 : vector<1x192xf32> to vector<128x192xf32>
    %18 = arith.addf %15, %17 : vector<128x192xf32>
    %cst_7 = arith.constant 0.000000e+00 : f32
    %19 = vector.broadcast %cst_7 : f32 to vector<128x192xf32>
    %20 = arith.cmpf ogt, %18, %19 : vector<128x192xf32>
    %cst_8 = arith.constant 0.00999999977 : f32
    %21 = vector.broadcast %cst_8 : f32 to vector<128x192xf32>
    %22 = arith.mulf %21, %18 : vector<128x192xf32>
    %23 = arith.select %20, %18, %22 : vector<128x192xi1>, vector<128x192xf32>
    %24 = arith.truncf %23 : vector<128x192xf32> to vector<128x192xbf16>
    %c0_9 = arith.constant 0 : index
    %c0_10 = arith.constant 0 : index
    %c0_11 = arith.constant 0 : index
    %25 = vector.load %arg8[%c0_9, %c0_10, %c0_11] : memref<3x192x192xbf16, #tpu.memory_space<vmem>>, vector<1x192x192xbf16>
    %26 = vector.shape_cast %25 : vector<1x192x192xbf16> to vector<192x192xbf16>
    %cst_12 = arith.constant dense<0.000000e+00> : vector<128x192xf32>
    %27 = tpu.matmul %24, %26, %cst_12 {dimension_numbers = #tpu.dot_dimension_numbers<[1], [0], [0], [1], [0, 0, 1, 1], [], []>} : vector<128x192xbf16>, vector<192x192xbf16>, vector<128x192xf32> -> vector<128x192xf32>
    %28 = vector.extract_strided_slice %0 {offsets = [1, 0], sizes = [1, 192], strides = [1, 1]} : vector<18x192xf32> to vector<1x192xf32>
    %29 = vector.broadcast %28 : vector<1x192xf32> to vector<128x192xf32>
    %30 = arith.addf %27, %29 : vector<128x192xf32>
    %cst_13 = arith.constant 0.000000e+00 : f32
    %31 = vector.broadcast %cst_13 : f32 to vector<128x192xf32>
    %32 = arith.cmpf ogt, %30, %31 : vector<128x192xf32>
    %cst_14 = arith.constant 0.00999999977 : f32
    %33 = vector.broadcast %cst_14 : f32 to vector<128x192xf32>
    %34 = arith.mulf %33, %30 : vector<128x192xf32>
    %35 = arith.select %32, %30, %34 : vector<128x192xi1>, vector<128x192xf32>
    %36 = arith.truncf %35 : vector<128x192xf32> to vector<128x192xbf16>
    %c0_15 = arith.constant 0 : index
    %c0_16 = arith.constant 0 : index
    %c0_17 = arith.constant 0 : index
    %37 = vector.load %arg9[%c0_15, %c0_16, %c0_17] : memref<3x192x96xbf16, #tpu.memory_space<vmem>>, vector<1x192x96xbf16>
    %38 = vector.shape_cast %37 : vector<1x192x96xbf16> to vector<192x96xbf16>
    %cst_18 = arith.constant dense<0.000000e+00> : vector<128x96xf32>
    %39 = tpu.matmul %36, %38, %cst_18 {dimension_numbers = #tpu.dot_dimension_numbers<[1], [0], [0], [1], [0, 0, 1, 1], [], []>} : vector<128x192xbf16>, vector<192x96xbf16>, vector<128x96xf32> -> vector<128x96xf32>
    %40 = vector.extract_strided_slice %0 {offsets = [2, 0], sizes = [1, 96], strides = [1, 1]} : vector<18x192xf32> to vector<1x96xf32>
    %41 = vector.broadcast %40 : vector<1x96xf32> to vector<128x96xf32>
    %42 = arith.addf %39, %41 : vector<128x96xf32>
    %cst_19 = arith.constant 0.000000e+00 : f32
    %43 = vector.broadcast %cst_19 : f32 to vector<128x96xf32>
    %44 = arith.cmpf ogt, %42, %43 : vector<128x96xf32>
    %cst_20 = arith.constant 0.00999999977 : f32
    %45 = vector.broadcast %cst_20 : f32 to vector<128x96xf32>
    %46 = arith.mulf %45, %42 : vector<128x96xf32>
    %47 = arith.select %44, %42, %46 : vector<128x96xi1>, vector<128x96xf32>
    %48 = arith.truncf %47 : vector<128x96xf32> to vector<128x96xbf16>
    %c0_21 = arith.constant 0 : index
    %c0_22 = arith.constant 0 : index
    %c0_23 = arith.constant 0 : index
    %49 = vector.load %arg10[%c0_21, %c0_22, %c0_23] : memref<3x96x96xbf16, #tpu.memory_space<vmem>>, vector<1x96x96xbf16>
    %50 = vector.shape_cast %49 : vector<1x96x96xbf16> to vector<96x96xbf16>
    %cst_24 = arith.constant dense<0.000000e+00> : vector<128x96xf32>
    %51 = tpu.matmul %48, %50, %cst_24 {dimension_numbers = #tpu.dot_dimension_numbers<[1], [0], [0], [1], [0, 0, 1, 1], [], []>} : vector<128x96xbf16>, vector<96x96xbf16>, vector<128x96xf32> -> vector<128x96xf32>
    %52 = vector.extract_strided_slice %0 {offsets = [3, 0], sizes = [1, 96], strides = [1, 1]} : vector<18x192xf32> to vector<1x96xf32>
    %53 = vector.broadcast %52 : vector<1x96xf32> to vector<128x96xf32>
    %54 = arith.addf %51, %53 : vector<128x96xf32>
    %cst_25 = arith.constant 0.000000e+00 : f32
    %55 = vector.broadcast %cst_25 : f32 to vector<128x96xf32>
    %56 = arith.cmpf ogt, %54, %55 : vector<128x96xf32>
    %cst_26 = arith.constant 0.00999999977 : f32
    %57 = vector.broadcast %cst_26 : f32 to vector<128x96xf32>
    %58 = arith.mulf %57, %54 : vector<128x96xf32>
    %59 = arith.select %56, %54, %58 : vector<128x96xi1>, vector<128x96xf32>
    %60 = vector.extract_strided_slice %0 {offsets = [5, 0], sizes = [1, 96], strides = [1, 1]} : vector<18x192xf32> to vector<1x96xf32>
    %61 = vector.shape_cast %59 : vector<128x96xf32> to vector<2x8x8x96xf32>
    %62 = vector.shape_cast %60 : vector<1x96xf32> to vector<1x1x1x96xf32>
    %63 = vector.broadcast %62 : vector<1x1x1x96xf32> to vector<2x8x8x96xf32>
    %64 = arith.mulf %61, %63 : vector<2x8x8x96xf32>
    %cst_27 = arith.constant dense<0.000000e+00> : vector<2x8x8xf32>
    %65 = vector.multi_reduction <add>, %64, %cst_27 [3] : vector<2x8x8x96xf32> to vector<2x8x8xf32>
    %cst_28 = arith.constant 1.000000e+08 : f32
    %66 = vector.broadcast %cst_28 : f32 to vector<2x8x8xf32>
    %67 = arith.subf %65, %66 : vector<2x8x8xf32>
    %68 = vector.shape_cast %3 : vector<8x8xi1> to vector<1x8x8xi1>
    %69 = vector.broadcast %68 : vector<1x8x8xi1> to vector<2x8x8xi1>
    %70 = arith.select %69, %67, %65 : vector<2x8x8xi1>, vector<2x8x8xf32>
    %cst_29 = arith.constant dense<0xFF800000> : vector<2x8xf32>
    %71 = vector.multi_reduction <maximumf>, %70, %cst_29 [2] : vector<2x8x8xf32> to vector<2x8xf32>
    %72 = vector.shape_cast %71 : vector<2x8xf32> to vector<2x8x1xf32>
    %73 = vector.broadcast %72 : vector<2x8x1xf32> to vector<2x8x8xf32>
    %74 = arith.subf %70, %73 : vector<2x8x8xf32>
    %75 = math.exp %74 : vector<2x8x8xf32>
    %cst_30 = arith.constant dense<0.000000e+00> : vector<2x8xf32>
    %76 = vector.multi_reduction <add>, %75, %cst_30 [2] : vector<2x8x8xf32> to vector<2x8xf32>
    %77 = vector.shape_cast %76 : vector<2x8xf32> to vector<2x8x1xf32>
    %78 = tpu.reciprocal %77 {approx = true} : vector<2x8x1xf32> -> vector<2x8x1xf32>
    %79 = vector.broadcast %78 : vector<2x8x1xf32> to vector<2x8x8xf32>
    %80 = arith.mulf %75, %79 : vector<2x8x8xf32>
    %81 = vector.shape_cast %80 : vector<2x8x8xf32> to vector<2x64xf32>
    %c0_31 = arith.constant 0 : index
    %c0_32 = arith.constant 0 : index
    %c0_33 = arith.constant 0 : index
    %82 = vector.load %arg12[%c0_31, %c0_32, %c0_33] : memref<2x3x64xf32, #tpu.memory_space<vmem>>, vector<2x1x64xf32>
    %83 = vector.shape_cast %82 : vector<2x1x64xf32> to vector<2x64xf32>
    %84 = vector.shape_cast %81 : vector<2x64xf32> to vector<2x1x64xf32>
    tpu.vector_store %arg12[%c0_31, %c0_32, %c0_33], %84 {strides = array<i32>} : memref<2x3x64xf32, #tpu.memory_space<vmem>>, vector<2x1x64xf32>,
    %85 = vector.extract_strided_slice %0 {offsets = [4, 0], sizes = [1, 48], strides = [1, 1]} : vector<18x192xf32> to vector<1x48xf32>
    %86 = vector.shape_cast %80 : vector<2x8x8xf32> to vector<2x8x8x1xf32>
    %87 = vector.shape_cast %4 : vector<2x8x48xf32> to vector<2x1x8x48xf32>
    %88 = vector.broadcast %86 : vector<2x8x8x1xf32> to vector<2x8x8x48xf32>
    %89 = vector.broadcast %87 : vector<2x1x8x48xf32> to vector<2x8x8x48xf32>
    %90 = arith.mulf %88, %89 : vector<2x8x8x48xf32>
    %cst_34 = arith.constant dense<0.000000e+00> : vector<2x8x48xf32>
    %91 = vector.multi_reduction <add>, %90, %cst_34 [2] : vector<2x8x8x48xf32> to vector<2x8x48xf32>
    %92 = vector.shape_cast %4 : vector<2x8x48xf32> to vector<16x48xf32>
    %93 = arith.truncf %92 : vector<16x48xf32> to vector<16x48xbf16>
    %c0_35 = arith.constant 0 : index
    %c0_36 = arith.constant 0 : index
    %c0_37 = arith.constant 0 : index
    %94 = vector.load %arg5[%c0_35, %c0_36, %c0_37] : memref<2x48x48xbf16, #tpu.memory_space<vmem>>, vector<1x48x48xbf16>
    %95 = vector.shape_cast %94 : vector<1x48x48xbf16> to vector<48x48xbf16>
    %cst_38 = arith.constant dense<0.000000e+00> : vector<16x48xf32>
    %96 = tpu.matmul %93, %95, %cst_38 {dimension_numbers = #tpu.dot_dimension_numbers<[1], [0], [0], [1], [0, 0, 1, 1], [], []>} : vector<16x48xbf16>, vector<48x48xbf16>, vector<16x48xf32> -> vector<16x48xf32>
    %97 = vector.shape_cast %91 : vector<2x8x48xf32> to vector<16x48xf32>
    %98 = arith.truncf %97 : vector<16x48xf32> to vector<16x48xbf16>
    %c1 = arith.constant 1 : index
    %c0_39 = arith.constant 0 : index
    %c0_40 = arith.constant 0 : index
    %99 = vector.load %arg5[%c1, %c0_39, %c0_40] : memref<2x48x48xbf16, #tpu.memory_space<vmem>>, vector<1x48x48xbf16>
    %100 = vector.shape_cast %99 : vector<1x48x48xbf16> to vector<48x48xbf16>
    %cst_41 = arith.constant dense<0.000000e+00> : vector<16x48xf32>
    %101 = tpu.matmul %98, %100, %cst_41 {dimension_numbers = #tpu.dot_dimension_numbers<[1], [0], [0], [1], [0, 0, 1, 1], [], []>} : vector<16x48xbf16>, vector<48x48xbf16>, vector<16x48xf32> -> vector<16x48xf32>
    %102 = arith.addf %96, %101 : vector<16x48xf32>
    %103 = vector.broadcast %85 : vector<1x48xf32> to vector<16x48xf32>
    %104 = arith.addf %102, %103 : vector<16x48xf32>
    %cst_42 = arith.constant 0.000000e+00 : f32
    %105 = vector.broadcast %cst_42 : f32 to vector<16x48xf32>
    %106 = arith.cmpf ogt, %104, %105 : vector<16x48xf32>
    %cst_43 = arith.constant 0.00999999977 : f32
    %107 = vector.broadcast %cst_43 : f32 to vector<16x48xf32>
    %108 = arith.mulf %107, %104 : vector<16x48xf32>
    %109 = arith.select %106, %104, %108 : vector<16x48xi1>, vector<16x48xf32>
    %110 = vector.shape_cast %109 : vector<16x48xf32> to vector<2x8x48xf32>
    %111 = vector.shape_cast %4 : vector<2x8x48xf32> to vector<2x8x1x48xf32>
    %112 = vector.shape_cast %4 : vector<2x8x48xf32> to vector<2x1x8x48xf32>
    %113 = vector.broadcast %111 : vector<2x8x1x48xf32> to vector<2x8x8x48xf32>
    %114 = vector.broadcast %112 : vector<2x1x8x48xf32> to vector<2x8x8x48xf32>
    %115 = arith.subf %113, %114 : vector<2x8x8x48xf32>
    %116 = math.absf %115 : vector<2x8x8x48xf32>
    %117 = vector.shape_cast %116 : vector<2x8x8x48xf32> to vector<128x48xf32>
    %118 = arith.truncf %117 : vector<128x48xf32> to vector<128x48xbf16>
    %c0_44 = arith.constant 0 : index
    %c0_45 = arith.constant 0 : index
    %c0_46 = arith.constant 0 : index
    %119 = vector.load %arg3[%c0_44, %c0_45, %c0_46] : memref<2x48x192xbf16, #tpu.memory_space<vmem>>, vector<1x48x192xbf16>
    %120 = vector.shape_cast %119 : vector<1x48x192xbf16> to vector<48x192xbf16>
    %cst_47 = arith.constant dense<0.000000e+00> : vector<128x192xf32>
    %121 = tpu.matmul %118, %120, %cst_47 {dimension_numbers = #tpu.dot_dimension_numbers<[1], [0], [0], [1], [0, 0, 1, 1], [], []>} : vector<128x48xbf16>, vector<48x192xbf16>, vector<128x192xf32> -> vector<128x192xf32>
    %122 = vector.shape_cast %110 : vector<2x8x48xf32> to vector<2x8x1x48xf32>
    %123 = vector.shape_cast %110 : vector<2x8x48xf32> to vector<2x1x8x48xf32>
    %124 = vector.broadcast %122 : vector<2x8x1x48xf32> to vector<2x8x8x48xf32>
    %125 = vector.broadcast %123 : vector<2x1x8x48xf32> to vector<2x8x8x48xf32>
    %126 = arith.subf %124, %125 : vector<2x8x8x48xf32>
    %127 = math.absf %126 : vector<2x8x8x48xf32>
    %128 = vector.shape_cast %127 : vector<2x8x8x48xf32> to vector<128x48xf32>
    %129 = arith.truncf %128 : vector<128x48xf32> to vector<128x48xbf16>
    %c1_48 = arith.constant 1 : index
    %c0_49 = arith.constant 0 : index
    %c0_50 = arith.constant 0 : index
    %130 = vector.load %arg3[%c1_48, %c0_49, %c0_50] : memref<2x48x192xbf16, #tpu.memory_space<vmem>>, vector<1x48x192xbf16>
    %131 = vector.shape_cast %130 : vector<1x48x192xbf16> to vector<48x192xbf16>
    %cst_51 = arith.constant dense<0.000000e+00> : vector<128x192xf32>
    %132 = tpu.matmul %129, %131, %cst_51 {dimension_numbers = #tpu.dot_dimension_numbers<[1], [0], [0], [1], [0, 0, 1, 1], [], []>} : vector<128x48xbf16>, vector<48x192xbf16>, vector<128x192xf32> -> vector<128x192xf32>
    %133 = arith.addf %121, %132 : vector<128x192xf32>
    %134 = vector.extract_strided_slice %0 {offsets = [6, 0], sizes = [1, 192], strides = [1, 1]} : vector<18x192xf32> to vector<1x192xf32>
    %135 = vector.broadcast %134 : vector<1x192xf32> to vector<128x192xf32>
    %136 = arith.addf %133, %135 : vector<128x192xf32>
    %cst_52 = arith.constant 0.000000e+00 : f32
    %137 = vector.broadcast %cst_52 : f32 to vector<128x192xf32>
    %138 = arith.cmpf ogt, %136, %137 : vector<128x192xf32>
    %cst_53 = arith.constant 0.00999999977 : f32
    %139 = vector.broadcast %cst_53 : f32 to vector<128x192xf32>
    %140 = arith.mulf %139, %136 : vector<128x192xf32>
    %141 = arith.select %138, %136, %140 : vector<128x192xi1>, vector<128x192xf32>
    %142 = arith.truncf %141 : vector<128x192xf32> to vector<128x192xbf16>
    %c1_54 = arith.constant 1 : index
    %c0_55 = arith.constant 0 : index
    %c0_56 = arith.constant 0 : index
    %143 = vector.load %arg8[%c1_54, %c0_55, %c0_56] : memref<3x192x192xbf16, #tpu.memory_space<vmem>>, vector<1x192x192xbf16>
    %144 = vector.shape_cast %143 : vector<1x192x192xbf16> to vector<192x192xbf16>
    %cst_57 = arith.constant dense<0.000000e+00> : vector<128x192xf32>
    %145 = tpu.matmul %142, %144, %cst_57 {dimension_numbers = #tpu.dot_dimension_numbers<[1], [0], [0], [1], [0, 0, 1, 1], [], []>} : vector<128x192xbf16>, vector<192x192xbf16>, vector<128x192xf32> -> vector<128x192xf32>
    %146 = vector.extract_strided_slice %0 {offsets = [7, 0], sizes = [1, 192], strides = [1, 1]} : vector<18x192xf32> to vector<1x192xf32>
    %147 = vector.broadcast %146 : vector<1x192xf32> to vector<128x192xf32>
    %148 = arith.addf %145, %147 : vector<128x192xf32>
    %cst_58 = arith.constant 0.000000e+00 : f32
    %149 = vector.broadcast %cst_58 : f32 to vector<128x192xf32>
    %150 = arith.cmpf ogt, %148, %149 : vector<128x192xf32>
    %cst_59 = arith.constant 0.00999999977 : f32
    %151 = vector.broadcast %cst_59 : f32 to vector<128x192xf32>
    %152 = arith.mulf %151, %148 : vector<128x192xf32>
    %153 = arith.select %150, %148, %152 : vector<128x192xi1>, vector<128x192xf32>
    %154 = arith.truncf %153 : vector<128x192xf32> to vector<128x192xbf16>
    %c1_60 = arith.constant 1 : index
    %c0_61 = arith.constant 0 : index
    %c0_62 = arith.constant 0 : index
    %155 = vector.load %arg9[%c1_60, %c0_61, %c0_62] : memref<3x192x96xbf16, #tpu.memory_space<vmem>>, vector<1x192x96xbf16>
    %156 = vector.shape_cast %155 : vector<1x192x96xbf16> to vector<192x96xbf16>
    %cst_63 = arith.constant dense<0.000000e+00> : vector<128x96xf32>
    %157 = tpu.matmul %154, %156, %cst_63 {dimension_numbers = #tpu.dot_dimension_numbers<[1], [0], [0], [1], [0, 0, 1, 1], [], []>} : vector<128x192xbf16>, vector<192x96xbf16>, vector<128x96xf32> -> vector<128x96xf32>
    %158 = vector.extract_strided_slice %0 {offsets = [8, 0], sizes = [1, 96], strides = [1, 1]} : vector<18x192xf32> to vector<1x96xf32>
    %159 = vector.broadcast %158 : vector<1x96xf32> to vector<128x96xf32>
    %160 = arith.addf %157, %159 : vector<128x96xf32>
    %cst_64 = arith.constant 0.000000e+00 : f32
    %161 = vector.broadcast %cst_64 : f32 to vector<128x96xf32>
    %162 = arith.cmpf ogt, %160, %161 : vector<128x96xf32>
    %cst_65 = arith.constant 0.00999999977 : f32
    %163 = vector.broadcast %cst_65 : f32 to vector<128x96xf32>
    %164 = arith.mulf %163, %160 : vector<128x96xf32>
    %165 = arith.select %162, %160, %164 : vector<128x96xi1>, vector<128x96xf32>
    %166 = arith.truncf %165 : vector<128x96xf32> to vector<128x96xbf16>
    %c1_66 = arith.constant 1 : index
    %c0_67 = arith.constant 0 : index
    %c0_68 = arith.constant 0 : index
    %167 = vector.load %arg10[%c1_66, %c0_67, %c0_68] : memref<3x96x96xbf16, #tpu.memory_space<vmem>>, vector<1x96x96xbf16>
    %168 = vector.shape_cast %167 : vector<1x96x96xbf16> to vector<96x96xbf16>
    %cst_69 = arith.constant dense<0.000000e+00> : vector<128x96xf32>
    %169 = tpu.matmul %166, %168, %cst_69 {dimension_numbers = #tpu.dot_dimension_numbers<[1], [0], [0], [1], [0, 0, 1, 1], [], []>} : vector<128x96xbf16>, vector<96x96xbf16>, vector<128x96xf32> -> vector<128x96xf32>
    %170 = vector.extract_strided_slice %0 {offsets = [9, 0], sizes = [1, 96], strides = [1, 1]} : vector<18x192xf32> to vector<1x96xf32>
    %171 = vector.broadcast %170 : vector<1x96xf32> to vector<128x96xf32>
    %172 = arith.addf %169, %171 : vector<128x96xf32>
    %cst_70 = arith.constant 0.000000e+00 : f32
    %173 = vector.broadcast %cst_70 : f32 to vector<128x96xf32>
    %174 = arith.cmpf ogt, %172, %173 : vector<128x96xf32>
    %cst_71 = arith.constant 0.00999999977 : f32
    %175 = vector.broadcast %cst_71 : f32 to vector<128x96xf32>
    %176 = arith.mulf %175, %172 : vector<128x96xf32>
    %177 = arith.select %174, %172, %176 : vector<128x96xi1>, vector<128x96xf32>
    %178 = vector.extract_strided_slice %0 {offsets = [11, 0], sizes = [1, 96], strides = [1, 1]} : vector<18x192xf32> to vector<1x96xf32>
    %179 = vector.shape_cast %177 : vector<128x96xf32> to vector<2x8x8x96xf32>
    %180 = vector.shape_cast %178 : vector<1x96xf32> to vector<1x1x1x96xf32>
    %181 = vector.broadcast %180 : vector<1x1x1x96xf32> to vector<2x8x8x96xf32>
    %182 = arith.mulf %179, %181 : vector<2x8x8x96xf32>
    %cst_72 = arith.constant dense<0.000000e+00> : vector<2x8x8xf32>
    %183 = vector.multi_reduction <add>, %182, %cst_72 [3] : vector<2x8x8x96xf32> to vector<2x8x8xf32>
    %cst_73 = arith.constant 1.000000e+08 : f32
    %184 = vector.broadcast %cst_73 : f32 to vector<2x8x8xf32>
    %185 = arith.subf %183, %184 : vector<2x8x8xf32>
    %186 = vector.shape_cast %3 : vector<8x8xi1> to vector<1x8x8xi1>
    %187 = vector.broadcast %186 : vector<1x8x8xi1> to vector<2x8x8xi1>
    %188 = arith.select %187, %185, %183 : vector<2x8x8xi1>, vector<2x8x8xf32>
    %cst_74 = arith.constant dense<0xFF800000> : vector<2x8xf32>
    %189 = vector.multi_reduction <maximumf>, %188, %cst_74 [2] : vector<2x8x8xf32> to vector<2x8xf32>
    %190 = vector.shape_cast %189 : vector<2x8xf32> to vector<2x8x1xf32>
    %191 = vector.broadcast %190 : vector<2x8x1xf32> to vector<2x8x8xf32>
    %192 = arith.subf %188, %191 : vector<2x8x8xf32>
    %193 = math.exp %192 : vector<2x8x8xf32>
    %cst_75 = arith.constant dense<0.000000e+00> : vector<2x8xf32>
    %194 = vector.multi_reduction <add>, %193, %cst_75 [2] : vector<2x8x8xf32> to vector<2x8xf32>
    %195 = vector.shape_cast %194 : vector<2x8xf32> to vector<2x8x1xf32>
    %196 = tpu.reciprocal %195 {approx = true} : vector<2x8x1xf32> -> vector<2x8x1xf32>
    %197 = vector.broadcast %196 : vector<2x8x1xf32> to vector<2x8x8xf32>
    %198 = arith.mulf %193, %197 : vector<2x8x8xf32>
    %199 = vector.shape_cast %198 : vector<2x8x8xf32> to vector<2x64xf32>
    %c0_76 = arith.constant 0 : index
    %c1_77 = arith.constant 1 : index
    %c0_78 = arith.constant 0 : index
    %200 = vector.load %arg12[%c0_76, %c1_77, %c0_78] : memref<2x3x64xf32, #tpu.memory_space<vmem>>, vector<2x1x64xf32>
    %201 = vector.shape_cast %200 : vector<2x1x64xf32> to vector<2x64xf32>
    %202 = vector.shape_cast %199 : vector<2x64xf32> to vector<2x1x64xf32>
    tpu.vector_store %arg12[%c0_76, %c1_77, %c0_78], %202 {strides = array<i32>} : memref<2x3x64xf32, #tpu.memory_space<vmem>>, vector<2x1x64xf32>,
    %203 = vector.extract_strided_slice %0 {offsets = [10, 0], sizes = [1, 48], strides = [1, 1]} : vector<18x192xf32> to vector<1x48xf32>
    %204 = vector.shape_cast %198 : vector<2x8x8xf32> to vector<2x8x8x1xf32>
    %205 = vector.shape_cast %4 : vector<2x8x48xf32> to vector<2x1x8x48xf32>
    %206 = vector.broadcast %204 : vector<2x8x8x1xf32> to vector<2x8x8x48xf32>
    %207 = vector.broadcast %205 : vector<2x1x8x48xf32> to vector<2x8x8x48xf32>
    %208 = arith.mulf %206, %207 : vector<2x8x8x48xf32>
    %cst_79 = arith.constant dense<0.000000e+00> : vector<2x8x48xf32>
    %209 = vector.multi_reduction <add>, %208, %cst_79 [2] : vector<2x8x8x48xf32> to vector<2x8x48xf32>
    %210 = vector.shape_cast %4 : vector<2x8x48xf32> to vector<16x48xf32>
    %211 = arith.truncf %210 : vector<16x48xf32> to vector<16x48xbf16>
    %c0_80 = arith.constant 0 : index
    %c0_81 = arith.constant 0 : index
    %c0_82 = arith.constant 0 : index
    %212 = vector.load %arg6[%c0_80, %c0_81, %c0_82] : memref<4x48x48xbf16, #tpu.memory_space<vmem>>, vector<1x48x48xbf16>
    %213 = vector.shape_cast %212 : vector<1x48x48xbf16> to vector<48x48xbf16>
    %cst_83 = arith.constant dense<0.000000e+00> : vector<16x48xf32>
    %214 = tpu.matmul %211, %213, %cst_83 {dimension_numbers = #tpu.dot_dimension_numbers<[1], [0], [0], [1], [0, 0, 1, 1], [], []>} : vector<16x48xbf16>, vector<48x48xbf16>, vector<16x48xf32> -> vector<16x48xf32>
    %215 = vector.shape_cast %209 : vector<2x8x48xf32> to vector<16x48xf32>
    %216 = arith.truncf %215 : vector<16x48xf32> to vector<16x48xbf16>
    %c2 = arith.constant 2 : index
    %c0_84 = arith.constant 0 : index
    %c0_85 = arith.constant 0 : index
    %217 = vector.load %arg6[%c2, %c0_84, %c0_85] : memref<4x48x48xbf16, #tpu.memory_space<vmem>>, vector<1x48x48xbf16>
    %218 = vector.shape_cast %217 : vector<1x48x48xbf16> to vector<48x48xbf16>
    %cst_86 = arith.constant dense<0.000000e+00> : vector<16x48xf32>
    %219 = tpu.matmul %216, %218, %cst_86 {dimension_numbers = #tpu.dot_dimension_numbers<[1], [0], [0], [1], [0, 0, 1, 1], [], []>} : vector<16x48xbf16>, vector<48x48xbf16>, vector<16x48xf32> -> vector<16x48xf32>
    %220 = arith.addf %214, %219 : vector<16x48xf32>
    %221 = vector.shape_cast %198 : vector<2x8x8xf32> to vector<2x8x8x1xf32>
    %222 = vector.shape_cast %110 : vector<2x8x48xf32> to vector<2x1x8x48xf32>
    %223 = vector.broadcast %221 : vector<2x8x8x1xf32> to vector<2x8x8x48xf32>
    %224 = vector.broadcast %222 : vector<2x1x8x48xf32> to vector<2x8x8x48xf32>
    %225 = arith.mulf %223, %224 : vector<2x8x8x48xf32>
    %cst_87 = arith.constant dense<0.000000e+00> : vector<2x8x48xf32>
    %226 = vector.multi_reduction <add>, %225, %cst_87 [2] : vector<2x8x8x48xf32> to vector<2x8x48xf32>
    %227 = vector.shape_cast %110 : vector<2x8x48xf32> to vector<16x48xf32>
    %228 = arith.truncf %227 : vector<16x48xf32> to vector<16x48xbf16>
    %c1_88 = arith.constant 1 : index
    %c0_89 = arith.constant 0 : index
    %c0_90 = arith.constant 0 : index
    %229 = vector.load %arg6[%c1_88, %c0_89, %c0_90] : memref<4x48x48xbf16, #tpu.memory_space<vmem>>, vector<1x48x48xbf16>
    %230 = vector.shape_cast %229 : vector<1x48x48xbf16> to vector<48x48xbf16>
    %cst_91 = arith.constant dense<0.000000e+00> : vector<16x48xf32>
    %231 = tpu.matmul %228, %230, %cst_91 {dimension_numbers = #tpu.dot_dimension_numbers<[1], [0], [0], [1], [0, 0, 1, 1], [], []>} : vector<16x48xbf16>, vector<48x48xbf16>, vector<16x48xf32> -> vector<16x48xf32>
    %232 = vector.shape_cast %226 : vector<2x8x48xf32> to vector<16x48xf32>
    %233 = arith.truncf %232 : vector<16x48xf32> to vector<16x48xbf16>
    %c3 = arith.constant 3 : index
    %c0_92 = arith.constant 0 : index
    %c0_93 = arith.constant 0 : index
    %234 = vector.load %arg6[%c3, %c0_92, %c0_93] : memref<4x48x48xbf16, #tpu.memory_space<vmem>>, vector<1x48x48xbf16>
    %235 = vector.shape_cast %234 : vector<1x48x48xbf16> to vector<48x48xbf16>
    %cst_94 = arith.constant dense<0.000000e+00> : vector<16x48xf32>
    %236 = tpu.matmul %233, %235, %cst_94 {dimension_numbers = #tpu.dot_dimension_numbers<[1], [0], [0], [1], [0, 0, 1, 1], [], []>} : vector<16x48xbf16>, vector<48x48xbf16>, vector<16x48xf32> -> vector<16x48xf32>
    %237 = arith.addf %231, %236 : vector<16x48xf32>
    %238 = arith.addf %220, %237 : vector<16x48xf32>
    %239 = vector.broadcast %203 : vector<1x48xf32> to vector<16x48xf32>
    %240 = arith.addf %238, %239 : vector<16x48xf32>
    %cst_95 = arith.constant 0.000000e+00 : f32
    %241 = vector.broadcast %cst_95 : f32 to vector<16x48xf32>
    %242 = arith.cmpf ogt, %240, %241 : vector<16x48xf32>
    %cst_96 = arith.constant 0.00999999977 : f32
    %243 = vector.broadcast %cst_96 : f32 to vector<16x48xf32>
    %244 = arith.mulf %243, %240 : vector<16x48xf32>
    %245 = arith.select %242, %240, %244 : vector<16x48xi1>, vector<16x48xf32>
    %246 = vector.shape_cast %245 : vector<16x48xf32> to vector<2x8x48xf32>
    %247 = vector.shape_cast %4 : vector<2x8x48xf32> to vector<2x8x1x48xf32>
    %248 = vector.shape_cast %4 : vector<2x8x48xf32> to vector<2x1x8x48xf32>
    %249 = vector.broadcast %247 : vector<2x8x1x48xf32> to vector<2x8x8x48xf32>
    %250 = vector.broadcast %248 : vector<2x1x8x48xf32> to vector<2x8x8x48xf32>
    %251 = arith.subf %249, %250 : vector<2x8x8x48xf32>
    %252 = math.absf %251 : vector<2x8x8x48xf32>
    %253 = vector.shape_cast %252 : vector<2x8x8x48xf32> to vector<128x48xf32>
    %254 = arith.truncf %253 : vector<128x48xf32> to vector<128x48xbf16>
    %c0_97 = arith.constant 0 : index
    %c0_98 = arith.constant 0 : index
    %c0_99 = arith.constant 0 : index
    %255 = vector.load %arg4[%c0_97, %c0_98, %c0_99] : memref<3x48x192xbf16, #tpu.memory_space<vmem>>, vector<1x48x192xbf16>
    %256 = vector.shape_cast %255 : vector<1x48x192xbf16> to vector<48x192xbf16>
    %cst_100 = arith.constant dense<0.000000e+00> : vector<128x192xf32>
    %257 = tpu.matmul %254, %256, %cst_100 {dimension_numbers = #tpu.dot_dimension_numbers<[1], [0], [0], [1], [0, 0, 1, 1], [], []>} : vector<128x48xbf16>, vector<48x192xbf16>, vector<128x192xf32> -> vector<128x192xf32>
    %258 = vector.shape_cast %110 : vector<2x8x48xf32> to vector<2x8x1x48xf32>
    %259 = vector.shape_cast %110 : vector<2x8x48xf32> to vector<2x1x8x48xf32>
    %260 = vector.broadcast %258 : vector<2x8x1x48xf32> to vector<2x8x8x48xf32>
    %261 = vector.broadcast %259 : vector<2x1x8x48xf32> to vector<2x8x8x48xf32>
    %262 = arith.subf %260, %261 : vector<2x8x8x48xf32>
    %263 = math.absf %262 : vector<2x8x8x48xf32>
    %264 = vector.shape_cast %263 : vector<2x8x8x48xf32> to vector<128x48xf32>
    %265 = arith.truncf %264 : vector<128x48xf32> to vector<128x48xbf16>
    %c1_101 = arith.constant 1 : index
    %c0_102 = arith.constant 0 : index
    %c0_103 = arith.constant 0 : index
    %266 = vector.load %arg4[%c1_101, %c0_102, %c0_103] : memref<3x48x192xbf16, #tpu.memory_space<vmem>>, vector<1x48x192xbf16>
    %267 = vector.shape_cast %266 : vector<1x48x192xbf16> to vector<48x192xbf16>
    %cst_104 = arith.constant dense<0.000000e+00> : vector<128x192xf32>
    %268 = tpu.matmul %265, %267, %cst_104 {dimension_numbers = #tpu.dot_dimension_numbers<[1], [0], [0], [1], [0, 0, 1, 1], [], []>} : vector<128x48xbf16>, vector<48x192xbf16>, vector<128x192xf32> -> vector<128x192xf32>
    %269 = arith.addf %257, %268 : vector<128x192xf32>
    %270 = vector.shape_cast %246 : vector<2x8x48xf32> to vector<2x8x1x48xf32>
    %271 = vector.shape_cast %246 : vector<2x8x48xf32> to vector<2x1x8x48xf32>
    %272 = vector.broadcast %270 : vector<2x8x1x48xf32> to vector<2x8x8x48xf32>
    %273 = vector.broadcast %271 : vector<2x1x8x48xf32> to vector<2x8x8x48xf32>
    %274 = arith.subf %272, %273 : vector<2x8x8x48xf32>
    %275 = math.absf %274 : vector<2x8x8x48xf32>
    %276 = vector.shape_cast %275 : vector<2x8x8x48xf32> to vector<128x48xf32>
    %277 = arith.truncf %276 : vector<128x48xf32> to vector<128x48xbf16>
    %c2_105 = arith.constant 2 : index
    %c0_106 = arith.constant 0 : index
    %c0_107 = arith.constant 0 : index
    %278 = vector.load %arg4[%c2_105, %c0_106, %c0_107] : memref<3x48x192xbf16, #tpu.memory_space<vmem>>, vector<1x48x192xbf16>
    %279 = vector.shape_cast %278 : vector<1x48x192xbf16> to vector<48x192xbf16>
    %cst_108 = arith.constant dense<0.000000e+00> : vector<128x192xf32>
    %280 = tpu.matmul %277, %279, %cst_108 {dimension_numbers = #tpu.dot_dimension_numbers<[1], [0], [0], [1], [0, 0, 1, 1], [], []>} : vector<128x48xbf16>, vector<48x192xbf16>, vector<128x192xf32> -> vector<128x192xf32>
    %281 = arith.addf %269, %280 : vector<128x192xf32>
    %282 = vector.extract_strided_slice %0 {offsets = [12, 0], sizes = [1, 192], strides = [1, 1]} : vector<18x192xf32> to vector<1x192xf32>
    %283 = vector.broadcast %282 : vector<1x192xf32> to vector<128x192xf32>
    %284 = arith.addf %281, %283 : vector<128x192xf32>
    %cst_109 = arith.constant 0.000000e+00 : f32
    %285 = vector.broadcast %cst_109 : f32 to vector<128x192xf32>
    %286 = arith.cmpf ogt, %284, %285 : vector<128x192xf32>
    %cst_110 = arith.constant 0.00999999977 : f32
    %287 = vector.broadcast %cst_110 : f32 to vector<128x192xf32>
    %288 = arith.mulf %287, %284 : vector<128x192xf32>
    %289 = arith.select %286, %284, %288 : vector<128x192xi1>, vector<128x192xf32>
    %290 = arith.truncf %289 : vector<128x192xf32> to vector<128x192xbf16>
    %c2_111 = arith.constant 2 : index
    %c0_112 = arith.constant 0 : index
    %c0_113 = arith.constant 0 : index
    %291 = vector.load %arg8[%c2_111, %c0_112, %c0_113] : memref<3x192x192xbf16, #tpu.memory_space<vmem>>, vector<1x192x192xbf16>
    %292 = vector.shape_cast %291 : vector<1x192x192xbf16> to vector<192x192xbf16>
    %cst_114 = arith.constant dense<0.000000e+00> : vector<128x192xf32>
    %293 = tpu.matmul %290, %292, %cst_114 {dimension_numbers = #tpu.dot_dimension_numbers<[1], [0], [0], [1], [0, 0, 1, 1], [], []>} : vector<128x192xbf16>, vector<192x192xbf16>, vector<128x192xf32> -> vector<128x192xf32>
    %294 = vector.extract_strided_slice %0 {offsets = [13, 0], sizes = [1, 192], strides = [1, 1]} : vector<18x192xf32> to vector<1x192xf32>
    %295 = vector.broadcast %294 : vector<1x192xf32> to vector<128x192xf32>
    %296 = arith.addf %293, %295 : vector<128x192xf32>
    %cst_115 = arith.constant 0.000000e+00 : f32
    %297 = vector.broadcast %cst_115 : f32 to vector<128x192xf32>
    %298 = arith.cmpf ogt, %296, %297 : vector<128x192xf32>
    %cst_116 = arith.constant 0.00999999977 : f32
    %299 = vector.broadcast %cst_116 : f32 to vector<128x192xf32>
    %300 = arith.mulf %299, %296 : vector<128x192xf32>
    %301 = arith.select %298, %296, %300 : vector<128x192xi1>, vector<128x192xf32>
    %302 = arith.truncf %301 : vector<128x192xf32> to vector<128x192xbf16>
    %c2_117 = arith.constant 2 : index
    %c0_118 = arith.constant 0 : index
    %c0_119 = arith.constant 0 : index
    %303 = vector.load %arg9[%c2_117, %c0_118, %c0_119] : memref<3x192x96xbf16, #tpu.memory_space<vmem>>, vector<1x192x96xbf16>
    %304 = vector.shape_cast %303 : vector<1x192x96xbf16> to vector<192x96xbf16>
    %cst_120 = arith.constant dense<0.000000e+00> : vector<128x96xf32>
    %305 = tpu.matmul %302, %304, %cst_120 {dimension_numbers = #tpu.dot_dimension_numbers<[1], [0], [0], [1], [0, 0, 1, 1], [], []>} : vector<128x192xbf16>, vector<192x96xbf16>, vector<128x96xf32> -> vector<128x96xf32>
    %306 = vector.extract_strided_slice %0 {offsets = [14, 0], sizes = [1, 96], strides = [1, 1]} : vector<18x192xf32> to vector<1x96xf32>
    %307 = vector.broadcast %306 : vector<1x96xf32> to vector<128x96xf32>
    %308 = arith.addf %305, %307 : vector<128x96xf32>
    %cst_121 = arith.constant 0.000000e+00 : f32
    %309 = vector.broadcast %cst_121 : f32 to vector<128x96xf32>
    %310 = arith.cmpf ogt, %308, %309 : vector<128x96xf32>
    %cst_122 = arith.constant 0.00999999977 : f32
    %311 = vector.broadcast %cst_122 : f32 to vector<128x96xf32>
    %312 = arith.mulf %311, %308 : vector<128x96xf32>
    %313 = arith.select %310, %308, %312 : vector<128x96xi1>, vector<128x96xf32>
    %314 = arith.truncf %313 : vector<128x96xf32> to vector<128x96xbf16>
    %c2_123 = arith.constant 2 : index
    %c0_124 = arith.constant 0 : index
    %c0_125 = arith.constant 0 : index
    %315 = vector.load %arg10[%c2_123, %c0_124, %c0_125] : memref<3x96x96xbf16, #tpu.memory_space<vmem>>, vector<1x96x96xbf16>
    %316 = vector.shape_cast %315 : vector<1x96x96xbf16> to vector<96x96xbf16>
    %cst_126 = arith.constant dense<0.000000e+00> : vector<128x96xf32>
    %317 = tpu.matmul %314, %316, %cst_126 {dimension_numbers = #tpu.dot_dimension_numbers<[1], [0], [0], [1], [0, 0, 1, 1], [], []>} : vector<128x96xbf16>, vector<96x96xbf16>, vector<128x96xf32> -> vector<128x96xf32>
    %318 = vector.extract_strided_slice %0 {offsets = [15, 0], sizes = [1, 96], strides = [1, 1]} : vector<18x192xf32> to vector<1x96xf32>
    %319 = vector.broadcast %318 : vector<1x96xf32> to vector<128x96xf32>
    %320 = arith.addf %317, %319 : vector<128x96xf32>
    %cst_127 = arith.constant 0.000000e+00 : f32
    %321 = vector.broadcast %cst_127 : f32 to vector<128x96xf32>
    %322 = arith.cmpf ogt, %320, %321 : vector<128x96xf32>
    %cst_128 = arith.constant 0.00999999977 : f32
    %323 = vector.broadcast %cst_128 : f32 to vector<128x96xf32>
    %324 = arith.mulf %323, %320 : vector<128x96xf32>
    %325 = arith.select %322, %320, %324 : vector<128x96xi1>, vector<128x96xf32>
    %326 = vector.extract_strided_slice %0 {offsets = [17, 0], sizes = [1, 96], strides = [1, 1]} : vector<18x192xf32> to vector<1x96xf32>
    %327 = vector.shape_cast %325 : vector<128x96xf32> to vector<2x8x8x96xf32>
    %328 = vector.shape_cast %326 : vector<1x96xf32> to vector<1x1x1x96xf32>
    %329 = vector.broadcast %328 : vector<1x1x1x96xf32> to vector<2x8x8x96xf32>
    %330 = arith.mulf %327, %329 : vector<2x8x8x96xf32>
    %cst_129 = arith.constant dense<0.000000e+00> : vector<2x8x8xf32>
    %331 = vector.multi_reduction <add>, %330, %cst_129 [3] : vector<2x8x8x96xf32> to vector<2x8x8xf32>
    %cst_130 = arith.constant 1.000000e+08 : f32
    %332 = vector.broadcast %cst_130 : f32 to vector<2x8x8xf32>
    %333 = arith.subf %331, %332 : vector<2x8x8xf32>
    %334 = vector.shape_cast %3 : vector<8x8xi1> to vector<1x8x8xi1>
    %335 = vector.broadcast %334 : vector<1x8x8xi1> to vector<2x8x8xi1>
    %336 = arith.select %335, %333, %331 : vector<2x8x8xi1>, vector<2x8x8xf32>
    %cst_131 = arith.constant dense<0xFF800000> : vector<2x8xf32>
    %337 = vector.multi_reduction <maximumf>, %336, %cst_131 [2] : vector<2x8x8xf32> to vector<2x8xf32>
    %338 = vector.shape_cast %337 : vector<2x8xf32> to vector<2x8x1xf32>
    %339 = vector.broadcast %338 : vector<2x8x1xf32> to vector<2x8x8xf32>
    %340 = arith.subf %336, %339 : vector<2x8x8xf32>
    %341 = math.exp %340 : vector<2x8x8xf32>
    %cst_132 = arith.constant dense<0.000000e+00> : vector<2x8xf32>
    %342 = vector.multi_reduction <add>, %341, %cst_132 [2] : vector<2x8x8xf32> to vector<2x8xf32>
    %343 = vector.shape_cast %342 : vector<2x8xf32> to vector<2x8x1xf32>
    %344 = tpu.reciprocal %343 {approx = true} : vector<2x8x1xf32> -> vector<2x8x1xf32>
    %345 = vector.broadcast %344 : vector<2x8x1xf32> to vector<2x8x8xf32>
    %346 = arith.mulf %341, %345 : vector<2x8x8xf32>
    %347 = vector.shape_cast %346 : vector<2x8x8xf32> to vector<2x64xf32>
    %c0_133 = arith.constant 0 : index
    %c2_134 = arith.constant 2 : index
    %c0_135 = arith.constant 0 : index
    %348 = vector.load %arg12[%c0_133, %c2_134, %c0_135] : memref<2x3x64xf32, #tpu.memory_space<vmem>>, vector<2x1x64xf32>
    %349 = vector.shape_cast %348 : vector<2x1x64xf32> to vector<2x64xf32>
    %350 = vector.shape_cast %347 : vector<2x64xf32> to vector<2x1x64xf32>
    tpu.vector_store %arg12[%c0_133, %c2_134, %c0_135], %350 {strides = array<i32>} : memref<2x3x64xf32, #tpu.memory_space<vmem>>, vector<2x1x64xf32>,
    %351 = vector.extract_strided_slice %0 {offsets = [16, 0], sizes = [1, 4], strides = [1, 1]} : vector<18x192xf32> to vector<1x4xf32>
    %352 = vector.extract_strided_slice %4 {offsets = [0, 0, 0], sizes = [2, 1, 48], strides = [1, 1, 1]} : vector<2x8x48xf32> to vector<2x1x48xf32>
    %353 = vector.shape_cast %352 : vector<2x1x48xf32> to vector<2x48xf32>
    %354 = vector.extract_strided_slice %346 {offsets = [0, 0, 0], sizes = [2, 1, 8], strides = [1, 1, 1]} : vector<2x8x8xf32> to vector<2x1x8xf32>
    %355 = vector.shape_cast %354 : vector<2x1x8xf32> to vector<2x8xf32>
    %356 = vector.shape_cast %355 : vector<2x8xf32> to vector<2x8x1xf32>
    %357 = vector.broadcast %356 : vector<2x8x1xf32> to vector<2x8x48xf32>
    %358 = arith.mulf %357, %4 : vector<2x8x48xf32>
    %cst_136 = arith.constant dense<0.000000e+00> : vector<2x48xf32>
    %359 = vector.multi_reduction <add>, %358, %cst_136 [1] : vector<2x8x48xf32> to vector<2x48xf32>
    %360 = arith.truncf %353 : vector<2x48xf32> to vector<2x48xbf16>
    %c0_137 = arith.constant 0 : index
    %c0_138 = arith.constant 0 : index
    %c0_139 = arith.constant 0 : index
    %361 = vector.load %arg7[%c0_137, %c0_138, %c0_139] : memref<6x48x4xbf16, #tpu.memory_space<vmem>>, vector<1x48x4xbf16>
    %362 = vector.shape_cast %361 : vector<1x48x4xbf16> to vector<48x4xbf16>
    %cst_140 = arith.constant dense<0.000000e+00> : vector<2x4xf32>
    %363 = tpu.matmul %360, %362, %cst_140 {dimension_numbers = #tpu.dot_dimension_numbers<[1], [0], [0], [1], [0, 0, 1, 1], [], []>} : vector<2x48xbf16>, vector<48x4xbf16>, vector<2x4xf32> -> vector<2x4xf32>
    %364 = arith.truncf %359 : vector<2x48xf32> to vector<2x48xbf16>
    %c3_141 = arith.constant 3 : index
    %c0_142 = arith.constant 0 : index
    %c0_143 = arith.constant 0 : index
    %365 = vector.load %arg7[%c3_141, %c0_142, %c0_143] : memref<6x48x4xbf16, #tpu.memory_space<vmem>>, vector<1x48x4xbf16>
    %366 = vector.shape_cast %365 : vector<1x48x4xbf16> to vector<48x4xbf16>
    %cst_144 = arith.constant dense<0.000000e+00> : vector<2x4xf32>
    %367 = tpu.matmul %364, %366, %cst_144 {dimension_numbers = #tpu.dot_dimension_numbers<[1], [0], [0], [1], [0, 0, 1, 1], [], []>} : vector<2x48xbf16>, vector<48x4xbf16>, vector<2x4xf32> -> vector<2x4xf32>
    %368 = arith.addf %363, %367 : vector<2x4xf32>
    %369 = vector.extract_strided_slice %110 {offsets = [0, 0, 0], sizes = [2, 1, 48], strides = [1, 1, 1]} : vector<2x8x48xf32> to vector<2x1x48xf32>
    %370 = vector.shape_cast %369 : vector<2x1x48xf32> to vector<2x48xf32>
    %371 = vector.extract_strided_slice %346 {offsets = [0, 0, 0], sizes = [2, 1, 8], strides = [1, 1, 1]} : vector<2x8x8xf32> to vector<2x1x8xf32>
    %372 = vector.shape_cast %371 : vector<2x1x8xf32> to vector<2x8xf32>
    %373 = vector.shape_cast %372 : vector<2x8xf32> to vector<2x8x1xf32>
    %374 = vector.broadcast %373 : vector<2x8x1xf32> to vector<2x8x48xf32>
    %375 = arith.mulf %374, %110 : vector<2x8x48xf32>
    %cst_145 = arith.constant dense<0.000000e+00> : vector<2x48xf32>
    %376 = vector.multi_reduction <add>, %375, %cst_145 [1] : vector<2x8x48xf32> to vector<2x48xf32>
    %377 = arith.truncf %370 : vector<2x48xf32> to vector<2x48xbf16>
    %c1_146 = arith.constant 1 : index
    %c0_147 = arith.constant 0 : index
    %c0_148 = arith.constant 0 : index
    %378 = vector.load %arg7[%c1_146, %c0_147, %c0_148] : memref<6x48x4xbf16, #tpu.memory_space<vmem>>, vector<1x48x4xbf16>
    %379 = vector.shape_cast %378 : vector<1x48x4xbf16> to vector<48x4xbf16>
    %cst_149 = arith.constant dense<0.000000e+00> : vector<2x4xf32>
    %380 = tpu.matmul %377, %379, %cst_149 {dimension_numbers = #tpu.dot_dimension_numbers<[1], [0], [0], [1], [0, 0, 1, 1], [], []>} : vector<2x48xbf16>, vector<48x4xbf16>, vector<2x4xf32> -> vector<2x4xf32>
    %381 = arith.truncf %376 : vector<2x48xf32> to vector<2x48xbf16>
    %c4 = arith.constant 4 : index
    %c0_150 = arith.constant 0 : index
    %c0_151 = arith.constant 0 : index
    %382 = vector.load %arg7[%c4, %c0_150, %c0_151] : memref<6x48x4xbf16, #tpu.memory_space<vmem>>, vector<1x48x4xbf16>
    %383 = vector.shape_cast %382 : vector<1x48x4xbf16> to vector<48x4xbf16>
    %cst_152 = arith.constant dense<0.000000e+00> : vector<2x4xf32>
    %384 = tpu.matmul %381, %383, %cst_152 {dimension_numbers = #tpu.dot_dimension_numbers<[1], [0], [0], [1], [0, 0, 1, 1], [], []>} : vector<2x48xbf16>, vector<48x4xbf16>, vector<2x4xf32> -> vector<2x4xf32>
    %385 = arith.addf %380, %384 : vector<2x4xf32>
    %386 = arith.addf %368, %385 : vector<2x4xf32>
    %387 = vector.extract_strided_slice %246 {offsets = [0, 0, 0], sizes = [2, 1, 48], strides = [1, 1, 1]} : vector<2x8x48xf32> to vector<2x1x48xf32>
    %388 = vector.shape_cast %387 : vector<2x1x48xf32> to vector<2x48xf32>
    %389 = vector.extract_strided_slice %346 {offsets = [0, 0, 0], sizes = [2, 1, 8], strides = [1, 1, 1]} : vector<2x8x8xf32> to vector<2x1x8xf32>
    %390 = vector.shape_cast %389 : vector<2x1x8xf32> to vector<2x8xf32>
    %391 = vector.shape_cast %390 : vector<2x8xf32> to vector<2x8x1xf32>
    %392 = vector.broadcast %391 : vector<2x8x1xf32> to vector<2x8x48xf32>
    %393 = arith.mulf %392, %246 : vector<2x8x48xf32>
    %cst_153 = arith.constant dense<0.000000e+00> : vector<2x48xf32>
    %394 = vector.multi_reduction <add>, %393, %cst_153 [1] : vector<2x8x48xf32> to vector<2x48xf32>
    %395 = arith.truncf %388 : vector<2x48xf32> to vector<2x48xbf16>
    %c2_154 = arith.constant 2 : index
    %c0_155 = arith.constant 0 : index
    %c0_156 = arith.constant 0 : index
    %396 = vector.load %arg7[%c2_154, %c0_155, %c0_156] : memref<6x48x4xbf16, #tpu.memory_space<vmem>>, vector<1x48x4xbf16>
    %397 = vector.shape_cast %396 : vector<1x48x4xbf16> to vector<48x4xbf16>
    %cst_157 = arith.constant dense<0.000000e+00> : vector<2x4xf32>
    %398 = tpu.matmul %395, %397, %cst_157 {dimension_numbers = #tpu.dot_dimension_numbers<[1], [0], [0], [1], [0, 0, 1, 1], [], []>} : vector<2x48xbf16>, vector<48x4xbf16>, vector<2x4xf32> -> vector<2x4xf32>
    %399 = arith.truncf %394 : vector<2x48xf32> to vector<2x48xbf16>
    %c5 = arith.constant 5 : index
    %c0_158 = arith.constant 0 : index
    %c0_159 = arith.constant 0 : index
    %400 = vector.load %arg7[%c5, %c0_158, %c0_159] : memref<6x48x4xbf16, #tpu.memory_space<vmem>>, vector<1x48x4xbf16>
    %401 = vector.shape_cast %400 : vector<1x48x4xbf16> to vector<48x4xbf16>
    %cst_160 = arith.constant dense<0.000000e+00> : vector<2x4xf32>
    %402 = tpu.matmul %399, %401, %cst_160 {dimension_numbers = #tpu.dot_dimension_numbers<[1], [0], [0], [1], [0, 0, 1, 1], [], []>} : vector<2x48xbf16>, vector<48x4xbf16>, vector<2x4xf32> -> vector<2x4xf32>
    %403 = arith.addf %398, %402 : vector<2x4xf32>
    %404 = arith.addf %386, %403 : vector<2x4xf32>
    %405 = vector.broadcast %351 : vector<1x4xf32> to vector<2x4xf32>
    %406 = arith.addf %404, %405 : vector<2x4xf32>
    %c0_161 = arith.constant 0 : index
    %c0_162 = arith.constant 0 : index
    %c0_163 = arith.constant 0 : index
    %407 = vector.load %arg13[%c0_161, %c0_162, %c0_163] : memref<2x1x4xf32, #tpu.memory_space<vmem>>, vector<2x1x4xf32>
    %408 = vector.shape_cast %407 : vector<2x1x4xf32> to vector<2x4xf32>
    %409 = vector.shape_cast %406 : vector<2x4xf32> to vector<2x1x4xf32>
    tpu.vector_store %arg13[%c0_161, %c0_162, %c0_163], %409 {strides = array<i32>} : memref<2x1x4xf32, #tpu.memory_space<vmem>>, vector<2x1x4xf32>,
    return
  }
  func.func @transform_0(%arg0: i32) -> (i32, i32, i32) {
    %c0_i32 = arith.constant 0 : i32
    %c0_i32_0 = arith.constant 0 : i32
    %c0_i32_1 = arith.constant 0 : i32
    return %arg0, %c0_i32, %c0_i32_0 : i32, i32, i32
  }
  func.func @transform_1(%arg0: i32) -> (i32, i32, i32) {
    %c0_i32 = arith.constant 0 : i32
    %c0_i32_0 = arith.constant 0 : i32
    %c0_i32_1 = arith.constant 0 : i32
    %c0_i32_2 = arith.constant 0 : i32
    return %c0_i32, %c0_i32_0, %c0_i32_1 : i32, i32, i32
  }
  func.func @transform_2(%arg0: i32) -> (i32, i32, i32) {
    %c0_i32 = arith.constant 0 : i32
    %c0_i32_0 = arith.constant 0 : i32
    %c0_i32_1 = arith.constant 0 : i32
    %c0_i32_2 = arith.constant 0 : i32
    return %c0_i32, %c0_i32_0, %c0_i32_1 : i32, i32, i32
  }
  func.func @transform_3(%arg0: i32) -> (i32, i32, i32) {
    %c0_i32 = arith.constant 0 : i32
    %c0_i32_0 = arith.constant 0 : i32
    %c0_i32_1 = arith.constant 0 : i32
    %c0_i32_2 = arith.constant 0 : i32
    return %c0_i32, %c0_i32_0, %c0_i32_1 : i32, i32, i32
  }
  func.func @transform_4(%arg0: i32) -> (i32, i32, i32) {
    %c0_i32 = arith.constant 0 : i32
    %c0_i32_0 = arith.constant 0 : i32
    %c0_i32_1 = arith.constant 0 : i32
    %c0_i32_2 = arith.constant 0 : i32
    return %c0_i32, %c0_i32_0, %c0_i32_1 : i32, i32, i32
  }
  func.func @transform_5(%arg0: i32) -> (i32, i32, i32) {
    %c0_i32 = arith.constant 0 : i32
    %c0_i32_0 = arith.constant 0 : i32
    %c0_i32_1 = arith.constant 0 : i32
    %c0_i32_2 = arith.constant 0 : i32
    return %c0_i32, %c0_i32_0, %c0_i32_1 : i32, i32, i32
  }
  func.func @transform_6(%arg0: i32) -> (i32, i32, i32) {
    %c0_i32 = arith.constant 0 : i32
    %c0_i32_0 = arith.constant 0 : i32
    %c0_i32_1 = arith.constant 0 : i32
    %c0_i32_2 = arith.constant 0 : i32
    return %c0_i32, %c0_i32_0, %c0_i32_1 : i32, i32, i32
  }
  func.func @transform_7(%arg0: i32) -> (i32, i32, i32) {
    %c0_i32 = arith.constant 0 : i32
    %c0_i32_0 = arith.constant 0 : i32
    %c0_i32_1 = arith.constant 0 : i32
    %c0_i32_2 = arith.constant 0 : i32
    return %c0_i32, %c0_i32_0, %c0_i32_1 : i32, i32, i32
  }
  func.func @transform_8(%arg0: i32) -> (i32, i32, i32) {
    %c0_i32 = arith.constant 0 : i32
    %c0_i32_0 = arith.constant 0 : i32
    %c0_i32_1 = arith.constant 0 : i32
    %c0_i32_2 = arith.constant 0 : i32
    return %c0_i32, %c0_i32_0, %c0_i32_1 : i32, i32, i32
  }
  func.func @transform_9(%arg0: i32) -> (i32, i32, i32) {
    %c0_i32 = arith.constant 0 : i32
    %c0_i32_0 = arith.constant 0 : i32
    %c0_i32_1 = arith.constant 0 : i32
    %c0_i32_2 = arith.constant 0 : i32
    return %c0_i32, %c0_i32_0, %c0_i32_1 : i32, i32, i32
  }
  func.func @transform_10(%arg0: i32) -> (i32, i32) {
    %c0_i32 = arith.constant 0 : i32
    %c0_i32_0 = arith.constant 0 : i32
    %c0_i32_1 = arith.constant 0 : i32
    return %c0_i32, %c0_i32_0 : i32, i32
  }
  func.func @transform_11(%arg0: i32) -> (i32, i32, i32) {
    %c0_i32 = arith.constant 0 : i32
    %c0_i32_0 = arith.constant 0 : i32
    %c0_i32_1 = arith.constant 0 : i32
    return %arg0, %c0_i32, %c0_i32_0 : i32, i32, i32
  }
  func.func @transform_12(%arg0: i32) -> (i32, i32, i32) {
    %c0_i32 = arith.constant 0 : i32
    %c0_i32_0 = arith.constant 0 : i32
    %c0_i32_1 = arith.constant 0 : i32
    return %arg0, %c0_i32, %c0_i32_0 : i32, i32, i32
  }
}

</mosaic_0001>

<llo_original>
// kernel: tpu_custom_call.1
$region0: #{tpu_custom_call.1}
  #allocation0 [shape = 'u32[]', space=smem, size = 0x4, offset = 0x4, fixed_abs, tag = 'smem constant byte address 0x4 - core index']
  #allocation1 [shape = 'u32[144,128]{1,0:T(1,128)}', space=vmem, size = 0x12000, scoped, tag = 'internal scratch']
  %s0 = inlined_call_operand.hbm [shape: f32[2,8,48], index: 0, kind: input, shape index: {}]
  %s1 = inlined_call_operand.hbm [shape: bf16[1,48,192], index: 1, kind: input, shape index: {}]
  %s2 = inlined_call_operand.hbm [shape: bf16[2,48,192], index: 2, kind: input, shape index: {}]
  %s3 = inlined_call_operand.vmem [shape: bf16[3,48,192], index: 3, kind: input, shape index: {}]
  %s4 = inlined_call_operand.hbm [shape: bf16[2,48,48], index: 4, kind: input, shape index: {}]
  %s5 = inlined_call_operand.hbm [shape: bf16[4,48,48], index: 5, kind: input, shape index: {}]
  %s6 = inlined_call_operand.vmem [shape: bf16[6,48,4], index: 6, kind: input, shape index: {}]
  %s7 = inlined_call_operand.hbm [shape: bf16[3,192,192], index: 7, kind: input, shape index: {}]
  %s8 = inlined_call_operand.hbm [shape: bf16[3,192,96], index: 8, kind: input, shape index: {}]
  %s9 = inlined_call_operand.hbm [shape: bf16[3,96,96], index: 9, kind: input, shape index: {}]
  %s10 = inlined_call_operand.vmem [shape: f32[18,192], index: 10, kind: input, shape index: {}]
  %s11 = inlined_call_operand.vmem [shape: f32[2,3,64], index: 11, kind: output, shape index: {0}]
  %s12 = inlined_call_operand.hbm [shape: f32[2,1,4], index: 12, kind: output, shape index: {1}]
  %13 = xla_tuple %s11, %s12
  %s14 = sld [smem:[#allocation0]]
  $region94: #{tpu_custom_call.1} parent=0
    _
  %s16 = ssub.s32 1, %s14
  %s17 = scalar_select 0, %s16, %s14
  $region1: #{tpu_custom_call.1} parent=0
    #allocation2 [shape = 'u8[8192]{0}', space=vmem, size = 0x2000, scoped, tag = 'input window, operand 0, single buffered']
    #allocation3 [shape = 's32[1]{0}', space=sflag, size = 0x4, scoped, tag = 'scoped memory for tpu_custom_call.1']
    #allocation4 [shape = 's32[1]{0}', space=sflag, size = 0x4, scoped, tag = 'scoped memory for tpu_custom_call.1']
    #allocation5 [shape = 'u8[24576]{0}', space=vmem, size = 0x6000, scoped, tag = 'input window, operand 1, single buffered']
    #allocation6 [shape = 's32[1]{0}', space=sflag, size = 0x4, scoped, tag = 'scoped memory for tpu_custom_call.1']
    #allocation7 [shape = 'u8[49152]{0}', space=vmem, size = 0xc000, scoped, tag = 'input window, operand 2, single buffered']
    #allocation8 [shape = 'u8[24576]{0}', space=vmem, size = 0x6000, scoped, tag = 'input window, operand 4, single buffered']
    #allocation9 [shape = 's32[1]{0}', space=sflag, size = 0x4, scoped, tag = 'scoped memory for tpu_custom_call.1']
    #allocation10 [shape = 'u8[49152]{0}', space=vmem, size = 0xc000, scoped, tag = 'input window, operand 5, single buffered']
    #allocation11 [shape = 'u8[294912]{0}', space=vmem, size = 0x48000, scoped, tag = 'input window, operand 7, single buffered']
    #allocation12 [shape = 's32[1]{0}', space=sflag, size = 0x4, scoped, tag = 'scoped memory for tpu_custom_call.1']
    #allocation13 [shape = 'u8[147456]{0}', space=vmem, size = 0x24000, scoped, tag = 'input window, operand 8, single buffered']
    #allocation14 [shape = 'u8[73728]{0}', space=vmem, size = 0x12000, scoped, tag = 'input window, operand 9, single buffered']
    #allocation15 [shape = 's32[1]{0}', space=sflag, size = 0x4, scoped, tag = 'scoped memory for tpu_custom_call.1']
    #allocation16 [shape = 'u8[1024]{0}', space=vmem, size = 0x400, scoped, tag = 'output window, operand 1, single buffered']
    %18 = vsyncpa [#allocation3], 0
    %19 = vsyncpa [#allocation6], 0
    %20 = vsyncpa [#allocation9], 0
    %21 = vsyncpa [#allocation12], 0
    %22 = vsyncpa [#allocation15], 0
    %23 = vsyncpa [#allocation4], 0
    // Predicated region
    $region2: #{tpu_custom_call.1} parent=1 // pred_check
      _
    $region3: #{tpu_custom_call.1} parent=1 // pred_check_branch
      %25 = sbr.rel (0) target = $region5
    $region4: #{tpu_custom_call.1} parent=1 // pred_region
      %s27 = ssub.s32 256, 256
      %28 = vsyncadd [#allocation3], %s27
      %s29 = sshll.u32 [#allocation2], 4
      %s30 = int_to_ptr.vmem [resolvable:$true] %s29
      %35 = dma.hbm_to_vmem [thread:$0]  %s0, 256, %s30, [#allocation3], 128, 128, 8
    $region5: #{tpu_custom_call.1} parent=1 // pred_fallthru
      _
    // Predicated region
    $region6: #{tpu_custom_call.1} parent=1 // pred_check
      _
    $region7: #{tpu_custom_call.1} parent=1 // pred_check_branch
      %37 = sbr.rel (0) target = $region9
    $region8: #{tpu_custom_call.1} parent=1 // pred_region
      %s39 = ssub.s32 768, 768
      %40 = vsyncadd [#allocation6], %s39
      %s41 = sshll.u32 [#allocation5], 4
      %s42 = int_to_ptr.vmem [resolvable:$true] %s41
      %47 = dma.hbm_to_vmem [thread:$0]  %s1, 768, %s42, [#allocation6], 128, 128, 8
    $region9: #{tpu_custom_call.1} parent=1 // pred_fallthru
      _
    // Predicated region
    $region10: #{tpu_custom_call.1} parent=1 // pred_check
      _
    $region11: #{tpu_custom_call.1} parent=1 // pred_check_branch
      %49 = sbr.rel (0) target = $region13
    $region12: #{tpu_custom_call.1} parent=1 // pred_region
      %s51 = ssub.s32 1536, 1536
      %52 = vsyncadd [#allocation6], %s51
      %s53 = sshll.u32 [#allocation7], 4
      %s54 = int_to_ptr.vmem [resolvable:$true] %s53
      %59 = dma.hbm_to_vmem [thread:$0]  %s2, 1536, %s54, [#allocation6], 128, 128, 8
    $region13: #{tpu_custom_call.1} parent=1 // pred_fallthru
      _
    // Predicated region
    $region14: #{tpu_custom_call.1} parent=1 // pred_check
      _
    $region15: #{tpu_custom_call.1} parent=1 // pred_check_branch
      %61 = sbr.rel (0) target = $region17
    $region16: #{tpu_custom_call.1} parent=1 // pred_region
      _
    $region17: #{tpu_custom_call.1} parent=1 // pred_fallthru
      _
    // Predicated region
    $region18: #{tpu_custom_call.1} parent=1 // pred_check
      _
    $region19: #{tpu_custom_call.1} parent=1 // pred_check_branch
      %63 = sbr.rel (0) target = $region21
    $region20: #{tpu_custom_call.1} parent=1 // pred_region
      %s65 = ssub.s32 768, 768
      %66 = vsyncadd [#allocation9], %s65
      %s67 = sshll.u32 [#allocation8], 4
      %s68 = int_to_ptr.vmem [resolvable:$true] %s67
      %73 = dma.hbm_to_vmem [thread:$0]  %s4, 768, %s68, [#allocation9], 64, 64, 4
    $region21: #{tpu_custom_call.1} parent=1 // pred_fallthru
      _
    // Predicated region
    $region22: #{tpu_custom_call.1} parent=1 // pred_check
      _
    $region23: #{tpu_custom_call.1} parent=1 // pred_check_branch
      %75 = sbr.rel (0) target = $region25
    $region24: #{tpu_custom_call.1} parent=1 // pred_region
      %s77 = ssub.s32 1536, 1536
      %78 = vsyncadd [#allocation9], %s77
      %s79 = sshll.u32 [#allocation10], 4
      %s80 = int_to_ptr.vmem [resolvable:$true] %s79
      %85 = dma.hbm_to_vmem [thread:$0]  %s5, 1536, %s80, [#allocation9], 64, 64, 4
    $region25: #{tpu_custom_call.1} parent=1 // pred_fallthru
      _
    // Predicated region
    $region26: #{tpu_custom_call.1} parent=1 // pred_check
      _
    $region27: #{tpu_custom_call.1} parent=1 // pred_check_branch
      %87 = sbr.rel (0) target = $region29
    $region28: #{tpu_custom_call.1} parent=1 // pred_region
      _
    $region29: #{tpu_custom_call.1} parent=1 // pred_fallthru
      _
    // Predicated region
    $region30: #{tpu_custom_call.1} parent=1 // pred_check
      _
    $region31: #{tpu_custom_call.1} parent=1 // pred_check_branch
      %89 = sbr.rel (0) target = $region33
    $region32: #{tpu_custom_call.1} parent=1 // pred_region
      %s91 = ssub.s32 9216, 9216
      %92 = vsyncadd [#allocation12], %s91
      %s93 = sshll.u32 [#allocation11], 4
      %s94 = int_to_ptr.vmem [resolvable:$true] %s93
      %99 = dma.hbm_to_vmem [thread:$0]  %s7, 9216, %s94, [#allocation12], 128, 128, 8
    $region33: #{tpu_custom_call.1} parent=1 // pred_fallthru
      _
    // Predicated region
    $region34: #{tpu_custom_call.1} parent=1 // pred_check
      _
    $region35: #{tpu_custom_call.1} parent=1 // pred_check_branch
      %101 = sbr.rel (0) target = $region37
    $region36: #{tpu_custom_call.1} parent=1 // pred_region
      %s103 = ssub.s32 4608, 4608
      %104 = vsyncadd [#allocation12], %s103
      %s105 = sshll.u32 [#allocation13], 4
      %s106 = int_to_ptr.vmem [resolvable:$true] %s105
      %111 = dma.hbm_to_vmem [thread:$0]  %s8, 4608, %s106, [#allocation12], 64, 64, 4
    $region37: #{tpu_custom_call.1} parent=1 // pred_fallthru
      _
    // Predicated region
    $region38: #{tpu_custom_call.1} parent=1 // pred_check
      _
    $region39: #{tpu_custom_call.1} parent=1 // pred_check_branch
      %113 = sbr.rel (0) target = $region41
    $region40: #{tpu_custom_call.1} parent=1 // pred_region
      %s115 = ssub.s32 2304, 2304
      %116 = vsyncadd [#allocation15], %s115
      %s117 = sshll.u32 [#allocation14], 4
      %s118 = int_to_ptr.vmem [resolvable:$true] %s117
      %123 = dma.hbm_to_vmem [thread:$0]  %s9, 2304, %s118, [#allocation15], 64, 64, 4
    $region41: #{tpu_custom_call.1} parent=1 // pred_fallthru
      _
    // Predicated region
    $region42: #{tpu_custom_call.1} parent=1 // pred_check
      _
    $region43: #{tpu_custom_call.1} parent=1 // pred_check_branch
      %125 = sbr.rel (0) target = $region45
    $region44: #{tpu_custom_call.1} parent=1 // pred_region
      _
    $region45: #{tpu_custom_call.1} parent=1 // pred_fallthru
      _
    // Predicated region
    $region46: #{tpu_custom_call.1} parent=1 // pred_check
      _
    $region47: #{tpu_custom_call.1} parent=1 // pred_check_branch
      %127 = sbr.rel (0) target = $region49
    $region48: #{tpu_custom_call.1} parent=1 // pred_region
      %128 = dma.done [#allocation3], 256
    $region49: #{tpu_custom_call.1} parent=1 // pred_fallthru
      _
    // Predicated region
    $region50: #{tpu_custom_call.1} parent=1 // pred_check
      _
    $region51: #{tpu_custom_call.1} parent=1 // pred_check_branch
      %130 = sbr.rel (0) target = $region53
    $region52: #{tpu_custom_call.1} parent=1 // pred_region
      %131 = dma.done [#allocation6], 768
    $region53: #{tpu_custom_call.1} parent=1 // pred_fallthru
      _
    // Predicated region
    $region54: #{tpu_custom_call.1} parent=1 // pred_check
      _
    $region55: #{tpu_custom_call.1} parent=1 // pred_check_branch
      %133 = sbr.rel (0) target = $region57
    $region56: #{tpu_custom_call.1} parent=1 // pred_region
      %134 = dma.done [#allocation6], 1536
    $region57: #{tpu_custom_call.1} parent=1 // pred_fallthru
      _
    // Predicated region
    $region58: #{tpu_custom_call.1} parent=1 // pred_check
      _
    $region59: #{tpu_custom_call.1} parent=1 // pred_check_branch
      %136 = sbr.rel (0) target = $region61
    $region60: #{tpu_custom_call.1} parent=1 // pred_region
      %137 = dma.done [#allocation9], 768
    $region61: #{tpu_custom_call.1} parent=1 // pred_fallthru
      _
    // Predicated region
    $region62: #{tpu_custom_call.1} parent=1 // pred_check
      _
    $region63: #{tpu_custom_call.1} parent=1 // pred_check_branch
      %139 = sbr.rel (0) target = $region65
    $region64: #{tpu_custom_call.1} parent=1 // pred_region
      %140 = dma.done [#allocation9], 1536
    $region65: #{tpu_custom_call.1} parent=1 // pred_fallthru
      _
    // Predicated region
    $region66: #{tpu_custom_call.1} parent=1 // pred_check
      _
    $region67: #{tpu_custom_call.1} parent=1 // pred_check_branch
      %142 = sbr.rel (0) target = $region69
    $region68: #{tpu_custom_call.1} parent=1 // pred_region
      %143 = dma.done [#allocation12], 9216
    $region69: #{tpu_custom_call.1} parent=1 // pred_fallthru
      _
    // Predicated region
    $region70: #{tpu_custom_call.1} parent=1 // pred_check
      _
    $region71: #{tpu_custom_call.1} parent=1 // pred_check_branch
      %145 = sbr.rel (0) target = $region73
    $region72: #{tpu_custom_call.1} parent=1 // pred_region
      %146 = dma.done [#allocation12], 4608
    $region73: #{tpu_custom_call.1} parent=1 // pred_fallthru
      _
    // Predicated region
    $region74: #{tpu_custom_call.1} parent=1 // pred_check
      _
    $region75: #{tpu_custom_call.1} parent=1 // pred_check_branch
      %148 = sbr.rel (0) target = $region77
    $region76: #{tpu_custom_call.1} parent=1 // pred_region
      %149 = dma.done [#allocation15], 2304
    $region77: #{tpu_custom_call.1} parent=1 // pred_fallthru
      _
    %v151 = vld [vmem:[%s10] sm:$0xff]
    %v152 = vld [vmem:[%s10 + $0x8] sm:$0xff]
    %v153 = vld [vmem:[%s10 + $0x10] sm:$0xff]
    %v154 = vld [vmem:[%s10 + $0x18] sm:$0xff]
    %v155 = vld [vmem:[%s10 + $0x20] sm:$0x3]
    %v156 = vlaneseq
    %v157 = vshrl.u32 %v156, 7
    %v158 = vlaneseq
    %v159 = vand.u32 %v158, 127
    %vm160 = vcmp.eq.s32.totalorder %v157, %v159
    %v161 = vld [vmem:[#allocation2] sm:$0xff]
    %v162 = vld [vmem:[#allocation2 + $0x8] sm:$0xff]
    %v165 = vcombine.high %v161, %v161
    %v167 = vunpack.c.l.s4 1966171168
    %v168 = vunpack.c.0.s8 %v167
    %v169 = vlaneseq
    %v170 = vshrl.u32 %v169, 7
    %v171 = vsub.s32 %v168, %v170
    %v172 = vrot.slane %v161, %v171
    %v174 = vunpack.c.l.s4 1966171168
    %v175 = vunpack.c.0.s8 %v174
    %v176 = vlaneseq
    %v177 = vshrl.u32 %v176, 7
    %v178 = vsub.s32 %v175, %v177
    %v179 = vrot.slane %v165, %v178
    %v180 = vcombine.high %v172, %v172
    %v181 = vcombine.high %v179, %v179
    %v183 = vunpack.c.l.s4 1966171168
    %v184 = vunpack.c.0.s8 %v183
    %v185 = vlaneseq
    %v186 = vshrl.u32 %v185, 7
    %v187 = vsub.s32 %v184, %v186
    %v188 = vrot.slane %v172, %v187
    %v190 = vunpack.c.l.s4 1966171168
    %v191 = vunpack.c.0.s8 %v190
    %v192 = vlaneseq
    %v193 = vshrl.u32 %v192, 7
    %v194 = vsub.s32 %v191, %v193
    %v195 = vrot.slane %v179, %v194
    %v197 = vunpack.c.l.s4 1966171168
    %v198 = vunpack.c.0.s8 %v197
    %v199 = vlaneseq
    %v200 = vshrl.u32 %v199, 7
    %v201 = vsub.s32 %v198, %v200
    %v202 = vrot.slane %v180, %v201
    %v204 = vunpack.c.l.s4 1966171168
    %v205 = vunpack.c.0.s8 %v204
    %v206 = vlaneseq
    %v207 = vshrl.u32 %v206, 7
    %v208 = vsub.s32 %v205, %v207
    %v209 = vrot.slane %v181, %v208
    %v210 = vcombine.high %v188, %v188
    %v211 = vcombine.high %v195, %v195
    %v212 = vcombine.high %v202, %v202
    %v213 = vcombine.high %v209, %v209
    %v214 = vcombine.high %v162, %v162
    %v216 = vunpack.c.l.s4 1966171168
    %v217 = vunpack.c.0.s8 %v216
    %v218 = vlaneseq
    %v219 = vshrl.u32 %v218, 7
    %v220 = vsub.s32 %v217, %v219
    %v221 = vrot.slane %v162, %v220
    %v223 = vunpack.c.l.s4 1966171168
    %v224 = vunpack.c.0.s8 %v223
    %v225 = vlaneseq
    %v226 = vshrl.u32 %v225, 7
    %v227 = vsub.s32 %v224, %v226
    %v228 = vrot.slane %v214, %v227
    %v229 = vcombine.high %v221, %v221
    %v230 = vcombine.high %v228, %v228
    %v232 = vunpack.c.l.s4 1966171168
    %v233 = vunpack.c.0.s8 %v232
    %v234 = vlaneseq
    %v235 = vshrl.u32 %v234, 7
    %v236 = vsub.s32 %v233, %v235
    %v237 = vrot.slane %v221, %v236
    %v239 = vunpack.c.l.s4 1966171168
    %v240 = vunpack.c.0.s8 %v239
    %v241 = vlaneseq
    %v242 = vshrl.u32 %v241, 7
    %v243 = vsub.s32 %v240, %v242
    %v244 = vrot.slane %v228, %v243
    %v246 = vunpack.c.l.s4 1966171168
    %v247 = vunpack.c.0.s8 %v246
    %v248 = vlaneseq
    %v249 = vshrl.u32 %v248, 7
    %v250 = vsub.s32 %v247, %v249
    %v251 = vrot.slane %v229, %v250
    %v253 = vunpack.c.l.s4 1966171168
    %v254 = vunpack.c.0.s8 %v253
    %v255 = vlaneseq
    %v256 = vshrl.u32 %v255, 7
    %v257 = vsub.s32 %v254, %v256
    %v258 = vrot.slane %v230, %v257
    %v259 = vcombine.high %v237, %v237
    %v260 = vcombine.high %v244, %v244
    %v261 = vcombine.high %v251, %v251
    %v262 = vcombine.high %v258, %v258
    %v263 = vlaneseq
    %v264 = vshrl.u32 %v263, 7
    %v265 = vsub.s32 0, %v264
    %v266 = vrot.slane %v188, %v265
    %v267 = vlaneseq
    %v268 = vshrl.u32 %v267, 7
    %v269 = vsub.s32 0, %v268
    %v270 = vrot.slane %v202, %v269
    %v271 = vlaneseq
    %v272 = vshrl.u32 %v271, 7
    %v273 = vsub.s32 0, %v272
    %v274 = vrot.slane %v210, %v273
    %v275 = vlaneseq
    %v276 = vshrl.u32 %v275, 7
    %v277 = vsub.s32 0, %v276
    %v278 = vrot.slane %v212, %v277
    %v279 = vlaneseq
    %v280 = vshrl.u32 %v279, 7
    %v281 = vsub.s32 0, %v280
    %v282 = vrot.slane %v195, %v281
    %v283 = vlaneseq
    %v284 = vshrl.u32 %v283, 7
    %v285 = vsub.s32 0, %v284
    %v286 = vrot.slane %v209, %v285
    %v287 = vlaneseq
    %v288 = vshrl.u32 %v287, 7
    %v289 = vsub.s32 0, %v288
    %v290 = vrot.slane %v211, %v289
    %v291 = vlaneseq
    %v292 = vshrl.u32 %v291, 7
    %v293 = vsub.s32 0, %v292
    %v294 = vrot.slane %v213, %v293
    %v295 = vlaneseq
    %v296 = vshrl.u32 %v295, 7
    %v297 = vsub.s32 0, %v296
    %v298 = vrot.slane %v237, %v297
    %v299 = vlaneseq
    %v300 = vshrl.u32 %v299, 7
    %v301 = vsub.s32 0, %v300
    %v302 = vrot.slane %v251, %v301
    %v303 = vlaneseq
    %v304 = vshrl.u32 %v303, 7
    %v305 = vsub.s32 0, %v304
    %v306 = vrot.slane %v259, %v305
    %v307 = vlaneseq
    %v308 = vshrl.u32 %v307, 7
    %v309 = vsub.s32 0, %v308
    %v310 = vrot.slane %v261, %v309
    %v311 = vlaneseq
    %v312 = vshrl.u32 %v311, 7
    %v313 = vsub.s32 0, %v312
    %v314 = vrot.slane %v244, %v313
    %v315 = vlaneseq
    %v316 = vshrl.u32 %v315, 7
    %v317 = vsub.s32 0, %v316
    %v318 = vrot.slane %v258, %v317
    %v319 = vlaneseq
    %v320 = vshrl.u32 %v319, 7
    %v321 = vsub.s32 0, %v320
    %v322 = vrot.slane %v260, %v321
    %v323 = vlaneseq
    %v324 = vshrl.u32 %v323, 7
    %v325 = vsub.s32 0, %v324
    %v326 = vrot.slane %v262, %v325
    %v343 = vsub.f32 %v266, %v161
    %v344 = vsub.f32 %v270, %v161
    %v345 = vsub.f32 %v274, %v161
    %v346 = vsub.f32 %v278, %v161
    %v347 = vsub.f32 %v282, %v161
    %v348 = vsub.f32 %v286, %v161
    %v349 = vsub.f32 %v290, %v161
    %v350 = vsub.f32 %v294, %v161
    %v351 = vsub.f32 %v298, %v162
    %v352 = vsub.f32 %v302, %v162
    %v353 = vsub.f32 %v306, %v162
    %v354 = vsub.f32 %v310, %v162
    %v355 = vsub.f32 %v314, %v162
    %v356 = vsub.f32 %v318, %v162
    %v357 = vsub.f32 %v322, %v162
    %v358 = vsub.f32 %v326, %v162
    %v359 = vand.u32 2147483647, %v343
    %v360 = vand.u32 2147483647, %v344
    %v361 = vand.u32 2147483647, %v345
    %v362 = vand.u32 2147483647, %v346
    %v363 = vand.u32 2147483647, %v347
    %v364 = vand.u32 2147483647, %v348
    %v365 = vand.u32 2147483647, %v349
    %v366 = vand.u32 2147483647, %v350
    %v367 = vand.u32 2147483647, %v351
    %v368 = vand.u32 2147483647, %v352
    %v369 = vand.u32 2147483647, %v353
    %v370 = vand.u32 2147483647, %v354
    %v371 = vand.u32 2147483647, %v355
    %v372 = vand.u32 2147483647, %v356
    %v373 = vand.u32 2147483647, %v357
    %v374 = vand.u32 2147483647, %v358
    %v375 = vpack.c.bf16 %v360, %v359
    %v376 = vpack.c.bf16 %v362, %v361
    %v377 = vpack.c.bf16 %v364, %v363
    %v378 = vpack.c.bf16 %v366, %v365
    %v379 = vpack.c.bf16 %v368, %v367
    %v380 = vpack.c.bf16 %v370, %v369
    %v381 = vpack.c.bf16 %v372, %v371
    %v382 = vpack.c.bf16 %v374, %v373
    %v383 = vld [vmem:[#allocation5] sm:$0xff]
    %v384 = vld [vmem:[#allocation5 + $0x8] sm:$0xff]
    %v385 = vld [vmem:[#allocation5 + $0x10] sm:$0xff]
    %v386 = vld [vmem:[#allocation5 + $0x18] sm:$0xff]
    %v387 = vld [vmem:[#allocation5 + $0x20] sm:$0xff]
    %v388 = vld [vmem:[#allocation5 + $0x28] sm:$0xff]
    %v389 = vlaneseq
    %v390 = vshrl.u32 %v389, 7
    %v391 = vsub.s32 0, %v390
    %v392 = vrot.slane %v151, %v391
    %v393 = vlaneseq
    %v394 = vshrl.u32 %v393, 7
    %v395 = vsub.s32 0, %v394
    %v396 = vrot.slane %v152, %v395
    %v403 = vunpack.c.l.b16 %v383
    %v404 = vunpack.c.h.b16 %v383
    %v405 = vunpack.c.l.b16 %v384
    %v406 = vunpack.c.h.b16 %v384
    %v407 = vunpack.c.l.b16 %v385
    %v408 = vunpack.c.h.b16 %v385
    %v409 = vunpack.c.l.b16 %v386
    %v410 = vunpack.c.h.b16 %v386
    %v411 = vunpack.c.l.b16 %v387
    %v412 = vunpack.c.h.b16 %v387
    %v413 = vunpack.c.l.b16 %v388
    %v414 = vunpack.c.h.b16 %v388
    %v415 = vpack.c.b16 %v405, %v403
    %v416 = vpack.c.b16 %v406, %v404
    %v417 = vpack.c.b16 %v409, %v407
    %v418 = vpack.c.b16 %v410, %v408
    %v419 = vpack.c.b16 %v413, %v411
    %v420 = vpack.c.b16 %v414, %v412
    %vm427 = vcmask 392192
    %v429 = vsel %vm427, %v375, 0
    %v432 = vsel %vm427, %v376, 0
    %v435 = vsel %vm427, %v377, 0
    %v438 = vsel %vm427, %v378, 0
    %v441 = vsel %vm427, %v379, 0
    %v444 = vsel %vm427, %v380, 0
    %v447 = vsel %vm427, %v381, 0
    %v450 = vsel %vm427, %v382, 0
    %452 = vmatprep.subr.bf16.mxu0 %v416
    %453 = vmatpush1.bf16.msra.mxu0 %v415
    %454 = vmatprep.subr.bf16.mxu0 %v418
    %455 = vmatpush1.bf16.msra.mxu0 %v417
    %456 = vmatprep.subr.bf16.mxu0 %v420
    %457 = vmatpush1.bf16.msra.mxu0 %v419
    %458 = vmatprep.subr.bf16.mxu0 0
    %459 = vmatpush1.bf16.msra.mxu0 0
    %460 = vmatprep.subr.bf16.mxu0 0
    %461 = vmatpush1.bf16.msra.mxu0 0
    %462 = vmatprep.subr.bf16.mxu0 0
    %463 = vmatpush1.bf16.msra.mxu0 0
    %464 = vmatprep.subr.bf16.mxu0 0
    %465 = vmatpush1.bf16.msra.mxu0 0
    %466 = vmatprep.subr.bf16.mxu0 0
    %467 = vmatpush1.bf16.msra.mxu0 0
    %468 = vmatprep.subr.bf16.mxu0 0
    %469 = vmatpush1.bf16.msra.mxu0 0
    %470 = vmatprep.subr.bf16.mxu0 0
    %471 = vmatpush1.bf16.msra.mxu0 0
    %472 = vmatprep.subr.bf16.mxu0 0
    %473 = vmatpush1.bf16.msra.mxu0 0
    %474 = vmatprep.subr.bf16.mxu0 0
    %475 = vmatpush1.bf16.msra.mxu0 0
    %476 = vmatprep.subr.bf16.mxu0 0
    %477 = vmatpush1.bf16.msra.mxu0 0
    %478 = vmatprep.subr.bf16.mxu0 0
    %479 = vmatpush1.bf16.msra.mxu0 0
    %480 = vmatprep.subr.bf16.mxu0 0
    %481 = vmatpush1.bf16.msra.mxu0 0
    %482 = vmatprep.subr.bf16.mxu0 0
    %483 = vmatpush1.bf16.msra.mxu0 0
    %484 = vmatprep.mubr.bf16.mxu0 0
    %485 = vmatmul.mubr.bf16.gmra.mrb[0].mxu0 %v429
    %v486 = vpop.f32.mrb[0].mxu0
    %v487 = vadd.f32 %v392, %v486
    %v488 = vpop.f32.mrb[0].mxu0
    %v489 = vadd.f32 %v396, %v488
    %v490 = vpop.f32.mrb[0].mxu0
    %v491 = vadd.f32 %v392, %v490
    %v492 = vpop.f32.mrb[0].mxu0
    %v493 = vadd.f32 %v396, %v492
    %494 = vmatprep.mubr.bf16.mxu0 0
    %495 = vmatmul.mubr.bf16.gmra.mrb[0].mxu0 %v432
    %v496 = vpop.f32.mrb[0].mxu0
    %v497 = vadd.f32 %v392, %v496
    %v498 = vpop.f32.mrb[0].mxu0
    %v499 = vadd.f32 %v396, %v498
    %v500 = vpop.f32.mrb[0].mxu0
    %v501 = vadd.f32 %v392, %v500
    %v502 = vpop.f32.mrb[0].mxu0
    %v503 = vadd.f32 %v396, %v502
    %504 = vmatprep.mubr.bf16.mxu0 0
    %505 = vmatmul.mubr.bf16.gmra.mrb[0].mxu0 %v435
    %v506 = vpop.f32.mrb[0].mxu0
    %v507 = vadd.f32 %v392, %v506
    %v508 = vpop.f32.mrb[0].mxu0
    %v509 = vadd.f32 %v396, %v508
    %v510 = vpop.f32.mrb[0].mxu0
    %v511 = vadd.f32 %v392, %v510
    %v512 = vpop.f32.mrb[0].mxu0
    %v513 = vadd.f32 %v396, %v512
    %514 = vmatprep.mubr.bf16.mxu0 0
    %515 = vmatmul.mubr.bf16.gmra.mrb[0].mxu0 %v438
    %v516 = vpop.f32.mrb[0].mxu0
    %v517 = vadd.f32 %v392, %v516
    %v518 = vpop.f32.mrb[0].mxu0
    %v519 = vadd.f32 %v396, %v518
    %v520 = vpop.f32.mrb[0].mxu0
    %v521 = vadd.f32 %v392, %v520
    %v522 = vpop.f32.mrb[0].mxu0
    %v523 = vadd.f32 %v396, %v522
    %524 = vmatprep.mubr.bf16.mxu0 0
    %525 = vmatmul.mubr.bf16.gmra.mrb[0].mxu0 %v441
    %v526 = vpop.f32.mrb[0].mxu0
    %v527 = vadd.f32 %v392, %v526
    %v528 = vpop.f32.mrb[0].mxu0
    %v529 = vadd.f32 %v396, %v528
    %v530 = vpop.f32.mrb[0].mxu0
    %v531 = vadd.f32 %v392, %v530
    %v532 = vpop.f32.mrb[0].mxu0
    %v533 = vadd.f32 %v396, %v532
    %534 = vmatprep.mubr.bf16.mxu0 0
    %535 = vmatmul.mubr.bf16.gmra.mrb[0].mxu0 %v444
    %v536 = vpop.f32.mrb[0].mxu0
    %v537 = vadd.f32 %v392, %v536
    %v538 = vpop.f32.mrb[0].mxu0
    %v539 = vadd.f32 %v396, %v538
    %v540 = vpop.f32.mrb[0].mxu0
    %v541 = vadd.f32 %v392, %v540
    %v542 = vpop.f32.mrb[0].mxu0
    %v543 = vadd.f32 %v396, %v542
    %544 = vmatprep.mubr.bf16.mxu0 0
    %545 = vmatmul.mubr.bf16.gmra.mrb[0].mxu0 %v447
    %v546 = vpop.f32.mrb[0].mxu0
    %v547 = vadd.f32 %v392, %v546
    %v548 = vpop.f32.mrb[0].mxu0
    %v549 = vadd.f32 %v396, %v548
    %v550 = vpop.f32.mrb[0].mxu0
    %v551 = vadd.f32 %v392, %v550
    %v552 = vpop.f32.mrb[0].mxu0
    %v553 = vadd.f32 %v396, %v552
    %554 = vmatprep.mubr.bf16.mxu0 0
    %555 = vmatmul.mubr.bf16.gmra.mrb[0].mxu0 %v450
    %v556 = vpop.f32.mrb[0].mxu0
    %v557 = vadd.f32 %v392, %v556
    %v558 = vpop.f32.mrb[0].mxu0
    %v559 = vadd.f32 %v396, %v558
    %v560 = vpop.f32.mrb[0].mxu0
    %v561 = vadd.f32 %v392, %v560
    %v562 = vpop.f32.mrb[0].mxu0
    %v563 = vadd.f32 %v396, %v562
    %564 = vdwg.mxu0
    %vm565 = vcmp.gt.f32.partialorder %v487, 0.0
    %vm566 = vcmp.gt.f32.partialorder %v489, 0.0
    %vm567 = vcmp.gt.f32.partialorder %v491, 0.0
    %vm568 = vcmp.gt.f32.partialorder %v493, 0.0
    %vm569 = vcmp.gt.f32.partialorder %v497, 0.0
    %vm570 = vcmp.gt.f32.partialorder %v499, 0.0
    %vm571 = vcmp.gt.f32.partialorder %v501, 0.0
    %vm572 = vcmp.gt.f32.partialorder %v503, 0.0
    %vm573 = vcmp.gt.f32.partialorder %v507, 0.0
    %vm574 = vcmp.gt.f32.partialorder %v509, 0.0
    %vm575 = vcmp.gt.f32.partialorder %v511, 0.0
    %vm576 = vcmp.gt.f32.partialorder %v513, 0.0
    %vm577 = vcmp.gt.f32.partialorder %v517, 0.0
    %vm578 = vcmp.gt.f32.partialorder %v519, 0.0
    %vm579 = vcmp.gt.f32.partialorder %v521, 0.0
    %vm580 = vcmp.gt.f32.partialorder %v523, 0.0
    %vm581 = vcmp.gt.f32.partialorder %v527, 0.0
    %vm582 = vcmp.gt.f32.partialorder %v529, 0.0
    %vm583 = vcmp.gt.f32.partialorder %v531, 0.0
    %vm584 = vcmp.gt.f32.partialorder %v533, 0.0
    %vm585 = vcmp.gt.f32.partialorder %v537, 0.0
    %vm586 = vcmp.gt.f32.partialorder %v539, 0.0
    %vm587 = vcmp.gt.f32.partialorder %v541, 0.0
    %vm588 = vcmp.gt.f32.partialorder %v543, 0.0
    %vm589 = vcmp.gt.f32.partialorder %v547, 0.0
    %vm590 = vcmp.gt.f32.partialorder %v549, 0.0
    %vm591 = vcmp.gt.f32.partialorder %v551, 0.0
    %vm592 = vcmp.gt.f32.partialorder %v553, 0.0
    %vm593 = vcmp.gt.f32.partialorder %v557, 0.0
    %vm594 = vcmp.gt.f32.partialorder %v559, 0.0
    %vm595 = vcmp.gt.f32.partialorder %v561, 0.0
    %vm596 = vcmp.gt.f32.partialorder %v563, 0.0
    %v597 = vmul.f32 %v487, 0.01
    %v598 = vmul.f32 %v489, 0.01
    %v599 = vmul.f32 %v491, 0.01
    %v600 = vmul.f32 %v493, 0.01
    %v601 = vmul.f32 %v497, 0.01
    %v602 = vmul.f32 %v499, 0.01
    %v603 = vmul.f32 %v501, 0.01
    %v604 = vmul.f32 %v503, 0.01
    %v605 = vmul.f32 %v507, 0.01
    %v606 = vmul.f32 %v509, 0.01
    %v607 = vmul.f32 %v511, 0.01
    %v608 = vmul.f32 %v513, 0.01
    %v609 = vmul.f32 %v517, 0.01
    %v610 = vmul.f32 %v519, 0.01
    %v611 = vmul.f32 %v521, 0.01
    %v612 = vmul.f32 %v523, 0.01
    %v613 = vmul.f32 %v527, 0.01
    %v614 = vmul.f32 %v529, 0.01
    %v615 = vmul.f32 %v531, 0.01
    %v616 = vmul.f32 %v533, 0.01
    %v617 = vmul.f32 %v537, 0.01
    %v618 = vmul.f32 %v539, 0.01
    %v619 = vmul.f32 %v541, 0.01
    %v620 = vmul.f32 %v543, 0.01
    %v621 = vmul.f32 %v547, 0.01
    %v622 = vmul.f32 %v549, 0.01
    %v623 = vmul.f32 %v551, 0.01
    %v624 = vmul.f32 %v553, 0.01
    %v625 = vmul.f32 %v557, 0.01
    %v626 = vmul.f32 %v559, 0.01
    %v627 = vmul.f32 %v561, 0.01
    %v628 = vmul.f32 %v563, 0.01
    %v629 = vsel %vm565, %v487, %v597
    %v630 = vsel %vm566, %v489, %v598
    %v631 = vsel %vm567, %v491, %v599
    %v632 = vsel %vm568, %v493, %v600
    %v633 = vsel %vm569, %v497, %v601
    %v634 = vsel %vm570, %v499, %v602
    %v635 = vsel %vm571, %v501, %v603
    %v636 = vsel %vm572, %v503, %v604
    %v637 = vsel %vm573, %v507, %v605
    %v638 = vsel %vm574, %v509, %v606
    %v639 = vsel %vm575, %v511, %v607
    %v640 = vsel %vm576, %v513, %v608
    %v641 = vsel %vm577, %v517, %v609
    %v642 = vsel %vm578, %v519, %v610
    %v643 = vsel %vm579, %v521, %v611
    %v644 = vsel %vm580, %v523, %v612
    %v645 = vsel %vm581, %v527, %v613
    %v646 = vsel %vm582, %v529, %v614
    %v647 = vsel %vm583, %v531, %v615
    %v648 = vsel %vm584, %v533, %v616
    %v649 = vsel %vm585, %v537, %v617
    %v650 = vsel %vm586, %v539, %v618
    %v651 = vsel %vm587, %v541, %v619
    %v652 = vsel %vm588, %v543, %v620
    %v653 = vsel %vm589, %v547, %v621
    %v654 = vsel %vm590, %v549, %v622
    %v655 = vsel %vm591, %v551, %v623
    %v656 = vsel %vm592, %v553, %v624
    %v657 = vsel %vm593, %v557, %v625
    %v658 = vsel %vm594, %v559, %v626
    %v659 = vsel %vm595, %v561, %v627
    %v660 = vsel %vm596, %v563, %v628
    %v661 = vpack.c.bf16 %v631, %v629
    %v662 = vpack.c.bf16 %v632, %v630
    %v663 = vpack.c.bf16 %v635, %v633
    %v664 = vpack.c.bf16 %v636, %v634
    %v665 = vpack.c.bf16 %v639, %v637
    %v666 = vpack.c.bf16 %v640, %v638
    %v667 = vpack.c.bf16 %v643, %v641
    %v668 = vpack.c.bf16 %v644, %v642
    %v669 = vpack.c.bf16 %v647, %v645
    %v670 = vpack.c.bf16 %v648, %v646
    %v671 = vpack.c.bf16 %v651, %v649
    %v672 = vpack.c.bf16 %v652, %v650
    %v673 = vpack.c.bf16 %v655, %v653
    %v674 = vpack.c.bf16 %v656, %v654
    %v675 = vpack.c.bf16 %v659, %v657
    %v676 = vpack.c.bf16 %v660, %v658
    %v677 = vld [vmem:[#allocation11] sm:$0xff]
    %v678 = vld [vmem:[#allocation11 + $0x8] sm:$0xff]
    %v679 = vld [vmem:[#allocation11 + $0x10] sm:$0xff]
    %v680 = vld [vmem:[#allocation11 + $0x18] sm:$0xff]
    %v681 = vld [vmem:[#allocation11 + $0x20] sm:$0xff]
    %v682 = vld [vmem:[#allocation11 + $0x28] sm:$0xff]
    %v683 = vld [vmem:[#allocation11 + $0x30] sm:$0xff]
    %v684 = vld [vmem:[#allocation11 + $0x38] sm:$0xff]
    %v685 = vld [vmem:[#allocation11 + $0x40] sm:$0xff]
    %v686 = vld [vmem:[#allocation11 + $0x48] sm:$0xff]
    %v687 = vld [vmem:[#allocation11 + $0x50] sm:$0xff]
    %v688 = vld [vmem:[#allocation11 + $0x58] sm:$0xff]
    %v689 = vld [vmem:[#allocation11 + $0x60] sm:$0xff]
    %v690 = vld [vmem:[#allocation11 + $0x68] sm:$0xff]
    %v691 = vld [vmem:[#allocation11 + $0x70] sm:$0xff]
    %v692 = vld [vmem:[#allocation11 + $0x78] sm:$0xff]
    %v693 = vld [vmem:[#allocation11 + $0x80] sm:$0xff]
    %v694 = vld [vmem:[#allocation11 + $0x88] sm:$0xff]
    %v695 = vld [vmem:[#allocation11 + $0x90] sm:$0xff]
    %v696 = vld [vmem:[#allocation11 + $0x98] sm:$0xff]
    %v697 = vld [vmem:[#allocation11 + $0xa0] sm:$0xff]
    %v698 = vld [vmem:[#allocation11 + $0xa8] sm:$0xff]
    %v699 = vld [vmem:[#allocation11 + $0xb0] sm:$0xff]
    %v700 = vld [vmem:[#allocation11 + $0xb8] sm:$0xff]
    %v701 = vlaneseq
    %v702 = vshrl.u32 %v701, 7
    %v703 = vsub.s32 1, %v702
    %v704 = vrot.slane %v151, %v703
    %v705 = vlaneseq
    %v706 = vshrl.u32 %v705, 7
    %v707 = vsub.s32 1, %v706
    %v708 = vrot.slane %v152, %v707
    %v733 = vunpack.c.l.b16 %v677
    %v734 = vunpack.c.h.b16 %v677
    %v735 = vunpack.c.l.b16 %v678
    %v736 = vunpack.c.h.b16 %v678
    %v737 = vunpack.c.l.b16 %v679
    %v738 = vunpack.c.h.b16 %v679
    %v739 = vunpack.c.l.b16 %v680
    %v740 = vunpack.c.h.b16 %v680
    %v741 = vunpack.c.l.b16 %v681
    %v742 = vunpack.c.h.b16 %v681
    %v743 = vunpack.c.l.b16 %v682
    %v744 = vunpack.c.h.b16 %v682
    %v745 = vunpack.c.l.b16 %v683
    %v746 = vunpack.c.h.b16 %v683
    %v747 = vunpack.c.l.b16 %v684
    %v748 = vunpack.c.h.b16 %v684
    %v749 = vunpack.c.l.b16 %v685
    %v750 = vunpack.c.h.b16 %v685
    %v751 = vunpack.c.l.b16 %v686
    %v752 = vunpack.c.h.b16 %v686
    %v753 = vunpack.c.l.b16 %v687
    %v754 = vunpack.c.h.b16 %v687
    %v755 = vunpack.c.l.b16 %v688
    %v756 = vunpack.c.h.b16 %v688
    %v757 = vunpack.c.l.b16 %v689
    %v758 = vunpack.c.h.b16 %v689
    %v759 = vunpack.c.l.b16 %v690
    %v760 = vunpack.c.h.b16 %v690
    %v761 = vunpack.c.l.b16 %v691
    %v762 = vunpack.c.h.b16 %v691
    %v763 = vunpack.c.l.b16 %v692
    %v764 = vunpack.c.h.b16 %v692
    %v765 = vunpack.c.l.b16 %v693
    %v766 = vunpack.c.h.b16 %v693
    %v767 = vunpack.c.l.b16 %v694
    %v768 = vunpack.c.h.b16 %v694
    %v769 = vunpack.c.l.b16 %v695
    %v770 = vunpack.c.h.b16 %v695
    %v771 = vunpack.c.l.b16 %v696
    %v772 = vunpack.c.h.b16 %v696
    %v773 = vunpack.c.l.b16 %v697
    %v774 = vunpack.c.h.b16 %v697
    %v775 = vunpack.c.l.b16 %v698
    %v776 = vunpack.c.h.b16 %v698
    %v777 = vunpack.c.l.b16 %v699
    %v778 = vunpack.c.h.b16 %v699
    %v779 = vunpack.c.l.b16 %v700
    %v780 = vunpack.c.h.b16 %v700
    %v781 = vpack.c.b16 %v735, %v733
    %v782 = vpack.c.b16 %v736, %v734
    %v783 = vpack.c.b16 %v739, %v737
    %v784 = vpack.c.b16 %v740, %v738
    %v785 = vpack.c.b16 %v743, %v741
    %v786 = vpack.c.b16 %v744, %v742
    %v787 = vpack.c.b16 %v747, %v745
    %v788 = vpack.c.b16 %v748, %v746
    %v789 = vpack.c.b16 %v751, %v749
    %v790 = vpack.c.b16 %v752, %v750
    %v791 = vpack.c.b16 %v755, %v753
    %v792 = vpack.c.b16 %v756, %v754
    %v793 = vpack.c.b16 %v759, %v757
    %v794 = vpack.c.b16 %v760, %v758
    %v795 = vpack.c.b16 %v763, %v761
    %v796 = vpack.c.b16 %v764, %v762
    %v797 = vpack.c.b16 %v767, %v765
    %v798 = vpack.c.b16 %v768, %v766
    %v799 = vpack.c.b16 %v771, %v769
    %v800 = vpack.c.b16 %v772, %v770
    %v801 = vpack.c.b16 %v775, %v773
    %v802 = vpack.c.b16 %v776, %v774
    %v803 = vpack.c.b16 %v779, %v777
    %v804 = vpack.c.b16 %v780, %v778
    %vm829 = vcmask 523264
    %v831 = vsel %vm829, %v662, 0
    %v834 = vsel %vm829, %v664, 0
    %v837 = vsel %vm829, %v666, 0
    %v840 = vsel %vm829, %v668, 0
    %v843 = vsel %vm829, %v670, 0
    %v846 = vsel %vm829, %v672, 0
    %v849 = vsel %vm829, %v674, 0
    %v852 = vsel %vm829, %v676, 0
    %854 = vmatprep.subr.bf16.mxu0 %v782
    %855 = vmatpush1.bf16.msra.mxu0 %v781
    %856 = vmatprep.subr.bf16.mxu0 %v784
    %857 = vmatpush1.bf16.msra.mxu0 %v783
    %858 = vmatprep.subr.bf16.mxu0 %v786
    %859 = vmatpush1.bf16.msra.mxu0 %v785
    %860 = vmatprep.subr.bf16.mxu0 %v788
    %861 = vmatpush1.bf16.msra.mxu0 %v787
    %862 = vmatprep.subr.bf16.mxu0 %v790
    %863 = vmatpush1.bf16.msra.mxu0 %v789
    %864 = vmatprep.subr.bf16.mxu0 %v792
    %865 = vmatpush1.bf16.msra.mxu0 %v791
    %866 = vmatprep.subr.bf16.mxu0 %v794
    %867 = vmatpush1.bf16.msra.mxu0 %v793
    %868 = vmatprep.subr.bf16.mxu0 %v796
    %869 = vmatpush1.bf16.msra.mxu0 %v795
    %870 = vmatprep.subr.bf16.mxu0 %v798
    %871 = vmatpush1.bf16.msra.mxu0 %v797
    %872 = vmatprep.subr.bf16.mxu0 %v800
    %873 = vmatpush1.bf16.msra.mxu0 %v799
    %874 = vmatprep.subr.bf16.mxu0 %v802
    %875 = vmatpush1.bf16.msra.mxu0 %v801
    %876 = vmatprep.subr.bf16.mxu0 %v804
    %877 = vmatpush1.bf16.msra.mxu0 %v803
    %878 = vmatprep.subr.bf16.mxu0 0
    %879 = vmatpush1.bf16.msra.mxu0 0
    %880 = vmatprep.subr.bf16.mxu0 0
    %881 = vmatpush1.bf16.msra.mxu0 0
    %882 = vmatprep.subr.bf16.mxu0 0
    %883 = vmatpush1.bf16.msra.mxu0 0
    %884 = vmatprep.subr.bf16.mxu0 0
    %885 = vmatpush1.bf16.msra.mxu0 0
    %886 = vmatprep.mubr.bf16.mxu0 %v831
    %887 = vmatmul.mubr.bf16.gmra.mrb[0].mxu0 %v661
    %v888 = vpop.f32.mrb[0].mxu0
    %v889 = vadd.f32 %v704, %v888
    %v890 = vpop.f32.mrb[0].mxu0
    %v891 = vadd.f32 %v708, %v890
    %v892 = vpop.f32.mrb[0].mxu0
    %v893 = vadd.f32 %v704, %v892
    %v894 = vpop.f32.mrb[0].mxu0
    %v895 = vadd.f32 %v708, %v894
    %896 = vmatprep.mubr.bf16.mxu0 %v834
    %897 = vmatmul.mubr.bf16.gmra.mrb[0].mxu0 %v663
    %v898 = vpop.f32.mrb[0].mxu0
    %v899 = vadd.f32 %v704, %v898
    %v900 = vpop.f32.mrb[0].mxu0
    %v901 = vadd.f32 %v708, %v900
    %v902 = vpop.f32.mrb[0].mxu0
    %v903 = vadd.f32 %v704, %v902
    %v904 = vpop.f32.mrb[0].mxu0
    %v905 = vadd.f32 %v708, %v904
    %906 = vmatprep.mubr.bf16.mxu0 %v837
    %907 = vmatmul.mubr.bf16.gmra.mrb[0].mxu0 %v665
    %v908 = vpop.f32.mrb[0].mxu0
    %v909 = vadd.f32 %v704, %v908
    %v910 = vpop.f32.mrb[0].mxu0
    %v911 = vadd.f32 %v708, %v910
    %v912 = vpop.f32.mrb[0].mxu0
    %v913 = vadd.f32 %v704, %v912
    %v914 = vpop.f32.mrb[0].mxu0
    %v915 = vadd.f32 %v708, %v914
    %916 = vmatprep.mubr.bf16.mxu0 %v840
    %917 = vmatmul.mubr.bf16.gmra.mrb[0].mxu0 %v667
    %v918 = vpop.f32.mrb[0].mxu0
    %v919 = vadd.f32 %v704, %v918
    %v920 = vpop.f32.mrb[0].mxu0
    %v921 = vadd.f32 %v708, %v920
    %v922 = vpop.f32.mrb[0].mxu0
    %v923 = vadd.f32 %v704, %v922
    %v924 = vpop.f32.mrb[0].mxu0
    %v925 = vadd.f32 %v708, %v924
    %926 = vmatprep.mubr.bf16.mxu0 %v843
    %927 = vmatmul.mubr.bf16.gmra.mrb[0].mxu0 %v669
    %v928 = vpop.f32.mrb[0].mxu0
    %v929 = vadd.f32 %v704, %v928
    %v930 = vpop.f32.mrb[0].mxu0
    %v931 = vadd.f32 %v708, %v930
    %v932 = vpop.f32.mrb[0].mxu0
    %v933 = vadd.f32 %v704, %v932
    %v934 = vpop.f32.mrb[0].mxu0
    %v935 = vadd.f32 %v708, %v934
    %936 = vmatprep.mubr.bf16.mxu0 %v846
    %937 = vmatmul.mubr.bf16.gmra.mrb[0].mxu0 %v671
    %v938 = vpop.f32.mrb[0].mxu0
    %v939 = vadd.f32 %v704, %v938
    %v940 = vpop.f32.mrb[0].mxu0
    %v941 = vadd.f32 %v708, %v940
    %v942 = vpop.f32.mrb[0].mxu0
    %v943 = vadd.f32 %v704, %v942
    %v944 = vpop.f32.mrb[0].mxu0
    %v945 = vadd.f32 %v708, %v944
    %946 = vmatprep.mubr.bf16.mxu0 %v849
    %947 = vmatmul.mubr.bf16.gmra.mrb[0].mxu0 %v673
    %v948 = vpop.f32.mrb[0].mxu0
    %v949 = vadd.f32 %v704, %v948
    %v950 = vpop.f32.mrb[0].mxu0
    %v951 = vadd.f32 %v708, %v950
    %v952 = vpop.f32.mrb[0].mxu0
    %v953 = vadd.f32 %v704, %v952
    %v954 = vpop.f32.mrb[0].mxu0
    %v955 = vadd.f32 %v708, %v954
    %956 = vmatprep.mubr.bf16.mxu0 %v852
    %957 = vmatmul.mubr.bf16.gmra.mrb[0].mxu0 %v675
    %v958 = vpop.f32.mrb[0].mxu0
    %v959 = vadd.f32 %v704, %v958
    %v960 = vpop.f32.mrb[0].mxu0
    %v961 = vadd.f32 %v708, %v960
    %v962 = vpop.f32.mrb[0].mxu0
    %v963 = vadd.f32 %v704, %v962
    %v964 = vpop.f32.mrb[0].mxu0
    %v965 = vadd.f32 %v708, %v964
    %966 = vdwg.mxu0
    %vm967 = vcmp.gt.f32.partialorder %v889, 0.0
    %vm968 = vcmp.gt.f32.partialorder %v891, 0.0
    %vm969 = vcmp.gt.f32.partialorder %v893, 0.0
    %vm970 = vcmp.gt.f32.partialorder %v895, 0.0
    %vm971 = vcmp.gt.f32.partialorder %v899, 0.0
    %vm972 = vcmp.gt.f32.partialorder %v901, 0.0
    %vm973 = vcmp.gt.f32.partialorder %v903, 0.0
    %vm974 = vcmp.gt.f32.partialorder %v905, 0.0
    %vm975 = vcmp.gt.f32.partialorder %v909, 0.0
    %vm976 = vcmp.gt.f32.partialorder %v911, 0.0
    %vm977 = vcmp.gt.f32.partialorder %v913, 0.0
    %vm978 = vcmp.gt.f32.partialorder %v915, 0.0
    %vm979 = vcmp.gt.f32.partialorder %v919, 0.0
    %vm980 = vcmp.gt.f32.partialorder %v921, 0.0
    %vm981 = vcmp.gt.f32.partialorder %v923, 0.0
    %vm982 = vcmp.gt.f32.partialorder %v925, 0.0
    %vm983 = vcmp.gt.f32.partialorder %v929, 0.0
    %vm984 = vcmp.gt.f32.partialorder %v931, 0.0
    %vm985 = vcmp.gt.f32.partialorder %v933, 0.0
    %vm986 = vcmp.gt.f32.partialorder %v935, 0.0
    %vm987 = vcmp.gt.f32.partialorder %v939, 0.0
    %vm988 = vcmp.gt.f32.partialorder %v941, 0.0
    %vm989 = vcmp.gt.f32.partialorder %v943, 0.0
    %vm990 = vcmp.gt.f32.partialorder %v945, 0.0
    %vm991 = vcmp.gt.f32.partialorder %v949, 0.0
    %vm992 = vcmp.gt.f32.partialorder %v951, 0.0
    %vm993 = vcmp.gt.f32.partialorder %v953, 0.0
    %vm994 = vcmp.gt.f32.partialorder %v955, 0.0
    %vm995 = vcmp.gt.f32.partialorder %v959, 0.0
    %vm996 = vcmp.gt.f32.partialorder %v961, 0.0
    %vm997 = vcmp.gt.f32.partialorder %v963, 0.0
    %vm998 = vcmp.gt.f32.partialorder %v965, 0.0
    %v999 = vmul.f32 %v889, 0.01
    %v1000 = vmul.f32 %v891, 0.01
    %v1001 = vmul.f32 %v893, 0.01
    %v1002 = vmul.f32 %v895, 0.01
    %v1003 = vmul.f32 %v899, 0.01
    %v1004 = vmul.f32 %v901, 0.01
    %v1005 = vmul.f32 %v903, 0.01
    %v1006 = vmul.f32 %v905, 0.01
    %v1007 = vmul.f32 %v909, 0.01
    %v1008 = vmul.f32 %v911, 0.01
    %v1009 = vmul.f32 %v913, 0.01
    %v1010 = vmul.f32 %v915, 0.01
    %v1011 = vmul.f32 %v919, 0.01
    %v1012 = vmul.f32 %v921, 0.01
    %v1013 = vmul.f32 %v923, 0.01
    %v1014 = vmul.f32 %v925, 0.01
    %v1015 = vmul.f32 %v929, 0.01
    %v1016 = vmul.f32 %v931, 0.01
    %v1017 = vmul.f32 %v933, 0.01
    %v1018 = vmul.f32 %v935, 0.01
    %v1019 = vmul.f32 %v939, 0.01
    %v1020 = vmul.f32 %v941, 0.01
    %v1021 = vmul.f32 %v943, 0.01
    %v1022 = vmul.f32 %v945, 0.01
    %v1023 = vmul.f32 %v949, 0.01
    %v1024 = vmul.f32 %v951, 0.01
    %v1025 = vmul.f32 %v953, 0.01
    %v1026 = vmul.f32 %v955, 0.01
    %v1027 = vmul.f32 %v959, 0.01
    %v1028 = vmul.f32 %v961, 0.01
    %v1029 = vmul.f32 %v963, 0.01
    %v1030 = vmul.f32 %v965, 0.01
    %v1031 = vsel %vm967, %v889, %v999
    %v1032 = vsel %vm968, %v891, %v1000
    %v1033 = vsel %vm969, %v893, %v1001
    %v1034 = vsel %vm970, %v895, %v1002
    %v1035 = vsel %vm971, %v899, %v1003
    %v1036 = vsel %vm972, %v901, %v1004
    %v1037 = vsel %vm973, %v903, %v1005
    %v1038 = vsel %vm974, %v905, %v1006
    %v1039 = vsel %vm975, %v909, %v1007
    %v1040 = vsel %vm976, %v911, %v1008
    %v1041 = vsel %vm977, %v913, %v1009
    %v1042 = vsel %vm978, %v915, %v1010
    %v1043 = vsel %vm979, %v919, %v1011
    %v1044 = vsel %vm980, %v921, %v1012
    %v1045 = vsel %vm981, %v923, %v1013
    %v1046 = vsel %vm982, %v925, %v1014
    %v1047 = vsel %vm983, %v929, %v1015
    %v1048 = vsel %vm984, %v931, %v1016
    %v1049 = vsel %vm985, %v933, %v1017
    %v1050 = vsel %vm986, %v935, %v1018
    %v1051 = vsel %vm987, %v939, %v1019
    %v1052 = vsel %vm988, %v941, %v1020
    %v1053 = vsel %vm989, %v943, %v1021
    %v1054 = vsel %vm990, %v945, %v1022
    %v1055 = vsel %vm991, %v949, %v1023
    %v1056 = vsel %vm992, %v951, %v1024
    %v1057 = vsel %vm993, %v953, %v1025
    %v1058 = vsel %vm994, %v955, %v1026
    %v1059 = vsel %vm995, %v959, %v1027
    %v1060 = vsel %vm996, %v961, %v1028
    %v1061 = vsel %vm997, %v963, %v1029
    %v1062 = vsel %vm998, %v965, %v1030
    %v1063 = vpack.c.bf16 %v1033, %v1031
    %v1064 = vpack.c.bf16 %v1034, %v1032
    %v1065 = vpack.c.bf16 %v1037, %v1035
    %v1066 = vpack.c.bf16 %v1038, %v1036
    %v1067 = vpack.c.bf16 %v1041, %v1039
    %v1068 = vpack.c.bf16 %v1042, %v1040
    %v1069 = vpack.c.bf16 %v1045, %v1043
    %v1070 = vpack.c.bf16 %v1046, %v1044
    %v1071 = vpack.c.bf16 %v1049, %v1047
    %v1072 = vpack.c.bf16 %v1050, %v1048
    %v1073 = vpack.c.bf16 %v1053, %v1051
    %v1074 = vpack.c.bf16 %v1054, %v1052
    %v1075 = vpack.c.bf16 %v1057, %v1055
    %v1076 = vpack.c.bf16 %v1058, %v1056
    %v1077 = vpack.c.bf16 %v1061, %v1059
    %v1078 = vpack.c.bf16 %v1062, %v1060
    %v1079 = vld [vmem:[#allocation13] sm:$0xf]
    %v1080 = vld [vmem:[#allocation13 + $0x4] sm:$0xf]
    %v1081 = vld [vmem:[#allocation13 + $0x8] sm:$0xf]
    %v1082 = vld [vmem:[#allocation13 + $0xc] sm:$0xf]
    %v1083 = vld [vmem:[#allocation13 + $0x10] sm:$0xf]
    %v1084 = vld [vmem:[#allocation13 + $0x14] sm:$0xf]
    %v1085 = vld [vmem:[#allocation13 + $0x18] sm:$0xf]
    %v1086 = vld [vmem:[#allocation13 + $0x1c] sm:$0xf]
    %v1087 = vld [vmem:[#allocation13 + $0x20] sm:$0xf]
    %v1088 = vld [vmem:[#allocation13 + $0x24] sm:$0xf]
    %v1089 = vld [vmem:[#allocation13 + $0x28] sm:$0xf]
    %v1090 = vld [vmem:[#allocation13 + $0x2c] sm:$0xf]
    %v1091 = vld [vmem:[#allocation13 + $0x30] sm:$0xf]
    %v1092 = vld [vmem:[#allocation13 + $0x34] sm:$0xf]
    %v1093 = vld [vmem:[#allocation13 + $0x38] sm:$0xf]
    %v1094 = vld [vmem:[#allocation13 + $0x3c] sm:$0xf]
    %v1095 = vld [vmem:[#allocation13 + $0x40] sm:$0xf]
    %v1096 = vld [vmem:[#allocation13 + $0x44] sm:$0xf]
    %v1097 = vld [vmem:[#allocation13 + $0x48] sm:$0xf]
    %v1098 = vld [vmem:[#allocation13 + $0x4c] sm:$0xf]
    %v1099 = vld [vmem:[#allocation13 + $0x50] sm:$0xf]
    %v1100 = vld [vmem:[#allocation13 + $0x54] sm:$0xf]
    %v1101 = vld [vmem:[#allocation13 + $0x58] sm:$0xf]
    %v1102 = vld [vmem:[#allocation13 + $0x5c] sm:$0xf]
    %v1103 = vlaneseq
    %v1104 = vshrl.u32 %v1103, 7
    %v1105 = vsub.s32 2, %v1104
    %v1106 = vrot.slane %v151, %v1105
    %v1131 = vunpack.c.l.b16 %v1079
    %v1132 = vunpack.c.l.b16 %v1080
    %v1133 = vunpack.c.l.b16 %v1081
    %v1134 = vunpack.c.l.b16 %v1082
    %v1135 = vunpack.c.l.b16 %v1083
    %v1136 = vunpack.c.l.b16 %v1084
    %v1137 = vunpack.c.l.b16 %v1085
    %v1138 = vunpack.c.l.b16 %v1086
    %v1139 = vunpack.c.l.b16 %v1087
    %v1140 = vunpack.c.l.b16 %v1088
    %v1141 = vunpack.c.l.b16 %v1089
    %v1142 = vunpack.c.l.b16 %v1090
    %v1143 = vunpack.c.l.b16 %v1091
    %v1144 = vunpack.c.l.b16 %v1092
    %v1145 = vunpack.c.l.b16 %v1093
    %v1146 = vunpack.c.l.b16 %v1094
    %v1147 = vunpack.c.l.b16 %v1095
    %v1148 = vunpack.c.l.b16 %v1096
    %v1149 = vunpack.c.l.b16 %v1097
    %v1150 = vunpack.c.l.b16 %v1098
    %v1151 = vunpack.c.l.b16 %v1099
    %v1152 = vunpack.c.l.b16 %v1100
    %v1153 = vunpack.c.l.b16 %v1101
    %v1154 = vunpack.c.l.b16 %v1102
    %v1155 = vpack.c.b16 %v1132, %v1131
    %v1156 = vpack.c.b16 %v1134, %v1133
    %v1157 = vpack.c.b16 %v1136, %v1135
    %v1158 = vpack.c.b16 %v1138, %v1137
    %v1159 = vpack.c.b16 %v1140, %v1139
    %v1160 = vpack.c.b16 %v1142, %v1141
    %v1161 = vpack.c.b16 %v1144, %v1143
    %v1162 = vpack.c.b16 %v1146, %v1145
    %v1163 = vpack.c.b16 %v1148, %v1147
    %v1164 = vpack.c.b16 %v1150, %v1149
    %v1165 = vpack.c.b16 %v1152, %v1151
    %v1166 = vpack.c.b16 %v1154, %v1153
    %v1180 = vsel %vm829, %v1064, 0
    %v1183 = vsel %vm829, %v1066, 0
    %v1186 = vsel %vm829, %v1068, 0
    %v1189 = vsel %vm829, %v1070, 0
    %v1192 = vsel %vm829, %v1072, 0
    %v1195 = vsel %vm829, %v1074, 0
    %v1198 = vsel %vm829, %v1076, 0
    %v1201 = vsel %vm829, %v1078, 0
    %1203 = vmatprep.subr.bf16.mxu0 0
    %1204 = vmatpush1.bf16.msra.mxu0 %v1155
    %1205 = vmatprep.subr.bf16.mxu0 0
    %1206 = vmatpush1.bf16.msra.mxu0 %v1156
    %1207 = vmatprep.subr.bf16.mxu0 0
    %1208 = vmatpush1.bf16.msra.mxu0 %v1157
    %1209 = vmatprep.subr.bf16.mxu0 0
    %1210 = vmatpush1.bf16.msra.mxu0 %v1158
    %1211 = vmatprep.subr.bf16.mxu0 0
    %1212 = vmatpush1.bf16.msra.mxu0 %v1159
    %1213 = vmatprep.subr.bf16.mxu0 0
    %1214 = vmatpush1.bf16.msra.mxu0 %v1160
    %1215 = vmatprep.subr.bf16.mxu0 0
    %1216 = vmatpush1.bf16.msra.mxu0 %v1161
    %1217 = vmatprep.subr.bf16.mxu0 0
    %1218 = vmatpush1.bf16.msra.mxu0 %v1162
    %1219 = vmatprep.subr.bf16.mxu0 0
    %1220 = vmatpush1.bf16.msra.mxu0 %v1163
    %1221 = vmatprep.subr.bf16.mxu0 0
    %1222 = vmatpush1.bf16.msra.mxu0 %v1164
    %1223 = vmatprep.subr.bf16.mxu0 0
    %1224 = vmatpush1.bf16.msra.mxu0 %v1165
    %1225 = vmatprep.subr.bf16.mxu0 0
    %1226 = vmatpush1.bf16.msra.mxu0 %v1166
    %1227 = vmatprep.subr.bf16.mxu0 0
    %1228 = vmatpush1.bf16.msra.mxu0 0
    %1229 = vmatprep.subr.bf16.mxu0 0
    %1230 = vmatpush1.bf16.msra.mxu0 0
    %1231 = vmatprep.subr.bf16.mxu0 0
    %1232 = vmatpush1.bf16.msra.mxu0 0
    %1233 = vmatprep.subr.bf16.mxu0 0
    %1234 = vmatpush1.bf16.msra.mxu0 0
    %1235 = vmatprep.mubr.bf16.mxu0 %v1180
    %1236 = vmatmul.mubr.bf16.gmra.mrb[0].mxu0 %v1063
    %v1237 = vpop.f32.mrb[0].mxu0
    %v1238 = vadd.f32 %v1106, %v1237
    %v1239 = vpop.f32.mrb[0].mxu0
    %v1240 = vpop.f32.mrb[0].mxu0
    %v1241 = vadd.f32 %v1106, %v1240
    %v1242 = vpop.f32.mrb[0].mxu0
    %1243 = vmatprep.mubr.bf16.mxu0 %v1183
    %1244 = vmatmul.mubr.bf16.gmra.mrb[0].mxu0 %v1065
    %v1245 = vpop.f32.mrb[0].mxu0
    %v1246 = vadd.f32 %v1106, %v1245
    %v1247 = vpop.f32.mrb[0].mxu0
    %v1248 = vpop.f32.mrb[0].mxu0
    %v1249 = vadd.f32 %v1106, %v1248
    %v1250 = vpop.f32.mrb[0].mxu0
    %1251 = vmatprep.mubr.bf16.mxu0 %v1186
    %1252 = vmatmul.mubr.bf16.gmra.mrb[0].mxu0 %v1067
    %v1253 = vpop.f32.mrb[0].mxu0
    %v1254 = vadd.f32 %v1106, %v1253
    %v1255 = vpop.f32.mrb[0].mxu0
    %v1256 = vpop.f32.mrb[0].mxu0
    %v1257 = vadd.f32 %v1106, %v1256
    %v1258 = vpop.f32.mrb[0].mxu0
    %1259 = vmatprep.mubr.bf16.mxu0 %v1189
    %1260 = vmatmul.mubr.bf16.gmra.mrb[0].mxu0 %v1069
    %v1261 = vpop.f32.mrb[0].mxu0
    %v1262 = vadd.f32 %v1106, %v1261
    %v1263 = vpop.f32.mrb[0].mxu0
    %v1264 = vpop.f32.mrb[0].mxu0
    %v1265 = vadd.f32 %v1106, %v1264
    %v1266 = vpop.f32.mrb[0].mxu0
    %1267 = vmatprep.mubr.bf16.mxu0 %v1192
    %1268 = vmatmul.mubr.bf16.gmra.mrb[0].mxu0 %v1071
    %v1269 = vpop.f32.mrb[0].mxu0
    %v1270 = vadd.f32 %v1106, %v1269
    %v1271 = vpop.f32.mrb[0].mxu0
    %v1272 = vpop.f32.mrb[0].mxu0
    %v1273 = vadd.f32 %v1106, %v1272
    %v1274 = vpop.f32.mrb[0].mxu0
    %1275 = vmatprep.mubr.bf16.mxu0 %v1195
    %1276 = vmatmul.mubr.bf16.gmra.mrb[0].mxu0 %v1073
    %v1277 = vpop.f32.mrb[0].mxu0
    %v1278 = vadd.f32 %v1106, %v1277
    %v1279 = vpop.f32.mrb[0].mxu0
    %v1280 = vpop.f32.mrb[0].mxu0
    %v1281 = vadd.f32 %v1106, %v1280
    %v1282 = vpop.f32.mrb[0].mxu0
    %1283 = vmatprep.mubr.bf16.mxu0 %v1198
    %1284 = vmatmul.mubr.bf16.gmra.mrb[0].mxu0 %v1075
    %v1285 = vpop.f32.mrb[0].mxu0
    %v1286 = vadd.f32 %v1106, %v1285
    %v1287 = vpop.f32.mrb[0].mxu0
    %v1288 = vpop.f32.mrb[0].mxu0
    %v1289 = vadd.f32 %v1106, %v1288
    %v1290 = vpop.f32.mrb[0].mxu0
    %1291 = vmatprep.mubr.bf16.mxu0 %v1201
    %1292 = vmatmul.mubr.bf16.gmra.mrb[0].mxu0 %v1077
    %v1293 = vpop.f32.mrb[0].mxu0
    %v1294 = vadd.f32 %v1106, %v1293
    %v1295 = vpop.f32.mrb[0].mxu0
    %v1296 = vpop.f32.mrb[0].mxu0
    %v1297 = vadd.f32 %v1106, %v1296
    %v1298 = vpop.f32.mrb[0].mxu0
    %1299 = vdwg.mxu0
    %vm1300 = vcmp.gt.f32.partialorder %v1238, 0.0
    %vm1301 = vcmp.gt.f32.partialorder %v1241, 0.0
    %vm1302 = vcmp.gt.f32.partialorder %v1246, 0.0
    %vm1303 = vcmp.gt.f32.partialorder %v1249, 0.0
    %vm1304 = vcmp.gt.f32.partialorder %v1254, 0.0
    %vm1305 = vcmp.gt.f32.partialorder %v1257, 0.0
    %vm1306 = vcmp.gt.f32.partialorder %v1262, 0.0
    %vm1307 = vcmp.gt.f32.partialorder %v1265, 0.0
    %vm1308 = vcmp.gt.f32.partialorder %v1270, 0.0
    %vm1309 = vcmp.gt.f32.partialorder %v1273, 0.0
    %vm1310 = vcmp.gt.f32.partialorder %v1278, 0.0
    %vm1311 = vcmp.gt.f32.partialorder %v1281, 0.0
    %vm1312 = vcmp.gt.f32.partialorder %v1286, 0.0
    %vm1313 = vcmp.gt.f32.partialorder %v1289, 0.0
    %vm1314 = vcmp.gt.f32.partialorder %v1294, 0.0
    %vm1315 = vcmp.gt.f32.partialorder %v1297, 0.0
    %v1316 = vmul.f32 %v1238, 0.01
    %v1317 = vmul.f32 %v1241, 0.01
    %v1318 = vmul.f32 %v1246, 0.01
    %v1319 = vmul.f32 %v1249, 0.01
    %v1320 = vmul.f32 %v1254, 0.01
    %v1321 = vmul.f32 %v1257, 0.01
    %v1322 = vmul.f32 %v1262, 0.01
    %v1323 = vmul.f32 %v1265, 0.01
    %v1324 = vmul.f32 %v1270, 0.01
    %v1325 = vmul.f32 %v1273, 0.01
    %v1326 = vmul.f32 %v1278, 0.01
    %v1327 = vmul.f32 %v1281, 0.01
    %v1328 = vmul.f32 %v1286, 0.01
    %v1329 = vmul.f32 %v1289, 0.01
    %v1330 = vmul.f32 %v1294, 0.01
    %v1331 = vmul.f32 %v1297, 0.01
    %v1332 = vsel %vm1300, %v1238, %v1316
    %v1333 = vsel %vm1301, %v1241, %v1317
    %v1334 = vsel %vm1302, %v1246, %v1318
    %v1335 = vsel %vm1303, %v1249, %v1319
    %v1336 = vsel %vm1304, %v1254, %v1320
    %v1337 = vsel %vm1305, %v1257, %v1321
    %v1338 = vsel %vm1306, %v1262, %v1322
    %v1339 = vsel %vm1307, %v1265, %v1323
    %v1340 = vsel %vm1308, %v1270, %v1324
    %v1341 = vsel %vm1309, %v1273, %v1325
    %v1342 = vsel %vm1310, %v1278, %v1326
    %v1343 = vsel %vm1311, %v1281, %v1327
    %v1344 = vsel %vm1312, %v1286, %v1328
    %v1345 = vsel %vm1313, %v1289, %v1329
    %v1346 = vsel %vm1314, %v1294, %v1330
    %v1347 = vsel %vm1315, %v1297, %v1331
    %v1348 = vpack.c.bf16 %v1333, %v1332
    %v1349 = vpack.c.bf16 %v1335, %v1334
    %v1350 = vpack.c.bf16 %v1337, %v1336
    %v1351 = vpack.c.bf16 %v1339, %v1338
    %v1352 = vpack.c.bf16 %v1341, %v1340
    %v1353 = vpack.c.bf16 %v1343, %v1342
    %v1354 = vpack.c.bf16 %v1345, %v1344
    %v1355 = vpack.c.bf16 %v1347, %v1346
    %v1356 = vld [vmem:[#allocation14] sm:$0xf]
    %v1357 = vld [vmem:[#allocation14 + $0x4] sm:$0xf]
    %v1358 = vld [vmem:[#allocation14 + $0x8] sm:$0xf]
    %v1359 = vld [vmem:[#allocation14 + $0xc] sm:$0xf]
    %v1360 = vld [vmem:[#allocation14 + $0x10] sm:$0xf]
    %v1361 = vld [vmem:[#allocation14 + $0x14] sm:$0xf]
    %v1362 = vld [vmem:[#allocation14 + $0x18] sm:$0xf]
    %v1363 = vld [vmem:[#allocation14 + $0x1c] sm:$0xf]
    %v1364 = vld [vmem:[#allocation14 + $0x20] sm:$0xf]
    %v1365 = vld [vmem:[#allocation14 + $0x24] sm:$0xf]
    %v1366 = vld [vmem:[#allocation14 + $0x28] sm:$0xf]
    %v1367 = vld [vmem:[#allocation14 + $0x2c] sm:$0xf]
    %v1368 = vlaneseq
    %v1369 = vshrl.u32 %v1368, 7
    %v1370 = vsub.s32 3, %v1369
    %v1371 = vrot.slane %v151, %v1370
    %v1384 = vunpack.c.l.b16 %v1356
    %v1385 = vunpack.c.l.b16 %v1357
    %v1386 = vunpack.c.l.b16 %v1358
    %v1387 = vunpack.c.l.b16 %v1359
    %v1388 = vunpack.c.l.b16 %v1360
    %v1389 = vunpack.c.l.b16 %v1361
    %v1390 = vunpack.c.l.b16 %v1362
    %v1391 = vunpack.c.l.b16 %v1363
    %v1392 = vunpack.c.l.b16 %v1364
    %v1393 = vunpack.c.l.b16 %v1365
    %v1394 = vunpack.c.l.b16 %v1366
    %v1395 = vunpack.c.l.b16 %v1367
    %v1396 = vpack.c.b16 %v1385, %v1384
    %v1397 = vpack.c.b16 %v1387, %v1386
    %v1398 = vpack.c.b16 %v1389, %v1388
    %v1399 = vpack.c.b16 %v1391, %v1390
    %v1400 = vpack.c.b16 %v1393, %v1392
    %v1401 = vpack.c.b16 %v1395, %v1394
    %vm1408 = vcmask 785408
    %v1410 = vsel %vm1408, %v1348, 0
    %v1413 = vsel %vm1408, %v1349, 0
    %v1416 = vsel %vm1408, %v1350, 0
    %v1419 = vsel %vm1408, %v1351, 0
    %v1422 = vsel %vm1408, %v1352, 0
    %v1425 = vsel %vm1408, %v1353, 0
    %v1428 = vsel %vm1408, %v1354, 0
    %v1431 = vsel %vm1408, %v1355, 0
    %1433 = vmatprep.subr.bf16.mxu0 0
    %1434 = vmatpush1.bf16.msra.mxu0 %v1396
    %1435 = vmatprep.subr.bf16.mxu0 0
    %1436 = vmatpush1.bf16.msra.mxu0 %v1397
    %1437 = vmatprep.subr.bf16.mxu0 0
    %1438 = vmatpush1.bf16.msra.mxu0 %v1398
    %1439 = vmatprep.subr.bf16.mxu0 0
    %1440 = vmatpush1.bf16.msra.mxu0 %v1399
    %1441 = vmatprep.subr.bf16.mxu0 0
    %1442 = vmatpush1.bf16.msra.mxu0 %v1400
    %1443 = vmatprep.subr.bf16.mxu0 0
    %1444 = vmatpush1.bf16.msra.mxu0 %v1401
    %1445 = vmatprep.subr.bf16.mxu0 0
    %1446 = vmatpush1.bf16.msra.mxu0 0
    %1447 = vmatprep.subr.bf16.mxu0 0
    %1448 = vmatpush1.bf16.msra.mxu0 0
    %1449 = vmatprep.subr.bf16.mxu0 0
    %1450 = vmatpush1.bf16.msra.mxu0 0
    %1451 = vmatprep.subr.bf16.mxu0 0
    %1452 = vmatpush1.bf16.msra.mxu0 0
    %1453 = vmatprep.subr.bf16.mxu0 0
    %1454 = vmatpush1.bf16.msra.mxu0 0
    %1455 = vmatprep.subr.bf16.mxu0 0
    %1456 = vmatpush1.bf16.msra.mxu0 0
    %1457 = vmatprep.subr.bf16.mxu0 0
    %1458 = vmatpush1.bf16.msra.mxu0 0
    %1459 = vmatprep.subr.bf16.mxu0 0
    %1460 = vmatpush1.bf16.msra.mxu0 0
    %1461 = vmatprep.subr.bf16.mxu0 0
    %1462 = vmatpush1.bf16.msra.mxu0 0
    %1463 = vmatprep.subr.bf16.mxu0 0
    %1464 = vmatpush1.bf16.msra.mxu0 0
    %1465 = vmatprep.mubr.bf16.mxu0 0
    %1466 = vmatmul.mubr.bf16.gmra.mrb[0].mxu0 %v1410
    %v1467 = vpop.f32.mrb[0].mxu0
    %v1468 = vadd.f32 %v1371, %v1467
    %v1469 = vpop.f32.mrb[0].mxu0
    %v1470 = vpop.f32.mrb[0].mxu0
    %v1471 = vadd.f32 %v1371, %v1470
    %v1472 = vpop.f32.mrb[0].mxu0
    %1473 = vmatprep.mubr.bf16.mxu0 0
    %1474 = vmatmul.mubr.bf16.gmra.mrb[0].mxu0 %v1413
    %v1475 = vpop.f32.mrb[0].mxu0
    %v1476 = vadd.f32 %v1371, %v1475
    %v1477 = vpop.f32.mrb[0].mxu0
    %v1478 = vpop.f32.mrb[0].mxu0
    %v1479 = vadd.f32 %v1371, %v1478
    %v1480 = vpop.f32.mrb[0].mxu0
    %1481 = vmatprep.mubr.bf16.mxu0 0
    %1482 = vmatmul.mubr.bf16.gmra.mrb[0].mxu0 %v1416
    %v1483 = vpop.f32.mrb[0].mxu0
    %v1484 = vadd.f32 %v1371, %v1483
    %v1485 = vpop.f32.mrb[0].mxu0
    %v1486 = vpop.f32.mrb[0].mxu0
    %v1487 = vadd.f32 %v1371, %v1486
    %v1488 = vpop.f32.mrb[0].mxu0
    %1489 = vmatprep.mubr.bf16.mxu0 0
    %1490 = vmatmul.mubr.bf16.gmra.mrb[0].mxu0 %v1419
    %v1491 = vpop.f32.mrb[0].mxu0
    %v1492 = vadd.f32 %v1371, %v1491
    %v1493 = vpop.f32.mrb[0].mxu0
    %v1494 = vpop.f32.mrb[0].mxu0
    %v1495 = vadd.f32 %v1371, %v1494
    %v1496 = vpop.f32.mrb[0].mxu0
    %1497 = vmatprep.mubr.bf16.mxu0 0
    %1498 = vmatmul.mubr.bf16.gmra.mrb[0].mxu0 %v1422
    %v1499 = vpop.f32.mrb[0].mxu0
    %v1500 = vadd.f32 %v1371, %v1499
    %v1501 = vpop.f32.mrb[0].mxu0
    %v1502 = vpop.f32.mrb[0].mxu0
    %v1503 = vadd.f32 %v1371, %v1502
    %v1504 = vpop.f32.mrb[0].mxu0
    %1505 = vmatprep.mubr.bf16.mxu0 0
    %1506 = vmatmul.mubr.bf16.gmra.mrb[0].mxu0 %v1425
    %v1507 = vpop.f32.mrb[0].mxu0
    %v1508 = vadd.f32 %v1371, %v1507
    %v1509 = vpop.f32.mrb[0].mxu0
    %v1510 = vpop.f32.mrb[0].mxu0
    %v1511 = vadd.f32 %v1371, %v1510
    %v1512 = vpop.f32.mrb[0].mxu0
    %1513 = vmatprep.mubr.bf16.mxu0 0
    %1514 = vmatmul.mubr.bf16.gmra.mrb[0].mxu0 %v1428
    %v1515 = vpop.f32.mrb[0].mxu0
    %v1516 = vadd.f32 %v1371, %v1515
    %v1517 = vpop.f32.mrb[0].mxu0
    %v1518 = vpop.f32.mrb[0].mxu0
    %v1519 = vadd.f32 %v1371, %v1518
    %v1520 = vpop.f32.mrb[0].mxu0
    %1521 = vmatprep.mubr.bf16.mxu0 0
    %1522 = vmatmul.mubr.bf16.gmra.mrb[0].mxu0 %v1431
    %v1523 = vpop.f32.mrb[0].mxu0
    %v1524 = vadd.f32 %v1371, %v1523
    %v1525 = vpop.f32.mrb[0].mxu0
    %v1526 = vpop.f32.mrb[0].mxu0
    %v1527 = vadd.f32 %v1371, %v1526
    %v1528 = vpop.f32.mrb[0].mxu0
    %1529 = vdwg.mxu0
    %vm1530 = vcmp.gt.f32.partialorder %v1468, 0.0
    %vm1531 = vcmp.gt.f32.partialorder %v1471, 0.0
    %vm1532 = vcmp.gt.f32.partialorder %v1476, 0.0
    %vm1533 = vcmp.gt.f32.partialorder %v1479, 0.0
    %vm1534 = vcmp.gt.f32.partialorder %v1484, 0.0
    %vm1535 = vcmp.gt.f32.partialorder %v1487, 0.0
    %vm1536 = vcmp.gt.f32.partialorder %v1492, 0.0
    %vm1537 = vcmp.gt.f32.partialorder %v1495, 0.0
    %vm1538 = vcmp.gt.f32.partialorder %v1500, 0.0
    %vm1539 = vcmp.gt.f32.partialorder %v1503, 0.0
    %vm1540 = vcmp.gt.f32.partialorder %v1508, 0.0
    %vm1541 = vcmp.gt.f32.partialorder %v1511, 0.0
    %vm1542 = vcmp.gt.f32.partialorder %v1516, 0.0
    %vm1543 = vcmp.gt.f32.partialorder %v1519, 0.0
    %vm1544 = vcmp.gt.f32.partialorder %v1524, 0.0
    %vm1545 = vcmp.gt.f32.partialorder %v1527, 0.0
    %v1546 = vmul.f32 %v1468, 0.01
    %v1547 = vmul.f32 %v1471, 0.01
    %v1548 = vmul.f32 %v1476, 0.01
    %v1549 = vmul.f32 %v1479, 0.01
    %v1550 = vmul.f32 %v1484, 0.01
    %v1551 = vmul.f32 %v1487, 0.01
    %v1552 = vmul.f32 %v1492, 0.01
    %v1553 = vmul.f32 %v1495, 0.01
    %v1554 = vmul.f32 %v1500, 0.01
    %v1555 = vmul.f32 %v1503, 0.01
    %v1556 = vmul.f32 %v1508, 0.01
    %v1557 = vmul.f32 %v1511, 0.01
    %v1558 = vmul.f32 %v1516, 0.01
    %v1559 = vmul.f32 %v1519, 0.01
    %v1560 = vmul.f32 %v1524, 0.01
    %v1561 = vmul.f32 %v1527, 0.01
    %v1562 = vsel %vm1530, %v1468, %v1546
    %v1563 = vsel %vm1531, %v1471, %v1547
    %v1564 = vsel %vm1532, %v1476, %v1548
    %v1565 = vsel %vm1533, %v1479, %v1549
    %v1566 = vsel %vm1534, %v1484, %v1550
    %v1567 = vsel %vm1535, %v1487, %v1551
    %v1568 = vsel %vm1536, %v1492, %v1552
    %v1569 = vsel %vm1537, %v1495, %v1553
    %v1570 = vsel %vm1538, %v1500, %v1554
    %v1571 = vsel %vm1539, %v1503, %v1555
    %v1572 = vsel %vm1540, %v1508, %v1556
    %v1573 = vsel %vm1541, %v1511, %v1557
    %v1574 = vsel %vm1542, %v1516, %v1558
    %v1575 = vsel %vm1543, %v1519, %v1559
    %v1576 = vsel %vm1544, %v1524, %v1560
    %v1577 = vsel %vm1545, %v1527, %v1561
    %v1578 = vlaneseq
    %v1579 = vshrl.u32 %v1578, 7
    %v1580 = vsub.s32 5, %v1579
    %v1581 = vrot.slane %v151, %v1580
    %v1582 = vmul.f32 %v1562, %v1581
    %v1583 = vmul.f32 %v1563, %v1581
    %v1584 = vmul.f32 %v1564, %v1581
    %v1585 = vmul.f32 %v1565, %v1581
    %v1586 = vmul.f32 %v1566, %v1581
    %v1587 = vmul.f32 %v1567, %v1581
    %v1588 = vmul.f32 %v1568, %v1581
    %v1589 = vmul.f32 %v1569, %v1581
    %v1590 = vmul.f32 %v1570, %v1581
    %v1591 = vmul.f32 %v1571, %v1581
    %v1592 = vmul.f32 %v1572, %v1581
    %v1593 = vmul.f32 %v1573, %v1581
    %v1594 = vmul.f32 %v1574, %v1581
    %v1595 = vmul.f32 %v1575, %v1581
    %v1596 = vmul.f32 %v1576, %v1581
    %v1597 = vmul.f32 %v1577, %v1581
    %v1598 = vsel %vm1408, %v1582, 0.0
    %1599 = vadd.xlane.f32.xlu0 %v1598
    %v1600 = vpop.xlane.xlu0 %1599
    %v1601 = vsel %vm1408, %v1583, 0.0
    %1602 = vadd.xlane.f32.xlu0 %v1601
    %v1603 = vpop.xlane.xlu0 %1602
    %v1604 = vsel %vm1408, %v1584, 0.0
    %1605 = vadd.xlane.f32.xlu0 %v1604
    %v1606 = vpop.xlane.xlu0 %1605
    %v1607 = vsel %vm1408, %v1585, 0.0
    %1608 = vadd.xlane.f32.xlu0 %v1607
    %v1609 = vpop.xlane.xlu0 %1608
    %v1610 = vsel %vm1408, %v1586, 0.0
    %1611 = vadd.xlane.f32.xlu0 %v1610
    %v1612 = vpop.xlane.xlu0 %1611
    %v1613 = vsel %vm1408, %v1587, 0.0
    %1614 = vadd.xlane.f32.xlu0 %v1613
    %v1615 = vpop.xlane.xlu0 %1614
    %v1616 = vsel %vm1408, %v1588, 0.0
    %1617 = vadd.xlane.f32.xlu0 %v1616
    %v1618 = vpop.xlane.xlu0 %1617
    %v1619 = vsel %vm1408, %v1589, 0.0
    %1620 = vadd.xlane.f32.xlu0 %v1619
    %v1621 = vpop.xlane.xlu0 %1620
    %v1622 = vsel %vm1408, %v1590, 0.0
    %1623 = vadd.xlane.f32.xlu0 %v1622
    %v1624 = vpop.xlane.xlu0 %1623
    %v1625 = vsel %vm1408, %v1591, 0.0
    %1626 = vadd.xlane.f32.xlu0 %v1625
    %v1627 = vpop.xlane.xlu0 %1626
    %v1628 = vsel %vm1408, %v1592, 0.0
    %1629 = vadd.xlane.f32.xlu0 %v1628
    %v1630 = vpop.xlane.xlu0 %1629
    %v1631 = vsel %vm1408, %v1593, 0.0
    %1632 = vadd.xlane.f32.xlu0 %v1631
    %v1633 = vpop.xlane.xlu0 %1632
    %v1634 = vsel %vm1408, %v1594, 0.0
    %1635 = vadd.xlane.f32.xlu0 %v1634
    %v1636 = vpop.xlane.xlu0 %1635
    %v1637 = vsel %vm1408, %v1595, 0.0
    %1638 = vadd.xlane.f32.xlu0 %v1637
    %v1639 = vpop.xlane.xlu0 %1638
    %v1640 = vsel %vm1408, %v1596, 0.0
    %1641 = vadd.xlane.f32.xlu0 %v1640
    %v1642 = vpop.xlane.xlu0 %1641
    %v1643 = vsel %vm1408, %v1597, 0.0
    %1644 = vadd.xlane.f32.xlu0 %v1643
    %v1645 = vpop.xlane.xlu0 %1644
    %v1646 = vsub.f32 %v1600, 1e+08
    %v1647 = vsub.f32 %v1603, 1e+08
    %v1648 = vsub.f32 %v1606, 1e+08
    %v1649 = vsub.f32 %v1609, 1e+08
    %v1650 = vsub.f32 %v1612, 1e+08
    %v1651 = vsub.f32 %v1615, 1e+08
    %v1652 = vsub.f32 %v1618, 1e+08
    %v1653 = vsub.f32 %v1621, 1e+08
    %v1654 = vsub.f32 %v1624, 1e+08
    %v1655 = vsub.f32 %v1627, 1e+08
    %v1656 = vsub.f32 %v1630, 1e+08
    %v1657 = vsub.f32 %v1633, 1e+08
    %v1658 = vsub.f32 %v1636, 1e+08
    %v1659 = vsub.f32 %v1639, 1e+08
    %v1660 = vsub.f32 %v1642, 1e+08
    %v1661 = vsub.f32 %v1645, 1e+08
    %v1662 = vsel %vm160, 1, 0
    %vm1663 = vcmp.eq.s32.totalorder %v1662, 1
    %v1680 = vlaneseq
    %v1681 = vshrl.u32 %v1680, 7
    %v1682 = vsub.s32 %v159, %v1681
    %v1683 = vrot.slane %v1646, %v1682
    %v1684 = vlaneseq
    %v1685 = vshrl.u32 %v1684, 7
    %v1686 = vsub.s32 %v159, %v1685
    %v1687 = vrot.slane %v1647, %v1686
    %v1688 = vlaneseq
    %v1689 = vshrl.u32 %v1688, 7
    %v1690 = vsub.s32 %v159, %v1689
    %v1691 = vrot.slane %v1648, %v1690
    %v1692 = vlaneseq
    %v1693 = vshrl.u32 %v1692, 7
    %v1694 = vsub.s32 %v159, %v1693
    %v1695 = vrot.slane %v1649, %v1694
    %v1696 = vlaneseq
    %v1697 = vshrl.u32 %v1696, 7
    %v1698 = vsub.s32 %v159, %v1697
    %v1699 = vrot.slane %v1650, %v1698
    %v1700 = vlaneseq
    %v1701 = vshrl.u32 %v1700, 7
    %v1702 = vsub.s32 %v159, %v1701
    %v1703 = vrot.slane %v1651, %v1702
    %v1704 = vlaneseq
    %v1705 = vshrl.u32 %v1704, 7
    %v1706 = vsub.s32 %v159, %v1705
    %v1707 = vrot.slane %v1652, %v1706
    %v1708 = vlaneseq
    %v1709 = vshrl.u32 %v1708, 7
    %v1710 = vsub.s32 %v159, %v1709
    %v1711 = vrot.slane %v1653, %v1710
    %v1712 = vlaneseq
    %v1713 = vshrl.u32 %v1712, 7
    %v1714 = vsub.s32 %v159, %v1713
    %v1715 = vrot.slane %v1654, %v1714
    %v1716 = vlaneseq
    %v1717 = vshrl.u32 %v1716, 7
    %v1718 = vsub.s32 %v159, %v1717
    %v1719 = vrot.slane %v1655, %v1718
    %v1720 = vlaneseq
    %v1721 = vshrl.u32 %v1720, 7
    %v1722 = vsub.s32 %v159, %v1721
    %v1723 = vrot.slane %v1656, %v1722
    %v1724 = vlaneseq
    %v1725 = vshrl.u32 %v1724, 7
    %v1726 = vsub.s32 %v159, %v1725
    %v1727 = vrot.slane %v1657, %v1726
    %v1728 = vlaneseq
    %v1729 = vshrl.u32 %v1728, 7
    %v1730 = vsub.s32 %v159, %v1729
    %v1731 = vrot.slane %v1658, %v1730
    %v1732 = vlaneseq
    %v1733 = vshrl.u32 %v1732, 7
    %v1734 = vsub.s32 %v159, %v1733
    %v1735 = vrot.slane %v1659, %v1734
    %v1736 = vlaneseq
    %v1737 = vshrl.u32 %v1736, 7
    %v1738 = vsub.s32 %v159, %v1737
    %v1739 = vrot.slane %v1660, %v1738
    %v1740 = vlaneseq
    %v1741 = vshrl.u32 %v1740, 7
    %v1742 = vsub.s32 %v159, %v1741
    %v1743 = vrot.slane %v1661, %v1742
    %vm1744 = vcmask 1041409
    %v1745 = vsel %vm1744, %v1687, %v1683
    %vm1746 = vcmask 1042434
    %v1747 = vsel %vm1746, %v1691, %v1745
    %vm1748 = vcmask 1043459
    %v1749 = vsel %vm1748, %v1695, %v1747
    %vm1750 = vcmask 1044484
    %v1751 = vsel %vm1750, %v1699, %v1749
    %vm1752 = vcmask 1045509
    %v1753 = vsel %vm1752, %v1703, %v1751
    %vm1754 = vcmask 1046534
    %v1755 = vsel %vm1754, %v1707, %v1753
    %vm1756 = vcmask 1047559
    %v1757 = vsel %vm1756, %v1711, %v1755
    %v1758 = vsel %vm1744, %v1719, %v1715
    %v1759 = vsel %vm1746, %v1723, %v1758
    %v1760 = vsel %vm1748, %v1727, %v1759
    %v1761 = vsel %vm1750, %v1731, %v1760
    %v1762 = vsel %vm1752, %v1735, %v1761
    %v1763 = vsel %vm1754, %v1739, %v1762
    %v1764 = vsel %vm1756, %v1743, %v1763
    %v1783 = vlaneseq
    %v1784 = vshrl.u32 %v1783, 7
    %v1785 = vsub.s32 %v159, %v1784
    %v1786 = vrot.slane %v1600, %v1785
    %v1787 = vlaneseq
    %v1788 = vshrl.u32 %v1787, 7
    %v1789 = vsub.s32 %v159, %v1788
    %v1790 = vrot.slane %v1603, %v1789
    %v1791 = vlaneseq
    %v1792 = vshrl.u32 %v1791, 7
    %v1793 = vsub.s32 %v159, %v1792
    %v1794 = vrot.slane %v1606, %v1793
    %v1795 = vlaneseq
    %v1796 = vshrl.u32 %v1795, 7
    %v1797 = vsub.s32 %v159, %v1796
    %v1798 = vrot.slane %v1609, %v1797
    %v1799 = vlaneseq
    %v1800 = vshrl.u32 %v1799, 7
    %v1801 = vsub.s32 %v159, %v1800
    %v1802 = vrot.slane %v1612, %v1801
    %v1803 = vlaneseq
    %v1804 = vshrl.u32 %v1803, 7
    %v1805 = vsub.s32 %v159, %v1804
    %v1806 = vrot.slane %v1615, %v1805
    %v1807 = vlaneseq
    %v1808 = vshrl.u32 %v1807, 7
    %v1809 = vsub.s32 %v159, %v1808
    %v1810 = vrot.slane %v1618, %v1809
    %v1811 = vlaneseq
    %v1812 = vshrl.u32 %v1811, 7
    %v1813 = vsub.s32 %v159, %v1812
    %v1814 = vrot.slane %v1621, %v1813
    %v1815 = vlaneseq
    %v1816 = vshrl.u32 %v1815, 7
    %v1817 = vsub.s32 %v159, %v1816
    %v1818 = vrot.slane %v1624, %v1817
    %v1819 = vlaneseq
    %v1820 = vshrl.u32 %v1819, 7
    %v1821 = vsub.s32 %v159, %v1820
    %v1822 = vrot.slane %v1627, %v1821
    %v1823 = vlaneseq
    %v1824 = vshrl.u32 %v1823, 7
    %v1825 = vsub.s32 %v159, %v1824
    %v1826 = vrot.slane %v1630, %v1825
    %v1827 = vlaneseq
    %v1828 = vshrl.u32 %v1827, 7
    %v1829 = vsub.s32 %v159, %v1828
    %v1830 = vrot.slane %v1633, %v1829
    %v1831 = vlaneseq
    %v1832 = vshrl.u32 %v1831, 7
    %v1833 = vsub.s32 %v159, %v1832
    %v1834 = vrot.slane %v1636, %v1833
    %v1835 = vlaneseq
    %v1836 = vshrl.u32 %v1835, 7
    %v1837 = vsub.s32 %v159, %v1836
    %v1838 = vrot.slane %v1639, %v1837
    %v1839 = vlaneseq
    %v1840 = vshrl.u32 %v1839, 7
    %v1841 = vsub.s32 %v159, %v1840
    %v1842 = vrot.slane %v1642, %v1841
    %v1843 = vlaneseq
    %v1844 = vshrl.u32 %v1843, 7
    %v1845 = vsub.s32 %v159, %v1844
    %v1846 = vrot.slane %v1645, %v1845
    %v1847 = vsel %vm1744, %v1790, %v1786
    %v1848 = vsel %vm1746, %v1794, %v1847
    %v1849 = vsel %vm1748, %v1798, %v1848
    %v1850 = vsel %vm1750, %v1802, %v1849
    %v1851 = vsel %vm1752, %v1806, %v1850
    %v1852 = vsel %vm1754, %v1810, %v1851
    %v1853 = vsel %vm1756, %v1814, %v1852
    %v1854 = vsel %vm1744, %v1822, %v1818
    %v1855 = vsel %vm1746, %v1826, %v1854
    %v1856 = vsel %vm1748, %v1830, %v1855
    %v1857 = vsel %vm1750, %v1834, %v1856
    %v1858 = vsel %vm1752, %v1838, %v1857
    %v1859 = vsel %vm1754, %v1842, %v1858
    %v1860 = vsel %vm1756, %v1846, %v1859
    %v1863 = vsel %vm1663, %v1757, %v1853
    %v1864 = vsel %vm1663, %v1764, %v1860
    %vm1865 = vcmask 64512
    %v1866 = vsel %vm1865, %v1863, -inf
    %1867 = vmax.xlane.f32.xlu0 %v1866
    %v1868 = vpop.xlane.xlu0 %1867
    %v1869 = vsel %vm1865, %v1864, -inf
    %1870 = vmax.xlane.f32.xlu0 %v1869
    %v1871 = vpop.xlane.xlu0 %1870
    %v1872 = vsub.f32 %v1863, %v1868
    %v1873 = vsub.f32 %v1864, %v1871
    %v1874 = vmul.f32 %v1872, 1.442695
    %v1875 = vpow.pop %v1874
    %v1876 = vmul.f32 %v1873, 1.442695
    %v1877 = vpow.pop %v1876
    %v1878 = vsel %vm1865, %v1875, 0.0
    %1879 = vadd.xlane.f32.xlu0 %v1878
    %v1880 = vpop.xlane.xlu0 %1879
    %v1881 = vsel %vm1865, %v1877, 0.0
    %1882 = vadd.xlane.f32.xlu0 %v1881
    %v1883 = vpop.xlane.xlu0 %1882
    %v1884 = vrcp.pop %v1880
    %v1885 = vrcp.pop %v1883
    %v1886 = vmul.f32 %v1875, %v1884
    %v1887 = vmul.f32 %v1877, %v1885
    %v1888 = vcombine.high %v1886, 0.0
    %v1890 = vunpack.c.l.s4 1983009808
    %v1891 = vunpack.c.0.s8 %v1890
    %v1892 = vlaneseq
    %v1893 = vshrl.u32 %v1892, 7
    %v1894 = vsub.s32 %v1891, %v1893
    %v1895 = vrot.slane %v1886, %v1894
    %v1897 = vunpack.c.l.s4 1983009808
    %v1898 = vunpack.c.0.s8 %v1897
    %v1899 = vlaneseq
    %v1900 = vshrl.u32 %v1899, 7
    %v1901 = vsub.s32 %v1898, %v1900
    %v1902 = vrot.slane %v1888, %v1901
    %v1903 = vcombine.high %v1895, 0.0
    %v1905 = vunpack.c.l.s4 1934713408
    %v1906 = vunpack.c.0.s8 %v1905
    %v1907 = vlaneseq
    %v1908 = vshrl.u32 %v1907, 7
    %v1909 = vsub.s32 %v1906, %v1908
    %v1910 = vrot.slane %v1895, %v1909
    %v1912 = vunpack.c.l.s4 1934713408
    %v1913 = vunpack.c.0.s8 %v1912
    %v1914 = vlaneseq
    %v1915 = vshrl.u32 %v1914, 7
    %v1916 = vsub.s32 %v1913, %v1915
    %v1917 = vrot.slane %v1903, %v1916
    %v1918 = vcombine.high %v1902, 0.0
    %v1920 = vunpack.c.l.s4 1934713408
    %v1921 = vunpack.c.0.s8 %v1920
    %v1922 = vlaneseq
    %v1923 = vshrl.u32 %v1922, 7
    %v1924 = vsub.s32 %v1921, %v1923
    %v1925 = vrot.slane %v1902, %v1924
    %v1927 = vunpack.c.l.s4 1934713408
    %v1928 = vunpack.c.0.s8 %v1927
    %v1929 = vlaneseq
    %v1930 = vshrl.u32 %v1929, 7
    %v1931 = vsub.s32 %v1928, %v1930
    %v1932 = vrot.slane %v1918, %v1931
    %v1933 = vcombine.high %v1910, 0.0
    %v1934 = vcombine.high %v1917, 0.0
    %v1935 = vcombine.high %v1925, 0.0
    %v1936 = vcombine.high %v1932, 0.0
    %v1937 = vcombine.high %v1887, 0.0
    %v1939 = vunpack.c.l.s4 1983009808
    %v1940 = vunpack.c.0.s8 %v1939
    %v1941 = vlaneseq
    %v1942 = vshrl.u32 %v1941, 7
    %v1943 = vsub.s32 %v1940, %v1942
    %v1944 = vrot.slane %v1887, %v1943
    %v1946 = vunpack.c.l.s4 1983009808
    %v1947 = vunpack.c.0.s8 %v1946
    %v1948 = vlaneseq
    %v1949 = vshrl.u32 %v1948, 7
    %v1950 = vsub.s32 %v1947, %v1949
    %v1951 = vrot.slane %v1937, %v1950
    %v1952 = vcombine.high %v1944, 0.0
    %v1954 = vunpack.c.l.s4 1934713408
    %v1955 = vunpack.c.0.s8 %v1954
    %v1956 = vlaneseq
    %v1957 = vshrl.u32 %v1956, 7
    %v1958 = vsub.s32 %v1955, %v1957
    %v1959 = vrot.slane %v1944, %v1958
    %v1961 = vunpack.c.l.s4 1934713408
    %v1962 = vunpack.c.0.s8 %v1961
    %v1963 = vlaneseq
    %v1964 = vshrl.u32 %v1963, 7
    %v1965 = vsub.s32 %v1962, %v1964
    %v1966 = vrot.slane %v1952, %v1965
    %v1967 = vcombine.high %v1951, 0.0
    %v1969 = vunpack.c.l.s4 1934713408
    %v1970 = vunpack.c.0.s8 %v1969
    %v1971 = vlaneseq
    %v1972 = vshrl.u32 %v1971, 7
    %v1973 = vsub.s32 %v1970, %v1972
    %v1974 = vrot.slane %v1951, %v1973
    %v1976 = vunpack.c.l.s4 1934713408
    %v1977 = vunpack.c.0.s8 %v1976
    %v1978 = vlaneseq
    %v1979 = vshrl.u32 %v1978, 7
    %v1980 = vsub.s32 %v1977, %v1979
    %v1981 = vrot.slane %v1967, %v1980
    %v1982 = vcombine.high %v1959, 0.0
    %v1983 = vcombine.high %v1966, 0.0
    %v1984 = vcombine.high %v1974, 0.0
    %v1985 = vcombine.high %v1981, 0.0
    %1988 = vrot.lane.b32.xlu0 %v1933, 8
    %v1989 = vpop.permute.xlu0 %1988
    %1990 = vrot.lane.b32.xlu0 %v1982, 8
    %v1991 = vpop.permute.xlu0 %1990
    %1996 = vrot.lane.b32.xlu0 %v1917, 16
    %v1997 = vpop.permute.xlu0 %1996
    %1998 = vrot.lane.b32.xlu0 %v1966, 16
    %v1999 = vpop.permute.xlu0 %1998
    %2004 = vrot.lane.b32.xlu0 %v1934, 24
    %v2005 = vpop.permute.xlu0 %2004
    %2006 = vrot.lane.b32.xlu0 %v1983, 24
    %v2007 = vpop.permute.xlu0 %2006
    %2012 = vrot.lane.b32.xlu0 %v1925, 32
    %v2013 = vpop.permute.xlu0 %2012
    %2014 = vrot.lane.b32.xlu0 %v1974, 32
    %v2015 = vpop.permute.xlu0 %2014
    %2020 = vrot.lane.b32.xlu0 %v1935, 40
    %v2021 = vpop.permute.xlu0 %2020
    %2022 = vrot.lane.b32.xlu0 %v1984, 40
    %v2023 = vpop.permute.xlu0 %2022
    %2028 = vrot.lane.b32.xlu0 %v1932, 48
    %v2029 = vpop.permute.xlu0 %2028
    %2030 = vrot.lane.b32.xlu0 %v1981, 48
    %v2031 = vpop.permute.xlu0 %2030
    %2036 = vrot.lane.b32.xlu0 %v1936, 56
    %v2037 = vpop.permute.xlu0 %2036
    %2038 = vrot.lane.b32.xlu0 %v1985, 56
    %v2039 = vpop.permute.xlu0 %2038
    %v2042 = vsel %vm1865, %v1910, %v1989
    %v2043 = vsel %vm1865, %v1959, %v1991
    %vm2044 = vcmask 130048
    %v2045 = vsel %vm2044, %v2042, %v1997
    %v2046 = vsel %vm2044, %v2043, %v1999
    %vm2047 = vcmask 195584
    %v2048 = vsel %vm2047, %v2045, %v2005
    %v2049 = vsel %vm2047, %v2046, %v2007
    %vm2050 = vcmask 261120
    %v2051 = vsel %vm2050, %v2048, %v2013
    %v2052 = vsel %vm2050, %v2049, %v2015
    %vm2053 = vcmask 326656
    %v2054 = vsel %vm2053, %v2051, %v2021
    %v2055 = vsel %vm2053, %v2052, %v2023
    %v2056 = vsel %vm427, %v2054, %v2029
    %v2057 = vsel %vm427, %v2055, %v2031
    %vm2058 = vcmask 457728
    %v2059 = vsel %vm2058, %v2056, %v2037
    %v2060 = vsel %vm2058, %v2057, %v2039
    %vm2061 = vcmask 516096
    %2062 = vst.msk [vmem:[%s11] sm:$0x1] %vm2061, %v2059
    %2063 = vst.msk [vmem:[%s11 + $0x4] sm:$0x1] %vm2061, %v2060
    %v2064 = vlaneseq
    %v2065 = vshrl.u32 %v2064, 7
    %v2066 = vsub.s32 0, %v2065
    %v2067 = vrot.slane %v1886, %v2066
    %2069 = vbcast.lane.b32.xlu0 %v2067, 256
    %v2070 = vpop.permute.xlu0 %2069
    %v2071 = vlaneseq
    %v2072 = vshrl.u32 %v2071, 7
    %v2073 = vsub.s32 1, %v2072
    %v2074 = vrot.slane %v1886, %v2073
    %2076 = vbcast.lane.b32.xlu0 %v2074, 256
    %v2077 = vpop.permute.xlu0 %2076
    %v2078 = vlaneseq
    %v2079 = vshrl.u32 %v2078, 7
    %v2080 = vsub.s32 2, %v2079
    %v2081 = vrot.slane %v1886, %v2080
    %2083 = vbcast.lane.b32.xlu0 %v2081, 256
    %v2084 = vpop.permute.xlu0 %2083
    %v2085 = vlaneseq
    %v2086 = vshrl.u32 %v2085, 7
    %v2087 = vsub.s32 3, %v2086
    %v2088 = vrot.slane %v1886, %v2087
    %2090 = vbcast.lane.b32.xlu0 %v2088, 256
    %v2091 = vpop.permute.xlu0 %2090
    %v2092 = vlaneseq
    %v2093 = vshrl.u32 %v2092, 7
    %v2094 = vsub.s32 4, %v2093
    %v2095 = vrot.slane %v1886, %v2094
    %2097 = vbcast.lane.b32.xlu0 %v2095, 256
    %v2098 = vpop.permute.xlu0 %2097
    %v2099 = vlaneseq
    %v2100 = vshrl.u32 %v2099, 7
    %v2101 = vsub.s32 5, %v2100
    %v2102 = vrot.slane %v1886, %v2101
    %2104 = vbcast.lane.b32.xlu0 %v2102, 256
    %v2105 = vpop.permute.xlu0 %2104
    %v2106 = vlaneseq
    %v2107 = vshrl.u32 %v2106, 7
    %v2108 = vsub.s32 6, %v2107
    %v2109 = vrot.slane %v1886, %v2108
    %2111 = vbcast.lane.b32.xlu0 %v2109, 256
    %v2112 = vpop.permute.xlu0 %2111
    %v2113 = vlaneseq
    %v2114 = vshrl.u32 %v2113, 7
    %v2115 = vsub.s32 7, %v2114
    %v2116 = vrot.slane %v1886, %v2115
    %2118 = vbcast.lane.b32.xlu0 %v2116, 256
    %v2119 = vpop.permute.xlu0 %2118
    %v2120 = vlaneseq
    %v2121 = vshrl.u32 %v2120, 7
    %v2122 = vsub.s32 0, %v2121
    %v2123 = vrot.slane %v1887, %v2122
    %2125 = vbcast.lane.b32.xlu0 %v2123, 256
    %v2126 = vpop.permute.xlu0 %2125
    %v2127 = vlaneseq
    %v2128 = vshrl.u32 %v2127, 7
    %v2129 = vsub.s32 1, %v2128
    %v2130 = vrot.slane %v1887, %v2129
    %2132 = vbcast.lane.b32.xlu0 %v2130, 256
    %v2133 = vpop.permute.xlu0 %2132
    %v2134 = vlaneseq
    %v2135 = vshrl.u32 %v2134, 7
    %v2136 = vsub.s32 2, %v2135
    %v2137 = vrot.slane %v1887, %v2136
    %2139 = vbcast.lane.b32.xlu0 %v2137, 256
    %v2140 = vpop.permute.xlu0 %2139
    %v2141 = vlaneseq
    %v2142 = vshrl.u32 %v2141, 7
    %v2143 = vsub.s32 3, %v2142
    %v2144 = vrot.slane %v1887, %v2143
    %2146 = vbcast.lane.b32.xlu0 %v2144, 256
    %v2147 = vpop.permute.xlu0 %2146
    %v2148 = vlaneseq
    %v2149 = vshrl.u32 %v2148, 7
    %v2150 = vsub.s32 4, %v2149
    %v2151 = vrot.slane %v1887, %v2150
    %2153 = vbcast.lane.b32.xlu0 %v2151, 256
    %v2154 = vpop.permute.xlu0 %2153
    %v2155 = vlaneseq
    %v2156 = vshrl.u32 %v2155, 7
    %v2157 = vsub.s32 5, %v2156
    %v2158 = vrot.slane %v1887, %v2157
    %2160 = vbcast.lane.b32.xlu0 %v2158, 256
    %v2161 = vpop.permute.xlu0 %2160
    %v2162 = vlaneseq
    %v2163 = vshrl.u32 %v2162, 7
    %v2164 = vsub.s32 6, %v2163
    %v2165 = vrot.slane %v1887, %v2164
    %2167 = vbcast.lane.b32.xlu0 %v2165, 256
    %v2168 = vpop.permute.xlu0 %2167
    %v2169 = vlaneseq
    %v2170 = vshrl.u32 %v2169, 7
    %v2171 = vsub.s32 7, %v2170
    %v2172 = vrot.slane %v1887, %v2171
    %2174 = vbcast.lane.b32.xlu0 %v2172, 256
    %v2175 = vpop.permute.xlu0 %2174
    %v2176 = vmul.f32 %v2070, %v161
    %v2177 = vmul.f32 %v2077, %v161
    %v2178 = vmul.f32 %v2084, %v161
    %v2179 = vmul.f32 %v2091, %v161
    %v2180 = vmul.f32 %v2098, %v161
    %v2181 = vmul.f32 %v2105, %v161
    %v2182 = vmul.f32 %v2112, %v161
    %v2183 = vmul.f32 %v2119, %v161
    %v2184 = vmul.f32 %v2126, %v162
    %v2185 = vmul.f32 %v2133, %v162
    %v2186 = vmul.f32 %v2140, %v162
    %v2187 = vmul.f32 %v2147, %v162
    %v2188 = vmul.f32 %v2154, %v162
    %v2189 = vmul.f32 %v2161, %v162
    %v2190 = vmul.f32 %v2168, %v162
    %v2191 = vmul.f32 %v2175, %v162
    %v2192 = vsel %vm427, %v2176, 0.0
    %v2193 = vrot.slane %v2192, 4
    %v2194 = vadd.f32 %v2192, %v2193
    %v2195 = vrot.slane %v2194, 2
    %v2196 = vadd.f32 %v2194, %v2195
    %v2197 = vrot.slane %v2196, 1
    %v2198 = vadd.f32 %v2196, %v2197
    %v2199 = vsel %vm427, %v2177, 0.0
    %v2200 = vrot.slane %v2199, 4
    %v2201 = vadd.f32 %v2199, %v2200
    %v2202 = vrot.slane %v2201, 2
    %v2203 = vadd.f32 %v2201, %v2202
    %v2204 = vrot.slane %v2203, 1
    %v2205 = vadd.f32 %v2203, %v2204
    %v2206 = vsel %vm427, %v2178, 0.0
    %v2207 = vrot.slane %v2206, 4
    %v2208 = vadd.f32 %v2206, %v2207
    %v2209 = vrot.slane %v2208, 2
    %v2210 = vadd.f32 %v2208, %v2209
    %v2211 = vrot.slane %v2210, 1
    %v2212 = vadd.f32 %v2210, %v2211
    %v2213 = vsel %vm427, %v2179, 0.0
    %v2214 = vrot.slane %v2213, 4
    %v2215 = vadd.f32 %v2213, %v2214
    %v2216 = vrot.slane %v2215, 2
    %v2217 = vadd.f32 %v2215, %v2216
    %v2218 = vrot.slane %v2217, 1
    %v2219 = vadd.f32 %v2217, %v2218
    %v2220 = vsel %vm427, %v2180, 0.0
    %v2221 = vrot.slane %v2220, 4
    %v2222 = vadd.f32 %v2220, %v2221
    %v2223 = vrot.slane %v2222, 2
    %v2224 = vadd.f32 %v2222, %v2223
    %v2225 = vrot.slane %v2224, 1
    %v2226 = vadd.f32 %v2224, %v2225
    %v2227 = vsel %vm427, %v2181, 0.0
    %v2228 = vrot.slane %v2227, 4
    %v2229 = vadd.f32 %v2227, %v2228
    %v2230 = vrot.slane %v2229, 2
    %v2231 = vadd.f32 %v2229, %v2230
    %v2232 = vrot.slane %v2231, 1
    %v2233 = vadd.f32 %v2231, %v2232
    %v2234 = vsel %vm427, %v2182, 0.0
    %v2235 = vrot.slane %v2234, 4
    %v2236 = vadd.f32 %v2234, %v2235
    %v2237 = vrot.slane %v2236, 2
    %v2238 = vadd.f32 %v2236, %v2237
    %v2239 = vrot.slane %v2238, 1
    %v2240 = vadd.f32 %v2238, %v2239
    %v2241 = vsel %vm427, %v2183, 0.0
    %v2242 = vrot.slane %v2241, 4
    %v2243 = vadd.f32 %v2241, %v2242
    %v2244 = vrot.slane %v2243, 2
    %v2245 = vadd.f32 %v2243, %v2244
    %v2246 = vrot.slane %v2245, 1
    %v2247 = vadd.f32 %v2245, %v2246
    %v2248 = vsel %vm427, %v2184, 0.0
    %v2249 = vrot.slane %v2248, 4
    %v2250 = vadd.f32 %v2248, %v2249
    %v2251 = vrot.slane %v2250, 2
    %v2252 = vadd.f32 %v2250, %v2251
    %v2253 = vrot.slane %v2252, 1
    %v2254 = vadd.f32 %v2252, %v2253
    %v2255 = vsel %vm427, %v2185, 0.0
    %v2256 = vrot.slane %v2255, 4
    %v2257 = vadd.f32 %v2255, %v2256
    %v2258 = vrot.slane %v2257, 2
    %v2259 = vadd.f32 %v2257, %v2258
    %v2260 = vrot.slane %v2259, 1
    %v2261 = vadd.f32 %v2259, %v2260
    %v2262 = vsel %vm427, %v2186, 0.0
    %v2263 = vrot.slane %v2262, 4
    %v2264 = vadd.f32 %v2262, %v2263
    %v2265 = vrot.slane %v2264, 2
    %v2266 = vadd.f32 %v2264, %v2265
    %v2267 = vrot.slane %v2266, 1
    %v2268 = vadd.f32 %v2266, %v2267
    %v2269 = vsel %vm427, %v2187, 0.0
    %v2270 = vrot.slane %v2269, 4
    %v2271 = vadd.f32 %v2269, %v2270
    %v2272 = vrot.slane %v2271, 2
    %v2273 = vadd.f32 %v2271, %v2272
    %v2274 = vrot.slane %v2273, 1
    %v2275 = vadd.f32 %v2273, %v2274
    %v2276 = vsel %vm427, %v2188, 0.0
    %v2277 = vrot.slane %v2276, 4
    %v2278 = vadd.f32 %v2276, %v2277
    %v2279 = vrot.slane %v2278, 2
    %v2280 = vadd.f32 %v2278, %v2279
    %v2281 = vrot.slane %v2280, 1
    %v2282 = vadd.f32 %v2280, %v2281
    %v2283 = vsel %vm427, %v2189, 0.0
    %v2284 = vrot.slane %v2283, 4
    %v2285 = vadd.f32 %v2283, %v2284
    %v2286 = vrot.slane %v2285, 2
    %v2287 = vadd.f32 %v2285, %v2286
    %v2288 = vrot.slane %v2287, 1
    %v2289 = vadd.f32 %v2287, %v2288
    %v2290 = vsel %vm427, %v2190, 0.0
    %v2291 = vrot.slane %v2290, 4
    %v2292 = vadd.f32 %v2290, %v2291
    %v2293 = vrot.slane %v2292, 2
    %v2294 = vadd.f32 %v2292, %v2293
    %v2295 = vrot.slane %v2294, 1
    %v2296 = vadd.f32 %v2294, %v2295
    %v2297 = vsel %vm427, %v2191, 0.0
    %v2298 = vrot.slane %v2297, 4
    %v2299 = vadd.f32 %v2297, %v2298
    %v2300 = vrot.slane %v2299, 2
    %v2301 = vadd.f32 %v2299, %v2300
    %v2302 = vrot.slane %v2301, 1
    %v2303 = vadd.f32 %v2301, %v2302
    %v2304 = vpack.c.bf16 %v162, %v161
    %v2305 = vld [vmem:[#allocation8] sm:$0xf]
    %v2306 = vld [vmem:[#allocation8 + $0x4] sm:$0xf]
    %v2307 = vld [vmem:[#allocation8 + $0x8] sm:$0xf]
    %v2308 = vld [vmem:[#allocation8 + $0xc] sm:$0xf]
    %v2309 = vld [vmem:[#allocation8 + $0x10] sm:$0xf]
    %v2310 = vld [vmem:[#allocation8 + $0x14] sm:$0xf]
    %v2311 = vpack.c.bf16 %v2198, %v2198
    %v2312 = vpack.c.bf16 %v2205, %v2205
    %v2313 = vpack.c.bf16 %v2212, %v2212
    %v2314 = vpack.c.bf16 %v2219, %v2219
    %v2315 = vpack.c.bf16 %v2226, %v2226
    %v2316 = vpack.c.bf16 %v2233, %v2233
    %v2317 = vpack.c.bf16 %v2240, %v2240
    %v2318 = vpack.c.bf16 %v2247, %v2247
    %v2319 = vpack.c.bf16 %v2254, %v2254
    %v2320 = vpack.c.bf16 %v2261, %v2261
    %v2321 = vpack.c.bf16 %v2268, %v2268
    %v2322 = vpack.c.bf16 %v2275, %v2275
    %v2323 = vpack.c.bf16 %v2282, %v2282
    %v2324 = vpack.c.bf16 %v2289, %v2289
    %v2325 = vpack.c.bf16 %v2296, %v2296
    %v2326 = vpack.c.bf16 %v2303, %v2303
    %s2327 = scalar_lea.vmem [#allocation8], 24
    %v2328 = vld [vmem:[%s2327] sm:$0xf]
    %v2329 = vld [vmem:[%s2327 + $0x4] sm:$0xf]
    %v2330 = vld [vmem:[%s2327 + $0x8] sm:$0xf]
    %v2331 = vld [vmem:[%s2327 + $0xc] sm:$0xf]
    %v2332 = vld [vmem:[%s2327 + $0x10] sm:$0xf]
    %v2333 = vld [vmem:[%s2327 + $0x14] sm:$0xf]
    %v2350 = vunpack.c.l.b16 %v2311
    %v2351 = vunpack.c.l.b16 %v2312
    %v2352 = vunpack.c.l.b16 %v2313
    %v2353 = vunpack.c.l.b16 %v2314
    %v2354 = vunpack.c.l.b16 %v2315
    %v2355 = vunpack.c.l.b16 %v2316
    %v2356 = vunpack.c.l.b16 %v2317
    %v2357 = vunpack.c.l.b16 %v2318
    %v2358 = vunpack.c.l.b16 %v2319
    %v2359 = vunpack.c.l.b16 %v2320
    %v2360 = vunpack.c.l.b16 %v2321
    %v2361 = vunpack.c.l.b16 %v2322
    %v2362 = vunpack.c.l.b16 %v2323
    %v2363 = vunpack.c.l.b16 %v2324
    %v2364 = vunpack.c.l.b16 %v2325
    %v2365 = vunpack.c.l.b16 %v2326
    %v2366 = vsel %vm1744, %v2351, %v2350
    %v2367 = vsel %vm1746, %v2352, %v2366
    %v2368 = vsel %vm1748, %v2353, %v2367
    %v2369 = vsel %vm1750, %v2354, %v2368
    %v2370 = vsel %vm1752, %v2355, %v2369
    %v2371 = vsel %vm1754, %v2356, %v2370
    %v2372 = vsel %vm1756, %v2357, %v2371
    %v2373 = vsel %vm1744, %v2359, %v2358
    %v2374 = vsel %vm1746, %v2360, %v2373
    %v2375 = vsel %vm1748, %v2361, %v2374
    %v2376 = vsel %vm1750, %v2362, %v2375
    %v2377 = vsel %vm1752, %v2363, %v2376
    %v2378 = vsel %vm1754, %v2364, %v2377
    %v2379 = vsel %vm1756, %v2365, %v2378
    %v2380 = vpack.c.b16 %v2379, %v2372
    %v2387 = vunpack.c.l.b16 %v2328
    %v2388 = vunpack.c.l.b16 %v2329
    %v2389 = vunpack.c.l.b16 %v2330
    %v2390 = vunpack.c.l.b16 %v2331
    %v2391 = vunpack.c.l.b16 %v2332
    %v2392 = vunpack.c.l.b16 %v2333
    %v2393 = vpack.c.b16 %v2388, %v2387
    %v2394 = vpack.c.b16 %v2390, %v2389
    %v2395 = vpack.c.b16 %v2392, %v2391
    %v2400 = vsel %vm427, %v2380, 0
    %2402 = vmatprep.subr.bf16.mxu0 0
    %2403 = vmatpush1.bf16.msra.mxu0 %v2393
    %2404 = vmatprep.subr.bf16.mxu0 0
    %2405 = vmatpush1.bf16.msra.mxu0 %v2394
    %2406 = vmatprep.subr.bf16.mxu0 0
    %2407 = vmatpush1.bf16.msra.mxu0 %v2395
    %2408 = vmatprep.subr.bf16.mxu0 0
    %2409 = vmatpush1.bf16.msra.mxu0 0
    %2410 = vmatprep.subr.bf16.mxu0 0
    %2411 = vmatpush1.bf16.msra.mxu0 0
    %2412 = vmatprep.subr.bf16.mxu0 0
    %2413 = vmatpush1.bf16.msra.mxu0 0
    %2414 = vmatprep.subr.bf16.mxu0 0
    %2415 = vmatpush1.bf16.msra.mxu0 0
    %2416 = vmatprep.subr.bf16.mxu0 0
    %2417 = vmatpush1.bf16.msra.mxu0 0
    %2418 = vmatprep.subr.bf16.mxu0 0
    %2419 = vmatpush1.bf16.msra.mxu0 0
    %2420 = vmatprep.subr.bf16.mxu0 0
    %2421 = vmatpush1.bf16.msra.mxu0 0
    %2422 = vmatprep.subr.bf16.mxu0 0
    %2423 = vmatpush1.bf16.msra.mxu0 0
    %2424 = vmatprep.subr.bf16.mxu0 0
    %2425 = vmatpush1.bf16.msra.mxu0 0
    %2426 = vmatprep.subr.bf16.mxu0 0
    %2427 = vmatpush1.bf16.msra.mxu0 0
    %2428 = vmatprep.subr.bf16.mxu0 0
    %2429 = vmatpush1.bf16.msra.mxu0 0
    %2430 = vmatprep.subr.bf16.mxu0 0
    %2431 = vmatpush1.bf16.msra.mxu0 0
    %2432 = vmatprep.subr.bf16.mxu0 0
    %2433 = vmatpush1.bf16.msra.mxu0 0
    %2434 = vmatprep.mubr.bf16.mxu0 0
    %2435 = vmatmul.mubr.bf16.gmra.mrb[0].mxu0 %v2400
    %v2436 = vpop.f32.mrb[0].mxu0
    %v2437 = vadd.f32 0.0, %v2436
    %v2438 = vpop.f32.mrb[0].mxu0
    %v2439 = vpop.f32.mrb[0].mxu0
    %v2440 = vadd.f32 0.0, %v2439
    %v2441 = vpop.f32.mrb[0].mxu0
    %2442 = vdwg.mxu0
    %v2449 = vunpack.c.l.b16 %v2305
    %v2450 = vunpack.c.l.b16 %v2306
    %v2451 = vunpack.c.l.b16 %v2307
    %v2452 = vunpack.c.l.b16 %v2308
    %v2453 = vunpack.c.l.b16 %v2309
    %v2454 = vunpack.c.l.b16 %v2310
    %v2455 = vpack.c.b16 %v2450, %v2449
    %v2456 = vpack.c.b16 %v2452, %v2451
    %v2457 = vpack.c.b16 %v2454, %v2453
    %v2462 = vsel %vm427, %v2304, 0
    %2464 = vmatprep.subr.bf16.mxu0 0
    %2465 = vmatpush1.bf16.msra.mxu0 %v2455
    %2466 = vmatprep.subr.bf16.mxu0 0
    %2467 = vmatpush1.bf16.msra.mxu0 %v2456
    %2468 = vmatprep.subr.bf16.mxu0 0
    %2469 = vmatpush1.bf16.msra.mxu0 %v2457
    %2470 = vmatprep.subr.bf16.mxu0 0
    %2471 = vmatpush1.bf16.msra.mxu0 0
    %2472 = vmatprep.subr.bf16.mxu0 0
    %2473 = vmatpush1.bf16.msra.mxu0 0
    %2474 = vmatprep.subr.bf16.mxu0 0
    %2475 = vmatpush1.bf16.msra.mxu0 0
    %2476 = vmatprep.subr.bf16.mxu0 0
    %2477 = vmatpush1.bf16.msra.mxu0 0
    %2478 = vmatprep.subr.bf16.mxu0 0
    %2479 = vmatpush1.bf16.msra.mxu0 0
    %2480 = vmatprep.subr.bf16.mxu0 0
    %2481 = vmatpush1.bf16.msra.mxu0 0
    %2482 = vmatprep.subr.bf16.mxu0 0
    %2483 = vmatpush1.bf16.msra.mxu0 0
    %2484 = vmatprep.subr.bf16.mxu0 0
    %2485 = vmatpush1.bf16.msra.mxu0 0
    %2486 = vmatprep.subr.bf16.mxu0 0
    %2487 = vmatpush1.bf16.msra.mxu0 0
    %2488 = vmatprep.subr.bf16.mxu0 0
    %2489 = vmatpush1.bf16.msra.mxu0 0
    %2490 = vmatprep.subr.bf16.mxu0 0
    %2491 = vmatpush1.bf16.msra.mxu0 0
    %2492 = vmatprep.subr.bf16.mxu0 0
    %2493 = vmatpush1.bf16.msra.mxu0 0
    %2494 = vmatprep.subr.bf16.mxu0 0
    %2495 = vmatpush1.bf16.msra.mxu0 0
    %2496 = vmatprep.mubr.bf16.mxu0 0
    %2497 = vmatmul.mubr.bf16.gmra.mrb[0].mxu0 %v2462
    %v2498 = vpop.f32.mrb[0].mxu0
    %v2499 = vadd.f32 %v2437, %v2498
    %v2500 = vpop.f32.mrb[0].mxu0
    %v2501 = vpop.f32.mrb[0].mxu0
    %v2502 = vadd.f32 %v2440, %v2501
    %v2503 = vpop.f32.mrb[0].mxu0
    %2504 = vdwg.mxu0
    %v2505 = vlaneseq
    %v2506 = vshrl.u32 %v2505, 7
    %v2507 = vsub.s32 4, %v2506
    %v2508 = vrot.slane %v151, %v2507
    %v2509 = vadd.f32 %v2499, %v2508
    %v2510 = vadd.f32 %v2502, %v2508
    %vm2511 = vcmp.gt.f32.partialorder %v2509, 0.0
    %vm2512 = vcmp.gt.f32.partialorder %v2510, 0.0
    %v2513 = vmul.f32 %v2509, 0.01
    %v2514 = vmul.f32 %v2510, 0.01
    %v2515 = vsel %vm2511, %v2509, %v2513
    %v2516 = vsel %vm2512, %v2510, %v2514
    %v2517 = vld [vmem:[#allocation7] sm:$0xff]
    %v2518 = vld [vmem:[#allocation7 + $0x8] sm:$0xff]
    %v2519 = vld [vmem:[#allocation7 + $0x10] sm:$0xff]
    %v2520 = vld [vmem:[#allocation7 + $0x18] sm:$0xff]
    %v2521 = vld [vmem:[#allocation7 + $0x20] sm:$0xff]
    %v2522 = vld [vmem:[#allocation7 + $0x28] sm:$0xff]
    %v2525 = vcombine.high %v2515, %v2515
    %v2527 = vunpack.c.l.s4 1966171168
    %v2528 = vunpack.c.0.s8 %v2527
    %v2529 = vlaneseq
    %v2530 = vshrl.u32 %v2529, 7
    %v2531 = vsub.s32 %v2528, %v2530
    %v2532 = vrot.slane %v2515, %v2531
    %v2534 = vunpack.c.l.s4 1966171168
    %v2535 = vunpack.c.0.s8 %v2534
    %v2536 = vlaneseq
    %v2537 = vshrl.u32 %v2536, 7
    %v2538 = vsub.s32 %v2535, %v2537
    %v2539 = vrot.slane %v2525, %v2538
    %v2540 = vcombine.high %v2532, %v2532
    %v2541 = vcombine.high %v2539, %v2539
    %v2543 = vunpack.c.l.s4 1966171168
    %v2544 = vunpack.c.0.s8 %v2543
    %v2545 = vlaneseq
    %v2546 = vshrl.u32 %v2545, 7
    %v2547 = vsub.s32 %v2544, %v2546
    %v2548 = vrot.slane %v2532, %v2547
    %v2550 = vunpack.c.l.s4 1966171168
    %v2551 = vunpack.c.0.s8 %v2550
    %v2552 = vlaneseq
    %v2553 = vshrl.u32 %v2552, 7
    %v2554 = vsub.s32 %v2551, %v2553
    %v2555 = vrot.slane %v2539, %v2554
    %v2557 = vunpack.c.l.s4 1966171168
    %v2558 = vunpack.c.0.s8 %v2557
    %v2559 = vlaneseq
    %v2560 = vshrl.u32 %v2559, 7
    %v2561 = vsub.s32 %v2558, %v2560
    %v2562 = vrot.slane %v2540, %v2561
    %v2564 = vunpack.c.l.s4 1966171168
    %v2565 = vunpack.c.0.s8 %v2564
    %v2566 = vlaneseq
    %v2567 = vshrl.u32 %v2566, 7
    %v2568 = vsub.s32 %v2565, %v2567
    %v2569 = vrot.slane %v2541, %v2568
    %v2570 = vcombine.high %v2548, %v2548
    %v2571 = vcombine.high %v2555, %v2555
    %v2572 = vcombine.high %v2562, %v2562
    %v2573 = vcombine.high %v2569, %v2569
    %v2574 = vcombine.high %v2516, %v2516
    %v2576 = vunpack.c.l.s4 1966171168
    %v2577 = vunpack.c.0.s8 %v2576
    %v2578 = vlaneseq
    %v2579 = vshrl.u32 %v2578, 7
    %v2580 = vsub.s32 %v2577, %v2579
    %v2581 = vrot.slane %v2516, %v2580
    %v2583 = vunpack.c.l.s4 1966171168
    %v2584 = vunpack.c.0.s8 %v2583
    %v2585 = vlaneseq
    %v2586 = vshrl.u32 %v2585, 7
    %v2587 = vsub.s32 %v2584, %v2586
    %v2588 = vrot.slane %v2574, %v2587
    %v2589 = vcombine.high %v2581, %v2581
    %v2590 = vcombine.high %v2588, %v2588
    %v2592 = vunpack.c.l.s4 1966171168
    %v2593 = vunpack.c.0.s8 %v2592
    %v2594 = vlaneseq
    %v2595 = vshrl.u32 %v2594, 7
    %v2596 = vsub.s32 %v2593, %v2595
    %v2597 = vrot.slane %v2581, %v2596
    %v2599 = vunpack.c.l.s4 1966171168
    %v2600 = vunpack.c.0.s8 %v2599
    %v2601 = vlaneseq
    %v2602 = vshrl.u32 %v2601, 7
    %v2603 = vsub.s32 %v2600, %v2602
    %v2604 = vrot.slane %v2588, %v2603
    %v2606 = vunpack.c.l.s4 1966171168
    %v2607 = vunpack.c.0.s8 %v2606
    %v2608 = vlaneseq
    %v2609 = vshrl.u32 %v2608, 7
    %v2610 = vsub.s32 %v2607, %v2609
    %v2611 = vrot.slane %v2589, %v2610
    %v2613 = vunpack.c.l.s4 1966171168
    %v2614 = vunpack.c.0.s8 %v2613
    %v2615 = vlaneseq
    %v2616 = vshrl.u32 %v2615, 7
    %v2617 = vsub.s32 %v2614, %v2616
    %v2618 = vrot.slane %v2590, %v2617
    %v2619 = vcombine.high %v2597, %v2597
    %v2620 = vcombine.high %v2604, %v2604
    %v2621 = vcombine.high %v2611, %v2611
    %v2622 = vcombine.high %v2618, %v2618
    %v2623 = vlaneseq
    %v2624 = vshrl.u32 %v2623, 7
    %v2625 = vsub.s32 0, %v2624
    %v2626 = vrot.slane %v2548, %v2625
    %v2627 = vlaneseq
    %v2628 = vshrl.u32 %v2627, 7
    %v2629 = vsub.s32 0, %v2628
    %v2630 = vrot.slane %v2562, %v2629
    %v2631 = vlaneseq
    %v2632 = vshrl.u32 %v2631, 7
    %v2633 = vsub.s32 0, %v2632
    %v2634 = vrot.slane %v2570, %v2633
    %v2635 = vlaneseq
    %v2636 = vshrl.u32 %v2635, 7
    %v2637 = vsub.s32 0, %v2636
    %v2638 = vrot.slane %v2572, %v2637
    %v2639 = vlaneseq
    %v2640 = vshrl.u32 %v2639, 7
    %v2641 = vsub.s32 0, %v2640
    %v2642 = vrot.slane %v2555, %v2641
    %v2643 = vlaneseq
    %v2644 = vshrl.u32 %v2643, 7
    %v2645 = vsub.s32 0, %v2644
    %v2646 = vrot.slane %v2569, %v2645
    %v2647 = vlaneseq
    %v2648 = vshrl.u32 %v2647, 7
    %v2649 = vsub.s32 0, %v2648
    %v2650 = vrot.slane %v2571, %v2649
    %v2651 = vlaneseq
    %v2652 = vshrl.u32 %v2651, 7
    %v2653 = vsub.s32 0, %v2652
    %v2654 = vrot.slane %v2573, %v2653
    %v2655 = vlaneseq
    %v2656 = vshrl.u32 %v2655, 7
    %v2657 = vsub.s32 0, %v2656
    %v2658 = vrot.slane %v2597, %v2657
    %v2659 = vlaneseq
    %v2660 = vshrl.u32 %v2659, 7
    %v2661 = vsub.s32 0, %v2660
    %v2662 = vrot.slane %v2611, %v2661
    %v2663 = vlaneseq
    %v2664 = vshrl.u32 %v2663, 7
    %v2665 = vsub.s32 0, %v2664
    %v2666 = vrot.slane %v2619, %v2665
    %v2667 = vlaneseq
    %v2668 = vshrl.u32 %v2667, 7
    %v2669 = vsub.s32 0, %v2668
    %v2670 = vrot.slane %v2621, %v2669
    %v2671 = vlaneseq
    %v2672 = vshrl.u32 %v2671, 7
    %v2673 = vsub.s32 0, %v2672
    %v2674 = vrot.slane %v2604, %v2673
    %v2675 = vlaneseq
    %v2676 = vshrl.u32 %v2675, 7
    %v2677 = vsub.s32 0, %v2676
    %v2678 = vrot.slane %v2618, %v2677
    %v2679 = vlaneseq
    %v2680 = vshrl.u32 %v2679, 7
    %v2681 = vsub.s32 0, %v2680
    %v2682 = vrot.slane %v2620, %v2681
    %v2683 = vlaneseq
    %v2684 = vshrl.u32 %v2683, 7
    %v2685 = vsub.s32 0, %v2684
    %v2686 = vrot.slane %v2622, %v2685
    %v2703 = vsub.f32 %v2626, %v2515
    %v2704 = vsub.f32 %v2630, %v2515
    %v2705 = vsub.f32 %v2634, %v2515
    %v2706 = vsub.f32 %v2638, %v2515
    %v2707 = vsub.f32 %v2642, %v2515
    %v2708 = vsub.f32 %v2646, %v2515
    %v2709 = vsub.f32 %v2650, %v2515
    %v2710 = vsub.f32 %v2654, %v2515
    %v2711 = vsub.f32 %v2658, %v2516
    %v2712 = vsub.f32 %v2662, %v2516
    %v2713 = vsub.f32 %v2666, %v2516
    %v2714 = vsub.f32 %v2670, %v2516
    %v2715 = vsub.f32 %v2674, %v2516
    %v2716 = vsub.f32 %v2678, %v2516
    %v2717 = vsub.f32 %v2682, %v2516
    %v2718 = vsub.f32 %v2686, %v2516
    %v2719 = vand.u32 2147483647, %v2703
    %v2720 = vand.u32 2147483647, %v2704
    %v2721 = vand.u32 2147483647, %v2705
    %v2722 = vand.u32 2147483647, %v2706
    %v2723 = vand.u32 2147483647, %v2707
    %v2724 = vand.u32 2147483647, %v2708
    %v2725 = vand.u32 2147483647, %v2709
    %v2726 = vand.u32 2147483647, %v2710
    %v2727 = vand.u32 2147483647, %v2711
    %v2728 = vand.u32 2147483647, %v2712
    %v2729 = vand.u32 2147483647, %v2713
    %v2730 = vand.u32 2147483647, %v2714
    %v2731 = vand.u32 2147483647, %v2715
    %v2732 = vand.u32 2147483647, %v2716
    %v2733 = vand.u32 2147483647, %v2717
    %v2734 = vand.u32 2147483647, %v2718
    %v2735 = vpack.c.bf16 %v2720, %v2719
    %v2736 = vpack.c.bf16 %v2722, %v2721
    %v2737 = vpack.c.bf16 %v2724, %v2723
    %v2738 = vpack.c.bf16 %v2726, %v2725
    %v2739 = vpack.c.bf16 %v2728, %v2727
    %v2740 = vpack.c.bf16 %v2730, %v2729
    %v2741 = vpack.c.bf16 %v2732, %v2731
    %v2742 = vpack.c.bf16 %v2734, %v2733
    %s2743 = scalar_lea.vmem [#allocation7], 48
    %v2744 = vld [vmem:[%s2743] sm:$0xff]
    %v2745 = vld [vmem:[%s2743 + $0x8] sm:$0xff]
    %v2746 = vld [vmem:[%s2743 + $0x10] sm:$0xff]
    %v2747 = vld [vmem:[%s2743 + $0x18] sm:$0xff]
    %v2748 = vld [vmem:[%s2743 + $0x20] sm:$0xff]
    %v2749 = vld [vmem:[%s2743 + $0x28] sm:$0xff]
    %v2756 = vunpack.c.l.b16 %v2744
    %v2757 = vunpack.c.h.b16 %v2744
    %v2758 = vunpack.c.l.b16 %v2745
    %v2759 = vunpack.c.h.b16 %v2745
    %v2760 = vunpack.c.l.b16 %v2746
    %v2761 = vunpack.c.h.b16 %v2746
    %v2762 = vunpack.c.l.b16 %v2747
    %v2763 = vunpack.c.h.b16 %v2747
    %v2764 = vunpack.c.l.b16 %v2748
    %v2765 = vunpack.c.h.b16 %v2748
    %v2766 = vunpack.c.l.b16 %v2749
    %v2767 = vunpack.c.h.b16 %v2749
    %v2768 = vpack.c.b16 %v2758, %v2756
    %v2769 = vpack.c.b16 %v2759, %v2757
    %v2770 = vpack.c.b16 %v2762, %v2760
    %v2771 = vpack.c.b16 %v2763, %v2761
    %v2772 = vpack.c.b16 %v2766, %v2764
    %v2773 = vpack.c.b16 %v2767, %v2765
    %v2781 = vsel %vm427, %v2735, 0
    %v2784 = vsel %vm427, %v2736, 0
    %v2787 = vsel %vm427, %v2737, 0
    %v2790 = vsel %vm427, %v2738, 0
    %v2793 = vsel %vm427, %v2739, 0
    %v2796 = vsel %vm427, %v2740, 0
    %v2799 = vsel %vm427, %v2741, 0
    %v2802 = vsel %vm427, %v2742, 0
    %2804 = vmatprep.subr.bf16.mxu0 %v2769
    %2805 = vmatpush1.bf16.msra.mxu0 %v2768
    %2806 = vmatprep.subr.bf16.mxu0 %v2771
    %2807 = vmatpush1.bf16.msra.mxu0 %v2770
    %2808 = vmatprep.subr.bf16.mxu0 %v2773
    %2809 = vmatpush1.bf16.msra.mxu0 %v2772
    %2810 = vmatprep.subr.bf16.mxu0 0
    %2811 = vmatpush1.bf16.msra.mxu0 0
    %2812 = vmatprep.subr.bf16.mxu0 0
    %2813 = vmatpush1.bf16.msra.mxu0 0
    %2814 = vmatprep.subr.bf16.mxu0 0
    %2815 = vmatpush1.bf16.msra.mxu0 0
    %2816 = vmatprep.subr.bf16.mxu0 0
    %2817 = vmatpush1.bf16.msra.mxu0 0
    %2818 = vmatprep.subr.bf16.mxu0 0
    %2819 = vmatpush1.bf16.msra.mxu0 0
    %2820 = vmatprep.subr.bf16.mxu0 0
    %2821 = vmatpush1.bf16.msra.mxu0 0
    %2822 = vmatprep.subr.bf16.mxu0 0
    %2823 = vmatpush1.bf16.msra.mxu0 0
    %2824 = vmatprep.subr.bf16.mxu0 0
    %2825 = vmatpush1.bf16.msra.mxu0 0
    %2826 = vmatprep.subr.bf16.mxu0 0
    %2827 = vmatpush1.bf16.msra.mxu0 0
    %2828 = vmatprep.subr.bf16.mxu0 0
    %2829 = vmatpush1.bf16.msra.mxu0 0
    %2830 = vmatprep.subr.bf16.mxu0 0
    %2831 = vmatpush1.bf16.msra.mxu0 0
    %2832 = vmatprep.subr.bf16.mxu0 0
    %2833 = vmatpush1.bf16.msra.mxu0 0
    %2834 = vmatprep.subr.bf16.mxu0 0
    %2835 = vmatpush1.bf16.msra.mxu0 0
    %2836 = vmatprep.mubr.bf16.mxu0 0
    %2837 = vmatmul.mubr.bf16.gmra.mrb[0].mxu0 %v2781
    %v2838 = vpop.f32.mrb[0].mxu0
    %v2839 = vadd.f32 0.0, %v2838
    %v2840 = vpop.f32.mrb[0].mxu0
    %v2841 = vadd.f32 0.0, %v2840
    %v2842 = vpop.f32.mrb[0].mxu0
    %v2843 = vadd.f32 0.0, %v2842
    %v2844 = vpop.f32.mrb[0].mxu0
    %v2845 = vadd.f32 0.0, %v2844
    %2846 = vmatprep.mubr.bf16.mxu0 0
    %2847 = vmatmul.mubr.bf16.gmra.mrb[0].mxu0 %v2784
    %v2848 = vpop.f32.mrb[0].mxu0
    %v2849 = vadd.f32 0.0, %v2848
    %v2850 = vpop.f32.mrb[0].mxu0
    %v2851 = vadd.f32 0.0, %v2850
    %v2852 = vpop.f32.mrb[0].mxu0
    %v2853 = vadd.f32 0.0, %v2852
    %v2854 = vpop.f32.mrb[0].mxu0
    %v2855 = vadd.f32 0.0, %v2854
    %2856 = vmatprep.mubr.bf16.mxu0 0
    %2857 = vmatmul.mubr.bf16.gmra.mrb[0].mxu0 %v2787
    %v2858 = vpop.f32.mrb[0].mxu0
    %v2859 = vadd.f32 0.0, %v2858
    %v2860 = vpop.f32.mrb[0].mxu0
    %v2861 = vadd.f32 0.0, %v2860
    %v2862 = vpop.f32.mrb[0].mxu0
    %v2863 = vadd.f32 0.0, %v2862
    %v2864 = vpop.f32.mrb[0].mxu0
    %v2865 = vadd.f32 0.0, %v2864
    %2866 = vmatprep.mubr.bf16.mxu0 0
    %2867 = vmatmul.mubr.bf16.gmra.mrb[0].mxu0 %v2790
    %v2868 = vpop.f32.mrb[0].mxu0
    %v2869 = vadd.f32 0.0, %v2868
    %v2870 = vpop.f32.mrb[0].mxu0
    %v2871 = vadd.f32 0.0, %v2870
    %v2872 = vpop.f32.mrb[0].mxu0
    %v2873 = vadd.f32 0.0, %v2872
    %v2874 = vpop.f32.mrb[0].mxu0
    %v2875 = vadd.f32 0.0, %v2874
    %2876 = vmatprep.mubr.bf16.mxu0 0
    %2877 = vmatmul.mubr.bf16.gmra.mrb[0].mxu0 %v2793
    %v2878 = vpop.f32.mrb[0].mxu0
    %v2879 = vadd.f32 0.0, %v2878
    %v2880 = vpop.f32.mrb[0].mxu0
    %v2881 = vadd.f32 0.0, %v2880
    %v2882 = vpop.f32.mrb[0].mxu0
    %v2883 = vadd.f32 0.0, %v2882
    %v2884 = vpop.f32.mrb[0].mxu0
    %v2885 = vadd.f32 0.0, %v2884
    %2886 = vmatprep.mubr.bf16.mxu0 0
    %2887 = vmatmul.mubr.bf16.gmra.mrb[0].mxu0 %v2796
    %v2888 = vpop.f32.mrb[0].mxu0
    %v2889 = vadd.f32 0.0, %v2888
    %v2890 = vpop.f32.mrb[0].mxu0
    %v2891 = vadd.f32 0.0, %v2890
    %v2892 = vpop.f32.mrb[0].mxu0
    %v2893 = vadd.f32 0.0, %v2892
    %v2894 = vpop.f32.mrb[0].mxu0
    %v2895 = vadd.f32 0.0, %v2894
    %2896 = vmatprep.mubr.bf16.mxu0 0
    %2897 = vmatmul.mubr.bf16.gmra.mrb[0].mxu0 %v2799
    %v2898 = vpop.f32.mrb[0].mxu0
    %v2899 = vadd.f32 0.0, %v2898
    %v2900 = vpop.f32.mrb[0].mxu0
    %v2901 = vadd.f32 0.0, %v2900
    %v2902 = vpop.f32.mrb[0].mxu0
    %v2903 = vadd.f32 0.0, %v2902
    %v2904 = vpop.f32.mrb[0].mxu0
    %v2905 = vadd.f32 0.0, %v2904
    %2906 = vmatprep.mubr.bf16.mxu0 0
    %2907 = vmatmul.mubr.bf16.gmra.mrb[0].mxu0 %v2802
    %v2908 = vpop.f32.mrb[0].mxu0
    %v2909 = vadd.f32 0.0, %v2908
    %v2910 = vpop.f32.mrb[0].mxu0
    %v2911 = vadd.f32 0.0, %v2910
    %v2912 = vpop.f32.mrb[0].mxu0
    %v2913 = vadd.f32 0.0, %v2912
    %v2914 = vpop.f32.mrb[0].mxu0
    %v2915 = vadd.f32 0.0, %v2914
    %2916 = vdwg.mxu0
    %v2923 = vunpack.c.l.b16 %v2517
    %v2924 = vunpack.c.h.b16 %v2517
    %v2925 = vunpack.c.l.b16 %v2518
    %v2926 = vunpack.c.h.b16 %v2518
    %v2927 = vunpack.c.l.b16 %v2519
    %v2928 = vunpack.c.h.b16 %v2519
    %v2929 = vunpack.c.l.b16 %v2520
    %v2930 = vunpack.c.h.b16 %v2520
    %v2931 = vunpack.c.l.b16 %v2521
    %v2932 = vunpack.c.h.b16 %v2521
    %v2933 = vunpack.c.l.b16 %v2522
    %v2934 = vunpack.c.h.b16 %v2522
    %v2935 = vpack.c.b16 %v2925, %v2923
    %v2936 = vpack.c.b16 %v2926, %v2924
    %v2937 = vpack.c.b16 %v2929, %v2927
    %v2938 = vpack.c.b16 %v2930, %v2928
    %v2939 = vpack.c.b16 %v2933, %v2931
    %v2940 = vpack.c.b16 %v2934, %v2932
    %2947 = vmatprep.subr.bf16.mxu0 %v2936
    %2948 = vmatpush1.bf16.msra.mxu0 %v2935
    %2949 = vmatprep.subr.bf16.mxu0 %v2938
    %2950 = vmatpush1.bf16.msra.mxu0 %v2937
    %2951 = vmatprep.subr.bf16.mxu0 %v2940
    %2952 = vmatpush1.bf16.msra.mxu0 %v2939
    %2953 = vmatprep.subr.bf16.mxu0 0
    %2954 = vmatpush1.bf16.msra.mxu0 0
    %2955 = vmatprep.subr.bf16.mxu0 0
    %2956 = vmatpush1.bf16.msra.mxu0 0
    %2957 = vmatprep.subr.bf16.mxu0 0
    %2958 = vmatpush1.bf16.msra.mxu0 0
    %2959 = vmatprep.subr.bf16.mxu0 0
    %2960 = vmatpush1.bf16.msra.mxu0 0
    %2961 = vmatprep.subr.bf16.mxu0 0
    %2962 = vmatpush1.bf16.msra.mxu0 0
    %2963 = vmatprep.subr.bf16.mxu0 0
    %2964 = vmatpush1.bf16.msra.mxu0 0
    %2965 = vmatprep.subr.bf16.mxu0 0
    %2966 = vmatpush1.bf16.msra.mxu0 0
    %2967 = vmatprep.subr.bf16.mxu0 0
    %2968 = vmatpush1.bf16.msra.mxu0 0
    %2969 = vmatprep.subr.bf16.mxu0 0
    %2970 = vmatpush1.bf16.msra.mxu0 0
    %2971 = vmatprep.subr.bf16.mxu0 0
    %2972 = vmatpush1.bf16.msra.mxu0 0
    %2973 = vmatprep.subr.bf16.mxu0 0
    %2974 = vmatpush1.bf16.msra.mxu0 0
    %2975 = vmatprep.subr.bf16.mxu0 0
    %2976 = vmatpush1.bf16.msra.mxu0 0
    %2977 = vmatprep.subr.bf16.mxu0 0
    %2978 = vmatpush1.bf16.msra.mxu0 0
    %2979 = vmatprep.mubr.bf16.mxu0 0
    %2980 = vmatmul.mubr.bf16.gmra.mrb[0].mxu0 %v429
    %v2981 = vpop.f32.mrb[0].mxu0
    %v2982 = vadd.f32 %v2839, %v2981
    %v2983 = vpop.f32.mrb[0].mxu0
    %v2984 = vadd.f32 %v2841, %v2983
    %v2985 = vpop.f32.mrb[0].mxu0
    %v2986 = vadd.f32 %v2843, %v2985
    %v2987 = vpop.f32.mrb[0].mxu0
    %v2988 = vadd.f32 %v2845, %v2987
    %2989 = vmatprep.mubr.bf16.mxu0 0
    %2990 = vmatmul.mubr.bf16.gmra.mrb[0].mxu0 %v432
    %v2991 = vpop.f32.mrb[0].mxu0
    %v2992 = vadd.f32 %v2849, %v2991
    %v2993 = vpop.f32.mrb[0].mxu0
    %v2994 = vadd.f32 %v2851, %v2993
    %v2995 = vpop.f32.mrb[0].mxu0
    %v2996 = vadd.f32 %v2853, %v2995
    %v2997 = vpop.f32.mrb[0].mxu0
    %v2998 = vadd.f32 %v2855, %v2997
    %2999 = vmatprep.mubr.bf16.mxu0 0
    %3000 = vmatmul.mubr.bf16.gmra.mrb[0].mxu0 %v435
    %v3001 = vpop.f32.mrb[0].mxu0
    %v3002 = vadd.f32 %v2859, %v3001
    %v3003 = vpop.f32.mrb[0].mxu0
    %v3004 = vadd.f32 %v2861, %v3003
    %v3005 = vpop.f32.mrb[0].mxu0
    %v3006 = vadd.f32 %v2863, %v3005
    %v3007 = vpop.f32.mrb[0].mxu0
    %v3008 = vadd.f32 %v2865, %v3007
    %3009 = vmatprep.mubr.bf16.mxu0 0
    %3010 = vmatmul.mubr.bf16.gmra.mrb[0].mxu0 %v438
    %v3011 = vpop.f32.mrb[0].mxu0
    %v3012 = vadd.f32 %v2869, %v3011
    %v3013 = vpop.f32.mrb[0].mxu0
    %v3014 = vadd.f32 %v2871, %v3013
    %v3015 = vpop.f32.mrb[0].mxu0
    %v3016 = vadd.f32 %v2873, %v3015
    %v3017 = vpop.f32.mrb[0].mxu0
    %v3018 = vadd.f32 %v2875, %v3017
    %3019 = vmatprep.mubr.bf16.mxu0 0
    %3020 = vmatmul.mubr.bf16.gmra.mrb[0].mxu0 %v441
    %v3021 = vpop.f32.mrb[0].mxu0
    %v3022 = vadd.f32 %v2879, %v3021
    %v3023 = vpop.f32.mrb[0].mxu0
    %v3024 = vadd.f32 %v2881, %v3023
    %v3025 = vpop.f32.mrb[0].mxu0
    %v3026 = vadd.f32 %v2883, %v3025
    %v3027 = vpop.f32.mrb[0].mxu0
    %v3028 = vadd.f32 %v2885, %v3027
    %3029 = vmatprep.mubr.bf16.mxu0 0
    %3030 = vmatmul.mubr.bf16.gmra.mrb[0].mxu0 %v444
    %v3031 = vpop.f32.mrb[0].mxu0
    %v3032 = vadd.f32 %v2889, %v3031
    %v3033 = vpop.f32.mrb[0].mxu0
    %v3034 = vadd.f32 %v2891, %v3033
    %v3035 = vpop.f32.mrb[0].mxu0
    %v3036 = vadd.f32 %v2893, %v3035
    %v3037 = vpop.f32.mrb[0].mxu0
    %v3038 = vadd.f32 %v2895, %v3037
    %3039 = vmatprep.mubr.bf16.mxu0 0
    %3040 = vmatmul.mubr.bf16.gmra.mrb[0].mxu0 %v447
    %v3041 = vpop.f32.mrb[0].mxu0
    %v3042 = vadd.f32 %v2899, %v3041
    %v3043 = vpop.f32.mrb[0].mxu0
    %v3044 = vadd.f32 %v2901, %v3043
    %v3045 = vpop.f32.mrb[0].mxu0
    %v3046 = vadd.f32 %v2903, %v3045
    %v3047 = vpop.f32.mrb[0].mxu0
    %v3048 = vadd.f32 %v2905, %v3047
    %3049 = vmatprep.mubr.bf16.mxu0 0
    %3050 = vmatmul.mubr.bf16.gmra.mrb[0].mxu0 %v450
    %v3051 = vpop.f32.mrb[0].mxu0
    %v3052 = vadd.f32 %v2909, %v3051
    %v3053 = vpop.f32.mrb[0].mxu0
    %v3054 = vadd.f32 %v2911, %v3053
    %v3055 = vpop.f32.mrb[0].mxu0
    %v3056 = vadd.f32 %v2913, %v3055
    %v3057 = vpop.f32.mrb[0].mxu0
    %v3058 = vadd.f32 %v2915, %v3057
    %3059 = vdwg.mxu0
    %v3060 = vlaneseq
    %v3061 = vshrl.u32 %v3060, 7
    %v3062 = vsub.s32 6, %v3061
    %v3063 = vrot.slane %v151, %v3062
    %v3064 = vlaneseq
    %v3065 = vshrl.u32 %v3064, 7
    %v3066 = vsub.s32 6, %v3065
    %v3067 = vrot.slane %v152, %v3066
    %v3068 = vadd.f32 %v2982, %v3063
    %v3069 = vadd.f32 %v2984, %v3067
    %v3070 = vadd.f32 %v2986, %v3063
    %v3071 = vadd.f32 %v2988, %v3067
    %v3072 = vadd.f32 %v2992, %v3063
    %v3073 = vadd.f32 %v2994, %v3067
    %v3074 = vadd.f32 %v2996, %v3063
    %v3075 = vadd.f32 %v2998, %v3067
    %v3076 = vadd.f32 %v3002, %v3063
    %v3077 = vadd.f32 %v3004, %v3067
    %v3078 = vadd.f32 %v3006, %v3063
    %v3079 = vadd.f32 %v3008, %v3067
    %v3080 = vadd.f32 %v3012, %v3063
    %v3081 = vadd.f32 %v3014, %v3067
    %v3082 = vadd.f32 %v3016, %v3063
    %v3083 = vadd.f32 %v3018, %v3067
    %v3084 = vadd.f32 %v3022, %v3063
    %v3085 = vadd.f32 %v3024, %v3067
    %v3086 = vadd.f32 %v3026, %v3063
    %v3087 = vadd.f32 %v3028, %v3067
    %v3088 = vadd.f32 %v3032, %v3063
    %v3089 = vadd.f32 %v3034, %v3067
    %v3090 = vadd.f32 %v3036, %v3063
    %v3091 = vadd.f32 %v3038, %v3067
    %v3092 = vadd.f32 %v3042, %v3063
    %v3093 = vadd.f32 %v3044, %v3067
    %v3094 = vadd.f32 %v3046, %v3063
    %v3095 = vadd.f32 %v3048, %v3067
    %v3096 = vadd.f32 %v3052, %v3063
    %v3097 = vadd.f32 %v3054, %v3067
    %v3098 = vadd.f32 %v3056, %v3063
    %v3099 = vadd.f32 %v3058, %v3067
    %vm3100 = vcmp.gt.f32.partialorder %v3068, 0.0
    %vm3101 = vcmp.gt.f32.partialorder %v3069, 0.0
    %vm3102 = vcmp.gt.f32.partialorder %v3070, 0.0
    %vm3103 = vcmp.gt.f32.partialorder %v3071, 0.0
    %vm3104 = vcmp.gt.f32.partialorder %v3072, 0.0
    %vm3105 = vcmp.gt.f32.partialorder %v3073, 0.0
    %vm3106 = vcmp.gt.f32.partialorder %v3074, 0.0
    %vm3107 = vcmp.gt.f32.partialorder %v3075, 0.0
    %vm3108 = vcmp.gt.f32.partialorder %v3076, 0.0
    %vm3109 = vcmp.gt.f32.partialorder %v3077, 0.0
    %vm3110 = vcmp.gt.f32.partialorder %v3078, 0.0
    %vm3111 = vcmp.gt.f32.partialorder %v3079, 0.0
    %vm3112 = vcmp.gt.f32.partialorder %v3080, 0.0
    %vm3113 = vcmp.gt.f32.partialorder %v3081, 0.0
    %vm3114 = vcmp.gt.f32.partialorder %v3082, 0.0
    %vm3115 = vcmp.gt.f32.partialorder %v3083, 0.0
    %vm3116 = vcmp.gt.f32.partialorder %v3084, 0.0
    %vm3117 = vcmp.gt.f32.partialorder %v3085, 0.0
    %vm3118 = vcmp.gt.f32.partialorder %v3086, 0.0
    %vm3119 = vcmp.gt.f32.partialorder %v3087, 0.0
    %vm3120 = vcmp.gt.f32.partialorder %v3088, 0.0
    %vm3121 = vcmp.gt.f32.partialorder %v3089, 0.0
    %vm3122 = vcmp.gt.f32.partialorder %v3090, 0.0
    %vm3123 = vcmp.gt.f32.partialorder %v3091, 0.0
    %vm3124 = vcmp.gt.f32.partialorder %v3092, 0.0
    %vm3125 = vcmp.gt.f32.partialorder %v3093, 0.0
    %vm3126 = vcmp.gt.f32.partialorder %v3094, 0.0
    %vm3127 = vcmp.gt.f32.partialorder %v3095, 0.0
    %vm3128 = vcmp.gt.f32.partialorder %v3096, 0.0
    %vm3129 = vcmp.gt.f32.partialorder %v3097, 0.0
    %vm3130 = vcmp.gt.f32.partialorder %v3098, 0.0
    %vm3131 = vcmp.gt.f32.partialorder %v3099, 0.0
    %v3132 = vmul.f32 %v3068, 0.01
    %v3133 = vmul.f32 %v3069, 0.01
    %v3134 = vmul.f32 %v3070, 0.01
    %v3135 = vmul.f32 %v3071, 0.01
    %v3136 = vmul.f32 %v3072, 0.01
    %v3137 = vmul.f32 %v3073, 0.01
    %v3138 = vmul.f32 %v3074, 0.01
    %v3139 = vmul.f32 %v3075, 0.01
    %v3140 = vmul.f32 %v3076, 0.01
    %v3141 = vmul.f32 %v3077, 0.01
    %v3142 = vmul.f32 %v3078, 0.01
    %v3143 = vmul.f32 %v3079, 0.01
    %v3144 = vmul.f32 %v3080, 0.01
    %v3145 = vmul.f32 %v3081, 0.01
    %v3146 = vmul.f32 %v3082, 0.01
    %v3147 = vmul.f32 %v3083, 0.01
    %v3148 = vmul.f32 %v3084, 0.01
    %v3149 = vmul.f32 %v3085, 0.01
    %v3150 = vmul.f32 %v3086, 0.01
    %v3151 = vmul.f32 %v3087, 0.01
    %v3152 = vmul.f32 %v3088, 0.01
    %v3153 = vmul.f32 %v3089, 0.01
    %v3154 = vmul.f32 %v3090, 0.01
    %v3155 = vmul.f32 %v3091, 0.01
    %v3156 = vmul.f32 %v3092, 0.01
    %v3157 = vmul.f32 %v3093, 0.01
    %v3158 = vmul.f32 %v3094, 0.01
    %v3159 = vmul.f32 %v3095, 0.01
    %v3160 = vmul.f32 %v3096, 0.01
    %v3161 = vmul.f32 %v3097, 0.01
    %v3162 = vmul.f32 %v3098, 0.01
    %v3163 = vmul.f32 %v3099, 0.01
    %v3164 = vsel %vm3100, %v3068, %v3132
    %v3165 = vsel %vm3101, %v3069, %v3133
    %v3166 = vsel %vm3102, %v3070, %v3134
    %v3167 = vsel %vm3103, %v3071, %v3135
    %v3168 = vsel %vm3104, %v3072, %v3136
    %v3169 = vsel %vm3105, %v3073, %v3137
    %v3170 = vsel %vm3106, %v3074, %v3138
    %v3171 = vsel %vm3107, %v3075, %v3139
    %v3172 = vsel %vm3108, %v3076, %v3140
    %v3173 = vsel %vm3109, %v3077, %v3141
    %v3174 = vsel %vm3110, %v3078, %v3142
    %v3175 = vsel %vm3111, %v3079, %v3143
    %v3176 = vsel %vm3112, %v3080, %v3144
    %v3177 = vsel %vm3113, %v3081, %v3145
    %v3178 = vsel %vm3114, %v3082, %v3146
    %v3179 = vsel %vm3115, %v3083, %v3147
    %v3180 = vsel %vm3116, %v3084, %v3148
    %v3181 = vsel %vm3117, %v3085, %v3149
    %v3182 = vsel %vm3118, %v3086, %v3150
    %v3183 = vsel %vm3119, %v3087, %v3151
    %v3184 = vsel %vm3120, %v3088, %v3152
    %v3185 = vsel %vm3121, %v3089, %v3153
    %v3186 = vsel %vm3122, %v3090, %v3154
    %v3187 = vsel %vm3123, %v3091, %v3155
    %v3188 = vsel %vm3124, %v3092, %v3156
    %v3189 = vsel %vm3125, %v3093, %v3157
    %v3190 = vsel %vm3126, %v3094, %v3158
    %v3191 = vsel %vm3127, %v3095, %v3159
    %v3192 = vsel %vm3128, %v3096, %v3160
    %v3193 = vsel %vm3129, %v3097, %v3161
    %v3194 = vsel %vm3130, %v3098, %v3162
    %v3195 = vsel %vm3131, %v3099, %v3163
    %v3196 = vpack.c.bf16 %v3166, %v3164
    %v3197 = vpack.c.bf16 %v3167, %v3165
    %v3198 = vpack.c.bf16 %v3170, %v3168
    %v3199 = vpack.c.bf16 %v3171, %v3169
    %v3200 = vpack.c.bf16 %v3174, %v3172
    %v3201 = vpack.c.bf16 %v3175, %v3173
    %v3202 = vpack.c.bf16 %v3178, %v3176
    %v3203 = vpack.c.bf16 %v3179, %v3177
    %v3204 = vpack.c.bf16 %v3182, %v3180
    %v3205 = vpack.c.bf16 %v3183, %v3181
    %v3206 = vpack.c.bf16 %v3186, %v3184
    %v3207 = vpack.c.bf16 %v3187, %v3185
    %v3208 = vpack.c.bf16 %v3190, %v3188
    %v3209 = vpack.c.bf16 %v3191, %v3189
    %v3210 = vpack.c.bf16 %v3194, %v3192
    %v3211 = vpack.c.bf16 %v3195, %v3193
    %s3212 = scalar_lea.vmem [#allocation11], 192
    %v3213 = vld [vmem:[%s3212] sm:$0xff]
    %v3214 = vld [vmem:[%s3212 + $0x8] sm:$0xff]
    %v3215 = vld [vmem:[%s3212 + $0x10] sm:$0xff]
    %v3216 = vld [vmem:[%s3212 + $0x18] sm:$0xff]
    %v3217 = vld [vmem:[%s3212 + $0x20] sm:$0xff]
    %v3218 = vld [vmem:[%s3212 + $0x28] sm:$0xff]
    %v3219 = vld [vmem:[%s3212 + $0x30] sm:$0xff]
    %v3220 = vld [vmem:[%s3212 + $0x38] sm:$0xff]
    %v3221 = vld [vmem:[%s3212 + $0x40] sm:$0xff]
    %v3222 = vld [vmem:[%s3212 + $0x48] sm:$0xff]
    %v3223 = vld [vmem:[%s3212 + $0x50] sm:$0xff]
    %v3224 = vld [vmem:[%s3212 + $0x58] sm:$0xff]
    %v3225 = vld [vmem:[%s3212 + $0x60] sm:$0xff]
    %v3226 = vld [vmem:[%s3212 + $0x68] sm:$0xff]
    %v3227 = vld [vmem:[%s3212 + $0x70] sm:$0xff]
    %v3228 = vld [vmem:[%s3212 + $0x78] sm:$0xff]
    %v3229 = vld [vmem:[%s3212 + $0x80] sm:$0xff]
    %v3230 = vld [vmem:[%s3212 + $0x88] sm:$0xff]
    %v3231 = vld [vmem:[%s3212 + $0x90] sm:$0xff]
    %v3232 = vld [vmem:[%s3212 + $0x98] sm:$0xff]
    %v3233 = vld [vmem:[%s3212 + $0xa0] sm:$0xff]
    %v3234 = vld [vmem:[%s3212 + $0xa8] sm:$0xff]
    %v3235 = vld [vmem:[%s3212 + $0xb0] sm:$0xff]
    %v3236 = vld [vmem:[%s3212 + $0xb8] sm:$0xff]
    %v3237 = vlaneseq
    %v3238 = vshrl.u32 %v3237, 7
    %v3239 = vsub.s32 7, %v3238
    %v3240 = vrot.slane %v151, %v3239
    %v3241 = vlaneseq
    %v3242 = vshrl.u32 %v3241, 7
    %v3243 = vsub.s32 7, %v3242
    %v3244 = vrot.slane %v152, %v3243
    %v3269 = vunpack.c.l.b16 %v3213
    %v3270 = vunpack.c.h.b16 %v3213
    %v3271 = vunpack.c.l.b16 %v3214
    %v3272 = vunpack.c.h.b16 %v3214
    %v3273 = vunpack.c.l.b16 %v3215
    %v3274 = vunpack.c.h.b16 %v3215
    %v3275 = vunpack.c.l.b16 %v3216
    %v3276 = vunpack.c.h.b16 %v3216
    %v3277 = vunpack.c.l.b16 %v3217
    %v3278 = vunpack.c.h.b16 %v3217
    %v3279 = vunpack.c.l.b16 %v3218
    %v3280 = vunpack.c.h.b16 %v3218
    %v3281 = vunpack.c.l.b16 %v3219
    %v3282 = vunpack.c.h.b16 %v3219
    %v3283 = vunpack.c.l.b16 %v3220
    %v3284 = vunpack.c.h.b16 %v3220
    %v3285 = vunpack.c.l.b16 %v3221
    %v3286 = vunpack.c.h.b16 %v3221
    %v3287 = vunpack.c.l.b16 %v3222
    %v3288 = vunpack.c.h.b16 %v3222
    %v3289 = vunpack.c.l.b16 %v3223
    %v3290 = vunpack.c.h.b16 %v3223
    %v3291 = vunpack.c.l.b16 %v3224
    %v3292 = vunpack.c.h.b16 %v3224
    %v3293 = vunpack.c.l.b16 %v3225
    %v3294 = vunpack.c.h.b16 %v3225
    %v3295 = vunpack.c.l.b16 %v3226
    %v3296 = vunpack.c.h.b16 %v3226
    %v3297 = vunpack.c.l.b16 %v3227
    %v3298 = vunpack.c.h.b16 %v3227
    %v3299 = vunpack.c.l.b16 %v3228
    %v3300 = vunpack.c.h.b16 %v3228
    %v3301 = vunpack.c.l.b16 %v3229
    %v3302 = vunpack.c.h.b16 %v3229
    %v3303 = vunpack.c.l.b16 %v3230
    %v3304 = vunpack.c.h.b16 %v3230
    %v3305 = vunpack.c.l.b16 %v3231
    %v3306 = vunpack.c.h.b16 %v3231
    %v3307 = vunpack.c.l.b16 %v3232
    %v3308 = vunpack.c.h.b16 %v3232
    %v3309 = vunpack.c.l.b16 %v3233
    %v3310 = vunpack.c.h.b16 %v3233
    %v3311 = vunpack.c.l.b16 %v3234
    %v3312 = vunpack.c.h.b16 %v3234
    %v3313 = vunpack.c.l.b16 %v3235
    %v3314 = vunpack.c.h.b16 %v3235
    %v3315 = vunpack.c.l.b16 %v3236
    %v3316 = vunpack.c.h.b16 %v3236
    %v3317 = vpack.c.b16 %v3271, %v3269
    %v3318 = vpack.c.b16 %v3272, %v3270
    %v3319 = vpack.c.b16 %v3275, %v3273
    %v3320 = vpack.c.b16 %v3276, %v3274
    %v3321 = vpack.c.b16 %v3279, %v3277
    %v3322 = vpack.c.b16 %v3280, %v3278
    %v3323 = vpack.c.b16 %v3283, %v3281
    %v3324 = vpack.c.b16 %v3284, %v3282
    %v3325 = vpack.c.b16 %v3287, %v3285
    %v3326 = vpack.c.b16 %v3288, %v3286
    %v3327 = vpack.c.b16 %v3291, %v3289
    %v3328 = vpack.c.b16 %v3292, %v3290
    %v3329 = vpack.c.b16 %v3295, %v3293
    %v3330 = vpack.c.b16 %v3296, %v3294
    %v3331 = vpack.c.b16 %v3299, %v3297
    %v3332 = vpack.c.b16 %v3300, %v3298
    %v3333 = vpack.c.b16 %v3303, %v3301
    %v3334 = vpack.c.b16 %v3304, %v3302
    %v3335 = vpack.c.b16 %v3307, %v3305
    %v3336 = vpack.c.b16 %v3308, %v3306
    %v3337 = vpack.c.b16 %v3311, %v3309
    %v3338 = vpack.c.b16 %v3312, %v3310
    %v3339 = vpack.c.b16 %v3315, %v3313
    %v3340 = vpack.c.b16 %v3316, %v3314
    %v3366 = vsel %vm829, %v3197, 0
    %v3369 = vsel %vm829, %v3199, 0
    %v3372 = vsel %vm829, %v3201, 0
    %v3375 = vsel %vm829, %v3203, 0
    %v3378 = vsel %vm829, %v3205, 0
    %v3381 = vsel %vm829, %v3207, 0
    %v3384 = vsel %vm829, %v3209, 0
    %v3387 = vsel %vm829, %v3211, 0
    %3389 = vmatprep.subr.bf16.mxu0 %v3318
    %3390 = vmatpush1.bf16.msra.mxu0 %v3317
    %3391 = vmatprep.subr.bf16.mxu0 %v3320
    %3392 = vmatpush1.bf16.msra.mxu0 %v3319
    %3393 = vmatprep.subr.bf16.mxu0 %v3322
    %3394 = vmatpush1.bf16.msra.mxu0 %v3321
    %3395 = vmatprep.subr.bf16.mxu0 %v3324
    %3396 = vmatpush1.bf16.msra.mxu0 %v3323
    %3397 = vmatprep.subr.bf16.mxu0 %v3326
    %3398 = vmatpush1.bf16.msra.mxu0 %v3325
    %3399 = vmatprep.subr.bf16.mxu0 %v3328
    %3400 = vmatpush1.bf16.msra.mxu0 %v3327
    %3401 = vmatprep.subr.bf16.mxu0 %v3330
    %3402 = vmatpush1.bf16.msra.mxu0 %v3329
    %3403 = vmatprep.subr.bf16.mxu0 %v3332
    %3404 = vmatpush1.bf16.msra.mxu0 %v3331
    %3405 = vmatprep.subr.bf16.mxu0 %v3334
    %3406 = vmatpush1.bf16.msra.mxu0 %v3333
    %3407 = vmatprep.subr.bf16.mxu0 %v3336
    %3408 = vmatpush1.bf16.msra.mxu0 %v3335
    %3409 = vmatprep.subr.bf16.mxu0 %v3338
    %3410 = vmatpush1.bf16.msra.mxu0 %v3337
    %3411 = vmatprep.subr.bf16.mxu0 %v3340
    %3412 = vmatpush1.bf16.msra.mxu0 %v3339
    %3413 = vmatprep.subr.bf16.mxu0 0
    %3414 = vmatpush1.bf16.msra.mxu0 0
    %3415 = vmatprep.subr.bf16.mxu0 0
    %3416 = vmatpush1.bf16.msra.mxu0 0
    %3417 = vmatprep.subr.bf16.mxu0 0
    %3418 = vmatpush1.bf16.msra.mxu0 0
    %3419 = vmatprep.subr.bf16.mxu0 0
    %3420 = vmatpush1.bf16.msra.mxu0 0
    %3421 = vmatprep.mubr.bf16.mxu0 %v3366
    %3422 = vmatmul.mubr.bf16.gmra.mrb[0].mxu0 %v3196
    %v3423 = vpop.f32.mrb[0].mxu0
    %v3424 = vadd.f32 %v3240, %v3423
    %v3425 = vpop.f32.mrb[0].mxu0
    %v3426 = vadd.f32 %v3244, %v3425
    %v3427 = vpop.f32.mrb[0].mxu0
    %v3428 = vadd.f32 %v3240, %v3427
    %v3429 = vpop.f32.mrb[0].mxu0
    %v3430 = vadd.f32 %v3244, %v3429
    %3431 = vmatprep.mubr.bf16.mxu0 %v3369
    %3432 = vmatmul.mubr.bf16.gmra.mrb[0].mxu0 %v3198
    %v3433 = vpop.f32.mrb[0].mxu0
    %v3434 = vadd.f32 %v3240, %v3433
    %v3435 = vpop.f32.mrb[0].mxu0
    %v3436 = vadd.f32 %v3244, %v3435
    %v3437 = vpop.f32.mrb[0].mxu0
    %v3438 = vadd.f32 %v3240, %v3437
    %v3439 = vpop.f32.mrb[0].mxu0
    %v3440 = vadd.f32 %v3244, %v3439
    %3441 = vmatprep.mubr.bf16.mxu0 %v3372
    %3442 = vmatmul.mubr.bf16.gmra.mrb[0].mxu0 %v3200
    %v3443 = vpop.f32.mrb[0].mxu0
    %v3444 = vadd.f32 %v3240, %v3443
    %v3445 = vpop.f32.mrb[0].mxu0
    %v3446 = vadd.f32 %v3244, %v3445
    %v3447 = vpop.f32.mrb[0].mxu0
    %v3448 = vadd.f32 %v3240, %v3447
    %v3449 = vpop.f32.mrb[0].mxu0
    %v3450 = vadd.f32 %v3244, %v3449
    %3451 = vmatprep.mubr.bf16.mxu0 %v3375
    %3452 = vmatmul.mubr.bf16.gmra.mrb[0].mxu0 %v3202
    %v3453 = vpop.f32.mrb[0].mxu0
    %v3454 = vadd.f32 %v3240, %v3453
    %v3455 = vpop.f32.mrb[0].mxu0
    %v3456 = vadd.f32 %v3244, %v3455
    %v3457 = vpop.f32.mrb[0].mxu0
    %v3458 = vadd.f32 %v3240, %v3457
    %v3459 = vpop.f32.mrb[0].mxu0
    %v3460 = vadd.f32 %v3244, %v3459
    %3461 = vmatprep.mubr.bf16.mxu0 %v3378
    %3462 = vmatmul.mubr.bf16.gmra.mrb[0].mxu0 %v3204
    %v3463 = vpop.f32.mrb[0].mxu0
    %v3464 = vadd.f32 %v3240, %v3463
    %v3465 = vpop.f32.mrb[0].mxu0
    %v3466 = vadd.f32 %v3244, %v3465
    %v3467 = vpop.f32.mrb[0].mxu0
    %v3468 = vadd.f32 %v3240, %v3467
    %v3469 = vpop.f32.mrb[0].mxu0
    %v3470 = vadd.f32 %v3244, %v3469
    %3471 = vmatprep.mubr.bf16.mxu0 %v3381
    %3472 = vmatmul.mubr.bf16.gmra.mrb[0].mxu0 %v3206
    %v3473 = vpop.f32.mrb[0].mxu0
    %v3474 = vadd.f32 %v3240, %v3473
    %v3475 = vpop.f32.mrb[0].mxu0
    %v3476 = vadd.f32 %v3244, %v3475
    %v3477 = vpop.f32.mrb[0].mxu0
    %v3478 = vadd.f32 %v3240, %v3477
    %v3479 = vpop.f32.mrb[0].mxu0
    %v3480 = vadd.f32 %v3244, %v3479
    %3481 = vmatprep.mubr.bf16.mxu0 %v3384
    %3482 = vmatmul.mubr.bf16.gmra.mrb[0].mxu0 %v3208
    %v3483 = vpop.f32.mrb[0].mxu0
    %v3484 = vadd.f32 %v3240, %v3483
    %v3485 = vpop.f32.mrb[0].mxu0
    %v3486 = vadd.f32 %v3244, %v3485
    %v3487 = vpop.f32.mrb[0].mxu0
    %v3488 = vadd.f32 %v3240, %v3487
    %v3489 = vpop.f32.mrb[0].mxu0
    %v3490 = vadd.f32 %v3244, %v3489
    %3491 = vmatprep.mubr.bf16.mxu0 %v3387
    %3492 = vmatmul.mubr.bf16.gmra.mrb[0].mxu0 %v3210
    %v3493 = vpop.f32.mrb[0].mxu0
    %v3494 = vadd.f32 %v3240, %v3493
    %v3495 = vpop.f32.mrb[0].mxu0
    %v3496 = vadd.f32 %v3244, %v3495
    %v3497 = vpop.f32.mrb[0].mxu0
    %v3498 = vadd.f32 %v3240, %v3497
    %v3499 = vpop.f32.mrb[0].mxu0
    %v3500 = vadd.f32 %v3244, %v3499
    %3501 = vdwg.mxu0
    %vm3502 = vcmp.gt.f32.partialorder %v3424, 0.0
    %vm3503 = vcmp.gt.f32.partialorder %v3426, 0.0
    %vm3504 = vcmp.gt.f32.partialorder %v3428, 0.0
    %vm3505 = vcmp.gt.f32.partialorder %v3430, 0.0
    %vm3506 = vcmp.gt.f32.partialorder %v3434, 0.0
    %vm3507 = vcmp.gt.f32.partialorder %v3436, 0.0
    %vm3508 = vcmp.gt.f32.partialorder %v3438, 0.0
    %vm3509 = vcmp.gt.f32.partialorder %v3440, 0.0
    %vm3510 = vcmp.gt.f32.partialorder %v3444, 0.0
    %vm3511 = vcmp.gt.f32.partialorder %v3446, 0.0
    %vm3512 = vcmp.gt.f32.partialorder %v3448, 0.0
    %vm3513 = vcmp.gt.f32.partialorder %v3450, 0.0
    %vm3514 = vcmp.gt.f32.partialorder %v3454, 0.0
    %vm3515 = vcmp.gt.f32.partialorder %v3456, 0.0
    %vm3516 = vcmp.gt.f32.partialorder %v3458, 0.0
    %vm3517 = vcmp.gt.f32.partialorder %v3460, 0.0
    %vm3518 = vcmp.gt.f32.partialorder %v3464, 0.0
    %vm3519 = vcmp.gt.f32.partialorder %v3466, 0.0
    %vm3520 = vcmp.gt.f32.partialorder %v3468, 0.0
    %vm3521 = vcmp.gt.f32.partialorder %v3470, 0.0
    %vm3522 = vcmp.gt.f32.partialorder %v3474, 0.0
    %vm3523 = vcmp.gt.f32.partialorder %v3476, 0.0
    %vm3524 = vcmp.gt.f32.partialorder %v3478, 0.0
    %vm3525 = vcmp.gt.f32.partialorder %v3480, 0.0
    %vm3526 = vcmp.gt.f32.partialorder %v3484, 0.0
    %vm3527 = vcmp.gt.f32.partialorder %v3486, 0.0
    %vm3528 = vcmp.gt.f32.partialorder %v3488, 0.0
    %vm3529 = vcmp.gt.f32.partialorder %v3490, 0.0
    %vm3530 = vcmp.gt.f32.partialorder %v3494, 0.0
    %vm3531 = vcmp.gt.f32.partialorder %v3496, 0.0
    %vm3532 = vcmp.gt.f32.partialorder %v3498, 0.0
    %vm3533 = vcmp.gt.f32.partialorder %v3500, 0.0
    %v3534 = vmul.f32 %v3424, 0.01
    %v3535 = vmul.f32 %v3426, 0.01
    %v3536 = vmul.f32 %v3428, 0.01
    %v3537 = vmul.f32 %v3430, 0.01
    %v3538 = vmul.f32 %v3434, 0.01
    %v3539 = vmul.f32 %v3436, 0.01
    %v3540 = vmul.f32 %v3438, 0.01
    %v3541 = vmul.f32 %v3440, 0.01
    %v3542 = vmul.f32 %v3444, 0.01
    %v3543 = vmul.f32 %v3446, 0.01
    %v3544 = vmul.f32 %v3448, 0.01
    %v3545 = vmul.f32 %v3450, 0.01
    %v3546 = vmul.f32 %v3454, 0.01
    %v3547 = vmul.f32 %v3456, 0.01
    %v3548 = vmul.f32 %v3458, 0.01
    %v3549 = vmul.f32 %v3460, 0.01
    %v3550 = vmul.f32 %v3464, 0.01
    %v3551 = vmul.f32 %v3466, 0.01
    %v3552 = vmul.f32 %v3468, 0.01
    %v3553 = vmul.f32 %v3470, 0.01
    %v3554 = vmul.f32 %v3474, 0.01
    %v3555 = vmul.f32 %v3476, 0.01
    %v3556 = vmul.f32 %v3478, 0.01
    %v3557 = vmul.f32 %v3480, 0.01
    %v3558 = vmul.f32 %v3484, 0.01
    %v3559 = vmul.f32 %v3486, 0.01
    %v3560 = vmul.f32 %v3488, 0.01
    %v3561 = vmul.f32 %v3490, 0.01
    %v3562 = vmul.f32 %v3494, 0.01
    %v3563 = vmul.f32 %v3496, 0.01
    %v3564 = vmul.f32 %v3498, 0.01
    %v3565 = vmul.f32 %v3500, 0.01
    %v3566 = vsel %vm3502, %v3424, %v3534
    %v3567 = vsel %vm3503, %v3426, %v3535
    %v3568 = vsel %vm3504, %v3428, %v3536
    %v3569 = vsel %vm3505, %v3430, %v3537
    %v3570 = vsel %vm3506, %v3434, %v3538
    %v3571 = vsel %vm3507, %v3436, %v3539
    %v3572 = vsel %vm3508, %v3438, %v3540
    %v3573 = vsel %vm3509, %v3440, %v3541
    %v3574 = vsel %vm3510, %v3444, %v3542
    %v3575 = vsel %vm3511, %v3446, %v3543
    %v3576 = vsel %vm3512, %v3448, %v3544
    %v3577 = vsel %vm3513, %v3450, %v3545
    %v3578 = vsel %vm3514, %v3454, %v3546
    %v3579 = vsel %vm3515, %v3456, %v3547
    %v3580 = vsel %vm3516, %v3458, %v3548
    %v3581 = vsel %vm3517, %v3460, %v3549
    %v3582 = vsel %vm3518, %v3464, %v3550
    %v3583 = vsel %vm3519, %v3466, %v3551
    %v3584 = vsel %vm3520, %v3468, %v3552
    %v3585 = vsel %vm3521, %v3470, %v3553
    %v3586 = vsel %vm3522, %v3474, %v3554
    %v3587 = vsel %vm3523, %v3476, %v3555
    %v3588 = vsel %vm3524, %v3478, %v3556
    %v3589 = vsel %vm3525, %v3480, %v3557
    %v3590 = vsel %vm3526, %v3484, %v3558
    %v3591 = vsel %vm3527, %v3486, %v3559
    %v3592 = vsel %vm3528, %v3488, %v3560
    %v3593 = vsel %vm3529, %v3490, %v3561
    %v3594 = vsel %vm3530, %v3494, %v3562
    %v3595 = vsel %vm3531, %v3496, %v3563
    %v3596 = vsel %vm3532, %v3498, %v3564
    %v3597 = vsel %vm3533, %v3500, %v3565
    %v3598 = vpack.c.bf16 %v3568, %v3566
    %v3599 = vpack.c.bf16 %v3569, %v3567
    %v3600 = vpack.c.bf16 %v3572, %v3570
    %v3601 = vpack.c.bf16 %v3573, %v3571
    %v3602 = vpack.c.bf16 %v3576, %v3574
    %v3603 = vpack.c.bf16 %v3577, %v3575
    %v3604 = vpack.c.bf16 %v3580, %v3578
    %v3605 = vpack.c.bf16 %v3581, %v3579
    %v3606 = vpack.c.bf16 %v3584, %v3582
    %v3607 = vpack.c.bf16 %v3585, %v3583
    %v3608 = vpack.c.bf16 %v3588, %v3586
    %v3609 = vpack.c.bf16 %v3589, %v3587
    %v3610 = vpack.c.bf16 %v3592, %v3590
    %v3611 = vpack.c.bf16 %v3593, %v3591
    %v3612 = vpack.c.bf16 %v3596, %v3594
    %v3613 = vpack.c.bf16 %v3597, %v3595
    %s3614 = scalar_lea.vmem [#allocation13], 96
    %v3615 = vld [vmem:[%s3614] sm:$0xf]
    %v3616 = vld [vmem:[%s3614 + $0x4] sm:$0xf]
    %v3617 = vld [vmem:[%s3614 + $0x8] sm:$0xf]
    %v3618 = vld [vmem:[%s3614 + $0xc] sm:$0xf]
    %v3619 = vld [vmem:[%s3614 + $0x10] sm:$0xf]
    %v3620 = vld [vmem:[%s3614 + $0x14] sm:$0xf]
    %v3621 = vld [vmem:[%s3614 + $0x18] sm:$0xf]
    %v3622 = vld [vmem:[%s3614 + $0x1c] sm:$0xf]
    %v3623 = vld [vmem:[%s3614 + $0x20] sm:$0xf]
    %v3624 = vld [vmem:[%s3614 + $0x24] sm:$0xf]
    %v3625 = vld [vmem:[%s3614 + $0x28] sm:$0xf]
    %v3626 = vld [vmem:[%s3614 + $0x2c] sm:$0xf]
    %v3627 = vld [vmem:[%s3614 + $0x30] sm:$0xf]
    %v3628 = vld [vmem:[%s3614 + $0x34] sm:$0xf]
    %v3629 = vld [vmem:[%s3614 + $0x38] sm:$0xf]
    %v3630 = vld [vmem:[%s3614 + $0x3c] sm:$0xf]
    %v3631 = vld [vmem:[%s3614 + $0x40] sm:$0xf]
    %v3632 = vld [vmem:[%s3614 + $0x44] sm:$0xf]
    %v3633 = vld [vmem:[%s3614 + $0x48] sm:$0xf]
    %v3634 = vld [vmem:[%s3614 + $0x4c] sm:$0xf]
    %v3635 = vld [vmem:[%s3614 + $0x50] sm:$0xf]
    %v3636 = vld [vmem:[%s3614 + $0x54] sm:$0xf]
    %v3637 = vld [vmem:[%s3614 + $0x58] sm:$0xf]
    %v3638 = vld [vmem:[%s3614 + $0x5c] sm:$0xf]
    %v3639 = vlaneseq
    %v3640 = vshrl.u32 %v3639, 7
    %v3641 = vsub.s32 0, %v3640
    %v3642 = vrot.slane %v153, %v3641
    %v3667 = vunpack.c.l.b16 %v3615
    %v3668 = vunpack.c.l.b16 %v3616
    %v3669 = vunpack.c.l.b16 %v3617
    %v3670 = vunpack.c.l.b16 %v3618
    %v3671 = vunpack.c.l.b16 %v3619
    %v3672 = vunpack.c.l.b16 %v3620
    %v3673 = vunpack.c.l.b16 %v3621
    %v3674 = vunpack.c.l.b16 %v3622
    %v3675 = vunpack.c.l.b16 %v3623
    %v3676 = vunpack.c.l.b16 %v3624
    %v3677 = vunpack.c.l.b16 %v3625
    %v3678 = vunpack.c.l.b16 %v3626
    %v3679 = vunpack.c.l.b16 %v3627
    %v3680 = vunpack.c.l.b16 %v3628
    %v3681 = vunpack.c.l.b16 %v3629
    %v3682 = vunpack.c.l.b16 %v3630
    %v3683 = vunpack.c.l.b16 %v3631
    %v3684 = vunpack.c.l.b16 %v3632
    %v3685 = vunpack.c.l.b16 %v3633
    %v3686 = vunpack.c.l.b16 %v3634
    %v3687 = vunpack.c.l.b16 %v3635
    %v3688 = vunpack.c.l.b16 %v3636
    %v3689 = vunpack.c.l.b16 %v3637
    %v3690 = vunpack.c.l.b16 %v3638
    %v3691 = vpack.c.b16 %v3668, %v3667
    %v3692 = vpack.c.b16 %v3670, %v3669
    %v3693 = vpack.c.b16 %v3672, %v3671
    %v3694 = vpack.c.b16 %v3674, %v3673
    %v3695 = vpack.c.b16 %v3676, %v3675
    %v3696 = vpack.c.b16 %v3678, %v3677
    %v3697 = vpack.c.b16 %v3680, %v3679
    %v3698 = vpack.c.b16 %v3682, %v3681
    %v3699 = vpack.c.b16 %v3684, %v3683
    %v3700 = vpack.c.b16 %v3686, %v3685
    %v3701 = vpack.c.b16 %v3688, %v3687
    %v3702 = vpack.c.b16 %v3690, %v3689
    %v3716 = vsel %vm829, %v3599, 0
    %v3719 = vsel %vm829, %v3601, 0
    %v3722 = vsel %vm829, %v3603, 0
    %v3725 = vsel %vm829, %v3605, 0
    %v3728 = vsel %vm829, %v3607, 0
    %v3731 = vsel %vm829, %v3609, 0
    %v3734 = vsel %vm829, %v3611, 0
    %v3737 = vsel %vm829, %v3613, 0
    %3739 = vmatprep.subr.bf16.mxu0 0
    %3740 = vmatpush1.bf16.msra.mxu0 %v3691
    %3741 = vmatprep.subr.bf16.mxu0 0
    %3742 = vmatpush1.bf16.msra.mxu0 %v3692
    %3743 = vmatprep.subr.bf16.mxu0 0
    %3744 = vmatpush1.bf16.msra.mxu0 %v3693
    %3745 = vmatprep.subr.bf16.mxu0 0
    %3746 = vmatpush1.bf16.msra.mxu0 %v3694
    %3747 = vmatprep.subr.bf16.mxu0 0
    %3748 = vmatpush1.bf16.msra.mxu0 %v3695
    %3749 = vmatprep.subr.bf16.mxu0 0
    %3750 = vmatpush1.bf16.msra.mxu0 %v3696
    %3751 = vmatprep.subr.bf16.mxu0 0
    %3752 = vmatpush1.bf16.msra.mxu0 %v3697
    %3753 = vmatprep.subr.bf16.mxu0 0
    %3754 = vmatpush1.bf16.msra.mxu0 %v3698
    %3755 = vmatprep.subr.bf16.mxu0 0
    %3756 = vmatpush1.bf16.msra.mxu0 %v3699
    %3757 = vmatprep.subr.bf16.mxu0 0
    %3758 = vmatpush1.bf16.msra.mxu0 %v3700
    %3759 = vmatprep.subr.bf16.mxu0 0
    %3760 = vmatpush1.bf16.msra.mxu0 %v3701
    %3761 = vmatprep.subr.bf16.mxu0 0
    %3762 = vmatpush1.bf16.msra.mxu0 %v3702
    %3763 = vmatprep.subr.bf16.mxu0 0
    %3764 = vmatpush1.bf16.msra.mxu0 0
    %3765 = vmatprep.subr.bf16.mxu0 0
    %3766 = vmatpush1.bf16.msra.mxu0 0
    %3767 = vmatprep.subr.bf16.mxu0 0
    %3768 = vmatpush1.bf16.msra.mxu0 0
    %3769 = vmatprep.subr.bf16.mxu0 0
    %3770 = vmatpush1.bf16.msra.mxu0 0
    %3771 = vmatprep.mubr.bf16.mxu0 %v3716
    %3772 = vmatmul.mubr.bf16.gmra.mrb[0].mxu0 %v3598
    %v3773 = vpop.f32.mrb[0].mxu0
    %v3774 = vadd.f32 %v3642, %v3773
    %v3775 = vpop.f32.mrb[0].mxu0
    %v3776 = vpop.f32.mrb[0].mxu0
    %v3777 = vadd.f32 %v3642, %v3776
    %v3778 = vpop.f32.mrb[0].mxu0
    %3779 = vmatprep.mubr.bf16.mxu0 %v3719
    %3780 = vmatmul.mubr.bf16.gmra.mrb[0].mxu0 %v3600
    %v3781 = vpop.f32.mrb[0].mxu0
    %v3782 = vadd.f32 %v3642, %v3781
    %v3783 = vpop.f32.mrb[0].mxu0
    %v3784 = vpop.f32.mrb[0].mxu0
    %v3785 = vadd.f32 %v3642, %v3784
    %v3786 = vpop.f32.mrb[0].mxu0
    %3787 = vmatprep.mubr.bf16.mxu0 %v3722
    %3788 = vmatmul.mubr.bf16.gmra.mrb[0].mxu0 %v3602
    %v3789 = vpop.f32.mrb[0].mxu0
    %v3790 = vadd.f32 %v3642, %v3789
    %v3791 = vpop.f32.mrb[0].mxu0
    %v3792 = vpop.f32.mrb[0].mxu0
    %v3793 = vadd.f32 %v3642, %v3792
    %v3794 = vpop.f32.mrb[0].mxu0
    %3795 = vmatprep.mubr.bf16.mxu0 %v3725
    %3796 = vmatmul.mubr.bf16.gmra.mrb[0].mxu0 %v3604
    %v3797 = vpop.f32.mrb[0].mxu0
    %v3798 = vadd.f32 %v3642, %v3797
    %v3799 = vpop.f32.mrb[0].mxu0
    %v3800 = vpop.f32.mrb[0].mxu0
    %v3801 = vadd.f32 %v3642, %v3800
    %v3802 = vpop.f32.mrb[0].mxu0
    %3803 = vmatprep.mubr.bf16.mxu0 %v3728
    %3804 = vmatmul.mubr.bf16.gmra.mrb[0].mxu0 %v3606
    %v3805 = vpop.f32.mrb[0].mxu0
    %v3806 = vadd.f32 %v3642, %v3805
    %v3807 = vpop.f32.mrb[0].mxu0
    %v3808 = vpop.f32.mrb[0].mxu0
    %v3809 = vadd.f32 %v3642, %v3808
    %v3810 = vpop.f32.mrb[0].mxu0
    %3811 = vmatprep.mubr.bf16.mxu0 %v3731
    %3812 = vmatmul.mubr.bf16.gmra.mrb[0].mxu0 %v3608
    %v3813 = vpop.f32.mrb[0].mxu0
    %v3814 = vadd.f32 %v3642, %v3813
    %v3815 = vpop.f32.mrb[0].mxu0
    %v3816 = vpop.f32.mrb[0].mxu0
    %v3817 = vadd.f32 %v3642, %v3816
    %v3818 = vpop.f32.mrb[0].mxu0
    %3819 = vmatprep.mubr.bf16.mxu0 %v3734
    %3820 = vmatmul.mubr.bf16.gmra.mrb[0].mxu0 %v3610
    %v3821 = vpop.f32.mrb[0].mxu0
    %v3822 = vadd.f32 %v3642, %v3821
    %v3823 = vpop.f32.mrb[0].mxu0
    %v3824 = vpop.f32.mrb[0].mxu0
    %v3825 = vadd.f32 %v3642, %v3824
    %v3826 = vpop.f32.mrb[0].mxu0
    %3827 = vmatprep.mubr.bf16.mxu0 %v3737
    %3828 = vmatmul.mubr.bf16.gmra.mrb[0].mxu0 %v3612
    %v3829 = vpop.f32.mrb[0].mxu0
    %v3830 = vadd.f32 %v3642, %v3829
    %v3831 = vpop.f32.mrb[0].mxu0
    %v3832 = vpop.f32.mrb[0].mxu0
    %v3833 = vadd.f32 %v3642, %v3832
    %v3834 = vpop.f32.mrb[0].mxu0
    %3835 = vdwg.mxu0
    %vm3836 = vcmp.gt.f32.partialorder %v3774, 0.0
    %vm3837 = vcmp.gt.f32.partialorder %v3777, 0.0
    %vm3838 = vcmp.gt.f32.partialorder %v3782, 0.0
    %vm3839 = vcmp.gt.f32.partialorder %v3785, 0.0
    %vm3840 = vcmp.gt.f32.partialorder %v3790, 0.0
    %vm3841 = vcmp.gt.f32.partialorder %v3793, 0.0
    %vm3842 = vcmp.gt.f32.partialorder %v3798, 0.0
    %vm3843 = vcmp.gt.f32.partialorder %v3801, 0.0
    %vm3844 = vcmp.gt.f32.partialorder %v3806, 0.0
    %vm3845 = vcmp.gt.f32.partialorder %v3809, 0.0
    %vm3846 = vcmp.gt.f32.partialorder %v3814, 0.0
    %vm3847 = vcmp.gt.f32.partialorder %v3817, 0.0
    %vm3848 = vcmp.gt.f32.partialorder %v3822, 0.0
    %vm3849 = vcmp.gt.f32.partialorder %v3825, 0.0
    %vm3850 = vcmp.gt.f32.partialorder %v3830, 0.0
    %vm3851 = vcmp.gt.f32.partialorder %v3833, 0.0
    %v3852 = vmul.f32 %v3774, 0.01
    %v3853 = vmul.f32 %v3777, 0.01
    %v3854 = vmul.f32 %v3782, 0.01
    %v3855 = vmul.f32 %v3785, 0.01
    %v3856 = vmul.f32 %v3790, 0.01
    %v3857 = vmul.f32 %v3793, 0.01
    %v3858 = vmul.f32 %v3798, 0.01
    %v3859 = vmul.f32 %v3801, 0.01
    %v3860 = vmul.f32 %v3806, 0.01
    %v3861 = vmul.f32 %v3809, 0.01
    %v3862 = vmul.f32 %v3814, 0.01
    %v3863 = vmul.f32 %v3817, 0.01
    %v3864 = vmul.f32 %v3822, 0.01
    %v3865 = vmul.f32 %v3825, 0.01
    %v3866 = vmul.f32 %v3830, 0.01
    %v3867 = vmul.f32 %v3833, 0.01
    %v3868 = vsel %vm3836, %v3774, %v3852
    %v3869 = vsel %vm3837, %v3777, %v3853
    %v3870 = vsel %vm3838, %v3782, %v3854
    %v3871 = vsel %vm3839, %v3785, %v3855
    %v3872 = vsel %vm3840, %v3790, %v3856
    %v3873 = vsel %vm3841, %v3793, %v3857
    %v3874 = vsel %vm3842, %v3798, %v3858
    %v3875 = vsel %vm3843, %v3801, %v3859
    %v3876 = vsel %vm3844, %v3806, %v3860
    %v3877 = vsel %vm3845, %v3809, %v3861
    %v3878 = vsel %vm3846, %v3814, %v3862
    %v3879 = vsel %vm3847, %v3817, %v3863
    %v3880 = vsel %vm3848, %v3822, %v3864
    %v3881 = vsel %vm3849, %v3825, %v3865
    %v3882 = vsel %vm3850, %v3830, %v3866
    %v3883 = vsel %vm3851, %v3833, %v3867
    %v3884 = vpack.c.bf16 %v3869, %v3868
    %v3885 = vpack.c.bf16 %v3871, %v3870
    %v3886 = vpack.c.bf16 %v3873, %v3872
    %v3887 = vpack.c.bf16 %v3875, %v3874
    %v3888 = vpack.c.bf16 %v3877, %v3876
    %v3889 = vpack.c.bf16 %v3879, %v3878
    %v3890 = vpack.c.bf16 %v3881, %v3880
    %v3891 = vpack.c.bf16 %v3883, %v3882
    %s3892 = scalar_lea.vmem [#allocation14], 48
    %v3893 = vld [vmem:[%s3892] sm:$0xf]
    %v3894 = vld [vmem:[%s3892 + $0x4] sm:$0xf]
    %v3895 = vld [vmem:[%s3892 + $0x8] sm:$0xf]
    %v3896 = vld [vmem:[%s3892 + $0xc] sm:$0xf]
    %v3897 = vld [vmem:[%s3892 + $0x10] sm:$0xf]
    %v3898 = vld [vmem:[%s3892 + $0x14] sm:$0xf]
    %v3899 = vld [vmem:[%s3892 + $0x18] sm:$0xf]
    %v3900 = vld [vmem:[%s3892 + $0x1c] sm:$0xf]
    %v3901 = vld [vmem:[%s3892 + $0x20] sm:$0xf]
    %v3902 = vld [vmem:[%s3892 + $0x24] sm:$0xf]
    %v3903 = vld [vmem:[%s3892 + $0x28] sm:$0xf]
    %v3904 = vld [vmem:[%s3892 + $0x2c] sm:$0xf]
    %v3905 = vlaneseq
    %v3906 = vshrl.u32 %v3905, 7
    %v3907 = vsub.s32 1, %v3906
    %v3908 = vrot.slane %v153, %v3907
    %v3921 = vunpack.c.l.b16 %v3893
    %v3922 = vunpack.c.l.b16 %v3894
    %v3923 = vunpack.c.l.b16 %v3895
    %v3924 = vunpack.c.l.b16 %v3896
    %v3925 = vunpack.c.l.b16 %v3897
    %v3926 = vunpack.c.l.b16 %v3898
    %v3927 = vunpack.c.l.b16 %v3899
    %v3928 = vunpack.c.l.b16 %v3900
    %v3929 = vunpack.c.l.b16 %v3901
    %v3930 = vunpack.c.l.b16 %v3902
    %v3931 = vunpack.c.l.b16 %v3903
    %v3932 = vunpack.c.l.b16 %v3904
    %v3933 = vpack.c.b16 %v3922, %v3921
    %v3934 = vpack.c.b16 %v3924, %v3923
    %v3935 = vpack.c.b16 %v3926, %v3925
    %v3936 = vpack.c.b16 %v3928, %v3927
    %v3937 = vpack.c.b16 %v3930, %v3929
    %v3938 = vpack.c.b16 %v3932, %v3931
    %v3946 = vsel %vm1408, %v3884, 0
    %v3949 = vsel %vm1408, %v3885, 0
    %v3952 = vsel %vm1408, %v3886, 0
    %v3955 = vsel %vm1408, %v3887, 0
    %v3958 = vsel %vm1408, %v3888, 0
    %v3961 = vsel %vm1408, %v3889, 0
    %v3964 = vsel %vm1408, %v3890, 0
    %v3967 = vsel %vm1408, %v3891, 0
    %3969 = vmatprep.subr.bf16.mxu0 0
    %3970 = vmatpush1.bf16.msra.mxu0 %v3933
    %3971 = vmatprep.subr.bf16.mxu0 0
    %3972 = vmatpush1.bf16.msra.mxu0 %v3934
    %3973 = vmatprep.subr.bf16.mxu0 0
    %3974 = vmatpush1.bf16.msra.mxu0 %v3935
    %3975 = vmatprep.subr.bf16.mxu0 0
    %3976 = vmatpush1.bf16.msra.mxu0 %v3936
    %3977 = vmatprep.subr.bf16.mxu0 0
    %3978 = vmatpush1.bf16.msra.mxu0 %v3937
    %3979 = vmatprep.subr.bf16.mxu0 0
    %3980 = vmatpush1.bf16.msra.mxu0 %v3938
    %3981 = vmatprep.subr.bf16.mxu0 0
    %3982 = vmatpush1.bf16.msra.mxu0 0
    %3983 = vmatprep.subr.bf16.mxu0 0
    %3984 = vmatpush1.bf16.msra.mxu0 0
    %3985 = vmatprep.subr.bf16.mxu0 0
    %3986 = vmatpush1.bf16.msra.mxu0 0
    %3987 = vmatprep.subr.bf16.mxu0 0
    %3988 = vmatpush1.bf16.msra.mxu0 0
    %3989 = vmatprep.subr.bf16.mxu0 0
    %3990 = vmatpush1.bf16.msra.mxu0 0
    %3991 = vmatprep.subr.bf16.mxu0 0
    %3992 = vmatpush1.bf16.msra.mxu0 0
    %3993 = vmatprep.subr.bf16.mxu0 0
    %3994 = vmatpush1.bf16.msra.mxu0 0
    %3995 = vmatprep.subr.bf16.mxu0 0
    %3996 = vmatpush1.bf16.msra.mxu0 0
    %3997 = vmatprep.subr.bf16.mxu0 0
    %3998 = vmatpush1.bf16.msra.mxu0 0
    %3999 = vmatprep.subr.bf16.mxu0 0
    %4000 = vmatpush1.bf16.msra.mxu0 0
    %4001 = vmatprep.mubr.bf16.mxu0 0
    %4002 = vmatmul.mubr.bf16.gmra.mrb[0].mxu0 %v3946
    %v4003 = vpop.f32.mrb[0].mxu0
    %v4004 = vadd.f32 %v3908, %v4003
    %v4005 = vpop.f32.mrb[0].mxu0
    %v4006 = vpop.f32.mrb[0].mxu0
    %v4007 = vadd.f32 %v3908, %v4006
    %v4008 = vpop.f32.mrb[0].mxu0
    %4009 = vmatprep.mubr.bf16.mxu0 0
    %4010 = vmatmul.mubr.bf16.gmra.mrb[0].mxu0 %v3949
    %v4011 = vpop.f32.mrb[0].mxu0
    %v4012 = vadd.f32 %v3908, %v4011
    %v4013 = vpop.f32.mrb[0].mxu0
    %v4014 = vpop.f32.mrb[0].mxu0
    %v4015 = vadd.f32 %v3908, %v4014
    %v4016 = vpop.f32.mrb[0].mxu0
    %4017 = vmatprep.mubr.bf16.mxu0 0
    %4018 = vmatmul.mubr.bf16.gmra.mrb[0].mxu0 %v3952
    %v4019 = vpop.f32.mrb[0].mxu0
    %v4020 = vadd.f32 %v3908, %v4019
    %v4021 = vpop.f32.mrb[0].mxu0
    %v4022 = vpop.f32.mrb[0].mxu0
    %v4023 = vadd.f32 %v3908, %v4022
    %v4024 = vpop.f32.mrb[0].mxu0
    %4025 = vmatprep.mubr.bf16.mxu0 0
    %4026 = vmatmul.mubr.bf16.gmra.mrb[0].mxu0 %v3955
    %v4027 = vpop.f32.mrb[0].mxu0
    %v4028 = vadd.f32 %v3908, %v4027
    %v4029 = vpop.f32.mrb[0].mxu0
    %v4030 = vpop.f32.mrb[0].mxu0
    %v4031 = vadd.f32 %v3908, %v4030
    %v4032 = vpop.f32.mrb[0].mxu0
    %4033 = vmatprep.mubr.bf16.mxu0 0
    %4034 = vmatmul.mubr.bf16.gmra.mrb[0].mxu0 %v3958
    %v4035 = vpop.f32.mrb[0].mxu0
    %v4036 = vadd.f32 %v3908, %v4035
    %v4037 = vpop.f32.mrb[0].mxu0
    %v4038 = vpop.f32.mrb[0].mxu0
    %v4039 = vadd.f32 %v3908, %v4038
    %v4040 = vpop.f32.mrb[0].mxu0
    %4041 = vmatprep.mubr.bf16.mxu0 0
    %4042 = vmatmul.mubr.bf16.gmra.mrb[0].mxu0 %v3961
    %v4043 = vpop.f32.mrb[0].mxu0
    %v4044 = vadd.f32 %v3908, %v4043
    %v4045 = vpop.f32.mrb[0].mxu0
    %v4046 = vpop.f32.mrb[0].mxu0
    %v4047 = vadd.f32 %v3908, %v4046
    %v4048 = vpop.f32.mrb[0].mxu0
    %4049 = vmatprep.mubr.bf16.mxu0 0
    %4050 = vmatmul.mubr.bf16.gmra.mrb[0].mxu0 %v3964
    %v4051 = vpop.f32.mrb[0].mxu0
    %v4052 = vadd.f32 %v3908, %v4051
    %v4053 = vpop.f32.mrb[0].mxu0
    %v4054 = vpop.f32.mrb[0].mxu0
    %v4055 = vadd.f32 %v3908, %v4054
    %v4056 = vpop.f32.mrb[0].mxu0
    %4057 = vmatprep.mubr.bf16.mxu0 0
    %4058 = vmatmul.mubr.bf16.gmra.mrb[0].mxu0 %v3967
    %v4059 = vpop.f32.mrb[0].mxu0
    %v4060 = vadd.f32 %v3908, %v4059
    %v4061 = vpop.f32.mrb[0].mxu0
    %v4062 = vpop.f32.mrb[0].mxu0
    %v4063 = vadd.f32 %v3908, %v4062
    %v4064 = vpop.f32.mrb[0].mxu0
    %4065 = vdwg.mxu0
    %vm4066 = vcmp.gt.f32.partialorder %v4004, 0.0
    %vm4067 = vcmp.gt.f32.partialorder %v4007, 0.0
    %vm4068 = vcmp.gt.f32.partialorder %v4012, 0.0
    %vm4069 = vcmp.gt.f32.partialorder %v4015, 0.0
    %vm4070 = vcmp.gt.f32.partialorder %v4020, 0.0
    %vm4071 = vcmp.gt.f32.partialorder %v4023, 0.0
    %vm4072 = vcmp.gt.f32.partialorder %v4028, 0.0
    %vm4073 = vcmp.gt.f32.partialorder %v4031, 0.0
    %vm4074 = vcmp.gt.f32.partialorder %v4036, 0.0
    %vm4075 = vcmp.gt.f32.partialorder %v4039, 0.0
    %vm4076 = vcmp.gt.f32.partialorder %v4044, 0.0
    %vm4077 = vcmp.gt.f32.partialorder %v4047, 0.0
    %vm4078 = vcmp.gt.f32.partialorder %v4052, 0.0
    %vm4079 = vcmp.gt.f32.partialorder %v4055, 0.0
    %vm4080 = vcmp.gt.f32.partialorder %v4060, 0.0
    %vm4081 = vcmp.gt.f32.partialorder %v4063, 0.0
    %v4082 = vmul.f32 %v4004, 0.01
    %v4083 = vmul.f32 %v4007, 0.01
    %v4084 = vmul.f32 %v4012, 0.01
    %v4085 = vmul.f32 %v4015, 0.01
    %v4086 = vmul.f32 %v4020, 0.01
    %v4087 = vmul.f32 %v4023, 0.01
    %v4088 = vmul.f32 %v4028, 0.01
    %v4089 = vmul.f32 %v4031, 0.01
    %v4090 = vmul.f32 %v4036, 0.01
    %v4091 = vmul.f32 %v4039, 0.01
    %v4092 = vmul.f32 %v4044, 0.01
    %v4093 = vmul.f32 %v4047, 0.01
    %v4094 = vmul.f32 %v4052, 0.01
    %v4095 = vmul.f32 %v4055, 0.01
    %v4096 = vmul.f32 %v4060, 0.01
    %v4097 = vmul.f32 %v4063, 0.01
    %v4098 = vsel %vm4066, %v4004, %v4082
    %v4099 = vsel %vm4067, %v4007, %v4083
    %v4100 = vsel %vm4068, %v4012, %v4084
    %v4101 = vsel %vm4069, %v4015, %v4085
    %v4102 = vsel %vm4070, %v4020, %v4086
    %v4103 = vsel %vm4071, %v4023, %v4087
    %v4104 = vsel %vm4072, %v4028, %v4088
    %v4105 = vsel %vm4073, %v4031, %v4089
    %v4106 = vsel %vm4074, %v4036, %v4090
    %v4107 = vsel %vm4075, %v4039, %v4091
    %v4108 = vsel %vm4076, %v4044, %v4092
    %v4109 = vsel %vm4077, %v4047, %v4093
    %v4110 = vsel %vm4078, %v4052, %v4094
    %v4111 = vsel %vm4079, %v4055, %v4095
    %v4112 = vsel %vm4080, %v4060, %v4096
    %v4113 = vsel %vm4081, %v4063, %v4097
    %v4114 = vlaneseq
    %v4115 = vshrl.u32 %v4114, 7
    %v4116 = vsub.s32 3, %v4115
    %v4117 = vrot.slane %v153, %v4116
    %v4118 = vmul.f32 %v4098, %v4117
    %v4119 = vmul.f32 %v4099, %v4117
    %v4120 = vmul.f32 %v4100, %v4117
    %v4121 = vmul.f32 %v4101, %v4117
    %v4122 = vmul.f32 %v4102, %v4117
    %v4123 = vmul.f32 %v4103, %v4117
    %v4124 = vmul.f32 %v4104, %v4117
    %v4125 = vmul.f32 %v4105, %v4117
    %v4126 = vmul.f32 %v4106, %v4117
    %v4127 = vmul.f32 %v4107, %v4117
    %v4128 = vmul.f32 %v4108, %v4117
    %v4129 = vmul.f32 %v4109, %v4117
    %v4130 = vmul.f32 %v4110, %v4117
    %v4131 = vmul.f32 %v4111, %v4117
    %v4132 = vmul.f32 %v4112, %v4117
    %v4133 = vmul.f32 %v4113, %v4117
    %v4134 = vsel %vm1408, %v4118, 0.0
    %4135 = vadd.xlane.f32.xlu0 %v4134
    %v4136 = vpop.xlane.xlu0 %4135
    %v4137 = vsel %vm1408, %v4119, 0.0
    %4138 = vadd.xlane.f32.xlu0 %v4137
    %v4139 = vpop.xlane.xlu0 %4138
    %v4140 = vsel %vm1408, %v4120, 0.0
    %4141 = vadd.xlane.f32.xlu0 %v4140
    %v4142 = vpop.xlane.xlu0 %4141
    %v4143 = vsel %vm1408, %v4121, 0.0
    %4144 = vadd.xlane.f32.xlu0 %v4143
    %v4145 = vpop.xlane.xlu0 %4144
    %v4146 = vsel %vm1408, %v4122, 0.0
    %4147 = vadd.xlane.f32.xlu0 %v4146
    %v4148 = vpop.xlane.xlu0 %4147
    %v4149 = vsel %vm1408, %v4123, 0.0
    %4150 = vadd.xlane.f32.xlu0 %v4149
    %v4151 = vpop.xlane.xlu0 %4150
    %v4152 = vsel %vm1408, %v4124, 0.0
    %4153 = vadd.xlane.f32.xlu0 %v4152
    %v4154 = vpop.xlane.xlu0 %4153
    %v4155 = vsel %vm1408, %v4125, 0.0
    %4156 = vadd.xlane.f32.xlu0 %v4155
    %v4157 = vpop.xlane.xlu0 %4156
    %v4158 = vsel %vm1408, %v4126, 0.0
    %4159 = vadd.xlane.f32.xlu0 %v4158
    %v4160 = vpop.xlane.xlu0 %4159
    %v4161 = vsel %vm1408, %v4127, 0.0
    %4162 = vadd.xlane.f32.xlu0 %v4161
    %v4163 = vpop.xlane.xlu0 %4162
    %v4164 = vsel %vm1408, %v4128, 0.0
    %4165 = vadd.xlane.f32.xlu0 %v4164
    %v4166 = vpop.xlane.xlu0 %4165
    %v4167 = vsel %vm1408, %v4129, 0.0
    %4168 = vadd.xlane.f32.xlu0 %v4167
    %v4169 = vpop.xlane.xlu0 %4168
    %v4170 = vsel %vm1408, %v4130, 0.0
    %4171 = vadd.xlane.f32.xlu0 %v4170
    %v4172 = vpop.xlane.xlu0 %4171
    %v4173 = vsel %vm1408, %v4131, 0.0
    %4174 = vadd.xlane.f32.xlu0 %v4173
    %v4175 = vpop.xlane.xlu0 %4174
    %v4176 = vsel %vm1408, %v4132, 0.0
    %4177 = vadd.xlane.f32.xlu0 %v4176
    %v4178 = vpop.xlane.xlu0 %4177
    %v4179 = vsel %vm1408, %v4133, 0.0
    %4180 = vadd.xlane.f32.xlu0 %v4179
    %v4181 = vpop.xlane.xlu0 %4180
    %v4182 = vsub.f32 %v4136, 1e+08
    %v4183 = vsub.f32 %v4139, 1e+08
    %v4184 = vsub.f32 %v4142, 1e+08
    %v4185 = vsub.f32 %v4145, 1e+08
    %v4186 = vsub.f32 %v4148, 1e+08
    %v4187 = vsub.f32 %v4151, 1e+08
    %v4188 = vsub.f32 %v4154, 1e+08
    %v4189 = vsub.f32 %v4157, 1e+08
    %v4190 = vsub.f32 %v4160, 1e+08
    %v4191 = vsub.f32 %v4163, 1e+08
    %v4192 = vsub.f32 %v4166, 1e+08
    %v4193 = vsub.f32 %v4169, 1e+08
    %v4194 = vsub.f32 %v4172, 1e+08
    %v4195 = vsub.f32 %v4175, 1e+08
    %v4196 = vsub.f32 %v4178, 1e+08
    %v4197 = vsub.f32 %v4181, 1e+08
    %v4214 = vlaneseq
    %v4215 = vshrl.u32 %v4214, 7
    %v4216 = vsub.s32 %v159, %v4215
    %v4217 = vrot.slane %v4182, %v4216
    %v4218 = vlaneseq
    %v4219 = vshrl.u32 %v4218, 7
    %v4220 = vsub.s32 %v159, %v4219
    %v4221 = vrot.slane %v4183, %v4220
    %v4222 = vlaneseq
    %v4223 = vshrl.u32 %v4222, 7
    %v4224 = vsub.s32 %v159, %v4223
    %v4225 = vrot.slane %v4184, %v4224
    %v4226 = vlaneseq
    %v4227 = vshrl.u32 %v4226, 7
    %v4228 = vsub.s32 %v159, %v4227
    %v4229 = vrot.slane %v4185, %v4228
    %v4230 = vlaneseq
    %v4231 = vshrl.u32 %v4230, 7
    %v4232 = vsub.s32 %v159, %v4231
    %v4233 = vrot.slane %v4186, %v4232
    %v4234 = vlaneseq
    %v4235 = vshrl.u32 %v4234, 7
    %v4236 = vsub.s32 %v159, %v4235
    %v4237 = vrot.slane %v4187, %v4236
    %v4238 = vlaneseq
    %v4239 = vshrl.u32 %v4238, 7
    %v4240 = vsub.s32 %v159, %v4239
    %v4241 = vrot.slane %v4188, %v4240
    %v4242 = vlaneseq
    %v4243 = vshrl.u32 %v4242, 7
    %v4244 = vsub.s32 %v159, %v4243
    %v4245 = vrot.slane %v4189, %v4244
    %v4246 = vlaneseq
    %v4247 = vshrl.u32 %v4246, 7
    %v4248 = vsub.s32 %v159, %v4247
    %v4249 = vrot.slane %v4190, %v4248
    %v4250 = vlaneseq
    %v4251 = vshrl.u32 %v4250, 7
    %v4252 = vsub.s32 %v159, %v4251
    %v4253 = vrot.slane %v4191, %v4252
    %v4254 = vlaneseq
    %v4255 = vshrl.u32 %v4254, 7
    %v4256 = vsub.s32 %v159, %v4255
    %v4257 = vrot.slane %v4192, %v4256
    %v4258 = vlaneseq
    %v4259 = vshrl.u32 %v4258, 7
    %v4260 = vsub.s32 %v159, %v4259
    %v4261 = vrot.slane %v4193, %v4260
    %v4262 = vlaneseq
    %v4263 = vshrl.u32 %v4262, 7
    %v4264 = vsub.s32 %v159, %v4263
    %v4265 = vrot.slane %v4194, %v4264
    %v4266 = vlaneseq
    %v4267 = vshrl.u32 %v4266, 7
    %v4268 = vsub.s32 %v159, %v4267
    %v4269 = vrot.slane %v4195, %v4268
    %v4270 = vlaneseq
    %v4271 = vshrl.u32 %v4270, 7
    %v4272 = vsub.s32 %v159, %v4271
    %v4273 = vrot.slane %v4196, %v4272
    %v4274 = vlaneseq
    %v4275 = vshrl.u32 %v4274, 7
    %v4276 = vsub.s32 %v159, %v4275
    %v4277 = vrot.slane %v4197, %v4276
    %v4278 = vsel %vm1744, %v4221, %v4217
    %v4279 = vsel %vm1746, %v4225, %v4278
    %v4280 = vsel %vm1748, %v4229, %v4279
    %v4281 = vsel %vm1750, %v4233, %v4280
    %v4282 = vsel %vm1752, %v4237, %v4281
    %v4283 = vsel %vm1754, %v4241, %v4282
    %v4284 = vsel %vm1756, %v4245, %v4283
    %v4285 = vsel %vm1744, %v4253, %v4249
    %v4286 = vsel %vm1746, %v4257, %v4285
    %v4287 = vsel %vm1748, %v4261, %v4286
    %v4288 = vsel %vm1750, %v4265, %v4287
    %v4289 = vsel %vm1752, %v4269, %v4288
    %v4290 = vsel %vm1754, %v4273, %v4289
    %v4291 = vsel %vm1756, %v4277, %v4290
    %v4310 = vlaneseq
    %v4311 = vshrl.u32 %v4310, 7
    %v4312 = vsub.s32 %v159, %v4311
    %v4313 = vrot.slane %v4136, %v4312
    %v4314 = vlaneseq
    %v4315 = vshrl.u32 %v4314, 7
    %v4316 = vsub.s32 %v159, %v4315
    %v4317 = vrot.slane %v4139, %v4316
    %v4318 = vlaneseq
    %v4319 = vshrl.u32 %v4318, 7
    %v4320 = vsub.s32 %v159, %v4319
    %v4321 = vrot.slane %v4142, %v4320
    %v4322 = vlaneseq
    %v4323 = vshrl.u32 %v4322, 7
    %v4324 = vsub.s32 %v159, %v4323
    %v4325 = vrot.slane %v4145, %v4324
    %v4326 = vlaneseq
    %v4327 = vshrl.u32 %v4326, 7
    %v4328 = vsub.s32 %v159, %v4327
    %v4329 = vrot.slane %v4148, %v4328
    %v4330 = vlaneseq
    %v4331 = vshrl.u32 %v4330, 7
    %v4332 = vsub.s32 %v159, %v4331
    %v4333 = vrot.slane %v4151, %v4332
    %v4334 = vlaneseq
    %v4335 = vshrl.u32 %v4334, 7
    %v4336 = vsub.s32 %v159, %v4335
    %v4337 = vrot.slane %v4154, %v4336
    %v4338 = vlaneseq
    %v4339 = vshrl.u32 %v4338, 7
    %v4340 = vsub.s32 %v159, %v4339
    %v4341 = vrot.slane %v4157, %v4340
    %v4342 = vlaneseq
    %v4343 = vshrl.u32 %v4342, 7
    %v4344 = vsub.s32 %v159, %v4343
    %v4345 = vrot.slane %v4160, %v4344
    %v4346 = vlaneseq
    %v4347 = vshrl.u32 %v4346, 7
    %v4348 = vsub.s32 %v159, %v4347
    %v4349 = vrot.slane %v4163, %v4348
    %v4350 = vlaneseq
    %v4351 = vshrl.u32 %v4350, 7
    %v4352 = vsub.s32 %v159, %v4351
    %v4353 = vrot.slane %v4166, %v4352
    %v4354 = vlaneseq
    %v4355 = vshrl.u32 %v4354, 7
    %v4356 = vsub.s32 %v159, %v4355
    %v4357 = vrot.slane %v4169, %v4356
    %v4358 = vlaneseq
    %v4359 = vshrl.u32 %v4358, 7
    %v4360 = vsub.s32 %v159, %v4359
    %v4361 = vrot.slane %v4172, %v4360
    %v4362 = vlaneseq
    %v4363 = vshrl.u32 %v4362, 7
    %v4364 = vsub.s32 %v159, %v4363
    %v4365 = vrot.slane %v4175, %v4364
    %v4366 = vlaneseq
    %v4367 = vshrl.u32 %v4366, 7
    %v4368 = vsub.s32 %v159, %v4367
    %v4369 = vrot.slane %v4178, %v4368
    %v4370 = vlaneseq
    %v4371 = vshrl.u32 %v4370, 7
    %v4372 = vsub.s32 %v159, %v4371
    %v4373 = vrot.slane %v4181, %v4372
    %v4374 = vsel %vm1744, %v4317, %v4313
    %v4375 = vsel %vm1746, %v4321, %v4374
    %v4376 = vsel %vm1748, %v4325, %v4375
    %v4377 = vsel %vm1750, %v4329, %v4376
    %v4378 = vsel %vm1752, %v4333, %v4377
    %v4379 = vsel %vm1754, %v4337, %v4378
    %v4380 = vsel %vm1756, %v4341, %v4379
    %v4381 = vsel %vm1744, %v4349, %v4345
    %v4382 = vsel %vm1746, %v4353, %v4381
    %v4383 = vsel %vm1748, %v4357, %v4382
    %v4384 = vsel %vm1750, %v4361, %v4383
    %v4385 = vsel %vm1752, %v4365, %v4384
    %v4386 = vsel %vm1754, %v4369, %v4385
    %v4387 = vsel %vm1756, %v4373, %v4386
    %v4390 = vsel %vm1663, %v4284, %v4380
    %v4391 = vsel %vm1663, %v4291, %v4387
    %v4392 = vsel %vm1865, %v4390, -inf
    %4393 = vmax.xlane.f32.xlu0 %v4392
    %v4394 = vpop.xlane.xlu0 %4393
    %v4395 = vsel %vm1865, %v4391, -inf
    %4396 = vmax.xlane.f32.xlu0 %v4395
    %v4397 = vpop.xlane.xlu0 %4396
    %v4398 = vsub.f32 %v4390, %v4394
    %v4399 = vsub.f32 %v4391, %v4397
    %v4400 = vmul.f32 %v4398, 1.442695
    %v4401 = vpow.pop %v4400
    %v4402 = vmul.f32 %v4399, 1.442695
    %v4403 = vpow.pop %v4402
    %v4404 = vsel %vm1865, %v4401, 0.0
    %4405 = vadd.xlane.f32.xlu0 %v4404
    %v4406 = vpop.xlane.xlu0 %4405
    %v4407 = vsel %vm1865, %v4403, 0.0
    %4408 = vadd.xlane.f32.xlu0 %v4407
    %v4409 = vpop.xlane.xlu0 %4408
    %v4410 = vrcp.pop %v4406
    %v4411 = vrcp.pop %v4409
    %v4412 = vmul.f32 %v4401, %v4410
    %v4413 = vmul.f32 %v4403, %v4411
    %v4414 = vcombine.high %v4412, 0.0
    %v4416 = vunpack.c.l.s4 1983009808
    %v4417 = vunpack.c.0.s8 %v4416
    %v4418 = vlaneseq
    %v4419 = vshrl.u32 %v4418, 7
    %v4420 = vsub.s32 %v4417, %v4419
    %v4421 = vrot.slane %v4412, %v4420
    %v4423 = vunpack.c.l.s4 1983009808
    %v4424 = vunpack.c.0.s8 %v4423
    %v4425 = vlaneseq
    %v4426 = vshrl.u32 %v4425, 7
    %v4427 = vsub.s32 %v4424, %v4426
    %v4428 = vrot.slane %v4414, %v4427
    %v4429 = vcombine.high %v4421, 0.0
    %v4431 = vunpack.c.l.s4 1934713408
    %v4432 = vunpack.c.0.s8 %v4431
    %v4433 = vlaneseq
    %v4434 = vshrl.u32 %v4433, 7
    %v4435 = vsub.s32 %v4432, %v4434
    %v4436 = vrot.slane %v4421, %v4435
    %v4438 = vunpack.c.l.s4 1934713408
    %v4439 = vunpack.c.0.s8 %v4438
    %v4440 = vlaneseq
    %v4441 = vshrl.u32 %v4440, 7
    %v4442 = vsub.s32 %v4439, %v4441
    %v4443 = vrot.slane %v4429, %v4442
    %v4444 = vcombine.high %v4428, 0.0
    %v4446 = vunpack.c.l.s4 1934713408
    %v4447 = vunpack.c.0.s8 %v4446
    %v4448 = vlaneseq
    %v4449 = vshrl.u32 %v4448, 7
    %v4450 = vsub.s32 %v4447, %v4449
    %v4451 = vrot.slane %v4428, %v4450
    %v4453 = vunpack.c.l.s4 1934713408
    %v4454 = vunpack.c.0.s8 %v4453
    %v4455 = vlaneseq
    %v4456 = vshrl.u32 %v4455, 7
    %v4457 = vsub.s32 %v4454, %v4456
    %v4458 = vrot.slane %v4444, %v4457
    %v4459 = vcombine.high %v4436, 0.0
    %v4460 = vcombine.high %v4443, 0.0
    %v4461 = vcombine.high %v4451, 0.0
    %v4462 = vcombine.high %v4458, 0.0
    %v4463 = vcombine.high %v4413, 0.0
    %v4465 = vunpack.c.l.s4 1983009808
    %v4466 = vunpack.c.0.s8 %v4465
    %v4467 = vlaneseq
    %v4468 = vshrl.u32 %v4467, 7
    %v4469 = vsub.s32 %v4466, %v4468
    %v4470 = vrot.slane %v4413, %v4469
    %v4472 = vunpack.c.l.s4 1983009808
    %v4473 = vunpack.c.0.s8 %v4472
    %v4474 = vlaneseq
    %v4475 = vshrl.u32 %v4474, 7
    %v4476 = vsub.s32 %v4473, %v4475
    %v4477 = vrot.slane %v4463, %v4476
    %v4478 = vcombine.high %v4470, 0.0
    %v4480 = vunpack.c.l.s4 1934713408
    %v4481 = vunpack.c.0.s8 %v4480
    %v4482 = vlaneseq
    %v4483 = vshrl.u32 %v4482, 7
    %v4484 = vsub.s32 %v4481, %v4483
    %v4485 = vrot.slane %v4470, %v4484
    %v4487 = vunpack.c.l.s4 1934713408
    %v4488 = vunpack.c.0.s8 %v4487
    %v4489 = vlaneseq
    %v4490 = vshrl.u32 %v4489, 7
    %v4491 = vsub.s32 %v4488, %v4490
    %v4492 = vrot.slane %v4478, %v4491
    %v4493 = vcombine.high %v4477, 0.0
    %v4495 = vunpack.c.l.s4 1934713408
    %v4496 = vunpack.c.0.s8 %v4495
    %v4497 = vlaneseq
    %v4498 = vshrl.u32 %v4497, 7
    %v4499 = vsub.s32 %v4496, %v4498
    %v4500 = vrot.slane %v4477, %v4499
    %v4502 = vunpack.c.l.s4 1934713408
    %v4503 = vunpack.c.0.s8 %v4502
    %v4504 = vlaneseq
    %v4505 = vshrl.u32 %v4504, 7
    %v4506 = vsub.s32 %v4503, %v4505
    %v4507 = vrot.slane %v4493, %v4506
    %v4508 = vcombine.high %v4485, 0.0
    %v4509 = vcombine.high %v4492, 0.0
    %v4510 = vcombine.high %v4500, 0.0
    %v4511 = vcombine.high %v4507, 0.0
    %4514 = vrot.lane.b32.xlu0 %v4459, 8
    %v4515 = vpop.permute.xlu0 %4514
    %4516 = vrot.lane.b32.xlu0 %v4508, 8
    %v4517 = vpop.permute.xlu0 %4516
    %4522 = vrot.lane.b32.xlu0 %v4443, 16
    %v4523 = vpop.permute.xlu0 %4522
    %4524 = vrot.lane.b32.xlu0 %v4492, 16
    %v4525 = vpop.permute.xlu0 %4524
    %4530 = vrot.lane.b32.xlu0 %v4460, 24
    %v4531 = vpop.permute.xlu0 %4530
    %4532 = vrot.lane.b32.xlu0 %v4509, 24
    %v4533 = vpop.permute.xlu0 %4532
    %4538 = vrot.lane.b32.xlu0 %v4451, 32
    %v4539 = vpop.permute.xlu0 %4538
    %4540 = vrot.lane.b32.xlu0 %v4500, 32
    %v4541 = vpop.permute.xlu0 %4540
    %4546 = vrot.lane.b32.xlu0 %v4461, 40
    %v4547 = vpop.permute.xlu0 %4546
    %4548 = vrot.lane.b32.xlu0 %v4510, 40
    %v4549 = vpop.permute.xlu0 %4548
    %4554 = vrot.lane.b32.xlu0 %v4458, 48
    %v4555 = vpop.permute.xlu0 %4554
    %4556 = vrot.lane.b32.xlu0 %v4507, 48
    %v4557 = vpop.permute.xlu0 %4556
    %4562 = vrot.lane.b32.xlu0 %v4462, 56
    %v4563 = vpop.permute.xlu0 %4562
    %4564 = vrot.lane.b32.xlu0 %v4511, 56
    %v4565 = vpop.permute.xlu0 %4564
    %v4568 = vsel %vm1865, %v4436, %v4515
    %v4569 = vsel %vm1865, %v4485, %v4517
    %v4570 = vsel %vm2044, %v4568, %v4523
    %v4571 = vsel %vm2044, %v4569, %v4525
    %v4572 = vsel %vm2047, %v4570, %v4531
    %v4573 = vsel %vm2047, %v4571, %v4533
    %v4574 = vsel %vm2050, %v4572, %v4539
    %v4575 = vsel %vm2050, %v4573, %v4541
    %v4576 = vsel %vm2053, %v4574, %v4547
    %v4577 = vsel %vm2053, %v4575, %v4549
    %v4578 = vsel %vm427, %v4576, %v4555
    %v4579 = vsel %vm427, %v4577, %v4557
    %v4580 = vsel %vm2058, %v4578, %v4563
    %v4581 = vsel %vm2058, %v4579, %v4565
    %4582 = vst.msk [vmem:[%s11 + $0x1] sm:$0x1] %vm2061, %v4580
    %4583 = vst.msk [vmem:[%s11 + $0x5] sm:$0x1] %vm2061, %v4581
    %v4584 = vlaneseq
    %v4585 = vshrl.u32 %v4584, 7
    %v4586 = vsub.s32 0, %v4585
    %v4587 = vrot.slane %v4412, %v4586
    %4589 = vbcast.lane.b32.xlu0 %v4587, 256
    %v4590 = vpop.permute.xlu0 %4589
    %v4591 = vlaneseq
    %v4592 = vshrl.u32 %v4591, 7
    %v4593 = vsub.s32 1, %v4592
    %v4594 = vrot.slane %v4412, %v4593
    %4596 = vbcast.lane.b32.xlu0 %v4594, 256
    %v4597 = vpop.permute.xlu0 %4596
    %v4598 = vlaneseq
    %v4599 = vshrl.u32 %v4598, 7
    %v4600 = vsub.s32 2, %v4599
    %v4601 = vrot.slane %v4412, %v4600
    %4603 = vbcast.lane.b32.xlu0 %v4601, 256
    %v4604 = vpop.permute.xlu0 %4603
    %v4605 = vlaneseq
    %v4606 = vshrl.u32 %v4605, 7
    %v4607 = vsub.s32 3, %v4606
    %v4608 = vrot.slane %v4412, %v4607
    %4610 = vbcast.lane.b32.xlu0 %v4608, 256
    %v4611 = vpop.permute.xlu0 %4610
    %v4612 = vlaneseq
    %v4613 = vshrl.u32 %v4612, 7
    %v4614 = vsub.s32 4, %v4613
    %v4615 = vrot.slane %v4412, %v4614
    %4617 = vbcast.lane.b32.xlu0 %v4615, 256
    %v4618 = vpop.permute.xlu0 %4617
    %v4619 = vlaneseq
    %v4620 = vshrl.u32 %v4619, 7
    %v4621 = vsub.s32 5, %v4620
    %v4622 = vrot.slane %v4412, %v4621
    %4624 = vbcast.lane.b32.xlu0 %v4622, 256
    %v4625 = vpop.permute.xlu0 %4624
    %v4626 = vlaneseq
    %v4627 = vshrl.u32 %v4626, 7
    %v4628 = vsub.s32 6, %v4627
    %v4629 = vrot.slane %v4412, %v4628
    %4631 = vbcast.lane.b32.xlu0 %v4629, 256
    %v4632 = vpop.permute.xlu0 %4631
    %v4633 = vlaneseq
    %v4634 = vshrl.u32 %v4633, 7
    %v4635 = vsub.s32 7, %v4634
    %v4636 = vrot.slane %v4412, %v4635
    %4638 = vbcast.lane.b32.xlu0 %v4636, 256
    %v4639 = vpop.permute.xlu0 %4638
    %v4640 = vlaneseq
    %v4641 = vshrl.u32 %v4640, 7
    %v4642 = vsub.s32 0, %v4641
    %v4643 = vrot.slane %v4413, %v4642
    %4645 = vbcast.lane.b32.xlu0 %v4643, 256
    %v4646 = vpop.permute.xlu0 %4645
    %v4647 = vlaneseq
    %v4648 = vshrl.u32 %v4647, 7
    %v4649 = vsub.s32 1, %v4648
    %v4650 = vrot.slane %v4413, %v4649
    %4652 = vbcast.lane.b32.xlu0 %v4650, 256
    %v4653 = vpop.permute.xlu0 %4652
    %v4654 = vlaneseq
    %v4655 = vshrl.u32 %v4654, 7
    %v4656 = vsub.s32 2, %v4655
    %v4657 = vrot.slane %v4413, %v4656
    %4659 = vbcast.lane.b32.xlu0 %v4657, 256
    %v4660 = vpop.permute.xlu0 %4659
    %v4661 = vlaneseq
    %v4662 = vshrl.u32 %v4661, 7
    %v4663 = vsub.s32 3, %v4662
    %v4664 = vrot.slane %v4413, %v4663
    %4666 = vbcast.lane.b32.xlu0 %v4664, 256
    %v4667 = vpop.permute.xlu0 %4666
    %v4668 = vlaneseq
    %v4669 = vshrl.u32 %v4668, 7
    %v4670 = vsub.s32 4, %v4669
    %v4671 = vrot.slane %v4413, %v4670
    %4673 = vbcast.lane.b32.xlu0 %v4671, 256
    %v4674 = vpop.permute.xlu0 %4673
    %v4675 = vlaneseq
    %v4676 = vshrl.u32 %v4675, 7
    %v4677 = vsub.s32 5, %v4676
    %v4678 = vrot.slane %v4413, %v4677
    %4680 = vbcast.lane.b32.xlu0 %v4678, 256
    %v4681 = vpop.permute.xlu0 %4680
    %v4682 = vlaneseq
    %v4683 = vshrl.u32 %v4682, 7
    %v4684 = vsub.s32 6, %v4683
    %v4685 = vrot.slane %v4413, %v4684
    %4687 = vbcast.lane.b32.xlu0 %v4685, 256
    %v4688 = vpop.permute.xlu0 %4687
    %v4689 = vlaneseq
    %v4690 = vshrl.u32 %v4689, 7
    %v4691 = vsub.s32 7, %v4690
    %v4692 = vrot.slane %v4413, %v4691
    %4694 = vbcast.lane.b32.xlu0 %v4692, 256
    %v4695 = vpop.permute.xlu0 %4694
    %v4696 = vmul.f32 %v4590, %v161
    %v4697 = vmul.f32 %v4597, %v161
    %v4698 = vmul.f32 %v4604, %v161
    %v4699 = vmul.f32 %v4611, %v161
    %v4700 = vmul.f32 %v4618, %v161
    %v4701 = vmul.f32 %v4625, %v161
    %v4702 = vmul.f32 %v4632, %v161
    %v4703 = vmul.f32 %v4639, %v161
    %v4704 = vmul.f32 %v4646, %v162
    %v4705 = vmul.f32 %v4653, %v162
    %v4706 = vmul.f32 %v4660, %v162
    %v4707 = vmul.f32 %v4667, %v162
    %v4708 = vmul.f32 %v4674, %v162
    %v4709 = vmul.f32 %v4681, %v162
    %v4710 = vmul.f32 %v4688, %v162
    %v4711 = vmul.f32 %v4695, %v162
    %v4712 = vsel %vm427, %v4696, 0.0
    %v4713 = vrot.slane %v4712, 4
    %v4714 = vadd.f32 %v4712, %v4713
    %v4715 = vrot.slane %v4714, 2
    %v4716 = vadd.f32 %v4714, %v4715
    %v4717 = vrot.slane %v4716, 1
    %v4718 = vadd.f32 %v4716, %v4717
    %v4719 = vsel %vm427, %v4697, 0.0
    %v4720 = vrot.slane %v4719, 4
    %v4721 = vadd.f32 %v4719, %v4720
    %v4722 = vrot.slane %v4721, 2
    %v4723 = vadd.f32 %v4721, %v4722
    %v4724 = vrot.slane %v4723, 1
    %v4725 = vadd.f32 %v4723, %v4724
    %v4726 = vsel %vm427, %v4698, 0.0
    %v4727 = vrot.slane %v4726, 4
    %v4728 = vadd.f32 %v4726, %v4727
    %v4729 = vrot.slane %v4728, 2
    %v4730 = vadd.f32 %v4728, %v4729
    %v4731 = vrot.slane %v4730, 1
    %v4732 = vadd.f32 %v4730, %v4731
    %v4733 = vsel %vm427, %v4699, 0.0
    %v4734 = vrot.slane %v4733, 4
    %v4735 = vadd.f32 %v4733, %v4734
    %v4736 = vrot.slane %v4735, 2
    %v4737 = vadd.f32 %v4735, %v4736
    %v4738 = vrot.slane %v4737, 1
    %v4739 = vadd.f32 %v4737, %v4738
    %v4740 = vsel %vm427, %v4700, 0.0
    %v4741 = vrot.slane %v4740, 4
    %v4742 = vadd.f32 %v4740, %v4741
    %v4743 = vrot.slane %v4742, 2
    %v4744 = vadd.f32 %v4742, %v4743
    %v4745 = vrot.slane %v4744, 1
    %v4746 = vadd.f32 %v4744, %v4745
    %v4747 = vsel %vm427, %v4701, 0.0
    %v4748 = vrot.slane %v4747, 4
    %v4749 = vadd.f32 %v4747, %v4748
    %v4750 = vrot.slane %v4749, 2
    %v4751 = vadd.f32 %v4749, %v4750
    %v4752 = vrot.slane %v4751, 1
    %v4753 = vadd.f32 %v4751, %v4752
    %v4754 = vsel %vm427, %v4702, 0.0
    %v4755 = vrot.slane %v4754, 4
    %v4756 = vadd.f32 %v4754, %v4755
    %v4757 = vrot.slane %v4756, 2
    %v4758 = vadd.f32 %v4756, %v4757
    %v4759 = vrot.slane %v4758, 1
    %v4760 = vadd.f32 %v4758, %v4759
    %v4761 = vsel %vm427, %v4703, 0.0
    %v4762 = vrot.slane %v4761, 4
    %v4763 = vadd.f32 %v4761, %v4762
    %v4764 = vrot.slane %v4763, 2
    %v4765 = vadd.f32 %v4763, %v4764
    %v4766 = vrot.slane %v4765, 1
    %v4767 = vadd.f32 %v4765, %v4766
    %v4768 = vsel %vm427, %v4704, 0.0
    %v4769 = vrot.slane %v4768, 4
    %v4770 = vadd.f32 %v4768, %v4769
    %v4771 = vrot.slane %v4770, 2
    %v4772 = vadd.f32 %v4770, %v4771
    %v4773 = vrot.slane %v4772, 1
    %v4774 = vadd.f32 %v4772, %v4773
    %v4775 = vsel %vm427, %v4705, 0.0
    %v4776 = vrot.slane %v4775, 4
    %v4777 = vadd.f32 %v4775, %v4776
    %v4778 = vrot.slane %v4777, 2
    %v4779 = vadd.f32 %v4777, %v4778
    %v4780 = vrot.slane %v4779, 1
    %v4781 = vadd.f32 %v4779, %v4780
    %v4782 = vsel %vm427, %v4706, 0.0
    %v4783 = vrot.slane %v4782, 4
    %v4784 = vadd.f32 %v4782, %v4783
    %v4785 = vrot.slane %v4784, 2
    %v4786 = vadd.f32 %v4784, %v4785
    %v4787 = vrot.slane %v4786, 1
    %v4788 = vadd.f32 %v4786, %v4787
    %v4789 = vsel %vm427, %v4707, 0.0
    %v4790 = vrot.slane %v4789, 4
    %v4791 = vadd.f32 %v4789, %v4790
    %v4792 = vrot.slane %v4791, 2
    %v4793 = vadd.f32 %v4791, %v4792
    %v4794 = vrot.slane %v4793, 1
    %v4795 = vadd.f32 %v4793, %v4794
    %v4796 = vsel %vm427, %v4708, 0.0
    %v4797 = vrot.slane %v4796, 4
    %v4798 = vadd.f32 %v4796, %v4797
    %v4799 = vrot.slane %v4798, 2
    %v4800 = vadd.f32 %v4798, %v4799
    %v4801 = vrot.slane %v4800, 1
    %v4802 = vadd.f32 %v4800, %v4801
    %v4803 = vsel %vm427, %v4709, 0.0
    %v4804 = vrot.slane %v4803, 4
    %v4805 = vadd.f32 %v4803, %v4804
    %v4806 = vrot.slane %v4805, 2
    %v4807 = vadd.f32 %v4805, %v4806
    %v4808 = vrot.slane %v4807, 1
    %v4809 = vadd.f32 %v4807, %v4808
    %v4810 = vsel %vm427, %v4710, 0.0
    %v4811 = vrot.slane %v4810, 4
    %v4812 = vadd.f32 %v4810, %v4811
    %v4813 = vrot.slane %v4812, 2
    %v4814 = vadd.f32 %v4812, %v4813
    %v4815 = vrot.slane %v4814, 1
    %v4816 = vadd.f32 %v4814, %v4815
    %v4817 = vsel %vm427, %v4711, 0.0
    %v4818 = vrot.slane %v4817, 4
    %v4819 = vadd.f32 %v4817, %v4818
    %v4820 = vrot.slane %v4819, 2
    %v4821 = vadd.f32 %v4819, %v4820
    %v4822 = vrot.slane %v4821, 1
    %v4823 = vadd.f32 %v4821, %v4822
    %v4824 = vld [vmem:[#allocation10] sm:$0xf]
    %v4825 = vld [vmem:[#allocation10 + $0x4] sm:$0xf]
    %v4826 = vld [vmem:[#allocation10 + $0x8] sm:$0xf]
    %v4827 = vld [vmem:[#allocation10 + $0xc] sm:$0xf]
    %v4828 = vld [vmem:[#allocation10 + $0x10] sm:$0xf]
    %v4829 = vld [vmem:[#allocation10 + $0x14] sm:$0xf]
    %v4830 = vpack.c.bf16 %v4718, %v4718
    %v4831 = vpack.c.bf16 %v4725, %v4725
    %v4832 = vpack.c.bf16 %v4732, %v4732
    %v4833 = vpack.c.bf16 %v4739, %v4739
    %v4834 = vpack.c.bf16 %v4746, %v4746
    %v4835 = vpack.c.bf16 %v4753, %v4753
    %v4836 = vpack.c.bf16 %v4760, %v4760
    %v4837 = vpack.c.bf16 %v4767, %v4767
    %v4838 = vpack.c.bf16 %v4774, %v4774
    %v4839 = vpack.c.bf16 %v4781, %v4781
    %v4840 = vpack.c.bf16 %v4788, %v4788
    %v4841 = vpack.c.bf16 %v4795, %v4795
    %v4842 = vpack.c.bf16 %v4802, %v4802
    %v4843 = vpack.c.bf16 %v4809, %v4809
    %v4844 = vpack.c.bf16 %v4816, %v4816
    %v4845 = vpack.c.bf16 %v4823, %v4823
    %s4846 = scalar_lea.vmem [#allocation10], 48
    %v4847 = vld [vmem:[%s4846] sm:$0xf]
    %v4848 = vld [vmem:[%s4846 + $0x4] sm:$0xf]
    %v4849 = vld [vmem:[%s4846 + $0x8] sm:$0xf]
    %v4850 = vld [vmem:[%s4846 + $0xc] sm:$0xf]
    %v4851 = vld [vmem:[%s4846 + $0x10] sm:$0xf]
    %v4852 = vld [vmem:[%s4846 + $0x14] sm:$0xf]
    %v4869 = vunpack.c.l.b16 %v4830
    %v4870 = vunpack.c.l.b16 %v4831
    %v4871 = vunpack.c.l.b16 %v4832
    %v4872 = vunpack.c.l.b16 %v4833
    %v4873 = vunpack.c.l.b16 %v4834
    %v4874 = vunpack.c.l.b16 %v4835
    %v4875 = vunpack.c.l.b16 %v4836
    %v4876 = vunpack.c.l.b16 %v4837
    %v4877 = vunpack.c.l.b16 %v4838
    %v4878 = vunpack.c.l.b16 %v4839
    %v4879 = vunpack.c.l.b16 %v4840
    %v4880 = vunpack.c.l.b16 %v4841
    %v4881 = vunpack.c.l.b16 %v4842
    %v4882 = vunpack.c.l.b16 %v4843
    %v4883 = vunpack.c.l.b16 %v4844
    %v4884 = vunpack.c.l.b16 %v4845
    %v4885 = vsel %vm1744, %v4870, %v4869
    %v4886 = vsel %vm1746, %v4871, %v4885
    %v4887 = vsel %vm1748, %v4872, %v4886
    %v4888 = vsel %vm1750, %v4873, %v4887
    %v4889 = vsel %vm1752, %v4874, %v4888
    %v4890 = vsel %vm1754, %v4875, %v4889
    %v4891 = vsel %vm1756, %v4876, %v4890
    %v4892 = vsel %vm1744, %v4878, %v4877
    %v4893 = vsel %vm1746, %v4879, %v4892
    %v4894 = vsel %vm1748, %v4880, %v4893
    %v4895 = vsel %vm1750, %v4881, %v4894
    %v4896 = vsel %vm1752, %v4882, %v4895
    %v4897 = vsel %vm1754, %v4883, %v4896
    %v4898 = vsel %vm1756, %v4884, %v4897
    %v4899 = vpack.c.b16 %v4898, %v4891
    %v4906 = vunpack.c.l.b16 %v4847
    %v4907 = vunpack.c.l.b16 %v4848
    %v4908 = vunpack.c.l.b16 %v4849
    %v4909 = vunpack.c.l.b16 %v4850
    %v4910 = vunpack.c.l.b16 %v4851
    %v4911 = vunpack.c.l.b16 %v4852
    %v4912 = vpack.c.b16 %v4907, %v4906
    %v4913 = vpack.c.b16 %v4909, %v4908
    %v4914 = vpack.c.b16 %v4911, %v4910
    %v4919 = vsel %vm427, %v4899, 0
    %4921 = vmatprep.subr.bf16.mxu0 0
    %4922 = vmatpush1.bf16.msra.mxu0 %v4912
    %4923 = vmatprep.subr.bf16.mxu0 0
    %4924 = vmatpush1.bf16.msra.mxu0 %v4913
    %4925 = vmatprep.subr.bf16.mxu0 0
    %4926 = vmatpush1.bf16.msra.mxu0 %v4914
    %4927 = vmatprep.subr.bf16.mxu0 0
    %4928 = vmatpush1.bf16.msra.mxu0 0
    %4929 = vmatprep.subr.bf16.mxu0 0
    %4930 = vmatpush1.bf16.msra.mxu0 0
    %4931 = vmatprep.subr.bf16.mxu0 0
    %4932 = vmatpush1.bf16.msra.mxu0 0
    %4933 = vmatprep.subr.bf16.mxu0 0
    %4934 = vmatpush1.bf16.msra.mxu0 0
    %4935 = vmatprep.subr.bf16.mxu0 0
    %4936 = vmatpush1.bf16.msra.mxu0 0
    %4937 = vmatprep.subr.bf16.mxu0 0
    %4938 = vmatpush1.bf16.msra.mxu0 0
    %4939 = vmatprep.subr.bf16.mxu0 0
    %4940 = vmatpush1.bf16.msra.mxu0 0
    %4941 = vmatprep.subr.bf16.mxu0 0
    %4942 = vmatpush1.bf16.msra.mxu0 0
    %4943 = vmatprep.subr.bf16.mxu0 0
    %4944 = vmatpush1.bf16.msra.mxu0 0
    %4945 = vmatprep.subr.bf16.mxu0 0
    %4946 = vmatpush1.bf16.msra.mxu0 0
    %4947 = vmatprep.subr.bf16.mxu0 0
    %4948 = vmatpush1.bf16.msra.mxu0 0
    %4949 = vmatprep.subr.bf16.mxu0 0
    %4950 = vmatpush1.bf16.msra.mxu0 0
    %4951 = vmatprep.subr.bf16.mxu0 0
    %4952 = vmatpush1.bf16.msra.mxu0 0
    %4953 = vmatprep.mubr.bf16.mxu0 0
    %4954 = vmatmul.mubr.bf16.gmra.mrb[0].mxu0 %v4919
    %v4955 = vpop.f32.mrb[0].mxu0
    %v4956 = vadd.f32 0.0, %v4955
    %v4957 = vpop.f32.mrb[0].mxu0
    %v4958 = vpop.f32.mrb[0].mxu0
    %v4959 = vadd.f32 0.0, %v4958
    %v4960 = vpop.f32.mrb[0].mxu0
    %4961 = vdwg.mxu0
    %v4968 = vunpack.c.l.b16 %v4824
    %v4969 = vunpack.c.l.b16 %v4825
    %v4970 = vunpack.c.l.b16 %v4826
    %v4971 = vunpack.c.l.b16 %v4827
    %v4972 = vunpack.c.l.b16 %v4828
    %v4973 = vunpack.c.l.b16 %v4829
    %v4974 = vpack.c.b16 %v4969, %v4968
    %v4975 = vpack.c.b16 %v4971, %v4970
    %v4976 = vpack.c.b16 %v4973, %v4972
    %4980 = vmatprep.subr.bf16.mxu0 0
    %4981 = vmatpush1.bf16.msra.mxu0 %v4974
    %4982 = vmatprep.subr.bf16.mxu0 0
    %4983 = vmatpush1.bf16.msra.mxu0 %v4975
    %4984 = vmatprep.subr.bf16.mxu0 0
    %4985 = vmatpush1.bf16.msra.mxu0 %v4976
    %4986 = vmatprep.subr.bf16.mxu0 0
    %4987 = vmatpush1.bf16.msra.mxu0 0
    %4988 = vmatprep.subr.bf16.mxu0 0
    %4989 = vmatpush1.bf16.msra.mxu0 0
    %4990 = vmatprep.subr.bf16.mxu0 0
    %4991 = vmatpush1.bf16.msra.mxu0 0
    %4992 = vmatprep.subr.bf16.mxu0 0
    %4993 = vmatpush1.bf16.msra.mxu0 0
    %4994 = vmatprep.subr.bf16.mxu0 0
    %4995 = vmatpush1.bf16.msra.mxu0 0
    %4996 = vmatprep.subr.bf16.mxu0 0
    %4997 = vmatpush1.bf16.msra.mxu0 0
    %4998 = vmatprep.subr.bf16.mxu0 0
    %4999 = vmatpush1.bf16.msra.mxu0 0
    %5000 = vmatprep.subr.bf16.mxu0 0
    %5001 = vmatpush1.bf16.msra.mxu0 0
    %5002 = vmatprep.subr.bf16.mxu0 0
    %5003 = vmatpush1.bf16.msra.mxu0 0
    %5004 = vmatprep.subr.bf16.mxu0 0
    %5005 = vmatpush1.bf16.msra.mxu0 0
    %5006 = vmatprep.subr.bf16.mxu0 0
    %5007 = vmatpush1.bf16.msra.mxu0 0
    %5008 = vmatprep.subr.bf16.mxu0 0
    %5009 = vmatpush1.bf16.msra.mxu0 0
    %5010 = vmatprep.subr.bf16.mxu0 0
    %5011 = vmatpush1.bf16.msra.mxu0 0
    %5012 = vmatprep.mubr.bf16.mxu0 0
    %5013 = vmatmul.mubr.bf16.gmra.mrb[0].mxu0 %v2462
    %v5014 = vpop.f32.mrb[0].mxu0
    %v5015 = vadd.f32 %v4956, %v5014
    %v5016 = vpop.f32.mrb[0].mxu0
    %v5017 = vpop.f32.mrb[0].mxu0
    %v5018 = vadd.f32 %v4959, %v5017
    %v5019 = vpop.f32.mrb[0].mxu0
    %5020 = vdwg.mxu0
    %v5021 = vmul.f32 %v4590, %v2515
    %v5022 = vmul.f32 %v4597, %v2515
    %v5023 = vmul.f32 %v4604, %v2515
    %v5024 = vmul.f32 %v4611, %v2515
    %v5025 = vmul.f32 %v4618, %v2515
    %v5026 = vmul.f32 %v4625, %v2515
    %v5027 = vmul.f32 %v4632, %v2515
    %v5028 = vmul.f32 %v4639, %v2515
    %v5029 = vmul.f32 %v4646, %v2516
    %v5030 = vmul.f32 %v4653, %v2516
    %v5031 = vmul.f32 %v4660, %v2516
    %v5032 = vmul.f32 %v4667, %v2516
    %v5033 = vmul.f32 %v4674, %v2516
    %v5034 = vmul.f32 %v4681, %v2516
    %v5035 = vmul.f32 %v4688, %v2516
    %v5036 = vmul.f32 %v4695, %v2516
    %v5037 = vsel %vm427, %v5021, 0.0
    %v5038 = vrot.slane %v5037, 4
    %v5039 = vadd.f32 %v5037, %v5038
    %v5040 = vrot.slane %v5039, 2
    %v5041 = vadd.f32 %v5039, %v5040
    %v5042 = vrot.slane %v5041, 1
    %v5043 = vadd.f32 %v5041, %v5042
    %v5044 = vsel %vm427, %v5022, 0.0
    %v5045 = vrot.slane %v5044, 4
    %v5046 = vadd.f32 %v5044, %v5045
    %v5047 = vrot.slane %v5046, 2
    %v5048 = vadd.f32 %v5046, %v5047
    %v5049 = vrot.slane %v5048, 1
    %v5050 = vadd.f32 %v5048, %v5049
    %v5051 = vsel %vm427, %v5023, 0.0
    %v5052 = vrot.slane %v5051, 4
    %v5053 = vadd.f32 %v5051, %v5052
    %v5054 = vrot.slane %v5053, 2
    %v5055 = vadd.f32 %v5053, %v5054
    %v5056 = vrot.slane %v5055, 1
    %v5057 = vadd.f32 %v5055, %v5056
    %v5058 = vsel %vm427, %v5024, 0.0
    %v5059 = vrot.slane %v5058, 4
    %v5060 = vadd.f32 %v5058, %v5059
    %v5061 = vrot.slane %v5060, 2
    %v5062 = vadd.f32 %v5060, %v5061
    %v5063 = vrot.slane %v5062, 1
    %v5064 = vadd.f32 %v5062, %v5063
    %v5065 = vsel %vm427, %v5025, 0.0
    %v5066 = vrot.slane %v5065, 4
    %v5067 = vadd.f32 %v5065, %v5066
    %v5068 = vrot.slane %v5067, 2
    %v5069 = vadd.f32 %v5067, %v5068
    %v5070 = vrot.slane %v5069, 1
    %v5071 = vadd.f32 %v5069, %v5070
    %v5072 = vsel %vm427, %v5026, 0.0
    %v5073 = vrot.slane %v5072, 4
    %v5074 = vadd.f32 %v5072, %v5073
    %v5075 = vrot.slane %v5074, 2
    %v5076 = vadd.f32 %v5074, %v5075
    %v5077 = vrot.slane %v5076, 1
    %v5078 = vadd.f32 %v5076, %v5077
    %v5079 = vsel %vm427, %v5027, 0.0
    %v5080 = vrot.slane %v5079, 4
    %v5081 = vadd.f32 %v5079, %v5080
    %v5082 = vrot.slane %v5081, 2
    %v5083 = vadd.f32 %v5081, %v5082
    %v5084 = vrot.slane %v5083, 1
    %v5085 = vadd.f32 %v5083, %v5084
    %v5086 = vsel %vm427, %v5028, 0.0
    %v5087 = vrot.slane %v5086, 4
    %v5088 = vadd.f32 %v5086, %v5087
    %v5089 = vrot.slane %v5088, 2
    %v5090 = vadd.f32 %v5088, %v5089
    %v5091 = vrot.slane %v5090, 1
    %v5092 = vadd.f32 %v5090, %v5091
    %v5093 = vsel %vm427, %v5029, 0.0
    %v5094 = vrot.slane %v5093, 4
    %v5095 = vadd.f32 %v5093, %v5094
    %v5096 = vrot.slane %v5095, 2
    %v5097 = vadd.f32 %v5095, %v5096
    %v5098 = vrot.slane %v5097, 1
    %v5099 = vadd.f32 %v5097, %v5098
    %v5100 = vsel %vm427, %v5030, 0.0
    %v5101 = vrot.slane %v5100, 4
    %v5102 = vadd.f32 %v5100, %v5101
    %v5103 = vrot.slane %v5102, 2
    %v5104 = vadd.f32 %v5102, %v5103
    %v5105 = vrot.slane %v5104, 1
    %v5106 = vadd.f32 %v5104, %v5105
    %v5107 = vsel %vm427, %v5031, 0.0
    %v5108 = vrot.slane %v5107, 4
    %v5109 = vadd.f32 %v5107, %v5108
    %v5110 = vrot.slane %v5109, 2
    %v5111 = vadd.f32 %v5109, %v5110
    %v5112 = vrot.slane %v5111, 1
    %v5113 = vadd.f32 %v5111, %v5112
    %v5114 = vsel %vm427, %v5032, 0.0
    %v5115 = vrot.slane %v5114, 4
    %v5116 = vadd.f32 %v5114, %v5115
    %v5117 = vrot.slane %v5116, 2
    %v5118 = vadd.f32 %v5116, %v5117
    %v5119 = vrot.slane %v5118, 1
    %v5120 = vadd.f32 %v5118, %v5119
    %v5121 = vsel %vm427, %v5033, 0.0
    %v5122 = vrot.slane %v5121, 4
    %v5123 = vadd.f32 %v5121, %v5122
    %v5124 = vrot.slane %v5123, 2
    %v5125 = vadd.f32 %v5123, %v5124
    %v5126 = vrot.slane %v5125, 1
    %v5127 = vadd.f32 %v5125, %v5126
    %v5128 = vsel %vm427, %v5034, 0.0
    %v5129 = vrot.slane %v5128, 4
    %v5130 = vadd.f32 %v5128, %v5129
    %v5131 = vrot.slane %v5130, 2
    %v5132 = vadd.f32 %v5130, %v5131
    %v5133 = vrot.slane %v5132, 1
    %v5134 = vadd.f32 %v5132, %v5133
    %v5135 = vsel %vm427, %v5035, 0.0
    %v5136 = vrot.slane %v5135, 4
    %v5137 = vadd.f32 %v5135, %v5136
    %v5138 = vrot.slane %v5137, 2
    %v5139 = vadd.f32 %v5137, %v5138
    %v5140 = vrot.slane %v5139, 1
    %v5141 = vadd.f32 %v5139, %v5140
    %v5142 = vsel %vm427, %v5036, 0.0
    %v5143 = vrot.slane %v5142, 4
    %v5144 = vadd.f32 %v5142, %v5143
    %v5145 = vrot.slane %v5144, 2
    %v5146 = vadd.f32 %v5144, %v5145
    %v5147 = vrot.slane %v5146, 1
    %v5148 = vadd.f32 %v5146, %v5147
    %v5149 = vpack.c.bf16 %v2516, %v2515
    %s5150 = scalar_lea.vmem [#allocation10], 24
    %v5151 = vld [vmem:[%s5150] sm:$0xf]
    %v5152 = vld [vmem:[%s5150 + $0x4] sm:$0xf]
    %v5153 = vld [vmem:[%s5150 + $0x8] sm:$0xf]
    %v5154 = vld [vmem:[%s5150 + $0xc] sm:$0xf]
    %v5155 = vld [vmem:[%s5150 + $0x10] sm:$0xf]
    %v5156 = vld [vmem:[%s5150 + $0x14] sm:$0xf]
    %v5157 = vpack.c.bf16 %v5043, %v5043
    %v5158 = vpack.c.bf16 %v5050, %v5050
    %v5159 = vpack.c.bf16 %v5057, %v5057
    %v5160 = vpack.c.bf16 %v5064, %v5064
    %v5161 = vpack.c.bf16 %v5071, %v5071
    %v5162 = vpack.c.bf16 %v5078, %v5078
    %v5163 = vpack.c.bf16 %v5085, %v5085
    %v5164 = vpack.c.bf16 %v5092, %v5092
    %v5165 = vpack.c.bf16 %v5099, %v5099
    %v5166 = vpack.c.bf16 %v5106, %v5106
    %v5167 = vpack.c.bf16 %v5113, %v5113
    %v5168 = vpack.c.bf16 %v5120, %v5120
    %v5169 = vpack.c.bf16 %v5127, %v5127
    %v5170 = vpack.c.bf16 %v5134, %v5134
    %v5171 = vpack.c.bf16 %v5141, %v5141
    %v5172 = vpack.c.bf16 %v5148, %v5148
    %s5173 = scalar_lea.vmem [#allocation10], 72
    %v5174 = vld [vmem:[%s5173] sm:$0xf]
    %v5175 = vld [vmem:[%s5173 + $0x4] sm:$0xf]
    %v5176 = vld [vmem:[%s5173 + $0x8] sm:$0xf]
    %v5177 = vld [vmem:[%s5173 + $0xc] sm:$0xf]
    %v5178 = vld [vmem:[%s5173 + $0x10] sm:$0xf]
    %v5179 = vld [vmem:[%s5173 + $0x14] sm:$0xf]
    %v5196 = vunpack.c.l.b16 %v5157
    %v5197 = vunpack.c.l.b16 %v5158
    %v5198 = vunpack.c.l.b16 %v5159
    %v5199 = vunpack.c.l.b16 %v5160
    %v5200 = vunpack.c.l.b16 %v5161
    %v5201 = vunpack.c.l.b16 %v5162
    %v5202 = vunpack.c.l.b16 %v5163
    %v5203 = vunpack.c.l.b16 %v5164
    %v5204 = vunpack.c.l.b16 %v5165
    %v5205 = vunpack.c.l.b16 %v5166
    %v5206 = vunpack.c.l.b16 %v5167
    %v5207 = vunpack.c.l.b16 %v5168
    %v5208 = vunpack.c.l.b16 %v5169
    %v5209 = vunpack.c.l.b16 %v5170
    %v5210 = vunpack.c.l.b16 %v5171
    %v5211 = vunpack.c.l.b16 %v5172
    %v5212 = vsel %vm1744, %v5197, %v5196
    %v5213 = vsel %vm1746, %v5198, %v5212
    %v5214 = vsel %vm1748, %v5199, %v5213
    %v5215 = vsel %vm1750, %v5200, %v5214
    %v5216 = vsel %vm1752, %v5201, %v5215
    %v5217 = vsel %vm1754, %v5202, %v5216
    %v5218 = vsel %vm1756, %v5203, %v5217
    %v5219 = vsel %vm1744, %v5205, %v5204
    %v5220 = vsel %vm1746, %v5206, %v5219
    %v5221 = vsel %vm1748, %v5207, %v5220
    %v5222 = vsel %vm1750, %v5208, %v5221
    %v5223 = vsel %vm1752, %v5209, %v5222
    %v5224 = vsel %vm1754, %v5210, %v5223
    %v5225 = vsel %vm1756, %v5211, %v5224
    %v5226 = vpack.c.b16 %v5225, %v5218
    %v5233 = vunpack.c.l.b16 %v5174
    %v5234 = vunpack.c.l.b16 %v5175
    %v5235 = vunpack.c.l.b16 %v5176
    %v5236 = vunpack.c.l.b16 %v5177
    %v5237 = vunpack.c.l.b16 %v5178
    %v5238 = vunpack.c.l.b16 %v5179
    %v5239 = vpack.c.b16 %v5234, %v5233
    %v5240 = vpack.c.b16 %v5236, %v5235
    %v5241 = vpack.c.b16 %v5238, %v5237
    %v5246 = vsel %vm427, %v5226, 0
    %5248 = vmatprep.subr.bf16.mxu0 0
    %5249 = vmatpush1.bf16.msra.mxu0 %v5239
    %5250 = vmatprep.subr.bf16.mxu0 0
    %5251 = vmatpush1.bf16.msra.mxu0 %v5240
    %5252 = vmatprep.subr.bf16.mxu0 0
    %5253 = vmatpush1.bf16.msra.mxu0 %v5241
    %5254 = vmatprep.subr.bf16.mxu0 0
    %5255 = vmatpush1.bf16.msra.mxu0 0
    %5256 = vmatprep.subr.bf16.mxu0 0
    %5257 = vmatpush1.bf16.msra.mxu0 0
    %5258 = vmatprep.subr.bf16.mxu0 0
    %5259 = vmatpush1.bf16.msra.mxu0 0
    %5260 = vmatprep.subr.bf16.mxu0 0
    %5261 = vmatpush1.bf16.msra.mxu0 0
    %5262 = vmatprep.subr.bf16.mxu0 0
    %5263 = vmatpush1.bf16.msra.mxu0 0
    %5264 = vmatprep.subr.bf16.mxu0 0
    %5265 = vmatpush1.bf16.msra.mxu0 0
    %5266 = vmatprep.subr.bf16.mxu0 0
    %5267 = vmatpush1.bf16.msra.mxu0 0
    %5268 = vmatprep.subr.bf16.mxu0 0
    %5269 = vmatpush1.bf16.msra.mxu0 0
    %5270 = vmatprep.subr.bf16.mxu0 0
    %5271 = vmatpush1.bf16.msra.mxu0 0
    %5272 = vmatprep.subr.bf16.mxu0 0
    %5273 = vmatpush1.bf16.msra.mxu0 0
    %5274 = vmatprep.subr.bf16.mxu0 0
    %5275 = vmatpush1.bf16.msra.mxu0 0
    %5276 = vmatprep.subr.bf16.mxu0 0
    %5277 = vmatpush1.bf16.msra.mxu0 0
    %5278 = vmatprep.subr.bf16.mxu0 0
    %5279 = vmatpush1.bf16.msra.mxu0 0
    %5280 = vmatprep.mubr.bf16.mxu0 0
    %5281 = vmatmul.mubr.bf16.gmra.mrb[0].mxu0 %v5246
    %v5282 = vpop.f32.mrb[0].mxu0
    %v5283 = vadd.f32 0.0, %v5282
    %v5284 = vpop.f32.mrb[0].mxu0
    %v5285 = vpop.f32.mrb[0].mxu0
    %v5286 = vadd.f32 0.0, %v5285
    %v5287 = vpop.f32.mrb[0].mxu0
    %5288 = vdwg.mxu0
    %v5295 = vunpack.c.l.b16 %v5151
    %v5296 = vunpack.c.l.b16 %v5152
    %v5297 = vunpack.c.l.b16 %v5153
    %v5298 = vunpack.c.l.b16 %v5154
    %v5299 = vunpack.c.l.b16 %v5155
    %v5300 = vunpack.c.l.b16 %v5156
    %v5301 = vpack.c.b16 %v5296, %v5295
    %v5302 = vpack.c.b16 %v5298, %v5297
    %v5303 = vpack.c.b16 %v5300, %v5299
    %v5308 = vsel %vm427, %v5149, 0
    %5310 = vmatprep.subr.bf16.mxu0 0
    %5311 = vmatpush1.bf16.msra.mxu0 %v5301
    %5312 = vmatprep.subr.bf16.mxu0 0
    %5313 = vmatpush1.bf16.msra.mxu0 %v5302
    %5314 = vmatprep.subr.bf16.mxu0 0
    %5315 = vmatpush1.bf16.msra.mxu0 %v5303
    %5316 = vmatprep.subr.bf16.mxu0 0
    %5317 = vmatpush1.bf16.msra.mxu0 0
    %5318 = vmatprep.subr.bf16.mxu0 0
    %5319 = vmatpush1.bf16.msra.mxu0 0
    %5320 = vmatprep.subr.bf16.mxu0 0
    %5321 = vmatpush1.bf16.msra.mxu0 0
    %5322 = vmatprep.subr.bf16.mxu0 0
    %5323 = vmatpush1.bf16.msra.mxu0 0
    %5324 = vmatprep.subr.bf16.mxu0 0
    %5325 = vmatpush1.bf16.msra.mxu0 0
    %5326 = vmatprep.subr.bf16.mxu0 0
    %5327 = vmatpush1.bf16.msra.mxu0 0
    %5328 = vmatprep.subr.bf16.mxu0 0
    %5329 = vmatpush1.bf16.msra.mxu0 0
    %5330 = vmatprep.subr.bf16.mxu0 0
    %5331 = vmatpush1.bf16.msra.mxu0 0
    %5332 = vmatprep.subr.bf16.mxu0 0
    %5333 = vmatpush1.bf16.msra.mxu0 0
    %5334 = vmatprep.subr.bf16.mxu0 0
    %5335 = vmatpush1.bf16.msra.mxu0 0
    %5336 = vmatprep.subr.bf16.mxu0 0
    %5337 = vmatpush1.bf16.msra.mxu0 0
    %5338 = vmatprep.subr.bf16.mxu0 0
    %5339 = vmatpush1.bf16.msra.mxu0 0
    %5340 = vmatprep.subr.bf16.mxu0 0
    %5341 = vmatpush1.bf16.msra.mxu0 0
    %5342 = vmatprep.mubr.bf16.mxu0 0
    %5343 = vmatmul.mubr.bf16.gmra.mrb[0].mxu0 %v5308
    %v5344 = vpop.f32.mrb[0].mxu0
    %v5345 = vadd.f32 %v5283, %v5344
    %v5346 = vpop.f32.mrb[0].mxu0
    %v5347 = vpop.f32.mrb[0].mxu0
    %v5348 = vadd.f32 %v5286, %v5347
    %v5349 = vpop.f32.mrb[0].mxu0
    %5350 = vdwg.mxu0
    %v5351 = vadd.f32 %v5015, %v5345
    %v5352 = vadd.f32 %v5018, %v5348
    %v5353 = vlaneseq
    %v5354 = vshrl.u32 %v5353, 7
    %v5355 = vsub.s32 2, %v5354
    %v5356 = vrot.slane %v153, %v5355
    %v5357 = vadd.f32 %v5351, %v5356
    %v5358 = vadd.f32 %v5352, %v5356
    %vm5359 = vcmp.gt.f32.partialorder %v5357, 0.0
    %vm5360 = vcmp.gt.f32.partialorder %v5358, 0.0
    %v5361 = vmul.f32 %v5357, 0.01
    %v5362 = vmul.f32 %v5358, 0.01
    %v5363 = vsel %vm5359, %v5357, %v5361
    %v5364 = vsel %vm5360, %v5358, %v5362
    %v5365 = vld [vmem:[%s3] sm:$0xff]
    %v5366 = vld [vmem:[%s3 + $0x8] sm:$0xff]
    %v5367 = vld [vmem:[%s3 + $0x10] sm:$0xff]
    %v5368 = vld [vmem:[%s3 + $0x18] sm:$0xff]
    %v5369 = vld [vmem:[%s3 + $0x20] sm:$0xff]
    %v5370 = vld [vmem:[%s3 + $0x28] sm:$0xff]
    %s5371 = scalar_lea.vmem %s3, 48
    %v5372 = vld [vmem:[%s5371] sm:$0xff]
    %v5373 = vld [vmem:[%s5371 + $0x8] sm:$0xff]
    %v5374 = vld [vmem:[%s5371 + $0x10] sm:$0xff]
    %v5375 = vld [vmem:[%s5371 + $0x18] sm:$0xff]
    %v5376 = vld [vmem:[%s5371 + $0x20] sm:$0xff]
    %v5377 = vld [vmem:[%s5371 + $0x28] sm:$0xff]
    %v5384 = vunpack.c.l.b16 %v5372
    %v5385 = vunpack.c.h.b16 %v5372
    %v5386 = vunpack.c.l.b16 %v5373
    %v5387 = vunpack.c.h.b16 %v5373
    %v5388 = vunpack.c.l.b16 %v5374
    %v5389 = vunpack.c.h.b16 %v5374
    %v5390 = vunpack.c.l.b16 %v5375
    %v5391 = vunpack.c.h.b16 %v5375
    %v5392 = vunpack.c.l.b16 %v5376
    %v5393 = vunpack.c.h.b16 %v5376
    %v5394 = vunpack.c.l.b16 %v5377
    %v5395 = vunpack.c.h.b16 %v5377
    %v5396 = vpack.c.b16 %v5386, %v5384
    %v5397 = vpack.c.b16 %v5387, %v5385
    %v5398 = vpack.c.b16 %v5390, %v5388
    %v5399 = vpack.c.b16 %v5391, %v5389
    %v5400 = vpack.c.b16 %v5394, %v5392
    %v5401 = vpack.c.b16 %v5395, %v5393
    %5408 = vmatprep.subr.bf16.mxu0 %v5397
    %5409 = vmatpush1.bf16.msra.mxu0 %v5396
    %5410 = vmatprep.subr.bf16.mxu0 %v5399
    %5411 = vmatpush1.bf16.msra.mxu0 %v5398
    %5412 = vmatprep.subr.bf16.mxu0 %v5401
    %5413 = vmatpush1.bf16.msra.mxu0 %v5400
    %5414 = vmatprep.subr.bf16.mxu0 0
    %5415 = vmatpush1.bf16.msra.mxu0 0
    %5416 = vmatprep.subr.bf16.mxu0 0
    %5417 = vmatpush1.bf16.msra.mxu0 0
    %5418 = vmatprep.subr.bf16.mxu0 0
    %5419 = vmatpush1.bf16.msra.mxu0 0
    %5420 = vmatprep.subr.bf16.mxu0 0
    %5421 = vmatpush1.bf16.msra.mxu0 0
    %5422 = vmatprep.subr.bf16.mxu0 0
    %5423 = vmatpush1.bf16.msra.mxu0 0
    %5424 = vmatprep.subr.bf16.mxu0 0
    %5425 = vmatpush1.bf16.msra.mxu0 0
    %5426 = vmatprep.subr.bf16.mxu0 0
    %5427 = vmatpush1.bf16.msra.mxu0 0
    %5428 = vmatprep.subr.bf16.mxu0 0
    %5429 = vmatpush1.bf16.msra.mxu0 0
    %5430 = vmatprep.subr.bf16.mxu0 0
    %5431 = vmatpush1.bf16.msra.mxu0 0
    %5432 = vmatprep.subr.bf16.mxu0 0
    %5433 = vmatpush1.bf16.msra.mxu0 0
    %5434 = vmatprep.subr.bf16.mxu0 0
    %5435 = vmatpush1.bf16.msra.mxu0 0
    %5436 = vmatprep.subr.bf16.mxu0 0
    %5437 = vmatpush1.bf16.msra.mxu0 0
    %5438 = vmatprep.subr.bf16.mxu0 0
    %5439 = vmatpush1.bf16.msra.mxu0 0
    %5440 = vmatprep.mubr.bf16.mxu0 0
    %5441 = vmatmul.mubr.bf16.gmra.mrb[0].mxu0 %v2781
    %v5442 = vpop.f32.mrb[0].mxu0
    %v5443 = vadd.f32 0.0, %v5442
    %v5444 = vpop.f32.mrb[0].mxu0
    %v5445 = vadd.f32 0.0, %v5444
    %v5446 = vpop.f32.mrb[0].mxu0
    %v5447 = vadd.f32 0.0, %v5446
    %v5448 = vpop.f32.mrb[0].mxu0
    %v5449 = vadd.f32 0.0, %v5448
    %5450 = vmatprep.mubr.bf16.mxu0 0
    %5451 = vmatmul.mubr.bf16.gmra.mrb[0].mxu0 %v2784
    %v5452 = vpop.f32.mrb[0].mxu0
    %v5453 = vadd.f32 0.0, %v5452
    %v5454 = vpop.f32.mrb[0].mxu0
    %v5455 = vadd.f32 0.0, %v5454
    %v5456 = vpop.f32.mrb[0].mxu0
    %v5457 = vadd.f32 0.0, %v5456
    %v5458 = vpop.f32.mrb[0].mxu0
    %v5459 = vadd.f32 0.0, %v5458
    %5460 = vmatprep.mubr.bf16.mxu0 0
    %5461 = vmatmul.mubr.bf16.gmra.mrb[0].mxu0 %v2787
    %v5462 = vpop.f32.mrb[0].mxu0
    %v5463 = vadd.f32 0.0, %v5462
    %v5464 = vpop.f32.mrb[0].mxu0
    %v5465 = vadd.f32 0.0, %v5464
    %v5466 = vpop.f32.mrb[0].mxu0
    %v5467 = vadd.f32 0.0, %v5466
    %v5468 = vpop.f32.mrb[0].mxu0
    %v5469 = vadd.f32 0.0, %v5468
    %5470 = vmatprep.mubr.bf16.mxu0 0
    %5471 = vmatmul.mubr.bf16.gmra.mrb[0].mxu0 %v2790
    %v5472 = vpop.f32.mrb[0].mxu0
    %v5473 = vadd.f32 0.0, %v5472
    %v5474 = vpop.f32.mrb[0].mxu0
    %v5475 = vadd.f32 0.0, %v5474
    %v5476 = vpop.f32.mrb[0].mxu0
    %v5477 = vadd.f32 0.0, %v5476
    %v5478 = vpop.f32.mrb[0].mxu0
    %v5479 = vadd.f32 0.0, %v5478
    %5480 = vmatprep.mubr.bf16.mxu0 0
    %5481 = vmatmul.mubr.bf16.gmra.mrb[0].mxu0 %v2793
    %v5482 = vpop.f32.mrb[0].mxu0
    %v5483 = vadd.f32 0.0, %v5482
    %v5484 = vpop.f32.mrb[0].mxu0
    %v5485 = vadd.f32 0.0, %v5484
    %v5486 = vpop.f32.mrb[0].mxu0
    %v5487 = vadd.f32 0.0, %v5486
    %v5488 = vpop.f32.mrb[0].mxu0
    %v5489 = vadd.f32 0.0, %v5488
    %5490 = vmatprep.mubr.bf16.mxu0 0
    %5491 = vmatmul.mubr.bf16.gmra.mrb[0].mxu0 %v2796
    %v5492 = vpop.f32.mrb[0].mxu0
    %v5493 = vadd.f32 0.0, %v5492
    %v5494 = vpop.f32.mrb[0].mxu0
    %v5495 = vadd.f32 0.0, %v5494
    %v5496 = vpop.f32.mrb[0].mxu0
    %v5497 = vadd.f32 0.0, %v5496
    %v5498 = vpop.f32.mrb[0].mxu0
    %v5499 = vadd.f32 0.0, %v5498
    %5500 = vmatprep.mubr.bf16.mxu0 0
    %5501 = vmatmul.mubr.bf16.gmra.mrb[0].mxu0 %v2799
    %v5502 = vpop.f32.mrb[0].mxu0
    %v5503 = vadd.f32 0.0, %v5502
    %v5504 = vpop.f32.mrb[0].mxu0
    %v5505 = vadd.f32 0.0, %v5504
    %v5506 = vpop.f32.mrb[0].mxu0
    %v5507 = vadd.f32 0.0, %v5506
    %v5508 = vpop.f32.mrb[0].mxu0
    %v5509 = vadd.f32 0.0, %v5508
    %5510 = vmatprep.mubr.bf16.mxu0 0
    %5511 = vmatmul.mubr.bf16.gmra.mrb[0].mxu0 %v2802
    %v5512 = vpop.f32.mrb[0].mxu0
    %v5513 = vadd.f32 0.0, %v5512
    %v5514 = vpop.f32.mrb[0].mxu0
    %v5515 = vadd.f32 0.0, %v5514
    %v5516 = vpop.f32.mrb[0].mxu0
    %v5517 = vadd.f32 0.0, %v5516
    %v5518 = vpop.f32.mrb[0].mxu0
    %v5519 = vadd.f32 0.0, %v5518
    %5520 = vdwg.mxu0
    %v5527 = vunpack.c.l.b16 %v5365
    %v5528 = vunpack.c.h.b16 %v5365
    %v5529 = vunpack.c.l.b16 %v5366
    %v5530 = vunpack.c.h.b16 %v5366
    %v5531 = vunpack.c.l.b16 %v5367
    %v5532 = vunpack.c.h.b16 %v5367
    %v5533 = vunpack.c.l.b16 %v5368
    %v5534 = vunpack.c.h.b16 %v5368
    %v5535 = vunpack.c.l.b16 %v5369
    %v5536 = vunpack.c.h.b16 %v5369
    %v5537 = vunpack.c.l.b16 %v5370
    %v5538 = vunpack.c.h.b16 %v5370
    %v5539 = vpack.c.b16 %v5529, %v5527
    %v5540 = vpack.c.b16 %v5530, %v5528
    %v5541 = vpack.c.b16 %v5533, %v5531
    %v5542 = vpack.c.b16 %v5534, %v5532
    %v5543 = vpack.c.b16 %v5537, %v5535
    %v5544 = vpack.c.b16 %v5538, %v5536
    %5551 = vmatprep.subr.bf16.mxu0 %v5540
    %5552 = vmatpush1.bf16.msra.mxu0 %v5539
    %5553 = vmatprep.subr.bf16.mxu0 %v5542
    %5554 = vmatpush1.bf16.msra.mxu0 %v5541
    %5555 = vmatprep.subr.bf16.mxu0 %v5544
    %5556 = vmatpush1.bf16.msra.mxu0 %v5543
    %5557 = vmatprep.subr.bf16.mxu0 0
    %5558 = vmatpush1.bf16.msra.mxu0 0
    %5559 = vmatprep.subr.bf16.mxu0 0
    %5560 = vmatpush1.bf16.msra.mxu0 0
    %5561 = vmatprep.subr.bf16.mxu0 0
    %5562 = vmatpush1.bf16.msra.mxu0 0
    %5563 = vmatprep.subr.bf16.mxu0 0
    %5564 = vmatpush1.bf16.msra.mxu0 0
    %5565 = vmatprep.subr.bf16.mxu0 0
    %5566 = vmatpush1.bf16.msra.mxu0 0
    %5567 = vmatprep.subr.bf16.mxu0 0
    %5568 = vmatpush1.bf16.msra.mxu0 0
    %5569 = vmatprep.subr.bf16.mxu0 0
    %5570 = vmatpush1.bf16.msra.mxu0 0
    %5571 = vmatprep.subr.bf16.mxu0 0
    %5572 = vmatpush1.bf16.msra.mxu0 0
    %5573 = vmatprep.subr.bf16.mxu0 0
    %5574 = vmatpush1.bf16.msra.mxu0 0
    %5575 = vmatprep.subr.bf16.mxu0 0
    %5576 = vmatpush1.bf16.msra.mxu0 0
    %5577 = vmatprep.subr.bf16.mxu0 0
    %5578 = vmatpush1.bf16.msra.mxu0 0
    %5579 = vmatprep.subr.bf16.mxu0 0
    %5580 = vmatpush1.bf16.msra.mxu0 0
    %5581 = vmatprep.subr.bf16.mxu0 0
    %5582 = vmatpush1.bf16.msra.mxu0 0
    %5583 = vmatprep.mubr.bf16.mxu0 0
    %5584 = vmatmul.mubr.bf16.gmra.mrb[0].mxu0 %v429
    %v5585 = vpop.f32.mrb[0].mxu0
    %v5586 = vadd.f32 %v5443, %v5585
    %v5587 = vpop.f32.mrb[0].mxu0
    %v5588 = vadd.f32 %v5445, %v5587
    %v5589 = vpop.f32.mrb[0].mxu0
    %v5590 = vadd.f32 %v5447, %v5589
    %v5591 = vpop.f32.mrb[0].mxu0
    %v5592 = vadd.f32 %v5449, %v5591
    %5593 = vmatprep.mubr.bf16.mxu0 0
    %5594 = vmatmul.mubr.bf16.gmra.mrb[0].mxu0 %v432
    %v5595 = vpop.f32.mrb[0].mxu0
    %v5596 = vadd.f32 %v5453, %v5595
    %v5597 = vpop.f32.mrb[0].mxu0
    %v5598 = vadd.f32 %v5455, %v5597
    %v5599 = vpop.f32.mrb[0].mxu0
    %v5600 = vadd.f32 %v5457, %v5599
    %v5601 = vpop.f32.mrb[0].mxu0
    %v5602 = vadd.f32 %v5459, %v5601
    %5603 = vmatprep.mubr.bf16.mxu0 0
    %5604 = vmatmul.mubr.bf16.gmra.mrb[0].mxu0 %v435
    %v5605 = vpop.f32.mrb[0].mxu0
    %v5606 = vadd.f32 %v5463, %v5605
    %v5607 = vpop.f32.mrb[0].mxu0
    %v5608 = vadd.f32 %v5465, %v5607
    %v5609 = vpop.f32.mrb[0].mxu0
    %v5610 = vadd.f32 %v5467, %v5609
    %v5611 = vpop.f32.mrb[0].mxu0
    %v5612 = vadd.f32 %v5469, %v5611
    %5613 = vmatprep.mubr.bf16.mxu0 0
    %5614 = vmatmul.mubr.bf16.gmra.mrb[0].mxu0 %v438
    %v5615 = vpop.f32.mrb[0].mxu0
    %v5616 = vadd.f32 %v5473, %v5615
    %v5617 = vpop.f32.mrb[0].mxu0
    %v5618 = vadd.f32 %v5475, %v5617
    %v5619 = vpop.f32.mrb[0].mxu0
    %v5620 = vadd.f32 %v5477, %v5619
    %v5621 = vpop.f32.mrb[0].mxu0
    %v5622 = vadd.f32 %v5479, %v5621
    %5623 = vmatprep.mubr.bf16.mxu0 0
    %5624 = vmatmul.mubr.bf16.gmra.mrb[0].mxu0 %v441
    %v5625 = vpop.f32.mrb[0].mxu0
    %v5626 = vadd.f32 %v5483, %v5625
    %v5627 = vpop.f32.mrb[0].mxu0
    %v5628 = vadd.f32 %v5485, %v5627
    %v5629 = vpop.f32.mrb[0].mxu0
    %v5630 = vadd.f32 %v5487, %v5629
    %v5631 = vpop.f32.mrb[0].mxu0
    %v5632 = vadd.f32 %v5489, %v5631
    %5633 = vmatprep.mubr.bf16.mxu0 0
    %5634 = vmatmul.mubr.bf16.gmra.mrb[0].mxu0 %v444
    %v5635 = vpop.f32.mrb[0].mxu0
    %v5636 = vadd.f32 %v5493, %v5635
    %v5637 = vpop.f32.mrb[0].mxu0
    %v5638 = vadd.f32 %v5495, %v5637
    %v5639 = vpop.f32.mrb[0].mxu0
    %v5640 = vadd.f32 %v5497, %v5639
    %v5641 = vpop.f32.mrb[0].mxu0
    %v5642 = vadd.f32 %v5499, %v5641
    %5643 = vmatprep.mubr.bf16.mxu0 0
    %5644 = vmatmul.mubr.bf16.gmra.mrb[0].mxu0 %v447
    %v5645 = vpop.f32.mrb[0].mxu0
    %v5646 = vadd.f32 %v5503, %v5645
    %v5647 = vpop.f32.mrb[0].mxu0
    %v5648 = vadd.f32 %v5505, %v5647
    %v5649 = vpop.f32.mrb[0].mxu0
    %v5650 = vadd.f32 %v5507, %v5649
    %v5651 = vpop.f32.mrb[0].mxu0
    %v5652 = vadd.f32 %v5509, %v5651
    %5653 = vmatprep.mubr.bf16.mxu0 0
    %5654 = vmatmul.mubr.bf16.gmra.mrb[0].mxu0 %v450
    %v5655 = vpop.f32.mrb[0].mxu0
    %v5656 = vadd.f32 %v5513, %v5655
    %v5657 = vpop.f32.mrb[0].mxu0
    %v5658 = vadd.f32 %v5515, %v5657
    %v5659 = vpop.f32.mrb[0].mxu0
    %v5660 = vadd.f32 %v5517, %v5659
    %v5661 = vpop.f32.mrb[0].mxu0
    %v5662 = vadd.f32 %v5519, %v5661
    %5663 = vdwg.mxu0
    %v5666 = vcombine.high %v5363, %v5363
    %v5668 = vunpack.c.l.s4 1966171168
    %v5669 = vunpack.c.0.s8 %v5668
    %v5670 = vlaneseq
    %v5671 = vshrl.u32 %v5670, 7
    %v5672 = vsub.s32 %v5669, %v5671
    %v5673 = vrot.slane %v5363, %v5672
    %v5675 = vunpack.c.l.s4 1966171168
    %v5676 = vunpack.c.0.s8 %v5675
    %v5677 = vlaneseq
    %v5678 = vshrl.u32 %v5677, 7
    %v5679 = vsub.s32 %v5676, %v5678
    %v5680 = vrot.slane %v5666, %v5679
    %v5681 = vcombine.high %v5673, %v5673
    %v5682 = vcombine.high %v5680, %v5680
    %v5684 = vunpack.c.l.s4 1966171168
    %v5685 = vunpack.c.0.s8 %v5684
    %v5686 = vlaneseq
    %v5687 = vshrl.u32 %v5686, 7
    %v5688 = vsub.s32 %v5685, %v5687
    %v5689 = vrot.slane %v5673, %v5688
    %v5691 = vunpack.c.l.s4 1966171168
    %v5692 = vunpack.c.0.s8 %v5691
    %v5693 = vlaneseq
    %v5694 = vshrl.u32 %v5693, 7
    %v5695 = vsub.s32 %v5692, %v5694
    %v5696 = vrot.slane %v5680, %v5695
    %v5698 = vunpack.c.l.s4 1966171168
    %v5699 = vunpack.c.0.s8 %v5698
    %v5700 = vlaneseq
    %v5701 = vshrl.u32 %v5700, 7
    %v5702 = vsub.s32 %v5699, %v5701
    %v5703 = vrot.slane %v5681, %v5702
    %v5705 = vunpack.c.l.s4 1966171168
    %v5706 = vunpack.c.0.s8 %v5705
    %v5707 = vlaneseq
    %v5708 = vshrl.u32 %v5707, 7
    %v5709 = vsub.s32 %v5706, %v5708
    %v5710 = vrot.slane %v5682, %v5709
    %v5711 = vcombine.high %v5689, %v5689
    %v5712 = vcombine.high %v5696, %v5696
    %v5713 = vcombine.high %v5703, %v5703
    %v5714 = vcombine.high %v5710, %v5710
    %v5715 = vcombine.high %v5364, %v5364
    %v5717 = vunpack.c.l.s4 1966171168
    %v5718 = vunpack.c.0.s8 %v5717
    %v5719 = vlaneseq
    %v5720 = vshrl.u32 %v5719, 7
    %v5721 = vsub.s32 %v5718, %v5720
    %v5722 = vrot.slane %v5364, %v5721
    %v5724 = vunpack.c.l.s4 1966171168
    %v5725 = vunpack.c.0.s8 %v5724
    %v5726 = vlaneseq
    %v5727 = vshrl.u32 %v5726, 7
    %v5728 = vsub.s32 %v5725, %v5727
    %v5729 = vrot.slane %v5715, %v5728
    %v5730 = vcombine.high %v5722, %v5722
    %v5731 = vcombine.high %v5729, %v5729
    %v5733 = vunpack.c.l.s4 1966171168
    %v5734 = vunpack.c.0.s8 %v5733
    %v5735 = vlaneseq
    %v5736 = vshrl.u32 %v5735, 7
    %v5737 = vsub.s32 %v5734, %v5736
    %v5738 = vrot.slane %v5722, %v5737
    %v5740 = vunpack.c.l.s4 1966171168
    %v5741 = vunpack.c.0.s8 %v5740
    %v5742 = vlaneseq
    %v5743 = vshrl.u32 %v5742, 7
    %v5744 = vsub.s32 %v5741, %v5743
    %v5745 = vrot.slane %v5729, %v5744
    %v5747 = vunpack.c.l.s4 1966171168
    %v5748 = vunpack.c.0.s8 %v5747
    %v5749 = vlaneseq
    %v5750 = vshrl.u32 %v5749, 7
    %v5751 = vsub.s32 %v5748, %v5750
    %v5752 = vrot.slane %v5730, %v5751
    %v5754 = vunpack.c.l.s4 1966171168
    %v5755 = vunpack.c.0.s8 %v5754
    %v5756 = vlaneseq
    %v5757 = vshrl.u32 %v5756, 7
    %v5758 = vsub.s32 %v5755, %v5757
    %v5759 = vrot.slane %v5731, %v5758
    %v5760 = vcombine.high %v5738, %v5738
    %v5761 = vcombine.high %v5745, %v5745
    %v5762 = vcombine.high %v5752, %v5752
    %v5763 = vcombine.high %v5759, %v5759
    %v5764 = vlaneseq
    %v5765 = vshrl.u32 %v5764, 7
    %v5766 = vsub.s32 0, %v5765
    %v5767 = vrot.slane %v5689, %v5766
    %v5768 = vlaneseq
    %v5769 = vshrl.u32 %v5768, 7
    %v5770 = vsub.s32 0, %v5769
    %v5771 = vrot.slane %v5703, %v5770
    %v5772 = vlaneseq
    %v5773 = vshrl.u32 %v5772, 7
    %v5774 = vsub.s32 0, %v5773
    %v5775 = vrot.slane %v5711, %v5774
    %v5776 = vlaneseq
    %v5777 = vshrl.u32 %v5776, 7
    %v5778 = vsub.s32 0, %v5777
    %v5779 = vrot.slane %v5713, %v5778
    %v5780 = vlaneseq
    %v5781 = vshrl.u32 %v5780, 7
    %v5782 = vsub.s32 0, %v5781
    %v5783 = vrot.slane %v5696, %v5782
    %v5784 = vlaneseq
    %v5785 = vshrl.u32 %v5784, 7
    %v5786 = vsub.s32 0, %v5785
    %v5787 = vrot.slane %v5710, %v5786
    %v5788 = vlaneseq
    %v5789 = vshrl.u32 %v5788, 7
    %v5790 = vsub.s32 0, %v5789
    %v5791 = vrot.slane %v5712, %v5790
    %v5792 = vlaneseq
    %v5793 = vshrl.u32 %v5792, 7
    %v5794 = vsub.s32 0, %v5793
    %v5795 = vrot.slane %v5714, %v5794
    %v5796 = vlaneseq
    %v5797 = vshrl.u32 %v5796, 7
    %v5798 = vsub.s32 0, %v5797
    %v5799 = vrot.slane %v5738, %v5798
    %v5800 = vlaneseq
    %v5801 = vshrl.u32 %v5800, 7
    %v5802 = vsub.s32 0, %v5801
    %v5803 = vrot.slane %v5752, %v5802
    %v5804 = vlaneseq
    %v5805 = vshrl.u32 %v5804, 7
    %v5806 = vsub.s32 0, %v5805
    %v5807 = vrot.slane %v5760, %v5806
    %v5808 = vlaneseq
    %v5809 = vshrl.u32 %v5808, 7
    %v5810 = vsub.s32 0, %v5809
    %v5811 = vrot.slane %v5762, %v5810
    %v5812 = vlaneseq
    %v5813 = vshrl.u32 %v5812, 7
    %v5814 = vsub.s32 0, %v5813
    %v5815 = vrot.slane %v5745, %v5814
    %v5816 = vlaneseq
    %v5817 = vshrl.u32 %v5816, 7
    %v5818 = vsub.s32 0, %v5817
    %v5819 = vrot.slane %v5759, %v5818
    %v5820 = vlaneseq
    %v5821 = vshrl.u32 %v5820, 7
    %v5822 = vsub.s32 0, %v5821
    %v5823 = vrot.slane %v5761, %v5822
    %v5824 = vlaneseq
    %v5825 = vshrl.u32 %v5824, 7
    %v5826 = vsub.s32 0, %v5825
    %v5827 = vrot.slane %v5763, %v5826
    %v5844 = vsub.f32 %v5767, %v5363
    %v5845 = vsub.f32 %v5771, %v5363
    %v5846 = vsub.f32 %v5775, %v5363
    %v5847 = vsub.f32 %v5779, %v5363
    %v5848 = vsub.f32 %v5783, %v5363
    %v5849 = vsub.f32 %v5787, %v5363
    %v5850 = vsub.f32 %v5791, %v5363
    %v5851 = vsub.f32 %v5795, %v5363
    %v5852 = vsub.f32 %v5799, %v5364
    %v5853 = vsub.f32 %v5803, %v5364
    %v5854 = vsub.f32 %v5807, %v5364
    %v5855 = vsub.f32 %v5811, %v5364
    %v5856 = vsub.f32 %v5815, %v5364
    %v5857 = vsub.f32 %v5819, %v5364
    %v5858 = vsub.f32 %v5823, %v5364
    %v5859 = vsub.f32 %v5827, %v5364
    %v5860 = vand.u32 2147483647, %v5844
    %v5861 = vand.u32 2147483647, %v5845
    %v5862 = vand.u32 2147483647, %v5846
    %v5863 = vand.u32 2147483647, %v5847
    %v5864 = vand.u32 2147483647, %v5848
    %v5865 = vand.u32 2147483647, %v5849
    %v5866 = vand.u32 2147483647, %v5850
    %v5867 = vand.u32 2147483647, %v5851
    %v5868 = vand.u32 2147483647, %v5852
    %v5869 = vand.u32 2147483647, %v5853
    %v5870 = vand.u32 2147483647, %v5854
    %v5871 = vand.u32 2147483647, %v5855
    %v5872 = vand.u32 2147483647, %v5856
    %v5873 = vand.u32 2147483647, %v5857
    %v5874 = vand.u32 2147483647, %v5858
    %v5875 = vand.u32 2147483647, %v5859
    %v5876 = vpack.c.bf16 %v5861, %v5860
    %v5877 = vpack.c.bf16 %v5863, %v5862
    %v5878 = vpack.c.bf16 %v5865, %v5864
    %v5879 = vpack.c.bf16 %v5867, %v5866
    %v5880 = vpack.c.bf16 %v5869, %v5868
    %v5881 = vpack.c.bf16 %v5871, %v5870
    %v5882 = vpack.c.bf16 %v5873, %v5872
    %v5883 = vpack.c.bf16 %v5875, %v5874
    %s5884 = scalar_lea.vmem %s3, 96
    %v5885 = vld [vmem:[%s5884] sm:$0xff]
    %v5886 = vld [vmem:[%s5884 + $0x8] sm:$0xff]
    %v5887 = vld [vmem:[%s5884 + $0x10] sm:$0xff]
    %v5888 = vld [vmem:[%s5884 + $0x18] sm:$0xff]
    %v5889 = vld [vmem:[%s5884 + $0x20] sm:$0xff]
    %v5890 = vld [vmem:[%s5884 + $0x28] sm:$0xff]
    %v5897 = vunpack.c.l.b16 %v5885
    %v5898 = vunpack.c.h.b16 %v5885
    %v5899 = vunpack.c.l.b16 %v5886
    %v5900 = vunpack.c.h.b16 %v5886
    %v5901 = vunpack.c.l.b16 %v5887
    %v5902 = vunpack.c.h.b16 %v5887
    %v5903 = vunpack.c.l.b16 %v5888
    %v5904 = vunpack.c.h.b16 %v5888
    %v5905 = vunpack.c.l.b16 %v5889
    %v5906 = vunpack.c.h.b16 %v5889
    %v5907 = vunpack.c.l.b16 %v5890
    %v5908 = vunpack.c.h.b16 %v5890
    %v5909 = vpack.c.b16 %v5899, %v5897
    %v5910 = vpack.c.b16 %v5900, %v5898
    %v5911 = vpack.c.b16 %v5903, %v5901
    %v5912 = vpack.c.b16 %v5904, %v5902
    %v5913 = vpack.c.b16 %v5907, %v5905
    %v5914 = vpack.c.b16 %v5908, %v5906
    %v5922 = vsel %vm427, %v5876, 0
    %v5925 = vsel %vm427, %v5877, 0
    %v5928 = vsel %vm427, %v5878, 0
    %v5931 = vsel %vm427, %v5879, 0
    %v5934 = vsel %vm427, %v5880, 0
    %v5937 = vsel %vm427, %v5881, 0
    %v5940 = vsel %vm427, %v5882, 0
    %v5943 = vsel %vm427, %v5883, 0
    %5945 = vmatprep.subr.bf16.mxu0 %v5910
    %5946 = vmatpush1.bf16.msra.mxu0 %v5909
    %5947 = vmatprep.subr.bf16.mxu0 %v5912
    %5948 = vmatpush1.bf16.msra.mxu0 %v5911
    %5949 = vmatprep.subr.bf16.mxu0 %v5914
    %5950 = vmatpush1.bf16.msra.mxu0 %v5913
    %5951 = vmatprep.subr.bf16.mxu0 0
    %5952 = vmatpush1.bf16.msra.mxu0 0
    %5953 = vmatprep.subr.bf16.mxu0 0
    %5954 = vmatpush1.bf16.msra.mxu0 0
    %5955 = vmatprep.subr.bf16.mxu0 0
    %5956 = vmatpush1.bf16.msra.mxu0 0
    %5957 = vmatprep.subr.bf16.mxu0 0
    %5958 = vmatpush1.bf16.msra.mxu0 0
    %5959 = vmatprep.subr.bf16.mxu0 0
    %5960 = vmatpush1.bf16.msra.mxu0 0
    %5961 = vmatprep.subr.bf16.mxu0 0
    %5962 = vmatpush1.bf16.msra.mxu0 0
    %5963 = vmatprep.subr.bf16.mxu0 0
    %5964 = vmatpush1.bf16.msra.mxu0 0
    %5965 = vmatprep.subr.bf16.mxu0 0
    %5966 = vmatpush1.bf16.msra.mxu0 0
    %5967 = vmatprep.subr.bf16.mxu0 0
    %5968 = vmatpush1.bf16.msra.mxu0 0
    %5969 = vmatprep.subr.bf16.mxu0 0
    %5970 = vmatpush1.bf16.msra.mxu0 0
    %5971 = vmatprep.subr.bf16.mxu0 0
    %5972 = vmatpush1.bf16.msra.mxu0 0
    %5973 = vmatprep.subr.bf16.mxu0 0
    %5974 = vmatpush1.bf16.msra.mxu0 0
    %5975 = vmatprep.subr.bf16.mxu0 0
    %5976 = vmatpush1.bf16.msra.mxu0 0
    %5977 = vmatprep.mubr.bf16.mxu0 0
    %5978 = vmatmul.mubr.bf16.gmra.mrb[0].mxu0 %v5922
    %v5979 = vpop.f32.mrb[0].mxu0
    %v5980 = vadd.f32 0.0, %v5979
    %v5981 = vpop.f32.mrb[0].mxu0
    %v5982 = vadd.f32 0.0, %v5981
    %v5983 = vpop.f32.mrb[0].mxu0
    %v5984 = vadd.f32 0.0, %v5983
    %v5985 = vpop.f32.mrb[0].mxu0
    %v5986 = vadd.f32 0.0, %v5985
    %5987 = vmatprep.mubr.bf16.mxu0 0
    %5988 = vmatmul.mubr.bf16.gmra.mrb[0].mxu0 %v5925
    %v5989 = vpop.f32.mrb[0].mxu0
    %v5990 = vadd.f32 0.0, %v5989
    %v5991 = vpop.f32.mrb[0].mxu0
    %v5992 = vadd.f32 0.0, %v5991
    %v5993 = vpop.f32.mrb[0].mxu0
    %v5994 = vadd.f32 0.0, %v5993
    %v5995 = vpop.f32.mrb[0].mxu0
    %v5996 = vadd.f32 0.0, %v5995
    %5997 = vmatprep.mubr.bf16.mxu0 0
    %5998 = vmatmul.mubr.bf16.gmra.mrb[0].mxu0 %v5928
    %v5999 = vpop.f32.mrb[0].mxu0
    %v6000 = vadd.f32 0.0, %v5999
    %v6001 = vpop.f32.mrb[0].mxu0
    %v6002 = vadd.f32 0.0, %v6001
    %v6003 = vpop.f32.mrb[0].mxu0
    %v6004 = vadd.f32 0.0, %v6003
    %v6005 = vpop.f32.mrb[0].mxu0
    %v6006 = vadd.f32 0.0, %v6005
    %6007 = vmatprep.mubr.bf16.mxu0 0
    %6008 = vmatmul.mubr.bf16.gmra.mrb[0].mxu0 %v5931
    %v6009 = vpop.f32.mrb[0].mxu0
    %v6010 = vadd.f32 0.0, %v6009
    %v6011 = vpop.f32.mrb[0].mxu0
    %v6012 = vadd.f32 0.0, %v6011
    %v6013 = vpop.f32.mrb[0].mxu0
    %v6014 = vadd.f32 0.0, %v6013
    %v6015 = vpop.f32.mrb[0].mxu0
    %v6016 = vadd.f32 0.0, %v6015
    %6017 = vmatprep.mubr.bf16.mxu0 0
    %6018 = vmatmul.mubr.bf16.gmra.mrb[0].mxu0 %v5934
    %v6019 = vpop.f32.mrb[0].mxu0
    %v6020 = vadd.f32 0.0, %v6019
    %v6021 = vpop.f32.mrb[0].mxu0
    %v6022 = vadd.f32 0.0, %v6021
    %v6023 = vpop.f32.mrb[0].mxu0
    %v6024 = vadd.f32 0.0, %v6023
    %v6025 = vpop.f32.mrb[0].mxu0
    %v6026 = vadd.f32 0.0, %v6025
    %6027 = vmatprep.mubr.bf16.mxu0 0
    %6028 = vmatmul.mubr.bf16.gmra.mrb[0].mxu0 %v5937
    %v6029 = vpop.f32.mrb[0].mxu0
    %v6030 = vadd.f32 0.0, %v6029
    %v6031 = vpop.f32.mrb[0].mxu0
    %v6032 = vadd.f32 0.0, %v6031
    %v6033 = vpop.f32.mrb[0].mxu0
    %v6034 = vadd.f32 0.0, %v6033
    %v6035 = vpop.f32.mrb[0].mxu0
    %v6036 = vadd.f32 0.0, %v6035
    %6037 = vmatprep.mubr.bf16.mxu0 0
    %6038 = vmatmul.mubr.bf16.gmra.mrb[0].mxu0 %v5940
    %v6039 = vpop.f32.mrb[0].mxu0
    %v6040 = vadd.f32 0.0, %v6039
    %v6041 = vpop.f32.mrb[0].mxu0
    %v6042 = vadd.f32 0.0, %v6041
    %v6043 = vpop.f32.mrb[0].mxu0
    %v6044 = vadd.f32 0.0, %v6043
    %v6045 = vpop.f32.mrb[0].mxu0
    %v6046 = vadd.f32 0.0, %v6045
    %6047 = vmatprep.mubr.bf16.mxu0 0
    %6048 = vmatmul.mubr.bf16.gmra.mrb[0].mxu0 %v5943
    %v6049 = vpop.f32.mrb[0].mxu0
    %v6050 = vadd.f32 0.0, %v6049
    %v6051 = vpop.f32.mrb[0].mxu0
    %v6052 = vadd.f32 0.0, %v6051
    %v6053 = vpop.f32.mrb[0].mxu0
    %v6054 = vadd.f32 0.0, %v6053
    %v6055 = vpop.f32.mrb[0].mxu0
    %v6056 = vadd.f32 0.0, %v6055
    %6057 = vdwg.mxu0
    %v6058 = vadd.f32 %v5586, %v5980
    %v6059 = vadd.f32 %v5588, %v5982
    %v6060 = vadd.f32 %v5590, %v5984
    %v6061 = vadd.f32 %v5592, %v5986
    %v6062 = vadd.f32 %v5596, %v5990
    %v6063 = vadd.f32 %v5598, %v5992
    %v6064 = vadd.f32 %v5600, %v5994
    %v6065 = vadd.f32 %v5602, %v5996
    %v6066 = vadd.f32 %v5606, %v6000
    %v6067 = vadd.f32 %v5608, %v6002
    %v6068 = vadd.f32 %v5610, %v6004
    %v6069 = vadd.f32 %v5612, %v6006
    %v6070 = vadd.f32 %v5616, %v6010
    %v6071 = vadd.f32 %v5618, %v6012
    %v6072 = vadd.f32 %v5620, %v6014
    %v6073 = vadd.f32 %v5622, %v6016
    %v6074 = vadd.f32 %v5626, %v6020
    %v6075 = vadd.f32 %v5628, %v6022
    %v6076 = vadd.f32 %v5630, %v6024
    %v6077 = vadd.f32 %v5632, %v6026
    %v6078 = vadd.f32 %v5636, %v6030
    %v6079 = vadd.f32 %v5638, %v6032
    %v6080 = vadd.f32 %v5640, %v6034
    %v6081 = vadd.f32 %v5642, %v6036
    %v6082 = vadd.f32 %v5646, %v6040
    %v6083 = vadd.f32 %v5648, %v6042
    %v6084 = vadd.f32 %v5650, %v6044
    %v6085 = vadd.f32 %v5652, %v6046
    %v6086 = vadd.f32 %v5656, %v6050
    %v6087 = vadd.f32 %v5658, %v6052
    %v6088 = vadd.f32 %v5660, %v6054
    %v6089 = vadd.f32 %v5662, %v6056
    %v6090 = vlaneseq
    %v6091 = vshrl.u32 %v6090, 7
    %v6092 = vsub.s32 4, %v6091
    %v6093 = vrot.slane %v153, %v6092
    %v6094 = vlaneseq
    %v6095 = vshrl.u32 %v6094, 7
    %v6096 = vsub.s32 4, %v6095
    %v6097 = vrot.slane %v154, %v6096
    %v6098 = vadd.f32 %v6058, %v6093
    %v6099 = vadd.f32 %v6059, %v6097
    %v6100 = vadd.f32 %v6060, %v6093
    %v6101 = vadd.f32 %v6061, %v6097
    %v6102 = vadd.f32 %v6062, %v6093
    %v6103 = vadd.f32 %v6063, %v6097
    %v6104 = vadd.f32 %v6064, %v6093
    %v6105 = vadd.f32 %v6065, %v6097
    %v6106 = vadd.f32 %v6066, %v6093
    %v6107 = vadd.f32 %v6067, %v6097
    %v6108 = vadd.f32 %v6068, %v6093
    %v6109 = vadd.f32 %v6069, %v6097
    %v6110 = vadd.f32 %v6070, %v6093
    %v6111 = vadd.f32 %v6071, %v6097
    %v6112 = vadd.f32 %v6072, %v6093
    %v6113 = vadd.f32 %v6073, %v6097
    %v6114 = vadd.f32 %v6074, %v6093
    %v6115 = vadd.f32 %v6075, %v6097
    %v6116 = vadd.f32 %v6076, %v6093
    %v6117 = vadd.f32 %v6077, %v6097
    %v6118 = vadd.f32 %v6078, %v6093
    %v6119 = vadd.f32 %v6079, %v6097
    %v6120 = vadd.f32 %v6080, %v6093
    %v6121 = vadd.f32 %v6081, %v6097
    %v6122 = vadd.f32 %v6082, %v6093
    %v6123 = vadd.f32 %v6083, %v6097
    %v6124 = vadd.f32 %v6084, %v6093
    %v6125 = vadd.f32 %v6085, %v6097
    %v6126 = vadd.f32 %v6086, %v6093
    %v6127 = vadd.f32 %v6087, %v6097
    %v6128 = vadd.f32 %v6088, %v6093
    %v6129 = vadd.f32 %v6089, %v6097
    %vm6130 = vcmp.gt.f32.partialorder %v6098, 0.0
    %vm6131 = vcmp.gt.f32.partialorder %v6099, 0.0
    %vm6132 = vcmp.gt.f32.partialorder %v6100, 0.0
    %vm6133 = vcmp.gt.f32.partialorder %v6101, 0.0
    %vm6134 = vcmp.gt.f32.partialorder %v6102, 0.0
    %vm6135 = vcmp.gt.f32.partialorder %v6103, 0.0
    %vm6136 = vcmp.gt.f32.partialorder %v6104, 0.0
    %vm6137 = vcmp.gt.f32.partialorder %v6105, 0.0
    %vm6138 = vcmp.gt.f32.partialorder %v6106, 0.0
    %vm6139 = vcmp.gt.f32.partialorder %v6107, 0.0
    %vm6140 = vcmp.gt.f32.partialorder %v6108, 0.0
    %vm6141 = vcmp.gt.f32.partialorder %v6109, 0.0
    %vm6142 = vcmp.gt.f32.partialorder %v6110, 0.0
    %vm6143 = vcmp.gt.f32.partialorder %v6111, 0.0
    %vm6144 = vcmp.gt.f32.partialorder %v6112, 0.0
    %vm6145 = vcmp.gt.f32.partialorder %v6113, 0.0
    %vm6146 = vcmp.gt.f32.partialorder %v6114, 0.0
    %vm6147 = vcmp.gt.f32.partialorder %v6115, 0.0
    %vm6148 = vcmp.gt.f32.partialorder %v6116, 0.0
    %vm6149 = vcmp.gt.f32.partialorder %v6117, 0.0
    %vm6150 = vcmp.gt.f32.partialorder %v6118, 0.0
    %vm6151 = vcmp.gt.f32.partialorder %v6119, 0.0
    %vm6152 = vcmp.gt.f32.partialorder %v6120, 0.0
    %vm6153 = vcmp.gt.f32.partialorder %v6121, 0.0
    %vm6154 = vcmp.gt.f32.partialorder %v6122, 0.0
    %vm6155 = vcmp.gt.f32.partialorder %v6123, 0.0
    %vm6156 = vcmp.gt.f32.partialorder %v6124, 0.0
    %vm6157 = vcmp.gt.f32.partialorder %v6125, 0.0
    %vm6158 = vcmp.gt.f32.partialorder %v6126, 0.0
    %vm6159 = vcmp.gt.f32.partialorder %v6127, 0.0
    %vm6160 = vcmp.gt.f32.partialorder %v6128, 0.0
    %vm6161 = vcmp.gt.f32.partialorder %v6129, 0.0
    %v6162 = vmul.f32 %v6098, 0.01
    %v6163 = vmul.f32 %v6099, 0.01
    %v6164 = vmul.f32 %v6100, 0.01
    %v6165 = vmul.f32 %v6101, 0.01
    %v6166 = vmul.f32 %v6102, 0.01
    %v6167 = vmul.f32 %v6103, 0.01
    %v6168 = vmul.f32 %v6104, 0.01
    %v6169 = vmul.f32 %v6105, 0.01
    %v6170 = vmul.f32 %v6106, 0.01
    %v6171 = vmul.f32 %v6107, 0.01
    %v6172 = vmul.f32 %v6108, 0.01
    %v6173 = vmul.f32 %v6109, 0.01
    %v6174 = vmul.f32 %v6110, 0.01
    %v6175 = vmul.f32 %v6111, 0.01
    %v6176 = vmul.f32 %v6112, 0.01
    %v6177 = vmul.f32 %v6113, 0.01
    %v6178 = vmul.f32 %v6114, 0.01
    %v6179 = vmul.f32 %v6115, 0.01
    %v6180 = vmul.f32 %v6116, 0.01
    %v6181 = vmul.f32 %v6117, 0.01
    %v6182 = vmul.f32 %v6118, 0.01
    %v6183 = vmul.f32 %v6119, 0.01
    %v6184 = vmul.f32 %v6120, 0.01
    %v6185 = vmul.f32 %v6121, 0.01
    %v6186 = vmul.f32 %v6122, 0.01
    %v6187 = vmul.f32 %v6123, 0.01
    %v6188 = vmul.f32 %v6124, 0.01
    %v6189 = vmul.f32 %v6125, 0.01
    %v6190 = vmul.f32 %v6126, 0.01
    %v6191 = vmul.f32 %v6127, 0.01
    %v6192 = vmul.f32 %v6128, 0.01
    %v6193 = vmul.f32 %v6129, 0.01
    %v6194 = vsel %vm6130, %v6098, %v6162
    %v6195 = vsel %vm6131, %v6099, %v6163
    %v6196 = vsel %vm6132, %v6100, %v6164
    %v6197 = vsel %vm6133, %v6101, %v6165
    %v6198 = vsel %vm6134, %v6102, %v6166
    %v6199 = vsel %vm6135, %v6103, %v6167
    %v6200 = vsel %vm6136, %v6104, %v6168
    %v6201 = vsel %vm6137, %v6105, %v6169
    %v6202 = vsel %vm6138, %v6106, %v6170
    %v6203 = vsel %vm6139, %v6107, %v6171
    %v6204 = vsel %vm6140, %v6108, %v6172
    %v6205 = vsel %vm6141, %v6109, %v6173
    %v6206 = vsel %vm6142, %v6110, %v6174
    %v6207 = vsel %vm6143, %v6111, %v6175
    %v6208 = vsel %vm6144, %v6112, %v6176
    %v6209 = vsel %vm6145, %v6113, %v6177
    %v6210 = vsel %vm6146, %v6114, %v6178
    %v6211 = vsel %vm6147, %v6115, %v6179
    %v6212 = vsel %vm6148, %v6116, %v6180
    %v6213 = vsel %vm6149, %v6117, %v6181
    %v6214 = vsel %vm6150, %v6118, %v6182
    %v6215 = vsel %vm6151, %v6119, %v6183
    %v6216 = vsel %vm6152, %v6120, %v6184
    %v6217 = vsel %vm6153, %v6121, %v6185
    %v6218 = vsel %vm6154, %v6122, %v6186
    %v6219 = vsel %vm6155, %v6123, %v6187
    %v6220 = vsel %vm6156, %v6124, %v6188
    %v6221 = vsel %vm6157, %v6125, %v6189
    %v6222 = vsel %vm6158, %v6126, %v6190
    %v6223 = vsel %vm6159, %v6127, %v6191
    %v6224 = vsel %vm6160, %v6128, %v6192
    %v6225 = vsel %vm6161, %v6129, %v6193
    %v6226 = vpack.c.bf16 %v6196, %v6194
    %v6227 = vpack.c.bf16 %v6197, %v6195
    %v6228 = vpack.c.bf16 %v6200, %v6198
    %v6229 = vpack.c.bf16 %v6201, %v6199
    %v6230 = vpack.c.bf16 %v6204, %v6202
    %v6231 = vpack.c.bf16 %v6205, %v6203
    %v6232 = vpack.c.bf16 %v6208, %v6206
    %v6233 = vpack.c.bf16 %v6209, %v6207
    %v6234 = vpack.c.bf16 %v6212, %v6210
    %v6235 = vpack.c.bf16 %v6213, %v6211
    %v6236 = vpack.c.bf16 %v6216, %v6214
    %v6237 = vpack.c.bf16 %v6217, %v6215
    %v6238 = vpack.c.bf16 %v6220, %v6218
    %v6239 = vpack.c.bf16 %v6221, %v6219
    %v6240 = vpack.c.bf16 %v6224, %v6222
    %v6241 = vpack.c.bf16 %v6225, %v6223
    %s6242 = scalar_lea.vmem [#allocation11], 384
    %v6243 = vld [vmem:[%s6242] sm:$0xff]
    %v6244 = vld [vmem:[%s6242 + $0x8] sm:$0xff]
    %v6245 = vld [vmem:[%s6242 + $0x10] sm:$0xff]
    %v6246 = vld [vmem:[%s6242 + $0x18] sm:$0xff]
    %v6247 = vld [vmem:[%s6242 + $0x20] sm:$0xff]
    %v6248 = vld [vmem:[%s6242 + $0x28] sm:$0xff]
    %v6249 = vld [vmem:[%s6242 + $0x30] sm:$0xff]
    %v6250 = vld [vmem:[%s6242 + $0x38] sm:$0xff]
    %v6251 = vld [vmem:[%s6242 + $0x40] sm:$0xff]
    %v6252 = vld [vmem:[%s6242 + $0x48] sm:$0xff]
    %v6253 = vld [vmem:[%s6242 + $0x50] sm:$0xff]
    %v6254 = vld [vmem:[%s6242 + $0x58] sm:$0xff]
    %v6255 = vld [vmem:[%s6242 + $0x60] sm:$0xff]
    %v6256 = vld [vmem:[%s6242 + $0x68] sm:$0xff]
    %v6257 = vld [vmem:[%s6242 + $0x70] sm:$0xff]
    %v6258 = vld [vmem:[%s6242 + $0x78] sm:$0xff]
    %v6259 = vld [vmem:[%s6242 + $0x80] sm:$0xff]
    %v6260 = vld [vmem:[%s6242 + $0x88] sm:$0xff]
    %v6261 = vld [vmem:[%s6242 + $0x90] sm:$0xff]
    %v6262 = vld [vmem:[%s6242 + $0x98] sm:$0xff]
    %v6263 = vld [vmem:[%s6242 + $0xa0] sm:$0xff]
    %v6264 = vld [vmem:[%s6242 + $0xa8] sm:$0xff]
    %v6265 = vld [vmem:[%s6242 + $0xb0] sm:$0xff]
    %v6266 = vld [vmem:[%s6242 + $0xb8] sm:$0xff]
    %v6267 = vlaneseq
    %v6268 = vshrl.u32 %v6267, 7
    %v6269 = vsub.s32 5, %v6268
    %v6270 = vrot.slane %v153, %v6269
    %v6271 = vlaneseq
    %v6272 = vshrl.u32 %v6271, 7
    %v6273 = vsub.s32 5, %v6272
    %v6274 = vrot.slane %v154, %v6273
    %v6299 = vunpack.c.l.b16 %v6243
    %v6300 = vunpack.c.h.b16 %v6243
    %v6301 = vunpack.c.l.b16 %v6244
    %v6302 = vunpack.c.h.b16 %v6244
    %v6303 = vunpack.c.l.b16 %v6245
    %v6304 = vunpack.c.h.b16 %v6245
    %v6305 = vunpack.c.l.b16 %v6246
    %v6306 = vunpack.c.h.b16 %v6246
    %v6307 = vunpack.c.l.b16 %v6247
    %v6308 = vunpack.c.h.b16 %v6247
    %v6309 = vunpack.c.l.b16 %v6248
    %v6310 = vunpack.c.h.b16 %v6248
    %v6311 = vunpack.c.l.b16 %v6249
    %v6312 = vunpack.c.h.b16 %v6249
    %v6313 = vunpack.c.l.b16 %v6250
    %v6314 = vunpack.c.h.b16 %v6250
    %v6315 = vunpack.c.l.b16 %v6251
    %v6316 = vunpack.c.h.b16 %v6251
    %v6317 = vunpack.c.l.b16 %v6252
    %v6318 = vunpack.c.h.b16 %v6252
    %v6319 = vunpack.c.l.b16 %v6253
    %v6320 = vunpack.c.h.b16 %v6253
    %v6321 = vunpack.c.l.b16 %v6254
    %v6322 = vunpack.c.h.b16 %v6254
    %v6323 = vunpack.c.l.b16 %v6255
    %v6324 = vunpack.c.h.b16 %v6255
    %v6325 = vunpack.c.l.b16 %v6256
    %v6326 = vunpack.c.h.b16 %v6256
    %v6327 = vunpack.c.l.b16 %v6257
    %v6328 = vunpack.c.h.b16 %v6257
    %v6329 = vunpack.c.l.b16 %v6258
    %v6330 = vunpack.c.h.b16 %v6258
    %v6331 = vunpack.c.l.b16 %v6259
    %v6332 = vunpack.c.h.b16 %v6259
    %v6333 = vunpack.c.l.b16 %v6260
    %v6334 = vunpack.c.h.b16 %v6260
    %v6335 = vunpack.c.l.b16 %v6261
    %v6336 = vunpack.c.h.b16 %v6261
    %v6337 = vunpack.c.l.b16 %v6262
    %v6338 = vunpack.c.h.b16 %v6262
    %v6339 = vunpack.c.l.b16 %v6263
    %v6340 = vunpack.c.h.b16 %v6263
    %v6341 = vunpack.c.l.b16 %v6264
    %v6342 = vunpack.c.h.b16 %v6264
    %v6343 = vunpack.c.l.b16 %v6265
    %v6344 = vunpack.c.h.b16 %v6265
    %v6345 = vunpack.c.l.b16 %v6266
    %v6346 = vunpack.c.h.b16 %v6266
    %v6347 = vpack.c.b16 %v6301, %v6299
    %v6348 = vpack.c.b16 %v6302, %v6300
    %v6349 = vpack.c.b16 %v6305, %v6303
    %v6350 = vpack.c.b16 %v6306, %v6304
    %v6351 = vpack.c.b16 %v6309, %v6307
    %v6352 = vpack.c.b16 %v6310, %v6308
    %v6353 = vpack.c.b16 %v6313, %v6311
    %v6354 = vpack.c.b16 %v6314, %v6312
    %v6355 = vpack.c.b16 %v6317, %v6315
    %v6356 = vpack.c.b16 %v6318, %v6316
    %v6357 = vpack.c.b16 %v6321, %v6319
    %v6358 = vpack.c.b16 %v6322, %v6320
    %v6359 = vpack.c.b16 %v6325, %v6323
    %v6360 = vpack.c.b16 %v6326, %v6324
    %v6361 = vpack.c.b16 %v6329, %v6327
    %v6362 = vpack.c.b16 %v6330, %v6328
    %v6363 = vpack.c.b16 %v6333, %v6331
    %v6364 = vpack.c.b16 %v6334, %v6332
    %v6365 = vpack.c.b16 %v6337, %v6335
    %v6366 = vpack.c.b16 %v6338, %v6336
    %v6367 = vpack.c.b16 %v6341, %v6339
    %v6368 = vpack.c.b16 %v6342, %v6340
    %v6369 = vpack.c.b16 %v6345, %v6343
    %v6370 = vpack.c.b16 %v6346, %v6344
    %v6396 = vsel %vm829, %v6227, 0
    %v6399 = vsel %vm829, %v6229, 0
    %v6402 = vsel %vm829, %v6231, 0
    %v6405 = vsel %vm829, %v6233, 0
    %v6408 = vsel %vm829, %v6235, 0
    %v6411 = vsel %vm829, %v6237, 0
    %v6414 = vsel %vm829, %v6239, 0
    %v6417 = vsel %vm829, %v6241, 0
    %6419 = vmatprep.subr.bf16.mxu0 %v6348
    %6420 = vmatpush1.bf16.msra.mxu0 %v6347
    %6421 = vmatprep.subr.bf16.mxu0 %v6350
    %6422 = vmatpush1.bf16.msra.mxu0 %v6349
    %6423 = vmatprep.subr.bf16.mxu0 %v6352
    %6424 = vmatpush1.bf16.msra.mxu0 %v6351
    %6425 = vmatprep.subr.bf16.mxu0 %v6354
    %6426 = vmatpush1.bf16.msra.mxu0 %v6353
    %6427 = vmatprep.subr.bf16.mxu0 %v6356
    %6428 = vmatpush1.bf16.msra.mxu0 %v6355
    %6429 = vmatprep.subr.bf16.mxu0 %v6358
    %6430 = vmatpush1.bf16.msra.mxu0 %v6357
    %6431 = vmatprep.subr.bf16.mxu0 %v6360
    %6432 = vmatpush1.bf16.msra.mxu0 %v6359
    %6433 = vmatprep.subr.bf16.mxu0 %v6362
    %6434 = vmatpush1.bf16.msra.mxu0 %v6361
    %6435 = vmatprep.subr.bf16.mxu0 %v6364
    %6436 = vmatpush1.bf16.msra.mxu0 %v6363
    %6437 = vmatprep.subr.bf16.mxu0 %v6366
    %6438 = vmatpush1.bf16.msra.mxu0 %v6365
    %6439 = vmatprep.subr.bf16.mxu0 %v6368
    %6440 = vmatpush1.bf16.msra.mxu0 %v6367
    %6441 = vmatprep.subr.bf16.mxu0 %v6370
    %6442 = vmatpush1.bf16.msra.mxu0 %v6369
    %6443 = vmatprep.subr.bf16.mxu0 0
    %6444 = vmatpush1.bf16.msra.mxu0 0
    %6445 = vmatprep.subr.bf16.mxu0 0
    %6446 = vmatpush1.bf16.msra.mxu0 0
    %6447 = vmatprep.subr.bf16.mxu0 0
    %6448 = vmatpush1.bf16.msra.mxu0 0
    %6449 = vmatprep.subr.bf16.mxu0 0
    %6450 = vmatpush1.bf16.msra.mxu0 0
    %6451 = vmatprep.mubr.bf16.mxu0 %v6396
    %6452 = vmatmul.mubr.bf16.gmra.mrb[0].mxu0 %v6226
    %v6453 = vpop.f32.mrb[0].mxu0
    %v6454 = vadd.f32 %v6270, %v6453
    %v6455 = vpop.f32.mrb[0].mxu0
    %v6456 = vadd.f32 %v6274, %v6455
    %v6457 = vpop.f32.mrb[0].mxu0
    %v6458 = vadd.f32 %v6270, %v6457
    %v6459 = vpop.f32.mrb[0].mxu0
    %v6460 = vadd.f32 %v6274, %v6459
    %6461 = vmatprep.mubr.bf16.mxu0 %v6399
    %6462 = vmatmul.mubr.bf16.gmra.mrb[0].mxu0 %v6228
    %v6463 = vpop.f32.mrb[0].mxu0
    %v6464 = vadd.f32 %v6270, %v6463
    %v6465 = vpop.f32.mrb[0].mxu0
    %v6466 = vadd.f32 %v6274, %v6465
    %v6467 = vpop.f32.mrb[0].mxu0
    %v6468 = vadd.f32 %v6270, %v6467
    %v6469 = vpop.f32.mrb[0].mxu0
    %v6470 = vadd.f32 %v6274, %v6469
    %6471 = vmatprep.mubr.bf16.mxu0 %v6402
    %6472 = vmatmul.mubr.bf16.gmra.mrb[0].mxu0 %v6230
    %v6473 = vpop.f32.mrb[0].mxu0
    %v6474 = vadd.f32 %v6270, %v6473
    %v6475 = vpop.f32.mrb[0].mxu0
    %v6476 = vadd.f32 %v6274, %v6475
    %v6477 = vpop.f32.mrb[0].mxu0
    %v6478 = vadd.f32 %v6270, %v6477
    %v6479 = vpop.f32.mrb[0].mxu0
    %v6480 = vadd.f32 %v6274, %v6479
    %6481 = vmatprep.mubr.bf16.mxu0 %v6405
    %6482 = vmatmul.mubr.bf16.gmra.mrb[0].mxu0 %v6232
    %v6483 = vpop.f32.mrb[0].mxu0
    %v6484 = vadd.f32 %v6270, %v6483
    %v6485 = vpop.f32.mrb[0].mxu0
    %v6486 = vadd.f32 %v6274, %v6485
    %v6487 = vpop.f32.mrb[0].mxu0
    %v6488 = vadd.f32 %v6270, %v6487
    %v6489 = vpop.f32.mrb[0].mxu0
    %v6490 = vadd.f32 %v6274, %v6489
    %6491 = vmatprep.mubr.bf16.mxu0 %v6408
    %6492 = vmatmul.mubr.bf16.gmra.mrb[0].mxu0 %v6234
    %v6493 = vpop.f32.mrb[0].mxu0
    %v6494 = vadd.f32 %v6270, %v6493
    %v6495 = vpop.f32.mrb[0].mxu0
    %v6496 = vadd.f32 %v6274, %v6495
    %v6497 = vpop.f32.mrb[0].mxu0
    %v6498 = vadd.f32 %v6270, %v6497
    %v6499 = vpop.f32.mrb[0].mxu0
    %v6500 = vadd.f32 %v6274, %v6499
    %6501 = vmatprep.mubr.bf16.mxu0 %v6411
    %6502 = vmatmul.mubr.bf16.gmra.mrb[0].mxu0 %v6236
    %v6503 = vpop.f32.mrb[0].mxu0
    %v6504 = vadd.f32 %v6270, %v6503
    %v6505 = vpop.f32.mrb[0].mxu0
    %v6506 = vadd.f32 %v6274, %v6505
    %v6507 = vpop.f32.mrb[0].mxu0
    %v6508 = vadd.f32 %v6270, %v6507
    %v6509 = vpop.f32.mrb[0].mxu0
    %v6510 = vadd.f32 %v6274, %v6509
    %6511 = vmatprep.mubr.bf16.mxu0 %v6414
    %6512 = vmatmul.mubr.bf16.gmra.mrb[0].mxu0 %v6238
    %v6513 = vpop.f32.mrb[0].mxu0
    %v6514 = vadd.f32 %v6270, %v6513
    %v6515 = vpop.f32.mrb[0].mxu0
    %v6516 = vadd.f32 %v6274, %v6515
    %v6517 = vpop.f32.mrb[0].mxu0
    %v6518 = vadd.f32 %v6270, %v6517
    %v6519 = vpop.f32.mrb[0].mxu0
    %v6520 = vadd.f32 %v6274, %v6519
    %6521 = vmatprep.mubr.bf16.mxu0 %v6417
    %6522 = vmatmul.mubr.bf16.gmra.mrb[0].mxu0 %v6240
    %v6523 = vpop.f32.mrb[0].mxu0
    %v6524 = vadd.f32 %v6270, %v6523
    %v6525 = vpop.f32.mrb[0].mxu0
    %v6526 = vadd.f32 %v6274, %v6525
    %v6527 = vpop.f32.mrb[0].mxu0
    %v6528 = vadd.f32 %v6270, %v6527
    %v6529 = vpop.f32.mrb[0].mxu0
    %v6530 = vadd.f32 %v6274, %v6529
    %6531 = vdwg.mxu0
    %vm6532 = vcmp.gt.f32.partialorder %v6454, 0.0
    %vm6533 = vcmp.gt.f32.partialorder %v6456, 0.0
    %vm6534 = vcmp.gt.f32.partialorder %v6458, 0.0
    %vm6535 = vcmp.gt.f32.partialorder %v6460, 0.0
    %vm6536 = vcmp.gt.f32.partialorder %v6464, 0.0
    %vm6537 = vcmp.gt.f32.partialorder %v6466, 0.0
    %vm6538 = vcmp.gt.f32.partialorder %v6468, 0.0
    %vm6539 = vcmp.gt.f32.partialorder %v6470, 0.0
    %vm6540 = vcmp.gt.f32.partialorder %v6474, 0.0
    %vm6541 = vcmp.gt.f32.partialorder %v6476, 0.0
    %vm6542 = vcmp.gt.f32.partialorder %v6478, 0.0
    %vm6543 = vcmp.gt.f32.partialorder %v6480, 0.0
    %vm6544 = vcmp.gt.f32.partialorder %v6484, 0.0
    %vm6545 = vcmp.gt.f32.partialorder %v6486, 0.0
    %vm6546 = vcmp.gt.f32.partialorder %v6488, 0.0
    %vm6547 = vcmp.gt.f32.partialorder %v6490, 0.0
    %vm6548 = vcmp.gt.f32.partialorder %v6494, 0.0
    %vm6549 = vcmp.gt.f32.partialorder %v6496, 0.0
    %vm6550 = vcmp.gt.f32.partialorder %v6498, 0.0
    %vm6551 = vcmp.gt.f32.partialorder %v6500, 0.0
    %vm6552 = vcmp.gt.f32.partialorder %v6504, 0.0
    %vm6553 = vcmp.gt.f32.partialorder %v6506, 0.0
    %vm6554 = vcmp.gt.f32.partialorder %v6508, 0.0
    %vm6555 = vcmp.gt.f32.partialorder %v6510, 0.0
    %vm6556 = vcmp.gt.f32.partialorder %v6514, 0.0
    %vm6557 = vcmp.gt.f32.partialorder %v6516, 0.0
    %vm6558 = vcmp.gt.f32.partialorder %v6518, 0.0
    %vm6559 = vcmp.gt.f32.partialorder %v6520, 0.0
    %vm6560 = vcmp.gt.f32.partialorder %v6524, 0.0
    %vm6561 = vcmp.gt.f32.partialorder %v6526, 0.0
    %vm6562 = vcmp.gt.f32.partialorder %v6528, 0.0
    %vm6563 = vcmp.gt.f32.partialorder %v6530, 0.0
    %v6564 = vmul.f32 %v6454, 0.01
    %v6565 = vmul.f32 %v6456, 0.01
    %v6566 = vmul.f32 %v6458, 0.01
    %v6567 = vmul.f32 %v6460, 0.01
    %v6568 = vmul.f32 %v6464, 0.01
    %v6569 = vmul.f32 %v6466, 0.01
    %v6570 = vmul.f32 %v6468, 0.01
    %v6571 = vmul.f32 %v6470, 0.01
    %v6572 = vmul.f32 %v6474, 0.01
    %v6573 = vmul.f32 %v6476, 0.01
    %v6574 = vmul.f32 %v6478, 0.01
    %v6575 = vmul.f32 %v6480, 0.01
    %v6576 = vmul.f32 %v6484, 0.01
    %v6577 = vmul.f32 %v6486, 0.01
    %v6578 = vmul.f32 %v6488, 0.01
    %v6579 = vmul.f32 %v6490, 0.01
    %v6580 = vmul.f32 %v6494, 0.01
    %v6581 = vmul.f32 %v6496, 0.01
    %v6582 = vmul.f32 %v6498, 0.01
    %v6583 = vmul.f32 %v6500, 0.01
    %v6584 = vmul.f32 %v6504, 0.01
    %v6585 = vmul.f32 %v6506, 0.01
    %v6586 = vmul.f32 %v6508, 0.01
    %v6587 = vmul.f32 %v6510, 0.01
    %v6588 = vmul.f32 %v6514, 0.01
    %v6589 = vmul.f32 %v6516, 0.01
    %v6590 = vmul.f32 %v6518, 0.01
    %v6591 = vmul.f32 %v6520, 0.01
    %v6592 = vmul.f32 %v6524, 0.01
    %v6593 = vmul.f32 %v6526, 0.01
    %v6594 = vmul.f32 %v6528, 0.01
    %v6595 = vmul.f32 %v6530, 0.01
    %v6596 = vsel %vm6532, %v6454, %v6564
    %v6597 = vsel %vm6533, %v6456, %v6565
    %v6598 = vsel %vm6534, %v6458, %v6566
    %v6599 = vsel %vm6535, %v6460, %v6567
    %v6600 = vsel %vm6536, %v6464, %v6568
    %v6601 = vsel %vm6537, %v6466, %v6569
    %v6602 = vsel %vm6538, %v6468, %v6570
    %v6603 = vsel %vm6539, %v6470, %v6571
    %v6604 = vsel %vm6540, %v6474, %v6572
    %v6605 = vsel %vm6541, %v6476, %v6573
    %v6606 = vsel %vm6542, %v6478, %v6574
    %v6607 = vsel %vm6543, %v6480, %v6575
    %v6608 = vsel %vm6544, %v6484, %v6576
    %v6609 = vsel %vm6545, %v6486, %v6577
    %v6610 = vsel %vm6546, %v6488, %v6578
    %v6611 = vsel %vm6547, %v6490, %v6579
    %v6612 = vsel %vm6548, %v6494, %v6580
    %v6613 = vsel %vm6549, %v6496, %v6581
    %v6614 = vsel %vm6550, %v6498, %v6582
    %v6615 = vsel %vm6551, %v6500, %v6583
    %v6616 = vsel %vm6552, %v6504, %v6584
    %v6617 = vsel %vm6553, %v6506, %v6585
    %v6618 = vsel %vm6554, %v6508, %v6586
    %v6619 = vsel %vm6555, %v6510, %v6587
    %v6620 = vsel %vm6556, %v6514, %v6588
    %v6621 = vsel %vm6557, %v6516, %v6589
    %v6622 = vsel %vm6558, %v6518, %v6590
    %v6623 = vsel %vm6559, %v6520, %v6591
    %v6624 = vsel %vm6560, %v6524, %v6592
    %v6625 = vsel %vm6561, %v6526, %v6593
    %v6626 = vsel %vm6562, %v6528, %v6594
    %v6627 = vsel %vm6563, %v6530, %v6595
    %v6628 = vpack.c.bf16 %v6598, %v6596
    %v6629 = vpack.c.bf16 %v6599, %v6597
    %v6630 = vpack.c.bf16 %v6602, %v6600
    %v6631 = vpack.c.bf16 %v6603, %v6601
    %v6632 = vpack.c.bf16 %v6606, %v6604
    %v6633 = vpack.c.bf16 %v6607, %v6605
    %v6634 = vpack.c.bf16 %v6610, %v6608
    %v6635 = vpack.c.bf16 %v6611, %v6609
    %v6636 = vpack.c.bf16 %v6614, %v6612
    %v6637 = vpack.c.bf16 %v6615, %v6613
    %v6638 = vpack.c.bf16 %v6618, %v6616
    %v6639 = vpack.c.bf16 %v6619, %v6617
    %v6640 = vpack.c.bf16 %v6622, %v6620
    %v6641 = vpack.c.bf16 %v6623, %v6621
    %v6642 = vpack.c.bf16 %v6626, %v6624
    %v6643 = vpack.c.bf16 %v6627, %v6625
    %s6644 = scalar_lea.vmem [#allocation13], 192
    %v6645 = vld [vmem:[%s6644] sm:$0xf]
    %v6646 = vld [vmem:[%s6644 + $0x4] sm:$0xf]
    %v6647 = vld [vmem:[%s6644 + $0x8] sm:$0xf]
    %v6648 = vld [vmem:[%s6644 + $0xc] sm:$0xf]
    %v6649 = vld [vmem:[%s6644 + $0x10] sm:$0xf]
    %v6650 = vld [vmem:[%s6644 + $0x14] sm:$0xf]
    %v6651 = vld [vmem:[%s6644 + $0x18] sm:$0xf]
    %v6652 = vld [vmem:[%s6644 + $0x1c] sm:$0xf]
    %v6653 = vld [vmem:[%s6644 + $0x20] sm:$0xf]
    %v6654 = vld [vmem:[%s6644 + $0x24] sm:$0xf]
    %v6655 = vld [vmem:[%s6644 + $0x28] sm:$0xf]
    %v6656 = vld [vmem:[%s6644 + $0x2c] sm:$0xf]
    %v6657 = vld [vmem:[%s6644 + $0x30] sm:$0xf]
    %v6658 = vld [vmem:[%s6644 + $0x34] sm:$0xf]
    %v6659 = vld [vmem:[%s6644 + $0x38] sm:$0xf]
    %v6660 = vld [vmem:[%s6644 + $0x3c] sm:$0xf]
    %v6661 = vld [vmem:[%s6644 + $0x40] sm:$0xf]
    %v6662 = vld [vmem:[%s6644 + $0x44] sm:$0xf]
    %v6663 = vld [vmem:[%s6644 + $0x48] sm:$0xf]
    %v6664 = vld [vmem:[%s6644 + $0x4c] sm:$0xf]
    %v6665 = vld [vmem:[%s6644 + $0x50] sm:$0xf]
    %v6666 = vld [vmem:[%s6644 + $0x54] sm:$0xf]
    %v6667 = vld [vmem:[%s6644 + $0x58] sm:$0xf]
    %v6668 = vld [vmem:[%s6644 + $0x5c] sm:$0xf]
    %v6669 = vlaneseq
    %v6670 = vshrl.u32 %v6669, 7
    %v6671 = vsub.s32 6, %v6670
    %v6672 = vrot.slane %v153, %v6671
    %v6697 = vunpack.c.l.b16 %v6645
    %v6698 = vunpack.c.l.b16 %v6646
    %v6699 = vunpack.c.l.b16 %v6647
    %v6700 = vunpack.c.l.b16 %v6648
    %v6701 = vunpack.c.l.b16 %v6649
    %v6702 = vunpack.c.l.b16 %v6650
    %v6703 = vunpack.c.l.b16 %v6651
    %v6704 = vunpack.c.l.b16 %v6652
    %v6705 = vunpack.c.l.b16 %v6653
    %v6706 = vunpack.c.l.b16 %v6654
    %v6707 = vunpack.c.l.b16 %v6655
    %v6708 = vunpack.c.l.b16 %v6656
    %v6709 = vunpack.c.l.b16 %v6657
    %v6710 = vunpack.c.l.b16 %v6658
    %v6711 = vunpack.c.l.b16 %v6659
    %v6712 = vunpack.c.l.b16 %v6660
    %v6713 = vunpack.c.l.b16 %v6661
    %v6714 = vunpack.c.l.b16 %v6662
    %v6715 = vunpack.c.l.b16 %v6663
    %v6716 = vunpack.c.l.b16 %v6664
    %v6717 = vunpack.c.l.b16 %v6665
    %v6718 = vunpack.c.l.b16 %v6666
    %v6719 = vunpack.c.l.b16 %v6667
    %v6720 = vunpack.c.l.b16 %v6668
    %v6721 = vpack.c.b16 %v6698, %v6697
    %v6722 = vpack.c.b16 %v6700, %v6699
    %v6723 = vpack.c.b16 %v6702, %v6701
    %v6724 = vpack.c.b16 %v6704, %v6703
    %v6725 = vpack.c.b16 %v6706, %v6705
    %v6726 = vpack.c.b16 %v6708, %v6707
    %v6727 = vpack.c.b16 %v6710, %v6709
    %v6728 = vpack.c.b16 %v6712, %v6711
    %v6729 = vpack.c.b16 %v6714, %v6713
    %v6730 = vpack.c.b16 %v6716, %v6715
    %v6731 = vpack.c.b16 %v6718, %v6717
    %v6732 = vpack.c.b16 %v6720, %v6719
    %v6746 = vsel %vm829, %v6629, 0
    %v6749 = vsel %vm829, %v6631, 0
    %v6752 = vsel %vm829, %v6633, 0
    %v6755 = vsel %vm829, %v6635, 0
    %v6758 = vsel %vm829, %v6637, 0
    %v6761 = vsel %vm829, %v6639, 0
    %v6764 = vsel %vm829, %v6641, 0
    %v6767 = vsel %vm829, %v6643, 0
    %6769 = vmatprep.subr.bf16.mxu0 0
    %6770 = vmatpush1.bf16.msra.mxu0 %v6721
    %6771 = vmatprep.subr.bf16.mxu0 0
    %6772 = vmatpush1.bf16.msra.mxu0 %v6722
    %6773 = vmatprep.subr.bf16.mxu0 0
    %6774 = vmatpush1.bf16.msra.mxu0 %v6723
    %6775 = vmatprep.subr.bf16.mxu0 0
    %6776 = vmatpush1.bf16.msra.mxu0 %v6724
    %6777 = vmatprep.subr.bf16.mxu0 0
    %6778 = vmatpush1.bf16.msra.mxu0 %v6725
    %6779 = vmatprep.subr.bf16.mxu0 0
    %6780 = vmatpush1.bf16.msra.mxu0 %v6726
    %6781 = vmatprep.subr.bf16.mxu0 0
    %6782 = vmatpush1.bf16.msra.mxu0 %v6727
    %6783 = vmatprep.subr.bf16.mxu0 0
    %6784 = vmatpush1.bf16.msra.mxu0 %v6728
    %6785 = vmatprep.subr.bf16.mxu0 0
    %6786 = vmatpush1.bf16.msra.mxu0 %v6729
    %6787 = vmatprep.subr.bf16.mxu0 0
    %6788 = vmatpush1.bf16.msra.mxu0 %v6730
    %6789 = vmatprep.subr.bf16.mxu0 0
    %6790 = vmatpush1.bf16.msra.mxu0 %v6731
    %6791 = vmatprep.subr.bf16.mxu0 0
    %6792 = vmatpush1.bf16.msra.mxu0 %v6732
    %6793 = vmatprep.subr.bf16.mxu0 0
    %6794 = vmatpush1.bf16.msra.mxu0 0
    %6795 = vmatprep.subr.bf16.mxu0 0
    %6796 = vmatpush1.bf16.msra.mxu0 0
    %6797 = vmatprep.subr.bf16.mxu0 0
    %6798 = vmatpush1.bf16.msra.mxu0 0
    %6799 = vmatprep.subr.bf16.mxu0 0
    %6800 = vmatpush1.bf16.msra.mxu0 0
    %6801 = vmatprep.mubr.bf16.mxu0 %v6746
    %6802 = vmatmul.mubr.bf16.gmra.mrb[0].mxu0 %v6628
    %v6803 = vpop.f32.mrb[0].mxu0
    %v6804 = vadd.f32 %v6672, %v6803
    %v6805 = vpop.f32.mrb[0].mxu0
    %v6806 = vpop.f32.mrb[0].mxu0
    %v6807 = vadd.f32 %v6672, %v6806
    %v6808 = vpop.f32.mrb[0].mxu0
    %6809 = vmatprep.mubr.bf16.mxu0 %v6749
    %6810 = vmatmul.mubr.bf16.gmra.mrb[0].mxu0 %v6630
    %v6811 = vpop.f32.mrb[0].mxu0
    %v6812 = vadd.f32 %v6672, %v6811
    %v6813 = vpop.f32.mrb[0].mxu0
    %v6814 = vpop.f32.mrb[0].mxu0
    %v6815 = vadd.f32 %v6672, %v6814
    %v6816 = vpop.f32.mrb[0].mxu0
    %6817 = vmatprep.mubr.bf16.mxu0 %v6752
    %6818 = vmatmul.mubr.bf16.gmra.mrb[0].mxu0 %v6632
    %v6819 = vpop.f32.mrb[0].mxu0
    %v6820 = vadd.f32 %v6672, %v6819
    %v6821 = vpop.f32.mrb[0].mxu0
    %v6822 = vpop.f32.mrb[0].mxu0
    %v6823 = vadd.f32 %v6672, %v6822
    %v6824 = vpop.f32.mrb[0].mxu0
    %6825 = vmatprep.mubr.bf16.mxu0 %v6755
    %6826 = vmatmul.mubr.bf16.gmra.mrb[0].mxu0 %v6634
    %v6827 = vpop.f32.mrb[0].mxu0
    %v6828 = vadd.f32 %v6672, %v6827
    %v6829 = vpop.f32.mrb[0].mxu0
    %v6830 = vpop.f32.mrb[0].mxu0
    %v6831 = vadd.f32 %v6672, %v6830
    %v6832 = vpop.f32.mrb[0].mxu0
    %6833 = vmatprep.mubr.bf16.mxu0 %v6758
    %6834 = vmatmul.mubr.bf16.gmra.mrb[0].mxu0 %v6636
    %v6835 = vpop.f32.mrb[0].mxu0
    %v6836 = vadd.f32 %v6672, %v6835
    %v6837 = vpop.f32.mrb[0].mxu0
    %v6838 = vpop.f32.mrb[0].mxu0
    %v6839 = vadd.f32 %v6672, %v6838
    %v6840 = vpop.f32.mrb[0].mxu0
    %6841 = vmatprep.mubr.bf16.mxu0 %v6761
    %6842 = vmatmul.mubr.bf16.gmra.mrb[0].mxu0 %v6638
    %v6843 = vpop.f32.mrb[0].mxu0
    %v6844 = vadd.f32 %v6672, %v6843
    %v6845 = vpop.f32.mrb[0].mxu0
    %v6846 = vpop.f32.mrb[0].mxu0
    %v6847 = vadd.f32 %v6672, %v6846
    %v6848 = vpop.f32.mrb[0].mxu0
    %6849 = vmatprep.mubr.bf16.mxu0 %v6764
    %6850 = vmatmul.mubr.bf16.gmra.mrb[0].mxu0 %v6640
    %v6851 = vpop.f32.mrb[0].mxu0
    %v6852 = vadd.f32 %v6672, %v6851
    %v6853 = vpop.f32.mrb[0].mxu0
    %v6854 = vpop.f32.mrb[0].mxu0
    %v6855 = vadd.f32 %v6672, %v6854
    %v6856 = vpop.f32.mrb[0].mxu0
    %6857 = vmatprep.mubr.bf16.mxu0 %v6767
    %6858 = vmatmul.mubr.bf16.gmra.mrb[0].mxu0 %v6642
    %v6859 = vpop.f32.mrb[0].mxu0
    %v6860 = vadd.f32 %v6672, %v6859
    %v6861 = vpop.f32.mrb[0].mxu0
    %v6862 = vpop.f32.mrb[0].mxu0
    %v6863 = vadd.f32 %v6672, %v6862
    %v6864 = vpop.f32.mrb[0].mxu0
    %6865 = vdwg.mxu0
    %vm6866 = vcmp.gt.f32.partialorder %v6804, 0.0
    %vm6867 = vcmp.gt.f32.partialorder %v6807, 0.0
    %vm6868 = vcmp.gt.f32.partialorder %v6812, 0.0
    %vm6869 = vcmp.gt.f32.partialorder %v6815, 0.0
    %vm6870 = vcmp.gt.f32.partialorder %v6820, 0.0
    %vm6871 = vcmp.gt.f32.partialorder %v6823, 0.0
    %vm6872 = vcmp.gt.f32.partialorder %v6828, 0.0
    %vm6873 = vcmp.gt.f32.partialorder %v6831, 0.0
    %vm6874 = vcmp.gt.f32.partialorder %v6836, 0.0
    %vm6875 = vcmp.gt.f32.partialorder %v6839, 0.0
    %vm6876 = vcmp.gt.f32.partialorder %v6844, 0.0
    %vm6877 = vcmp.gt.f32.partialorder %v6847, 0.0
    %vm6878 = vcmp.gt.f32.partialorder %v6852, 0.0
    %vm6879 = vcmp.gt.f32.partialorder %v6855, 0.0
    %vm6880 = vcmp.gt.f32.partialorder %v6860, 0.0
    %vm6881 = vcmp.gt.f32.partialorder %v6863, 0.0
    %v6882 = vmul.f32 %v6804, 0.01
    %v6883 = vmul.f32 %v6807, 0.01
    %v6884 = vmul.f32 %v6812, 0.01
    %v6885 = vmul.f32 %v6815, 0.01
    %v6886 = vmul.f32 %v6820, 0.01
    %v6887 = vmul.f32 %v6823, 0.01
    %v6888 = vmul.f32 %v6828, 0.01
    %v6889 = vmul.f32 %v6831, 0.01
    %v6890 = vmul.f32 %v6836, 0.01
    %v6891 = vmul.f32 %v6839, 0.01
    %v6892 = vmul.f32 %v6844, 0.01
    %v6893 = vmul.f32 %v6847, 0.01
    %v6894 = vmul.f32 %v6852, 0.01
    %v6895 = vmul.f32 %v6855, 0.01
    %v6896 = vmul.f32 %v6860, 0.01
    %v6897 = vmul.f32 %v6863, 0.01
    %v6898 = vsel %vm6866, %v6804, %v6882
    %v6899 = vsel %vm6867, %v6807, %v6883
    %v6900 = vsel %vm6868, %v6812, %v6884
    %v6901 = vsel %vm6869, %v6815, %v6885
    %v6902 = vsel %vm6870, %v6820, %v6886
    %v6903 = vsel %vm6871, %v6823, %v6887
    %v6904 = vsel %vm6872, %v6828, %v6888
    %v6905 = vsel %vm6873, %v6831, %v6889
    %v6906 = vsel %vm6874, %v6836, %v6890
    %v6907 = vsel %vm6875, %v6839, %v6891
    %v6908 = vsel %vm6876, %v6844, %v6892
    %v6909 = vsel %vm6877, %v6847, %v6893
    %v6910 = vsel %vm6878, %v6852, %v6894
    %v6911 = vsel %vm6879, %v6855, %v6895
    %v6912 = vsel %vm6880, %v6860, %v6896
    %v6913 = vsel %vm6881, %v6863, %v6897
    %v6914 = vpack.c.bf16 %v6899, %v6898
    %v6915 = vpack.c.bf16 %v6901, %v6900
    %v6916 = vpack.c.bf16 %v6903, %v6902
    %v6917 = vpack.c.bf16 %v6905, %v6904
    %v6918 = vpack.c.bf16 %v6907, %v6906
    %v6919 = vpack.c.bf16 %v6909, %v6908
    %v6920 = vpack.c.bf16 %v6911, %v6910
    %v6921 = vpack.c.bf16 %v6913, %v6912
    %s6922 = scalar_lea.vmem [#allocation14], 96
    %v6923 = vld [vmem:[%s6922] sm:$0xf]
    %v6924 = vld [vmem:[%s6922 + $0x4] sm:$0xf]
    %v6925 = vld [vmem:[%s6922 + $0x8] sm:$0xf]
    %v6926 = vld [vmem:[%s6922 + $0xc] sm:$0xf]
    %v6927 = vld [vmem:[%s6922 + $0x10] sm:$0xf]
    %v6928 = vld [vmem:[%s6922 + $0x14] sm:$0xf]
    %v6929 = vld [vmem:[%s6922 + $0x18] sm:$0xf]
    %v6930 = vld [vmem:[%s6922 + $0x1c] sm:$0xf]
    %v6931 = vld [vmem:[%s6922 + $0x20] sm:$0xf]
    %v6932 = vld [vmem:[%s6922 + $0x24] sm:$0xf]
    %v6933 = vld [vmem:[%s6922 + $0x28] sm:$0xf]
    %v6934 = vld [vmem:[%s6922 + $0x2c] sm:$0xf]
    %v6935 = vlaneseq
    %v6936 = vshrl.u32 %v6935, 7
    %v6937 = vsub.s32 7, %v6936
    %v6938 = vrot.slane %v153, %v6937
    %v6951 = vunpack.c.l.b16 %v6923
    %v6952 = vunpack.c.l.b16 %v6924
    %v6953 = vunpack.c.l.b16 %v6925
    %v6954 = vunpack.c.l.b16 %v6926
    %v6955 = vunpack.c.l.b16 %v6927
    %v6956 = vunpack.c.l.b16 %v6928
    %v6957 = vunpack.c.l.b16 %v6929
    %v6958 = vunpack.c.l.b16 %v6930
    %v6959 = vunpack.c.l.b16 %v6931
    %v6960 = vunpack.c.l.b16 %v6932
    %v6961 = vunpack.c.l.b16 %v6933
    %v6962 = vunpack.c.l.b16 %v6934
    %v6963 = vpack.c.b16 %v6952, %v6951
    %v6964 = vpack.c.b16 %v6954, %v6953
    %v6965 = vpack.c.b16 %v6956, %v6955
    %v6966 = vpack.c.b16 %v6958, %v6957
    %v6967 = vpack.c.b16 %v6960, %v6959
    %v6968 = vpack.c.b16 %v6962, %v6961
    %v6976 = vsel %vm1408, %v6914, 0
    %v6979 = vsel %vm1408, %v6915, 0
    %v6982 = vsel %vm1408, %v6916, 0
    %v6985 = vsel %vm1408, %v6917, 0
    %v6988 = vsel %vm1408, %v6918, 0
    %v6991 = vsel %vm1408, %v6919, 0
    %v6994 = vsel %vm1408, %v6920, 0
    %v6997 = vsel %vm1408, %v6921, 0
    %6999 = vmatprep.subr.bf16.mxu0 0
    %7000 = vmatpush1.bf16.msra.mxu0 %v6963
    %7001 = vmatprep.subr.bf16.mxu0 0
    %7002 = vmatpush1.bf16.msra.mxu0 %v6964
    %7003 = vmatprep.subr.bf16.mxu0 0
    %7004 = vmatpush1.bf16.msra.mxu0 %v6965
    %7005 = vmatprep.subr.bf16.mxu0 0
    %7006 = vmatpush1.bf16.msra.mxu0 %v6966
    %7007 = vmatprep.subr.bf16.mxu0 0
    %7008 = vmatpush1.bf16.msra.mxu0 %v6967
    %7009 = vmatprep.subr.bf16.mxu0 0
    %7010 = vmatpush1.bf16.msra.mxu0 %v6968
    %7011 = vmatprep.subr.bf16.mxu0 0
    %7012 = vmatpush1.bf16.msra.mxu0 0
    %7013 = vmatprep.subr.bf16.mxu0 0
    %7014 = vmatpush1.bf16.msra.mxu0 0
    %7015 = vmatprep.subr.bf16.mxu0 0
    %7016 = vmatpush1.bf16.msra.mxu0 0
    %7017 = vmatprep.subr.bf16.mxu0 0
    %7018 = vmatpush1.bf16.msra.mxu0 0
    %7019 = vmatprep.subr.bf16.mxu0 0
    %7020 = vmatpush1.bf16.msra.mxu0 0
    %7021 = vmatprep.subr.bf16.mxu0 0
    %7022 = vmatpush1.bf16.msra.mxu0 0
    %7023 = vmatprep.subr.bf16.mxu0 0
    %7024 = vmatpush1.bf16.msra.mxu0 0
    %7025 = vmatprep.subr.bf16.mxu0 0
    %7026 = vmatpush1.bf16.msra.mxu0 0
    %7027 = vmatprep.subr.bf16.mxu0 0
    %7028 = vmatpush1.bf16.msra.mxu0 0
    %7029 = vmatprep.subr.bf16.mxu0 0
    %7030 = vmatpush1.bf16.msra.mxu0 0
    %7031 = vmatprep.mubr.bf16.mxu0 0
    %7032 = vmatmul.mubr.bf16.gmra.mrb[0].mxu0 %v6976
    %v7033 = vpop.f32.mrb[0].mxu0
    %v7034 = vadd.f32 %v6938, %v7033
    %v7035 = vpop.f32.mrb[0].mxu0
    %v7036 = vpop.f32.mrb[0].mxu0
    %v7037 = vadd.f32 %v6938, %v7036
    %v7038 = vpop.f32.mrb[0].mxu0
    %7039 = vmatprep.mubr.bf16.mxu0 0
    %7040 = vmatmul.mubr.bf16.gmra.mrb[0].mxu0 %v6979
    %v7041 = vpop.f32.mrb[0].mxu0
    %v7042 = vadd.f32 %v6938, %v7041
    %v7043 = vpop.f32.mrb[0].mxu0
    %v7044 = vpop.f32.mrb[0].mxu0
    %v7045 = vadd.f32 %v6938, %v7044
    %v7046 = vpop.f32.mrb[0].mxu0
    %7047 = vmatprep.mubr.bf16.mxu0 0
    %7048 = vmatmul.mubr.bf16.gmra.mrb[0].mxu0 %v6982
    %v7049 = vpop.f32.mrb[0].mxu0
    %v7050 = vadd.f32 %v6938, %v7049
    %v7051 = vpop.f32.mrb[0].mxu0
    %v7052 = vpop.f32.mrb[0].mxu0
    %v7053 = vadd.f32 %v6938, %v7052
    %v7054 = vpop.f32.mrb[0].mxu0
    %7055 = vmatprep.mubr.bf16.mxu0 0
    %7056 = vmatmul.mubr.bf16.gmra.mrb[0].mxu0 %v6985
    %v7057 = vpop.f32.mrb[0].mxu0
    %v7058 = vadd.f32 %v6938, %v7057
    %v7059 = vpop.f32.mrb[0].mxu0
    %v7060 = vpop.f32.mrb[0].mxu0
    %v7061 = vadd.f32 %v6938, %v7060
    %v7062 = vpop.f32.mrb[0].mxu0
    %7063 = vmatprep.mubr.bf16.mxu0 0
    %7064 = vmatmul.mubr.bf16.gmra.mrb[0].mxu0 %v6988
    %v7065 = vpop.f32.mrb[0].mxu0
    %v7066 = vadd.f32 %v6938, %v7065
    %v7067 = vpop.f32.mrb[0].mxu0
    %v7068 = vpop.f32.mrb[0].mxu0
    %v7069 = vadd.f32 %v6938, %v7068
    %v7070 = vpop.f32.mrb[0].mxu0
    %7071 = vmatprep.mubr.bf16.mxu0 0
    %7072 = vmatmul.mubr.bf16.gmra.mrb[0].mxu0 %v6991
    %v7073 = vpop.f32.mrb[0].mxu0
    %v7074 = vadd.f32 %v6938, %v7073
    %v7075 = vpop.f32.mrb[0].mxu0
    %v7076 = vpop.f32.mrb[0].mxu0
    %v7077 = vadd.f32 %v6938, %v7076
    %v7078 = vpop.f32.mrb[0].mxu0
    %7079 = vmatprep.mubr.bf16.mxu0 0
    %7080 = vmatmul.mubr.bf16.gmra.mrb[0].mxu0 %v6994
    %v7081 = vpop.f32.mrb[0].mxu0
    %v7082 = vadd.f32 %v6938, %v7081
    %v7083 = vpop.f32.mrb[0].mxu0
    %v7084 = vpop.f32.mrb[0].mxu0
    %v7085 = vadd.f32 %v6938, %v7084
    %v7086 = vpop.f32.mrb[0].mxu0
    %7087 = vmatprep.mubr.bf16.mxu0 0
    %7088 = vmatmul.mubr.bf16.gmra.mrb[0].mxu0 %v6997
    %v7089 = vpop.f32.mrb[0].mxu0
    %v7090 = vadd.f32 %v6938, %v7089
    %v7091 = vpop.f32.mrb[0].mxu0
    %v7092 = vpop.f32.mrb[0].mxu0
    %v7093 = vadd.f32 %v6938, %v7092
    %v7094 = vpop.f32.mrb[0].mxu0
    %7095 = vdwg.mxu0
    %vm7096 = vcmp.gt.f32.partialorder %v7034, 0.0
    %vm7097 = vcmp.gt.f32.partialorder %v7037, 0.0
    %vm7098 = vcmp.gt.f32.partialorder %v7042, 0.0
    %vm7099 = vcmp.gt.f32.partialorder %v7045, 0.0
    %vm7100 = vcmp.gt.f32.partialorder %v7050, 0.0
    %vm7101 = vcmp.gt.f32.partialorder %v7053, 0.0
    %vm7102 = vcmp.gt.f32.partialorder %v7058, 0.0
    %vm7103 = vcmp.gt.f32.partialorder %v7061, 0.0
    %vm7104 = vcmp.gt.f32.partialorder %v7066, 0.0
    %vm7105 = vcmp.gt.f32.partialorder %v7069, 0.0
    %vm7106 = vcmp.gt.f32.partialorder %v7074, 0.0
    %vm7107 = vcmp.gt.f32.partialorder %v7077, 0.0
    %vm7108 = vcmp.gt.f32.partialorder %v7082, 0.0
    %vm7109 = vcmp.gt.f32.partialorder %v7085, 0.0
    %vm7110 = vcmp.gt.f32.partialorder %v7090, 0.0
    %vm7111 = vcmp.gt.f32.partialorder %v7093, 0.0
    %v7112 = vmul.f32 %v7034, 0.01
    %v7113 = vmul.f32 %v7037, 0.01
    %v7114 = vmul.f32 %v7042, 0.01
    %v7115 = vmul.f32 %v7045, 0.01
    %v7116 = vmul.f32 %v7050, 0.01
    %v7117 = vmul.f32 %v7053, 0.01
    %v7118 = vmul.f32 %v7058, 0.01
    %v7119 = vmul.f32 %v7061, 0.01
    %v7120 = vmul.f32 %v7066, 0.01
    %v7121 = vmul.f32 %v7069, 0.01
    %v7122 = vmul.f32 %v7074, 0.01
    %v7123 = vmul.f32 %v7077, 0.01
    %v7124 = vmul.f32 %v7082, 0.01
    %v7125 = vmul.f32 %v7085, 0.01
    %v7126 = vmul.f32 %v7090, 0.01
    %v7127 = vmul.f32 %v7093, 0.01
    %v7128 = vsel %vm7096, %v7034, %v7112
    %v7129 = vsel %vm7097, %v7037, %v7113
    %v7130 = vsel %vm7098, %v7042, %v7114
    %v7131 = vsel %vm7099, %v7045, %v7115
    %v7132 = vsel %vm7100, %v7050, %v7116
    %v7133 = vsel %vm7101, %v7053, %v7117
    %v7134 = vsel %vm7102, %v7058, %v7118
    %v7135 = vsel %vm7103, %v7061, %v7119
    %v7136 = vsel %vm7104, %v7066, %v7120
    %v7137 = vsel %vm7105, %v7069, %v7121
    %v7138 = vsel %vm7106, %v7074, %v7122
    %v7139 = vsel %vm7107, %v7077, %v7123
    %v7140 = vsel %vm7108, %v7082, %v7124
    %v7141 = vsel %vm7109, %v7085, %v7125
    %v7142 = vsel %vm7110, %v7090, %v7126
    %v7143 = vsel %vm7111, %v7093, %v7127
    %v7144 = vlaneseq
    %v7145 = vshrl.u32 %v7144, 7
    %v7146 = vsub.s32 1, %v7145
    %v7147 = vrot.slane %v155, %v7146
    %v7148 = vmul.f32 %v7128, %v7147
    %v7149 = vmul.f32 %v7129, %v7147
    %v7150 = vmul.f32 %v7130, %v7147
    %v7151 = vmul.f32 %v7131, %v7147
    %v7152 = vmul.f32 %v7132, %v7147
    %v7153 = vmul.f32 %v7133, %v7147
    %v7154 = vmul.f32 %v7134, %v7147
    %v7155 = vmul.f32 %v7135, %v7147
    %v7156 = vmul.f32 %v7136, %v7147
    %v7157 = vmul.f32 %v7137, %v7147
    %v7158 = vmul.f32 %v7138, %v7147
    %v7159 = vmul.f32 %v7139, %v7147
    %v7160 = vmul.f32 %v7140, %v7147
    %v7161 = vmul.f32 %v7141, %v7147
    %v7162 = vmul.f32 %v7142, %v7147
    %v7163 = vmul.f32 %v7143, %v7147
    %v7164 = vsel %vm1408, %v7148, 0.0
    %7165 = vadd.xlane.f32.xlu0 %v7164
    %v7166 = vpop.xlane.xlu0 %7165
    %v7167 = vsel %vm1408, %v7149, 0.0
    %7168 = vadd.xlane.f32.xlu0 %v7167
    %v7169 = vpop.xlane.xlu0 %7168
    %v7170 = vsel %vm1408, %v7150, 0.0
    %7171 = vadd.xlane.f32.xlu0 %v7170
    %v7172 = vpop.xlane.xlu0 %7171
    %v7173 = vsel %vm1408, %v7151, 0.0
    %7174 = vadd.xlane.f32.xlu0 %v7173
    %v7175 = vpop.xlane.xlu0 %7174
    %v7176 = vsel %vm1408, %v7152, 0.0
    %7177 = vadd.xlane.f32.xlu0 %v7176
    %v7178 = vpop.xlane.xlu0 %7177
    %v7179 = vsel %vm1408, %v7153, 0.0
    %7180 = vadd.xlane.f32.xlu0 %v7179
    %v7181 = vpop.xlane.xlu0 %7180
    %v7182 = vsel %vm1408, %v7154, 0.0
    %7183 = vadd.xlane.f32.xlu0 %v7182
    %v7184 = vpop.xlane.xlu0 %7183
    %v7185 = vsel %vm1408, %v7155, 0.0
    %7186 = vadd.xlane.f32.xlu0 %v7185
    %v7187 = vpop.xlane.xlu0 %7186
    %v7188 = vsel %vm1408, %v7156, 0.0
    %7189 = vadd.xlane.f32.xlu0 %v7188
    %v7190 = vpop.xlane.xlu0 %7189
    %v7191 = vsel %vm1408, %v7157, 0.0
    %7192 = vadd.xlane.f32.xlu0 %v7191
    %v7193 = vpop.xlane.xlu0 %7192
    %v7194 = vsel %vm1408, %v7158, 0.0
    %7195 = vadd.xlane.f32.xlu0 %v7194
    %v7196 = vpop.xlane.xlu0 %7195
    %v7197 = vsel %vm1408, %v7159, 0.0
    %7198 = vadd.xlane.f32.xlu0 %v7197
    %v7199 = vpop.xlane.xlu0 %7198
    %v7200 = vsel %vm1408, %v7160, 0.0
    %7201 = vadd.xlane.f32.xlu0 %v7200
    %v7202 = vpop.xlane.xlu0 %7201
    %v7203 = vsel %vm1408, %v7161, 0.0
    %7204 = vadd.xlane.f32.xlu0 %v7203
    %v7205 = vpop.xlane.xlu0 %7204
    %v7206 = vsel %vm1408, %v7162, 0.0
    %7207 = vadd.xlane.f32.xlu0 %v7206
    %v7208 = vpop.xlane.xlu0 %7207
    %v7209 = vsel %vm1408, %v7163, 0.0
    %7210 = vadd.xlane.f32.xlu0 %v7209
    %v7211 = vpop.xlane.xlu0 %7210
    %v7212 = vsub.f32 %v7166, 1e+08
    %v7213 = vsub.f32 %v7169, 1e+08
    %v7214 = vsub.f32 %v7172, 1e+08
    %v7215 = vsub.f32 %v7175, 1e+08
    %v7216 = vsub.f32 %v7178, 1e+08
    %v7217 = vsub.f32 %v7181, 1e+08
    %v7218 = vsub.f32 %v7184, 1e+08
    %v7219 = vsub.f32 %v7187, 1e+08
    %v7220 = vsub.f32 %v7190, 1e+08
    %v7221 = vsub.f32 %v7193, 1e+08
    %v7222 = vsub.f32 %v7196, 1e+08
    %v7223 = vsub.f32 %v7199, 1e+08
    %v7224 = vsub.f32 %v7202, 1e+08
    %v7225 = vsub.f32 %v7205, 1e+08
    %v7226 = vsub.f32 %v7208, 1e+08
    %v7227 = vsub.f32 %v7211, 1e+08
    %v7244 = vlaneseq
    %v7245 = vshrl.u32 %v7244, 7
    %v7246 = vsub.s32 %v159, %v7245
    %v7247 = vrot.slane %v7212, %v7246
    %v7248 = vlaneseq
    %v7249 = vshrl.u32 %v7248, 7
    %v7250 = vsub.s32 %v159, %v7249
    %v7251 = vrot.slane %v7213, %v7250
    %v7252 = vlaneseq
    %v7253 = vshrl.u32 %v7252, 7
    %v7254 = vsub.s32 %v159, %v7253
    %v7255 = vrot.slane %v7214, %v7254
    %v7256 = vlaneseq
    %v7257 = vshrl.u32 %v7256, 7
    %v7258 = vsub.s32 %v159, %v7257
    %v7259 = vrot.slane %v7215, %v7258
    %v7260 = vlaneseq
    %v7261 = vshrl.u32 %v7260, 7
    %v7262 = vsub.s32 %v159, %v7261
    %v7263 = vrot.slane %v7216, %v7262
    %v7264 = vlaneseq
    %v7265 = vshrl.u32 %v7264, 7
    %v7266 = vsub.s32 %v159, %v7265
    %v7267 = vrot.slane %v7217, %v7266
    %v7268 = vlaneseq
    %v7269 = vshrl.u32 %v7268, 7
    %v7270 = vsub.s32 %v159, %v7269
    %v7271 = vrot.slane %v7218, %v7270
    %v7272 = vlaneseq
    %v7273 = vshrl.u32 %v7272, 7
    %v7274 = vsub.s32 %v159, %v7273
    %v7275 = vrot.slane %v7219, %v7274
    %v7276 = vlaneseq
    %v7277 = vshrl.u32 %v7276, 7
    %v7278 = vsub.s32 %v159, %v7277
    %v7279 = vrot.slane %v7220, %v7278
    %v7280 = vlaneseq
    %v7281 = vshrl.u32 %v7280, 7
    %v7282 = vsub.s32 %v159, %v7281
    %v7283 = vrot.slane %v7221, %v7282
    %v7284 = vlaneseq
    %v7285 = vshrl.u32 %v7284, 7
    %v7286 = vsub.s32 %v159, %v7285
    %v7287 = vrot.slane %v7222, %v7286
    %v7288 = vlaneseq
    %v7289 = vshrl.u32 %v7288, 7
    %v7290 = vsub.s32 %v159, %v7289
    %v7291 = vrot.slane %v7223, %v7290
    %v7292 = vlaneseq
    %v7293 = vshrl.u32 %v7292, 7
    %v7294 = vsub.s32 %v159, %v7293
    %v7295 = vrot.slane %v7224, %v7294
    %v7296 = vlaneseq
    %v7297 = vshrl.u32 %v7296, 7
    %v7298 = vsub.s32 %v159, %v7297
    %v7299 = vrot.slane %v7225, %v7298
    %v7300 = vlaneseq
    %v7301 = vshrl.u32 %v7300, 7
    %v7302 = vsub.s32 %v159, %v7301
    %v7303 = vrot.slane %v7226, %v7302
    %v7304 = vlaneseq
    %v7305 = vshrl.u32 %v7304, 7
    %v7306 = vsub.s32 %v159, %v7305
    %v7307 = vrot.slane %v7227, %v7306
    %v7308 = vsel %vm1744, %v7251, %v7247
    %v7309 = vsel %vm1746, %v7255, %v7308
    %v7310 = vsel %vm1748, %v7259, %v7309
    %v7311 = vsel %vm1750, %v7263, %v7310
    %v7312 = vsel %vm1752, %v7267, %v7311
    %v7313 = vsel %vm1754, %v7271, %v7312
    %v7314 = vsel %vm1756, %v7275, %v7313
    %v7315 = vsel %vm1744, %v7283, %v7279
    %v7316 = vsel %vm1746, %v7287, %v7315
    %v7317 = vsel %vm1748, %v7291, %v7316
    %v7318 = vsel %vm1750, %v7295, %v7317
    %v7319 = vsel %vm1752, %v7299, %v7318
    %v7320 = vsel %vm1754, %v7303, %v7319
    %v7321 = vsel %vm1756, %v7307, %v7320
    %v7340 = vlaneseq
    %v7341 = vshrl.u32 %v7340, 7
    %v7342 = vsub.s32 %v159, %v7341
    %v7343 = vrot.slane %v7166, %v7342
    %v7344 = vlaneseq
    %v7345 = vshrl.u32 %v7344, 7
    %v7346 = vsub.s32 %v159, %v7345
    %v7347 = vrot.slane %v7169, %v7346
    %v7348 = vlaneseq
    %v7349 = vshrl.u32 %v7348, 7
    %v7350 = vsub.s32 %v159, %v7349
    %v7351 = vrot.slane %v7172, %v7350
    %v7352 = vlaneseq
    %v7353 = vshrl.u32 %v7352, 7
    %v7354 = vsub.s32 %v159, %v7353
    %v7355 = vrot.slane %v7175, %v7354
    %v7356 = vlaneseq
    %v7357 = vshrl.u32 %v7356, 7
    %v7358 = vsub.s32 %v159, %v7357
    %v7359 = vrot.slane %v7178, %v7358
    %v7360 = vlaneseq
    %v7361 = vshrl.u32 %v7360, 7
    %v7362 = vsub.s32 %v159, %v7361
    %v7363 = vrot.slane %v7181, %v7362
    %v7364 = vlaneseq
    %v7365 = vshrl.u32 %v7364, 7
    %v7366 = vsub.s32 %v159, %v7365
    %v7367 = vrot.slane %v7184, %v7366
    %v7368 = vlaneseq
    %v7369 = vshrl.u32 %v7368, 7
    %v7370 = vsub.s32 %v159, %v7369
    %v7371 = vrot.slane %v7187, %v7370
    %v7372 = vlaneseq
    %v7373 = vshrl.u32 %v7372, 7
    %v7374 = vsub.s32 %v159, %v7373
    %v7375 = vrot.slane %v7190, %v7374
    %v7376 = vlaneseq
    %v7377 = vshrl.u32 %v7376, 7
    %v7378 = vsub.s32 %v159, %v7377
    %v7379 = vrot.slane %v7193, %v7378
    %v7380 = vlaneseq
    %v7381 = vshrl.u32 %v7380, 7
    %v7382 = vsub.s32 %v159, %v7381
    %v7383 = vrot.slane %v7196, %v7382
    %v7384 = vlaneseq
    %v7385 = vshrl.u32 %v7384, 7
    %v7386 = vsub.s32 %v159, %v7385
    %v7387 = vrot.slane %v7199, %v7386
    %v7388 = vlaneseq
    %v7389 = vshrl.u32 %v7388, 7
    %v7390 = vsub.s32 %v159, %v7389
    %v7391 = vrot.slane %v7202, %v7390
    %v7392 = vlaneseq
    %v7393 = vshrl.u32 %v7392, 7
    %v7394 = vsub.s32 %v159, %v7393
    %v7395 = vrot.slane %v7205, %v7394
    %v7396 = vlaneseq
    %v7397 = vshrl.u32 %v7396, 7
    %v7398 = vsub.s32 %v159, %v7397
    %v7399 = vrot.slane %v7208, %v7398
    %v7400 = vlaneseq
    %v7401 = vshrl.u32 %v7400, 7
    %v7402 = vsub.s32 %v159, %v7401
    %v7403 = vrot.slane %v7211, %v7402
    %v7404 = vsel %vm1744, %v7347, %v7343
    %v7405 = vsel %vm1746, %v7351, %v7404
    %v7406 = vsel %vm1748, %v7355, %v7405
    %v7407 = vsel %vm1750, %v7359, %v7406
    %v7408 = vsel %vm1752, %v7363, %v7407
    %v7409 = vsel %vm1754, %v7367, %v7408
    %v7410 = vsel %vm1756, %v7371, %v7409
    %v7411 = vsel %vm1744, %v7379, %v7375
    %v7412 = vsel %vm1746, %v7383, %v7411
    %v7413 = vsel %vm1748, %v7387, %v7412
    %v7414 = vsel %vm1750, %v7391, %v7413
    %v7415 = vsel %vm1752, %v7395, %v7414
    %v7416 = vsel %vm1754, %v7399, %v7415
    %v7417 = vsel %vm1756, %v7403, %v7416
    %v7420 = vsel %vm1663, %v7314, %v7410
    %v7421 = vsel %vm1663, %v7321, %v7417
    %v7422 = vsel %vm1865, %v7420, -inf
    %7423 = vmax.xlane.f32.xlu0 %v7422
    %v7424 = vpop.xlane.xlu0 %7423
    %v7425 = vsel %vm1865, %v7421, -inf
    %7426 = vmax.xlane.f32.xlu0 %v7425
    %v7427 = vpop.xlane.xlu0 %7426
    %v7428 = vsub.f32 %v7420, %v7424
    %v7429 = vsub.f32 %v7421, %v7427
    %v7430 = vmul.f32 %v7428, 1.442695
    %v7431 = vpow.pop %v7430
    %v7432 = vmul.f32 %v7429, 1.442695
    %v7433 = vpow.pop %v7432
    %v7434 = vsel %vm1865, %v7431, 0.0
    %7435 = vadd.xlane.f32.xlu0 %v7434
    %v7436 = vpop.xlane.xlu0 %7435
    %v7437 = vsel %vm1865, %v7433, 0.0
    %7438 = vadd.xlane.f32.xlu0 %v7437
    %v7439 = vpop.xlane.xlu0 %7438
    %v7440 = vrcp.pop %v7436
    %v7441 = vrcp.pop %v7439
    %v7442 = vmul.f32 %v7431, %v7440
    %v7443 = vmul.f32 %v7433, %v7441
    %v7444 = vcombine.high %v7442, 0.0
    %v7446 = vunpack.c.l.s4 1983009808
    %v7447 = vunpack.c.0.s8 %v7446
    %v7448 = vlaneseq
    %v7449 = vshrl.u32 %v7448, 7
    %v7450 = vsub.s32 %v7447, %v7449
    %v7451 = vrot.slane %v7442, %v7450
    %v7453 = vunpack.c.l.s4 1983009808
    %v7454 = vunpack.c.0.s8 %v7453
    %v7455 = vlaneseq
    %v7456 = vshrl.u32 %v7455, 7
    %v7457 = vsub.s32 %v7454, %v7456
    %v7458 = vrot.slane %v7444, %v7457
    %v7459 = vcombine.high %v7451, 0.0
    %v7461 = vunpack.c.l.s4 1934713408
    %v7462 = vunpack.c.0.s8 %v7461
    %v7463 = vlaneseq
    %v7464 = vshrl.u32 %v7463, 7
    %v7465 = vsub.s32 %v7462, %v7464
    %v7466 = vrot.slane %v7451, %v7465
    %v7468 = vunpack.c.l.s4 1934713408
    %v7469 = vunpack.c.0.s8 %v7468
    %v7470 = vlaneseq
    %v7471 = vshrl.u32 %v7470, 7
    %v7472 = vsub.s32 %v7469, %v7471
    %v7473 = vrot.slane %v7459, %v7472
    %v7474 = vcombine.high %v7458, 0.0
    %v7476 = vunpack.c.l.s4 1934713408
    %v7477 = vunpack.c.0.s8 %v7476
    %v7478 = vlaneseq
    %v7479 = vshrl.u32 %v7478, 7
    %v7480 = vsub.s32 %v7477, %v7479
    %v7481 = vrot.slane %v7458, %v7480
    %v7483 = vunpack.c.l.s4 1934713408
    %v7484 = vunpack.c.0.s8 %v7483
    %v7485 = vlaneseq
    %v7486 = vshrl.u32 %v7485, 7
    %v7487 = vsub.s32 %v7484, %v7486
    %v7488 = vrot.slane %v7474, %v7487
    %v7489 = vcombine.high %v7466, 0.0
    %v7490 = vcombine.high %v7473, 0.0
    %v7491 = vcombine.high %v7481, 0.0
    %v7492 = vcombine.high %v7488, 0.0
    %v7493 = vcombine.high %v7443, 0.0
    %v7495 = vunpack.c.l.s4 1983009808
    %v7496 = vunpack.c.0.s8 %v7495
    %v7497 = vlaneseq
    %v7498 = vshrl.u32 %v7497, 7
    %v7499 = vsub.s32 %v7496, %v7498
    %v7500 = vrot.slane %v7443, %v7499
    %v7502 = vunpack.c.l.s4 1983009808
    %v7503 = vunpack.c.0.s8 %v7502
    %v7504 = vlaneseq
    %v7505 = vshrl.u32 %v7504, 7
    %v7506 = vsub.s32 %v7503, %v7505
    %v7507 = vrot.slane %v7493, %v7506
    %v7508 = vcombine.high %v7500, 0.0
    %v7510 = vunpack.c.l.s4 1934713408
    %v7511 = vunpack.c.0.s8 %v7510
    %v7512 = vlaneseq
    %v7513 = vshrl.u32 %v7512, 7
    %v7514 = vsub.s32 %v7511, %v7513
    %v7515 = vrot.slane %v7500, %v7514
    %v7517 = vunpack.c.l.s4 1934713408
    %v7518 = vunpack.c.0.s8 %v7517
    %v7519 = vlaneseq
    %v7520 = vshrl.u32 %v7519, 7
    %v7521 = vsub.s32 %v7518, %v7520
    %v7522 = vrot.slane %v7508, %v7521
    %v7523 = vcombine.high %v7507, 0.0
    %v7525 = vunpack.c.l.s4 1934713408
    %v7526 = vunpack.c.0.s8 %v7525
    %v7527 = vlaneseq
    %v7528 = vshrl.u32 %v7527, 7
    %v7529 = vsub.s32 %v7526, %v7528
    %v7530 = vrot.slane %v7507, %v7529
    %v7532 = vunpack.c.l.s4 1934713408
    %v7533 = vunpack.c.0.s8 %v7532
    %v7534 = vlaneseq
    %v7535 = vshrl.u32 %v7534, 7
    %v7536 = vsub.s32 %v7533, %v7535
    %v7537 = vrot.slane %v7523, %v7536
    %v7538 = vcombine.high %v7515, 0.0
    %v7539 = vcombine.high %v7522, 0.0
    %v7540 = vcombine.high %v7530, 0.0
    %v7541 = vcombine.high %v7537, 0.0
    %7544 = vrot.lane.b32.xlu0 %v7489, 8
    %v7545 = vpop.permute.xlu0 %7544
    %7546 = vrot.lane.b32.xlu0 %v7538, 8
    %v7547 = vpop.permute.xlu0 %7546
    %7552 = vrot.lane.b32.xlu0 %v7473, 16
    %v7553 = vpop.permute.xlu0 %7552
    %7554 = vrot.lane.b32.xlu0 %v7522, 16
    %v7555 = vpop.permute.xlu0 %7554
    %7560 = vrot.lane.b32.xlu0 %v7490, 24
    %v7561 = vpop.permute.xlu0 %7560
    %7562 = vrot.lane.b32.xlu0 %v7539, 24
    %v7563 = vpop.permute.xlu0 %7562
    %7568 = vrot.lane.b32.xlu0 %v7481, 32
    %v7569 = vpop.permute.xlu0 %7568
    %7570 = vrot.lane.b32.xlu0 %v7530, 32
    %v7571 = vpop.permute.xlu0 %7570
    %7576 = vrot.lane.b32.xlu0 %v7491, 40
    %v7577 = vpop.permute.xlu0 %7576
    %7578 = vrot.lane.b32.xlu0 %v7540, 40
    %v7579 = vpop.permute.xlu0 %7578
    %7584 = vrot.lane.b32.xlu0 %v7488, 48
    %v7585 = vpop.permute.xlu0 %7584
    %7586 = vrot.lane.b32.xlu0 %v7537, 48
    %v7587 = vpop.permute.xlu0 %7586
    %7592 = vrot.lane.b32.xlu0 %v7492, 56
    %v7593 = vpop.permute.xlu0 %7592
    %7594 = vrot.lane.b32.xlu0 %v7541, 56
    %v7595 = vpop.permute.xlu0 %7594
    %v7598 = vsel %vm1865, %v7466, %v7545
    %v7599 = vsel %vm1865, %v7515, %v7547
    %v7600 = vsel %vm2044, %v7598, %v7553
    %v7601 = vsel %vm2044, %v7599, %v7555
    %v7602 = vsel %vm2047, %v7600, %v7561
    %v7603 = vsel %vm2047, %v7601, %v7563
    %v7604 = vsel %vm2050, %v7602, %v7569
    %v7605 = vsel %vm2050, %v7603, %v7571
    %v7606 = vsel %vm2053, %v7604, %v7577
    %v7607 = vsel %vm2053, %v7605, %v7579
    %v7608 = vsel %vm427, %v7606, %v7585
    %v7609 = vsel %vm427, %v7607, %v7587
    %v7610 = vsel %vm2058, %v7608, %v7593
    %v7611 = vsel %vm2058, %v7609, %v7595
    %7612 = vst.msk [vmem:[%s11 + $0x2] sm:$0x1] %vm2061, %v7610
    %7613 = vst.msk [vmem:[%s11 + $0x6] sm:$0x1] %vm2061, %v7611
    %v7614 = vlaneseq
    %v7615 = vshrl.u32 %v7614, 7
    %v7616 = vsub.s32 0, %v7615
    %v7617 = vrot.slane %v7442, %v7616
    %7619 = vbcast.lane.b32.xlu0 %v7617, 256
    %v7620 = vpop.permute.xlu0 %7619
    %v7621 = vlaneseq
    %v7622 = vshrl.u32 %v7621, 7
    %v7623 = vsub.s32 0, %v7622
    %v7624 = vrot.slane %v7443, %v7623
    %7626 = vbcast.lane.b32.xlu0 %v7624, 256
    %v7627 = vpop.permute.xlu0 %7626
    %v7628 = vmul.f32 %v7620, %v161
    %v7629 = vmul.f32 %v7627, %v162
    %v7630 = vsel %vm427, %v7628, 0.0
    %v7631 = vrot.slane %v7630, 4
    %v7632 = vadd.f32 %v7630, %v7631
    %v7633 = vrot.slane %v7632, 2
    %v7634 = vadd.f32 %v7632, %v7633
    %v7635 = vrot.slane %v7634, 1
    %v7636 = vadd.f32 %v7634, %v7635
    %v7637 = vsel %vm427, %v7629, 0.0
    %v7638 = vrot.slane %v7637, 4
    %v7639 = vadd.f32 %v7637, %v7638
    %v7640 = vrot.slane %v7639, 2
    %v7641 = vadd.f32 %v7639, %v7640
    %v7642 = vrot.slane %v7641, 1
    %v7643 = vadd.f32 %v7641, %v7642
    %v7644 = vpack.c.bf16 %v161, %v161
    %v7645 = vpack.c.bf16 %v162, %v162
    %v7646 = vld [vmem:[%s6] sm:$0xf]
    %v7647 = vld [vmem:[%s6 + $0x4] sm:$0xf]
    %v7648 = vld [vmem:[%s6 + $0x8] sm:$0xf]
    %v7649 = vld [vmem:[%s6 + $0xc] sm:$0xf]
    %v7650 = vld [vmem:[%s6 + $0x10] sm:$0xf]
    %v7651 = vld [vmem:[%s6 + $0x14] sm:$0xf]
    %v7652 = vpack.c.bf16 %v7636, %v7636
    %v7653 = vpack.c.bf16 %v7643, %v7643
    %s7654 = scalar_lea.vmem %s6, 72
    %v7655 = vld [vmem:[%s7654] sm:$0xf]
    %v7656 = vld [vmem:[%s7654 + $0x4] sm:$0xf]
    %v7657 = vld [vmem:[%s7654 + $0x8] sm:$0xf]
    %v7658 = vld [vmem:[%s7654 + $0xc] sm:$0xf]
    %v7659 = vld [vmem:[%s7654 + $0x10] sm:$0xf]
    %v7660 = vld [vmem:[%s7654 + $0x14] sm:$0xf]
    %v7663 = vunpack.c.l.b16 %v7652
    %v7664 = vunpack.c.l.b16 %v7653
    %v7665 = vsel %vm1744, %v7664, %v7663
    %v7666 = vpack.c.b16 %v7665, %v7665
    %v7673 = vunpack.c.l.b16 %v7655
    %v7674 = vunpack.c.l.b16 %v7656
    %v7675 = vunpack.c.l.b16 %v7657
    %v7676 = vunpack.c.l.b16 %v7658
    %v7677 = vunpack.c.l.b16 %v7659
    %v7678 = vunpack.c.l.b16 %v7660
    %v7679 = vpack.c.b16 %v7674, %v7673
    %v7680 = vpack.c.b16 %v7676, %v7675
    %v7681 = vpack.c.b16 %v7678, %v7677
    %v7686 = vsel %vm427, %v7666, 0
    %7688 = vmatprep.subr.bf16.mxu0 0
    %7689 = vmatpush1.bf16.msra.mxu0 %v7679
    %7690 = vmatprep.subr.bf16.mxu0 0
    %7691 = vmatpush1.bf16.msra.mxu0 %v7680
    %7692 = vmatprep.subr.bf16.mxu0 0
    %7693 = vmatpush1.bf16.msra.mxu0 %v7681
    %7694 = vmatprep.subr.bf16.mxu0 0
    %7695 = vmatpush1.bf16.msra.mxu0 0
    %7696 = vmatprep.subr.bf16.mxu0 0
    %7697 = vmatpush1.bf16.msra.mxu0 0
    %7698 = vmatprep.subr.bf16.mxu0 0
    %7699 = vmatpush1.bf16.msra.mxu0 0
    %7700 = vmatprep.subr.bf16.mxu0 0
    %7701 = vmatpush1.bf16.msra.mxu0 0
    %7702 = vmatprep.subr.bf16.mxu0 0
    %7703 = vmatpush1.bf16.msra.mxu0 0
    %7704 = vmatprep.subr.bf16.mxu0 0
    %7705 = vmatpush1.bf16.msra.mxu0 0
    %7706 = vmatprep.subr.bf16.mxu0 0
    %7707 = vmatpush1.bf16.msra.mxu0 0
    %7708 = vmatprep.subr.bf16.mxu0 0
    %7709 = vmatpush1.bf16.msra.mxu0 0
    %7710 = vmatprep.subr.bf16.mxu0 0
    %7711 = vmatpush1.bf16.msra.mxu0 0
    %7712 = vmatprep.subr.bf16.mxu0 0
    %7713 = vmatpush1.bf16.msra.mxu0 0
    %7714 = vmatprep.subr.bf16.mxu0 0
    %7715 = vmatpush1.bf16.msra.mxu0 0
    %7716 = vmatprep.subr.bf16.mxu0 0
    %7717 = vmatpush1.bf16.msra.mxu0 0
    %7718 = vmatprep.subr.bf16.mxu0 0
    %7719 = vmatpush1.bf16.msra.mxu0 0
    %7720 = vmatprep.mubr.bf16.mxu0 0
    %7721 = vmatmul.mubr.bf16.gmra.mrb[0].mxu0 %v7686
    %v7722 = vpop.f32.mrb[0].mxu0
    %v7723 = vadd.f32 0.0, %v7722
    %v7724 = vpop.f32.mrb[0].mxu0
    %v7725 = vpop.f32.mrb[0].mxu0
    %v7726 = vpop.f32.mrb[0].mxu0
    %7727 = vdwg.mxu0
    %v7730 = vunpack.c.l.b16 %v7644
    %v7731 = vunpack.c.l.b16 %v7645
    %v7732 = vrot.slane %v7731, 7
    %v7733 = vsel %vm1744, %v7732, %v7730
    %v7734 = vpack.c.b16 %v7733, %v7733
    %v7741 = vunpack.c.l.b16 %v7646
    %v7742 = vunpack.c.l.b16 %v7647
    %v7743 = vunpack.c.l.b16 %v7648
    %v7744 = vunpack.c.l.b16 %v7649
    %v7745 = vunpack.c.l.b16 %v7650
    %v7746 = vunpack.c.l.b16 %v7651
    %v7747 = vpack.c.b16 %v7742, %v7741
    %v7748 = vpack.c.b16 %v7744, %v7743
    %v7749 = vpack.c.b16 %v7746, %v7745
    %v7754 = vsel %vm427, %v7734, 0
    %7756 = vmatprep.subr.bf16.mxu0 0
    %7757 = vmatpush1.bf16.msra.mxu0 %v7747
    %7758 = vmatprep.subr.bf16.mxu0 0
    %7759 = vmatpush1.bf16.msra.mxu0 %v7748
    %7760 = vmatprep.subr.bf16.mxu0 0
    %7761 = vmatpush1.bf16.msra.mxu0 %v7749
    %7762 = vmatprep.subr.bf16.mxu0 0
    %7763 = vmatpush1.bf16.msra.mxu0 0
    %7764 = vmatprep.subr.bf16.mxu0 0
    %7765 = vmatpush1.bf16.msra.mxu0 0
    %7766 = vmatprep.subr.bf16.mxu0 0
    %7767 = vmatpush1.bf16.msra.mxu0 0
    %7768 = vmatprep.subr.bf16.mxu0 0
    %7769 = vmatpush1.bf16.msra.mxu0 0
    %7770 = vmatprep.subr.bf16.mxu0 0
    %7771 = vmatpush1.bf16.msra.mxu0 0
    %7772 = vmatprep.subr.bf16.mxu0 0
    %7773 = vmatpush1.bf16.msra.mxu0 0
    %7774 = vmatprep.subr.bf16.mxu0 0
    %7775 = vmatpush1.bf16.msra.mxu0 0
    %7776 = vmatprep.subr.bf16.mxu0 0
    %7777 = vmatpush1.bf16.msra.mxu0 0
    %7778 = vmatprep.subr.bf16.mxu0 0
    %7779 = vmatpush1.bf16.msra.mxu0 0
    %7780 = vmatprep.subr.bf16.mxu0 0
    %7781 = vmatpush1.bf16.msra.mxu0 0
    %7782 = vmatprep.subr.bf16.mxu0 0
    %7783 = vmatpush1.bf16.msra.mxu0 0
    %7784 = vmatprep.subr.bf16.mxu0 0
    %7785 = vmatpush1.bf16.msra.mxu0 0
    %7786 = vmatprep.subr.bf16.mxu0 0
    %7787 = vmatpush1.bf16.msra.mxu0 0
    %7788 = vmatprep.mubr.bf16.mxu0 0
    %7789 = vmatmul.mubr.bf16.gmra.mrb[0].mxu0 %v7754
    %v7790 = vpop.f32.mrb[0].mxu0
    %v7791 = vadd.f32 %v7723, %v7790
    %v7792 = vpop.f32.mrb[0].mxu0
    %v7793 = vpop.f32.mrb[0].mxu0
    %v7794 = vpop.f32.mrb[0].mxu0
    %7795 = vdwg.mxu0
    %v7796 = vmul.f32 %v7620, %v2515
    %v7797 = vmul.f32 %v7627, %v2516
    %v7798 = vsel %vm427, %v7796, 0.0
    %v7799 = vrot.slane %v7798, 4
    %v7800 = vadd.f32 %v7798, %v7799
    %v7801 = vrot.slane %v7800, 2
    %v7802 = vadd.f32 %v7800, %v7801
    %v7803 = vrot.slane %v7802, 1
    %v7804 = vadd.f32 %v7802, %v7803
    %v7805 = vsel %vm427, %v7797, 0.0
    %v7806 = vrot.slane %v7805, 4
    %v7807 = vadd.f32 %v7805, %v7806
    %v7808 = vrot.slane %v7807, 2
    %v7809 = vadd.f32 %v7807, %v7808
    %v7810 = vrot.slane %v7809, 1
    %v7811 = vadd.f32 %v7809, %v7810
    %v7812 = vpack.c.bf16 %v2515, %v2515
    %v7813 = vpack.c.bf16 %v2516, %v2516
    %s7814 = scalar_lea.vmem %s6, 24
    %v7815 = vld [vmem:[%s7814] sm:$0xf]
    %v7816 = vld [vmem:[%s7814 + $0x4] sm:$0xf]
    %v7817 = vld [vmem:[%s7814 + $0x8] sm:$0xf]
    %v7818 = vld [vmem:[%s7814 + $0xc] sm:$0xf]
    %v7819 = vld [vmem:[%s7814 + $0x10] sm:$0xf]
    %v7820 = vld [vmem:[%s7814 + $0x14] sm:$0xf]
    %v7821 = vpack.c.bf16 %v7804, %v7804
    %v7822 = vpack.c.bf16 %v7811, %v7811
    %s7823 = scalar_lea.vmem %s6, 96
    %v7824 = vld [vmem:[%s7823] sm:$0xf]
    %v7825 = vld [vmem:[%s7823 + $0x4] sm:$0xf]
    %v7826 = vld [vmem:[%s7823 + $0x8] sm:$0xf]
    %v7827 = vld [vmem:[%s7823 + $0xc] sm:$0xf]
    %v7828 = vld [vmem:[%s7823 + $0x10] sm:$0xf]
    %v7829 = vld [vmem:[%s7823 + $0x14] sm:$0xf]
    %v7832 = vunpack.c.l.b16 %v7821
    %v7833 = vunpack.c.l.b16 %v7822
    %v7834 = vsel %vm1744, %v7833, %v7832
    %v7835 = vpack.c.b16 %v7834, %v7834
    %v7842 = vunpack.c.l.b16 %v7824
    %v7843 = vunpack.c.l.b16 %v7825
    %v7844 = vunpack.c.l.b16 %v7826
    %v7845 = vunpack.c.l.b16 %v7827
    %v7846 = vunpack.c.l.b16 %v7828
    %v7847 = vunpack.c.l.b16 %v7829
    %v7848 = vpack.c.b16 %v7843, %v7842
    %v7849 = vpack.c.b16 %v7845, %v7844
    %v7850 = vpack.c.b16 %v7847, %v7846
    %v7855 = vsel %vm427, %v7835, 0
    %7857 = vmatprep.subr.bf16.mxu0 0
    %7858 = vmatpush1.bf16.msra.mxu0 %v7848
    %7859 = vmatprep.subr.bf16.mxu0 0
    %7860 = vmatpush1.bf16.msra.mxu0 %v7849
    %7861 = vmatprep.subr.bf16.mxu0 0
    %7862 = vmatpush1.bf16.msra.mxu0 %v7850
    %7863 = vmatprep.subr.bf16.mxu0 0
    %7864 = vmatpush1.bf16.msra.mxu0 0
    %7865 = vmatprep.subr.bf16.mxu0 0
    %7866 = vmatpush1.bf16.msra.mxu0 0
    %7867 = vmatprep.subr.bf16.mxu0 0
    %7868 = vmatpush1.bf16.msra.mxu0 0
    %7869 = vmatprep.subr.bf16.mxu0 0
    %7870 = vmatpush1.bf16.msra.mxu0 0
    %7871 = vmatprep.subr.bf16.mxu0 0
    %7872 = vmatpush1.bf16.msra.mxu0 0
    %7873 = vmatprep.subr.bf16.mxu0 0
    %7874 = vmatpush1.bf16.msra.mxu0 0
    %7875 = vmatprep.subr.bf16.mxu0 0
    %7876 = vmatpush1.bf16.msra.mxu0 0
    %7877 = vmatprep.subr.bf16.mxu0 0
    %7878 = vmatpush1.bf16.msra.mxu0 0
    %7879 = vmatprep.subr.bf16.mxu0 0
    %7880 = vmatpush1.bf16.msra.mxu0 0
    %7881 = vmatprep.subr.bf16.mxu0 0
    %7882 = vmatpush1.bf16.msra.mxu0 0
    %7883 = vmatprep.subr.bf16.mxu0 0
    %7884 = vmatpush1.bf16.msra.mxu0 0
    %7885 = vmatprep.subr.bf16.mxu0 0
    %7886 = vmatpush1.bf16.msra.mxu0 0
    %7887 = vmatprep.subr.bf16.mxu0 0
    %7888 = vmatpush1.bf16.msra.mxu0 0
    %7889 = vmatprep.mubr.bf16.mxu0 0
    %7890 = vmatmul.mubr.bf16.gmra.mrb[0].mxu0 %v7855
    %v7891 = vpop.f32.mrb[0].mxu0
    %v7892 = vadd.f32 0.0, %v7891
    %v7893 = vpop.f32.mrb[0].mxu0
    %v7894 = vpop.f32.mrb[0].mxu0
    %v7895 = vpop.f32.mrb[0].mxu0
    %7896 = vdwg.mxu0
    %v7899 = vunpack.c.l.b16 %v7812
    %v7900 = vunpack.c.l.b16 %v7813
    %v7901 = vrot.slane %v7900, 7
    %v7902 = vsel %vm1744, %v7901, %v7899
    %v7903 = vpack.c.b16 %v7902, %v7902
    %v7910 = vunpack.c.l.b16 %v7815
    %v7911 = vunpack.c.l.b16 %v7816
    %v7912 = vunpack.c.l.b16 %v7817
    %v7913 = vunpack.c.l.b16 %v7818
    %v7914 = vunpack.c.l.b16 %v7819
    %v7915 = vunpack.c.l.b16 %v7820
    %v7916 = vpack.c.b16 %v7911, %v7910
    %v7917 = vpack.c.b16 %v7913, %v7912
    %v7918 = vpack.c.b16 %v7915, %v7914
    %v7923 = vsel %vm427, %v7903, 0
    %7925 = vmatprep.subr.bf16.mxu0 0
    %7926 = vmatpush1.bf16.msra.mxu0 %v7916
    %7927 = vmatprep.subr.bf16.mxu0 0
    %7928 = vmatpush1.bf16.msra.mxu0 %v7917
    %7929 = vmatprep.subr.bf16.mxu0 0
    %7930 = vmatpush1.bf16.msra.mxu0 %v7918
    %7931 = vmatprep.subr.bf16.mxu0 0
    %7932 = vmatpush1.bf16.msra.mxu0 0
    %7933 = vmatprep.subr.bf16.mxu0 0
    %7934 = vmatpush1.bf16.msra.mxu0 0
    %7935 = vmatprep.subr.bf16.mxu0 0
    %7936 = vmatpush1.bf16.msra.mxu0 0
    %7937 = vmatprep.subr.bf16.mxu0 0
    %7938 = vmatpush1.bf16.msra.mxu0 0
    %7939 = vmatprep.subr.bf16.mxu0 0
    %7940 = vmatpush1.bf16.msra.mxu0 0
    %7941 = vmatprep.subr.bf16.mxu0 0
    %7942 = vmatpush1.bf16.msra.mxu0 0
    %7943 = vmatprep.subr.bf16.mxu0 0
    %7944 = vmatpush1.bf16.msra.mxu0 0
    %7945 = vmatprep.subr.bf16.mxu0 0
    %7946 = vmatpush1.bf16.msra.mxu0 0
    %7947 = vmatprep.subr.bf16.mxu0 0
    %7948 = vmatpush1.bf16.msra.mxu0 0
    %7949 = vmatprep.subr.bf16.mxu0 0
    %7950 = vmatpush1.bf16.msra.mxu0 0
    %7951 = vmatprep.subr.bf16.mxu0 0
    %7952 = vmatpush1.bf16.msra.mxu0 0
    %7953 = vmatprep.subr.bf16.mxu0 0
    %7954 = vmatpush1.bf16.msra.mxu0 0
    %7955 = vmatprep.subr.bf16.mxu0 0
    %7956 = vmatpush1.bf16.msra.mxu0 0
    %7957 = vmatprep.mubr.bf16.mxu0 0
    %7958 = vmatmul.mubr.bf16.gmra.mrb[0].mxu0 %v7923
    %v7959 = vpop.f32.mrb[0].mxu0
    %v7960 = vadd.f32 %v7892, %v7959
    %v7961 = vpop.f32.mrb[0].mxu0
    %v7962 = vpop.f32.mrb[0].mxu0
    %v7963 = vpop.f32.mrb[0].mxu0
    %7964 = vdwg.mxu0
    %v7965 = vadd.f32 %v7791, %v7960
    %v7966 = vmul.f32 %v7620, %v5363
    %v7967 = vmul.f32 %v7627, %v5364
    %v7968 = vsel %vm427, %v7966, 0.0
    %v7969 = vrot.slane %v7968, 4
    %v7970 = vadd.f32 %v7968, %v7969
    %v7971 = vrot.slane %v7970, 2
    %v7972 = vadd.f32 %v7970, %v7971
    %v7973 = vrot.slane %v7972, 1
    %v7974 = vadd.f32 %v7972, %v7973
    %v7975 = vsel %vm427, %v7967, 0.0
    %v7976 = vrot.slane %v7975, 4
    %v7977 = vadd.f32 %v7975, %v7976
    %v7978 = vrot.slane %v7977, 2
    %v7979 = vadd.f32 %v7977, %v7978
    %v7980 = vrot.slane %v7979, 1
    %v7981 = vadd.f32 %v7979, %v7980
    %v7982 = vpack.c.bf16 %v5363, %v5363
    %v7983 = vpack.c.bf16 %v5364, %v5364
    %s7984 = scalar_lea.vmem %s6, 48
    %v7985 = vld [vmem:[%s7984] sm:$0xf]
    %v7986 = vld [vmem:[%s7984 + $0x4] sm:$0xf]
    %v7987 = vld [vmem:[%s7984 + $0x8] sm:$0xf]
    %v7988 = vld [vmem:[%s7984 + $0xc] sm:$0xf]
    %v7989 = vld [vmem:[%s7984 + $0x10] sm:$0xf]
    %v7990 = vld [vmem:[%s7984 + $0x14] sm:$0xf]
    %v7991 = vpack.c.bf16 %v7974, %v7974
    %v7992 = vpack.c.bf16 %v7981, %v7981
    %s7993 = scalar_lea.vmem %s6, 120
    %v7994 = vld [vmem:[%s7993] sm:$0xf]
    %v7995 = vld [vmem:[%s7993 + $0x4] sm:$0xf]
    %v7996 = vld [vmem:[%s7993 + $0x8] sm:$0xf]
    %v7997 = vld [vmem:[%s7993 + $0xc] sm:$0xf]
    %v7998 = vld [vmem:[%s7993 + $0x10] sm:$0xf]
    %v7999 = vld [vmem:[%s7993 + $0x14] sm:$0xf]
    %v8002 = vunpack.c.l.b16 %v7991
    %v8003 = vunpack.c.l.b16 %v7992
    %v8004 = vsel %vm1744, %v8003, %v8002
    %v8005 = vpack.c.b16 %v8004, %v8004
    %v8012 = vunpack.c.l.b16 %v7994
    %v8013 = vunpack.c.l.b16 %v7995
    %v8014 = vunpack.c.l.b16 %v7996
    %v8015 = vunpack.c.l.b16 %v7997
    %v8016 = vunpack.c.l.b16 %v7998
    %v8017 = vunpack.c.l.b16 %v7999
    %v8018 = vpack.c.b16 %v8013, %v8012
    %v8019 = vpack.c.b16 %v8015, %v8014
    %v8020 = vpack.c.b16 %v8017, %v8016
    %v8025 = vsel %vm427, %v8005, 0
    %8027 = vmatprep.subr.bf16.mxu0 0
    %8028 = vmatpush1.bf16.msra.mxu0 %v8018
    %8029 = vmatprep.subr.bf16.mxu0 0
    %8030 = vmatpush1.bf16.msra.mxu0 %v8019
    %8031 = vmatprep.subr.bf16.mxu0 0
    %8032 = vmatpush1.bf16.msra.mxu0 %v8020
    %8033 = vmatprep.subr.bf16.mxu0 0
    %8034 = vmatpush1.bf16.msra.mxu0 0
    %8035 = vmatprep.subr.bf16.mxu0 0
    %8036 = vmatpush1.bf16.msra.mxu0 0
    %8037 = vmatprep.subr.bf16.mxu0 0
    %8038 = vmatpush1.bf16.msra.mxu0 0
    %8039 = vmatprep.subr.bf16.mxu0 0
    %8040 = vmatpush1.bf16.msra.mxu0 0
    %8041 = vmatprep.subr.bf16.mxu0 0
    %8042 = vmatpush1.bf16.msra.mxu0 0
    %8043 = vmatprep.subr.bf16.mxu0 0
    %8044 = vmatpush1.bf16.msra.mxu0 0
    %8045 = vmatprep.subr.bf16.mxu0 0
    %8046 = vmatpush1.bf16.msra.mxu0 0
    %8047 = vmatprep.subr.bf16.mxu0 0
    %8048 = vmatpush1.bf16.msra.mxu0 0
    %8049 = vmatprep.subr.bf16.mxu0 0
    %8050 = vmatpush1.bf16.msra.mxu0 0
    %8051 = vmatprep.subr.bf16.mxu0 0
    %8052 = vmatpush1.bf16.msra.mxu0 0
    %8053 = vmatprep.subr.bf16.mxu0 0
    %8054 = vmatpush1.bf16.msra.mxu0 0
    %8055 = vmatprep.subr.bf16.mxu0 0
    %8056 = vmatpush1.bf16.msra.mxu0 0
    %8057 = vmatprep.subr.bf16.mxu0 0
    %8058 = vmatpush1.bf16.msra.mxu0 0
    %8059 = vmatprep.mubr.bf16.mxu0 0
    %8060 = vmatmul.mubr.bf16.gmra.mrb[0].mxu0 %v8025
    %v8061 = vpop.f32.mrb[0].mxu0
    %v8062 = vadd.f32 0.0, %v8061
    %v8063 = vpop.f32.mrb[0].mxu0
    %v8064 = vpop.f32.mrb[0].mxu0
    %v8065 = vpop.f32.mrb[0].mxu0
    %8066 = vdwg.mxu0
    %v8069 = vunpack.c.l.b16 %v7982
    %v8070 = vunpack.c.l.b16 %v7983
    %v8071 = vrot.slane %v8070, 7
    %v8072 = vsel %vm1744, %v8071, %v8069
    %v8073 = vpack.c.b16 %v8072, %v8072
    %v8080 = vunpack.c.l.b16 %v7985
    %v8081 = vunpack.c.l.b16 %v7986
    %v8082 = vunpack.c.l.b16 %v7987
    %v8083 = vunpack.c.l.b16 %v7988
    %v8084 = vunpack.c.l.b16 %v7989
    %v8085 = vunpack.c.l.b16 %v7990
    %v8086 = vpack.c.b16 %v8081, %v8080
    %v8087 = vpack.c.b16 %v8083, %v8082
    %v8088 = vpack.c.b16 %v8085, %v8084
    %v8093 = vsel %vm427, %v8073, 0
    %8095 = vmatprep.subr.bf16.mxu0 0
    %8096 = vmatpush1.bf16.msra.mxu0 %v8086
    %8097 = vmatprep.subr.bf16.mxu0 0
    %8098 = vmatpush1.bf16.msra.mxu0 %v8087
    %8099 = vmatprep.subr.bf16.mxu0 0
    %8100 = vmatpush1.bf16.msra.mxu0 %v8088
    %8101 = vmatprep.subr.bf16.mxu0 0
    %8102 = vmatpush1.bf16.msra.mxu0 0
    %8103 = vmatprep.subr.bf16.mxu0 0
    %8104 = vmatpush1.bf16.msra.mxu0 0
    %8105 = vmatprep.subr.bf16.mxu0 0
    %8106 = vmatpush1.bf16.msra.mxu0 0
    %8107 = vmatprep.subr.bf16.mxu0 0
    %8108 = vmatpush1.bf16.msra.mxu0 0
    %8109 = vmatprep.subr.bf16.mxu0 0
    %8110 = vmatpush1.bf16.msra.mxu0 0
    %8111 = vmatprep.subr.bf16.mxu0 0
    %8112 = vmatpush1.bf16.msra.mxu0 0
    %8113 = vmatprep.subr.bf16.mxu0 0
    %8114 = vmatpush1.bf16.msra.mxu0 0
    %8115 = vmatprep.subr.bf16.mxu0 0
    %8116 = vmatpush1.bf16.msra.mxu0 0
    %8117 = vmatprep.subr.bf16.mxu0 0
    %8118 = vmatpush1.bf16.msra.mxu0 0
    %8119 = vmatprep.subr.bf16.mxu0 0
    %8120 = vmatpush1.bf16.msra.mxu0 0
    %8121 = vmatprep.subr.bf16.mxu0 0
    %8122 = vmatpush1.bf16.msra.mxu0 0
    %8123 = vmatprep.subr.bf16.mxu0 0
    %8124 = vmatpush1.bf16.msra.mxu0 0
    %8125 = vmatprep.subr.bf16.mxu0 0
    %8126 = vmatpush1.bf16.msra.mxu0 0
    %8127 = vmatprep.mubr.bf16.mxu0 0
    %8128 = vmatmul.mubr.bf16.gmra.mrb[0].mxu0 %v8093
    %v8129 = vpop.f32.mrb[0].mxu0
    %v8130 = vadd.f32 %v8062, %v8129
    %v8131 = vpop.f32.mrb[0].mxu0
    %v8132 = vpop.f32.mrb[0].mxu0
    %v8133 = vpop.f32.mrb[0].mxu0
    %8134 = vdwg.mxu0
    %v8135 = vadd.f32 %v7965, %v8130
    %v8136 = vlaneseq
    %v8137 = vshrl.u32 %v8136, 7
    %v8138 = vsub.s32 0, %v8137
    %v8139 = vrot.slane %v155, %v8138
    %v8140 = vadd.f32 %v8135, %v8139
    %v8143 = vunpack.c.l.s4 1966171168
    %v8144 = vunpack.c.0.s8 %v8143
    %v8145 = vlaneseq
    %v8146 = vshrl.u32 %v8145, 7
    %v8147 = vsub.s32 %v8144, %v8146
    %v8148 = vrot.slane %v8140, %v8147
    %v8149 = vcombine.high %v8148, %v8148
    %v8151 = vunpack.c.l.s4 1966171168
    %v8152 = vunpack.c.0.s8 %v8151
    %v8153 = vlaneseq
    %v8154 = vshrl.u32 %v8153, 7
    %v8155 = vsub.s32 %v8152, %v8154
    %v8156 = vrot.slane %v8148, %v8155
    %v8158 = vunpack.c.l.s4 1966171168
    %v8159 = vunpack.c.0.s8 %v8158
    %v8160 = vlaneseq
    %v8161 = vshrl.u32 %v8160, 7
    %v8162 = vsub.s32 %v8159, %v8161
    %v8163 = vrot.slane %v8149, %v8162
    %vm8166 = vcmask 24576
    %8167 = vst.msk [vmem:[#allocation16] sm:$0x1] %vm8166, %v8156
    %8168 = vst.msk [vmem:[#allocation16 + $0x1] sm:$0x1] %vm8166, %v8163
    // Predicated region
    $region78: #{tpu_custom_call.1} parent=1 // pred_check
      _
    $region79: #{tpu_custom_call.1} parent=1 // pred_check_branch
      %8170 = sbr.rel (0) target = $region81
    $region80: #{tpu_custom_call.1} parent=1 // pred_region
      _
    $region81: #{tpu_custom_call.1} parent=1 // pred_fallthru
      _
    // Predicated region
    $region82: #{tpu_custom_call.1} parent=1 // pred_check
      _
    $region83: #{tpu_custom_call.1} parent=1 // pred_check_branch
      %8172 = sbr.rel (0) target = $region85
    $region84: #{tpu_custom_call.1} parent=1 // pred_region
      %s8174 = ssub.s32 32, 32
      %8175 = vsyncadd [#allocation4], %s8174
      %s8176 = sshll.u32 [#allocation16], 4
      %s8177 = int_to_ptr.vmem [resolvable:$true] %s8176
      %8182 = dma.vmem_to_hbm [thread:$0]  %s8177, 32, %s12, [#allocation4], 16, 16, 1
    $region85: #{tpu_custom_call.1} parent=1 // pred_fallthru
      _
    // Predicated region
    $region86: #{tpu_custom_call.1} parent=1 // pred_check
      _
    $region87: #{tpu_custom_call.1} parent=1 // pred_check_branch
      %8184 = sbr.rel (0) target = $region89
    $region88: #{tpu_custom_call.1} parent=1 // pred_region
      _
    $region89: #{tpu_custom_call.1} parent=1 // pred_fallthru
      _
    // Predicated region
    $region90: #{tpu_custom_call.1} parent=1 // pred_check
      _
    $region91: #{tpu_custom_call.1} parent=1 // pred_check_branch
      %8186 = sbr.rel (0) target = $region93
    $region92: #{tpu_custom_call.1} parent=1 // pred_region
      %8187 = dma.done [#allocation4], 32
    $region93: #{tpu_custom_call.1} parent=1 // pred_fallthru
      _
    %8188 = vsyncpa [#allocation3], 1
    %8189 = vsyncpa [#allocation6], 1
    %8190 = vsyncpa [#allocation9], 1
    %8191 = vsyncpa [#allocation12], 1
    %8192 = vsyncpa [#allocation15], 1
    %8193 = vsyncpa [#allocation4], 1

</llo_original>
